<compile_context>
chip_gen: v7x
topology: tpu7x:2x2x1
jax: 0.10.0
libtpu: 0.0.40
codegen_flags: <defaults>
</compile_context>

<pallas_src>
import functools

import numpy as np

import jax
import jax.numpy as jnp
from jax.experimental import pallas as pl
from jax.experimental.pallas import tpu as pltpu


# ----------------------------------------------------------------------------
# Init-time packing: selection matrices, per-tap weights, folded final conv
# ----------------------------------------------------------------------------
def _selection_matrices(h, w, k, stride, pad):
    """0/1 matrices S[t] (t = i*k+j) with S[t] @ x_flat == tap (i,j) gather.

    x_flat is the feature map flattened row-major to [h*w, C]; S[t] has shape
    [ho*wo, h*w]; out-of-range (zero-padded) taps are all-zero rows.
    """
    ho = (h + 2 * pad - k) // stride + 1
    wo = (w + 2 * pad - k) // stride + 1
    s = np.zeros((k * k, ho * wo, h * w), np.float32)
    for i in range(k):
        for j in range(k):
            t = i * k + j
            for oh in range(ho):
                ih = stride * oh + i - pad
                if not (0 <= ih < h):
                    continue
                for ow in range(wo):
                    iw = stride * ow + j - pad
                    if 0 <= iw < w:
                        s[t, oh * wo + ow, ih * w + iw] = 1.0
    return s, ho, wo


def _taps_weight(w_oihw):
    """PyTorch OIHW conv weight -> [k*k, Cin, Cout] per-tap matrices."""
    cout, cin, kh, kw = w_oihw.shape
    w = np.asarray(w_oihw, np.float32)
    return np.transpose(w, (2, 3, 1, 0)).reshape(kh * kw, cin, cout)


def _fold_pad_and_final_conv(w_oihw, hs, ws):
    """Fold replication_pad2d_naive + 6x6 valid conv (-> 1x1) into a single
    per-position weight W_eff[hs*ws, C]: out = sum(h * W_eff) + bias."""
    _, c, kh, kw = w_oihw.shape
    pad_h = (kh - hs) // 2 if hs < kh else 0
    pad_w = (kw - ws) // 2 if ws < kw else 0
    # TODO(synk): odd pad deficits / spatial > kernel are outside the module's
    # intended use (padded map must be exactly kernel-sized -> 1x1 output).
    assert hs + 2 * pad_h == kh and ws + 2 * pad_w == kw, (
        "final conv must reduce the (padded) map to 1x1")
    w = np.asarray(w_oihw, np.float32)
    w_eff = np.zeros((hs * ws, c), np.float32)
    for ph in range(kh):
        sh = min(max(ph - pad_h, 0), hs - 1)
        for pw in range(kw):
            sw = min(max(pw - pad_w, 0), ws - 1)
            w_eff[sh * ws + sw, :] += w[0, :, ph, pw]
    return w_eff


def prepare_packed(params, *, num_features, lowres_hw):
    """Pre-transform all weights once (not in the hot path)."""
    hl, wl = lowres_hw
    pk = {}

    # Encoder branch: compose patch embed and the Sequential's Linear.  The CLS
    # token is dropped entirely (its projection is discarded by [:, 1:]).
    wp = np.asarray(params["patch_w"], np.float64)
    bp = np.asarray(params["patch_b"], np.float64)
    we = np.asarray(params["enc_lin_w"], np.float64)
    be = np.asarray(params["enc_lin_b"], np.float64)
    pk["wenc"] = jnp.asarray((wp @ we).astype(np.float32))
    pk["benc"] = jnp.asarray((bp @ we + be).astype(np.float32).reshape(1, -1))

    # downsample = Conv2d(C, C/2, 3, s2, p1) + ReLU
    s_down, hd, wd = _selection_matrices(hl, wl, 3, 2, 1)
    pk["s0"] = jnp.asarray(s_down)
    pk["w0"] = jnp.asarray(_taps_weight(params["down_w"]))
    pk["b0"] = jnp.asarray(np.asarray(params["down_b"], np.float32).reshape(1, -1))

    # head[0] = Conv2d(C/2, C/4, 3, s2, p1) + ReLU
    s_h0, ha, wa = _selection_matrices(hd, wd, 3, 2, 1)
    pk["s1"] = jnp.asarray(s_h0)
    pk["w1"] = jnp.asarray(_taps_weight(params["h0_w"]))
    pk["b1"] = jnp.asarray(np.asarray(params["h0_b"], np.float32).reshape(1, -1))

    # head[2] = Conv2d(C/4, C/8, 3, s2, p1) + ReLU
    s_h2, hb, wb = _selection_matrices(ha, wa, 3, 2, 1)
    pk["s2"] = jnp.asarray(s_h2)
    pk["w2"] = jnp.asarray(_taps_weight(params["h2_w"]))
    pk["b2"] = jnp.asarray(np.asarray(params["h2_b"], np.float32).reshape(1, -1))

    # replication pad + head[4] = Conv2d(C/8, 1, 6) folded into one weight
    pk["w4"] = jnp.asarray(_fold_pad_and_final_conv(params["h4_w"], hb, wb))
    pk["b4"] = jnp.asarray(np.asarray(params["h4_b"], np.float32).reshape(1, 1))
    return pk


# ----------------------------------------------------------------------------
# The single fused Pallas kernel (one grid step == one batch element)
# ----------------------------------------------------------------------------
def _conv_taps(x, s_ref, w_ref, b_ref, *, relu, add=None):
    """3x3 conv as sum over taps of (S[t] @ x) @ W[t]; everything on the MXU."""
    mout = s_ref.shape[1]
    cout = w_ref.shape[2]
    acc = jnp.zeros((mout, cout), jnp.float32)
    for t in range(s_ref.shape[0]):          # unrolled: 9 taps
        p = jnp.dot(s_ref[t], x, preferred_element_type=jnp.float32)
        acc = acc + jnp.dot(p, w_ref[t], preferred_element_type=jnp.float32)
    acc = acc + b_ref[...]
    if relu:
        acc = jnp.maximum(acc, 0.0)
    if add is not None:
        acc = acc + add
    return acc


def _fov_fused_kernel(patches_ref, x0_ref, wenc_ref, benc_ref,
                      w0_ref, b0_ref, s0_ref,
                      w1_ref, b1_ref, s1_ref,
                      w2_ref, b2_ref, s2_ref,
                      w4_ref, b4_ref, out_ref):
    # Encoder branch: composed (patch-embed o Linear) GEMM. [Ntok, 12]@[12, C/2]
    enc = jnp.dot(patches_ref[0], wenc_ref[...],
                  preferred_element_type=jnp.float32) + benc_ref[...]

    # downsample(lowres) = ReLU(conv 3x3 s2 p1), fused residual add of enc.
    h = _conv_taps(x0_ref[0], s0_ref, w0_ref, b0_ref, relu=True, add=enc)
    # head[0..1], head[2..3]
    h = _conv_taps(h, s1_ref, w1_ref, b1_ref, relu=True)
    h = _conv_taps(h, s2_ref, w2_ref, b2_ref, relu=True)

    # replication pad + head[4] (6x6 conv -> 1x1) folded into a weighted sum.
    g = h * w4_ref[...]
    r = jnp.sum(g, axis=0, keepdims=True)
    r = jnp.sum(r, axis=1, keepdims=True)
    out_ref[0] = r + b4_ref[...]


def _batched_spec(a):
    tail = (0,) * (a.ndim - 1)

    def idx(i):
        return (i,) + tail

    return pl.BlockSpec((1,) + tuple(a.shape[1:]), idx)


def _const_spec(a):
    zeros = (0,) * a.ndim

    def idx(i):
        return zeros

    return pl.BlockSpec(tuple(a.shape), idx)


# ----------------------------------------------------------------------------
# FOVNetwork forward (wrapper: layout glue + one pallas_call)
# ----------------------------------------------------------------------------
def fov_forward(packed, x_nchw, lowres_nchw, *, patch):
    b, _, hx, wx = x_nchw.shape
    _, c, hl, wl = lowres_nchw.shape
    assert hx % 4 == 0 and wx % 4 == 0, "closed-form 0.25x bilinear needs H,W % 4 == 0"

    # NCHW -> NHWC: channels sit on the lane axis inside the kernel.
    x = jnp.transpose(x_nchw, (0, 2, 3, 1))
    lowres = jnp.transpose(lowres_nchw, (0, 2, 3, 1))

    # F.interpolate(scale_factor=0.25, bilinear, align_corners=False): source
    # coordinate 4i+1.5 == mean of the central 2x2 of each 4x4 block (exact).
    xq = 0.25 * (x[:, 1::4, 1::4, :] + x[:, 1::4, 2::4, :]
                 + x[:, 2::4, 1::4, :] + x[:, 2::4, 2::4, :])

    # Synthetic fov_encoder input: patchify (layout glue only; GEMM is in-kernel
    # with the composed weight; CLS token dropped since [:, 1:] discards it).
    bq, hq, wq, cq = xq.shape
    gh, gw = hq // patch, wq // patch
    patches = xq.reshape(b, gh, patch, gw, patch, cq)
    patches = jnp.transpose(patches, (0, 1, 3, 2, 4, 5))
    patches = patches.reshape(b, gh * gw, patch * patch * cq)

    # token grid must match downsampled lowres spatial (reshape_as in PyTorch)
    hd = (hl + 2 - 3) // 2 + 1
    wd = (wl + 2 - 3) // 2 + 1
    assert gh * gw == hd * wd, "encoder token count must match downsampled lowres"

    # lowres flattened row-major to [B, H*W, C] (no im2col blow-up in HBM).
    x0 = lowres.reshape(b, hl * wl, c)

    batch_inputs = [patches, x0]
    const_inputs = [packed["wenc"], packed["benc"],
                    packed["w0"], packed["b0"], packed["s0"],
                    packed["w1"], packed["b1"], packed["s1"],
                    packed["w2"], packed["b2"], packed["s2"],
                    packed["w4"], packed["b4"]]
    in_specs = ([_batched_spec(a) for a in batch_inputs]
                + [_const_spec(a) for a in const_inputs])

    out = pl.pallas_call(
        _fov_fused_kernel,
        out_shape=jax.ShapeDtypeStruct((b, 1, 1), jnp.float32),
        grid=(b,),
        in_specs=in_specs,
        out_specs=pl.BlockSpec((1, 1, 1), lambda i: (i, 0, 0)),
        compiler_params=pltpu.CompilerParams(dimension_semantics=("parallel",)),
    )(*batch_inputs, *const_inputs)

    return out.reshape(b, 1, 1, 1)


# ----------------------------------------------------------------------------
# Parameter initialization (deterministic, PyTorch-like fan-in uniform)
# ----------------------------------------------------------------------------
def init_params(key, num_features, embed_dim, patch):
    c = num_features
    keys = jax.random.split(key, 6)

    def conv_init(k, cout, cin, kh, kw):
        kw_, kb = jax.random.split(k)
        scale = 1.0 / (cin * kh * kw) ** 0.5
        w = jax.random.uniform(kw_, (cout, cin, kh, kw), jnp.float32, -scale, scale)
        bb = jax.random.uniform(kb, (cout,), jnp.float32, -scale, scale)
        return w, bb

    def linear_init(k, fin, fout):
        kw_, kb = jax.random.split(k)
        scale = 1.0 / fin ** 0.5
        w = jax.random.uniform(kw_, (fin, fout), jnp.float32, -scale, scale)
        bb = jax.random.uniform(kb, (fout,), jnp.float32, -scale, scale)
        return w, bb

    p = {}
    # synthetic fov_encoder (linear patch embedding) + encoder tail Linear
    p["patch_w"], p["patch_b"] = linear_init(keys[0], patch * patch * 3, embed_dim)
    p["enc_lin_w"], p["enc_lin_b"] = linear_init(keys[1], embed_dim, c // 2)
    # downsample = Conv2d(C, C//2, 3, s2, p1) + ReLU
    p["down_w"], p["down_b"] = conv_init(keys[2], c // 2, c, 3, 3)
    # head = [Conv(C/2,C/4,3,s2,p1), ReLU, Conv(C/4,C/8,3,s2,p1), ReLU, Conv(C/8,1,6)]
    p["h0_w"], p["h0_b"] = conv_init(keys[3], c // 4, c // 2, 3, 3)
    p["h2_w"], p["h2_b"] = conv_init(keys[4], c // 8, c // 4, 3, 3)
    p["h4_w"], p["h4_b"] = conv_init(keys[5], 1, c // 8, 6, 6)
    return p


# ----------------------------------------------------------------------------
# Pure-JAX reference (uncomposed, conv via lax.conv) for a sanity check
# ----------------------------------------------------------------------------
def _reference_forward(params, x_nchw, lowres_nchw, *, patch):
    def conv_nhwc(xx, w_oihw, bb, stride, pad):
        out = jax.lax.conv_general_dilated(
            xx, jnp.transpose(w_oihw, (2, 3, 1, 0)),
            window_strides=(stride, stride),
            padding=[(pad, pad), (pad, pad)],
            dimension_numbers=("NHWC", "HWIO", "NHWC"))
        return out + bb

    x = jnp.transpose(x_nchw, (0, 2, 3, 1))
    lo = jnp.transpose(lowres_nchw, (0, 2, 3, 1))
    xq = 0.25 * (x[:, 1::4, 1::4, :] + x[:, 1::4, 2::4, :]
                 + x[:, 2::4, 1::4, :] + x[:, 2::4, 2::4, :])
    b, hq, wq, cq = xq.shape
    gh, gw = hq // patch, wq // patch
    pt = xq.reshape(b, gh, patch, gw, patch, cq)
    pt = jnp.transpose(pt, (0, 1, 3, 2, 4, 5)).reshape(b, gh * gw, patch * patch * cq)
    tok = pt @ params["patch_w"] + params["patch_b"]
    proj = tok @ params["enc_lin_w"] + params["enc_lin_b"]
    lo_ds = jax.nn.relu(conv_nhwc(lo, params["down_w"], params["down_b"], 2, 1))
    _, hd, wd, c2 = lo_ds.shape
    h = lo_ds + proj.reshape(b, hd, wd, c2)
    h = jax.nn.relu(conv_nhwc(h, params["h0_w"], params["h0_b"], 2, 1))
    h = jax.nn.relu(conv_nhwc(h, params["h2_w"], params["h2_b"], 2, 1))
    if h.shape[1] < 6:
        pad = (6 - h.shape[1]) // 2
        h = jnp.pad(h, ((0, 0), (pad, pad), (pad, pad), (0, 0)), mode="edge")
    h = conv_nhwc(h, params["h4_w"], params["h4_b"], 1, 0)
    return jnp.transpose(h, (0, 3, 1, 2))


# ----------------------------------------------------------------------------
if __name__ == "__main__":
    key = jax.random.PRNGKey(0)
    kx, kl, kp = jax.random.split(key, 3)

    B, C = 2, 32              # num_features = 32
    H = W = 64                # input image (NCHW)
    Hl = Wl = 16              # lowres feature (NCHW)
    embed_dim, patch = 24, 2  # synthetic fov_encoder config
    # token grid after 0.25x interp + patchify: (64/4/2)^2 = 64 == (16/2)^2

    x = jax.random.normal(kx, (B, 3, H, W), jnp.float32)
    lowres_feature = jax.random.normal(kl, (B, C, Hl, Wl), jnp.float32)

    params = init_params(kp, C, embed_dim, patch)
    packed = prepare_packed(params, num_features=C, lowres_hw=(Hl, Wl))

    fwd = jax.jit(functools.partial(fov_forward, patch=patch))
    out = fwd(packed, x, lowres_feature)
    out = jax.block_until_ready(out)

    assert out.shape == (B, 1, 1, 1), out.shape
    assert jnp.all(jnp.isfinite(out))

    # Loose sanity check against an uncomposed pure-JAX reference (tolerance
    # accounts for MXU default matmul precision differences).
    ref = _reference_forward(params, x, lowres_feature, patch=patch)
    np.testing.assert_allclose(np.asarray(out), np.asarray(ref), rtol=5e-2, atol=5e-2)

    print("KERNEL_OK")
</pallas_src>

<mosaic_0001>
module attributes {stable_mosaic.version = 11 : i64} {
  func.func @_fov_fused_kernel(%arg0: i32, %arg1: memref<1x64x12xf32, #tpu.memory_space<vmem>>, %arg2: memref<1x256x32xf32, #tpu.memory_space<vmem>>, %arg3: memref<12x16xf32, #tpu.memory_space<vmem>>, %arg4: memref<1x16xf32, #tpu.memory_space<vmem>>, %arg5: memref<9x32x16xf32, #tpu.memory_space<vmem>>, %arg6: memref<1x16xf32, #tpu.memory_space<vmem>>, %arg7: memref<9x64x256xf32, #tpu.memory_space<vmem>>, %arg8: memref<9x16x8xf32, #tpu.memory_space<vmem>>, %arg9: memref<1x8xf32, #tpu.memory_space<vmem>>, %arg10: memref<9x16x64xf32, #tpu.memory_space<vmem>>, %arg11: memref<9x8x4xf32, #tpu.memory_space<vmem>>, %arg12: memref<1x4xf32, #tpu.memory_space<vmem>>, %arg13: memref<9x4x16xf32, #tpu.memory_space<vmem>>, %arg14: memref<4x4xf32, #tpu.memory_space<vmem>>, %arg15: memref<1x1xf32, #tpu.memory_space<vmem>>, %arg16: memref<1x1x1xf32, #tpu.memory_space<vmem>>) attributes {dimension_semantics = [#tpu.dimension_semantics<parallel>], iteration_bounds = array<i64: 2>, scalar_prefetch = 0 : i64, scratch_operands = 0 : i64, tpu.core_type = #tpu.core_type<tc>, window_params = [{transform_indices = @transform_0, window_bounds = array<i64: 1, 64, 12>}, {transform_indices = @transform_1, window_bounds = array<i64: 1, 256, 32>}, {pipeline_mode = #tpu.pipeline_mode<synchronous>, transform_indices = @transform_2, window_bounds = array<i64: 12, 16>}, {pipeline_mode = #tpu.pipeline_mode<synchronous>, transform_indices = @transform_3, window_bounds = array<i64: 1, 16>}, {pipeline_mode = #tpu.pipeline_mode<synchronous>, transform_indices = @transform_4, window_bounds = array<i64: 9, 32, 16>}, {pipeline_mode = #tpu.pipeline_mode<synchronous>, transform_indices = @transform_5, window_bounds = array<i64: 1, 16>}, {pipeline_mode = #tpu.pipeline_mode<synchronous>, transform_indices = @transform_6, window_bounds = array<i64: 9, 64, 256>}, {pipeline_mode = #tpu.pipeline_mode<synchronous>, transform_indices = @transform_7, window_bounds = array<i64: 9, 16, 8>}, {pipeline_mode = #tpu.pipeline_mode<synchronous>, transform_indices = @transform_8, window_bounds = array<i64: 1, 8>}, {pipeline_mode = #tpu.pipeline_mode<synchronous>, transform_indices = @transform_9, window_bounds = array<i64: 9, 16, 64>}, {pipeline_mode = #tpu.pipeline_mode<synchronous>, transform_indices = @transform_10, window_bounds = array<i64: 9, 8, 4>}, {pipeline_mode = #tpu.pipeline_mode<synchronous>, transform_indices = @transform_11, window_bounds = array<i64: 1, 4>}, {pipeline_mode = #tpu.pipeline_mode<synchronous>, transform_indices = @transform_12, window_bounds = array<i64: 9, 4, 16>}, {pipeline_mode = #tpu.pipeline_mode<synchronous>, transform_indices = @transform_13, window_bounds = array<i64: 4, 4>}, {pipeline_mode = #tpu.pipeline_mode<synchronous>, transform_indices = @transform_14, window_bounds = array<i64: 1, 1>}, {transform_indices = @transform_15, window_bounds = array<i64: 1, 1, 1>}]} {
    %c0 = arith.constant 0 : index
    %c0_0 = arith.constant 0 : index
    %c0_1 = arith.constant 0 : index
    %0 = vector.load %arg1[%c0, %c0_0, %c0_1] : memref<1x64x12xf32, #tpu.memory_space<vmem>>, vector<1x64x12xf32>
    %1 = vector.shape_cast %0 : vector<1x64x12xf32> to vector<64x12xf32>
    %c0_2 = arith.constant 0 : index
    %c0_3 = arith.constant 0 : index
    %2 = vector.load %arg3[%c0_2, %c0_3] : memref<12x16xf32, #tpu.memory_space<vmem>>, vector<12x16xf32>
    %cst = arith.constant dense<0.000000e+00> : vector<64x16xf32>
    %3 = tpu.matmul %1, %2, %cst {dimension_numbers = #tpu.dot_dimension_numbers<[1], [0], [0], [1], [0, 0, 1, 1], [], []>} : vector<64x12xf32>, vector<12x16xf32>, vector<64x16xf32> -> vector<64x16xf32>
    %c0_4 = arith.constant 0 : index
    %c0_5 = arith.constant 0 : index
    %4 = vector.load %arg4[%c0_4, %c0_5] : memref<1x16xf32, #tpu.memory_space<vmem>>, vector<1x16xf32>
    %5 = vector.broadcast %4 : vector<1x16xf32> to vector<64x16xf32>
    %6 = arith.addf %3, %5 : vector<64x16xf32>
    %c0_6 = arith.constant 0 : index
    %c0_7 = arith.constant 0 : index
    %c0_8 = arith.constant 0 : index
    %7 = vector.load %arg2[%c0_6, %c0_7, %c0_8] : memref<1x256x32xf32, #tpu.memory_space<vmem>>, vector<1x256x32xf32>
    %8 = vector.shape_cast %7 : vector<1x256x32xf32> to vector<256x32xf32>
    %cst_9 = arith.constant 0.000000e+00 : f32
    %9 = vector.broadcast %cst_9 : f32 to vector<64x16xf32>
    %c0_10 = arith.constant 0 : index
    %c0_11 = arith.constant 0 : index
    %c0_12 = arith.constant 0 : index
    %10 = vector.load %arg7[%c0_10, %c0_11, %c0_12] : memref<9x64x256xf32, #tpu.memory_space<vmem>>, vector<1x64x256xf32>
    %11 = vector.shape_cast %10 : vector<1x64x256xf32> to vector<64x256xf32>
    %cst_13 = arith.constant dense<0.000000e+00> : vector<64x32xf32>
    %12 = tpu.matmul %11, %8, %cst_13 {dimension_numbers = #tpu.dot_dimension_numbers<[1], [0], [0], [1], [0, 0, 1, 1], [], []>} : vector<64x256xf32>, vector<256x32xf32>, vector<64x32xf32> -> vector<64x32xf32>
    %c0_14 = arith.constant 0 : index
    %c0_15 = arith.constant 0 : index
    %c0_16 = arith.constant 0 : index
    %13 = vector.load %arg5[%c0_14, %c0_15, %c0_16] : memref<9x32x16xf32, #tpu.memory_space<vmem>>, vector<1x32x16xf32>
    %14 = vector.shape_cast %13 : vector<1x32x16xf32> to vector<32x16xf32>
    %cst_17 = arith.constant dense<0.000000e+00> : vector<64x16xf32>
    %15 = tpu.matmul %12, %14, %cst_17 {dimension_numbers = #tpu.dot_dimension_numbers<[1], [0], [0], [1], [0, 0, 1, 1], [], []>} : vector<64x32xf32>, vector<32x16xf32>, vector<64x16xf32> -> vector<64x16xf32>
    %16 = arith.addf %9, %15 : vector<64x16xf32>
    %c1 = arith.constant 1 : index
    %c0_18 = arith.constant 0 : index
    %c0_19 = arith.constant 0 : index
    %17 = vector.load %arg7[%c1, %c0_18, %c0_19] : memref<9x64x256xf32, #tpu.memory_space<vmem>>, vector<1x64x256xf32>
    %18 = vector.shape_cast %17 : vector<1x64x256xf32> to vector<64x256xf32>
    %cst_20 = arith.constant dense<0.000000e+00> : vector<64x32xf32>
    %19 = tpu.matmul %18, %8, %cst_20 {dimension_numbers = #tpu.dot_dimension_numbers<[1], [0], [0], [1], [0, 0, 1, 1], [], []>} : vector<64x256xf32>, vector<256x32xf32>, vector<64x32xf32> -> vector<64x32xf32>
    %c1_21 = arith.constant 1 : index
    %c0_22 = arith.constant 0 : index
    %c0_23 = arith.constant 0 : index
    %20 = vector.load %arg5[%c1_21, %c0_22, %c0_23] : memref<9x32x16xf32, #tpu.memory_space<vmem>>, vector<1x32x16xf32>
    %21 = vector.shape_cast %20 : vector<1x32x16xf32> to vector<32x16xf32>
    %cst_24 = arith.constant dense<0.000000e+00> : vector<64x16xf32>
    %22 = tpu.matmul %19, %21, %cst_24 {dimension_numbers = #tpu.dot_dimension_numbers<[1], [0], [0], [1], [0, 0, 1, 1], [], []>} : vector<64x32xf32>, vector<32x16xf32>, vector<64x16xf32> -> vector<64x16xf32>
    %23 = arith.addf %16, %22 : vector<64x16xf32>
    %c2 = arith.constant 2 : index
    %c0_25 = arith.constant 0 : index
    %c0_26 = arith.constant 0 : index
    %24 = vector.load %arg7[%c2, %c0_25, %c0_26] : memref<9x64x256xf32, #tpu.memory_space<vmem>>, vector<1x64x256xf32>
    %25 = vector.shape_cast %24 : vector<1x64x256xf32> to vector<64x256xf32>
    %cst_27 = arith.constant dense<0.000000e+00> : vector<64x32xf32>
    %26 = tpu.matmul %25, %8, %cst_27 {dimension_numbers = #tpu.dot_dimension_numbers<[1], [0], [0], [1], [0, 0, 1, 1], [], []>} : vector<64x256xf32>, vector<256x32xf32>, vector<64x32xf32> -> vector<64x32xf32>
    %c2_28 = arith.constant 2 : index
    %c0_29 = arith.constant 0 : index
    %c0_30 = arith.constant 0 : index
    %27 = vector.load %arg5[%c2_28, %c0_29, %c0_30] : memref<9x32x16xf32, #tpu.memory_space<vmem>>, vector<1x32x16xf32>
    %28 = vector.shape_cast %27 : vector<1x32x16xf32> to vector<32x16xf32>
    %cst_31 = arith.constant dense<0.000000e+00> : vector<64x16xf32>
    %29 = tpu.matmul %26, %28, %cst_31 {dimension_numbers = #tpu.dot_dimension_numbers<[1], [0], [0], [1], [0, 0, 1, 1], [], []>} : vector<64x32xf32>, vector<32x16xf32>, vector<64x16xf32> -> vector<64x16xf32>
    %30 = arith.addf %23, %29 : vector<64x16xf32>
    %c3 = arith.constant 3 : index
    %c0_32 = arith.constant 0 : index
    %c0_33 = arith.constant 0 : index
    %31 = vector.load %arg7[%c3, %c0_32, %c0_33] : memref<9x64x256xf32, #tpu.memory_space<vmem>>, vector<1x64x256xf32>
    %32 = vector.shape_cast %31 : vector<1x64x256xf32> to vector<64x256xf32>
    %cst_34 = arith.constant dense<0.000000e+00> : vector<64x32xf32>
    %33 = tpu.matmul %32, %8, %cst_34 {dimension_numbers = #tpu.dot_dimension_numbers<[1], [0], [0], [1], [0, 0, 1, 1], [], []>} : vector<64x256xf32>, vector<256x32xf32>, vector<64x32xf32> -> vector<64x32xf32>
    %c3_35 = arith.constant 3 : index
    %c0_36 = arith.constant 0 : index
    %c0_37 = arith.constant 0 : index
    %34 = vector.load %arg5[%c3_35, %c0_36, %c0_37] : memref<9x32x16xf32, #tpu.memory_space<vmem>>, vector<1x32x16xf32>
    %35 = vector.shape_cast %34 : vector<1x32x16xf32> to vector<32x16xf32>
    %cst_38 = arith.constant dense<0.000000e+00> : vector<64x16xf32>
    %36 = tpu.matmul %33, %35, %cst_38 {dimension_numbers = #tpu.dot_dimension_numbers<[1], [0], [0], [1], [0, 0, 1, 1], [], []>} : vector<64x32xf32>, vector<32x16xf32>, vector<64x16xf32> -> vector<64x16xf32>
    %37 = arith.addf %30, %36 : vector<64x16xf32>
    %c4 = arith.constant 4 : index
    %c0_39 = arith.constant 0 : index
    %c0_40 = arith.constant 0 : index
    %38 = vector.load %arg7[%c4, %c0_39, %c0_40] : memref<9x64x256xf32, #tpu.memory_space<vmem>>, vector<1x64x256xf32>
    %39 = vector.shape_cast %38 : vector<1x64x256xf32> to vector<64x256xf32>
    %cst_41 = arith.constant dense<0.000000e+00> : vector<64x32xf32>
    %40 = tpu.matmul %39, %8, %cst_41 {dimension_numbers = #tpu.dot_dimension_numbers<[1], [0], [0], [1], [0, 0, 1, 1], [], []>} : vector<64x256xf32>, vector<256x32xf32>, vector<64x32xf32> -> vector<64x32xf32>
    %c4_42 = arith.constant 4 : index
    %c0_43 = arith.constant 0 : index
    %c0_44 = arith.constant 0 : index
    %41 = vector.load %arg5[%c4_42, %c0_43, %c0_44] : memref<9x32x16xf32, #tpu.memory_space<vmem>>, vector<1x32x16xf32>
    %42 = vector.shape_cast %41 : vector<1x32x16xf32> to vector<32x16xf32>
    %cst_45 = arith.constant dense<0.000000e+00> : vector<64x16xf32>
    %43 = tpu.matmul %40, %42, %cst_45 {dimension_numbers = #tpu.dot_dimension_numbers<[1], [0], [0], [1], [0, 0, 1, 1], [], []>} : vector<64x32xf32>, vector<32x16xf32>, vector<64x16xf32> -> vector<64x16xf32>
    %44 = arith.addf %37, %43 : vector<64x16xf32>
    %c5 = arith.constant 5 : index
    %c0_46 = arith.constant 0 : index
    %c0_47 = arith.constant 0 : index
    %45 = vector.load %arg7[%c5, %c0_46, %c0_47] : memref<9x64x256xf32, #tpu.memory_space<vmem>>, vector<1x64x256xf32>
    %46 = vector.shape_cast %45 : vector<1x64x256xf32> to vector<64x256xf32>
    %cst_48 = arith.constant dense<0.000000e+00> : vector<64x32xf32>
    %47 = tpu.matmul %46, %8, %cst_48 {dimension_numbers = #tpu.dot_dimension_numbers<[1], [0], [0], [1], [0, 0, 1, 1], [], []>} : vector<64x256xf32>, vector<256x32xf32>, vector<64x32xf32> -> vector<64x32xf32>
    %c5_49 = arith.constant 5 : index
    %c0_50 = arith.constant 0 : index
    %c0_51 = arith.constant 0 : index
    %48 = vector.load %arg5[%c5_49, %c0_50, %c0_51] : memref<9x32x16xf32, #tpu.memory_space<vmem>>, vector<1x32x16xf32>
    %49 = vector.shape_cast %48 : vector<1x32x16xf32> to vector<32x16xf32>
    %cst_52 = arith.constant dense<0.000000e+00> : vector<64x16xf32>
    %50 = tpu.matmul %47, %49, %cst_52 {dimension_numbers = #tpu.dot_dimension_numbers<[1], [0], [0], [1], [0, 0, 1, 1], [], []>} : vector<64x32xf32>, vector<32x16xf32>, vector<64x16xf32> -> vector<64x16xf32>
    %51 = arith.addf %44, %50 : vector<64x16xf32>
    %c6 = arith.constant 6 : index
    %c0_53 = arith.constant 0 : index
    %c0_54 = arith.constant 0 : index
    %52 = vector.load %arg7[%c6, %c0_53, %c0_54] : memref<9x64x256xf32, #tpu.memory_space<vmem>>, vector<1x64x256xf32>
    %53 = vector.shape_cast %52 : vector<1x64x256xf32> to vector<64x256xf32>
    %cst_55 = arith.constant dense<0.000000e+00> : vector<64x32xf32>
    %54 = tpu.matmul %53, %8, %cst_55 {dimension_numbers = #tpu.dot_dimension_numbers<[1], [0], [0], [1], [0, 0, 1, 1], [], []>} : vector<64x256xf32>, vector<256x32xf32>, vector<64x32xf32> -> vector<64x32xf32>
    %c6_56 = arith.constant 6 : index
    %c0_57 = arith.constant 0 : index
    %c0_58 = arith.constant 0 : index
    %55 = vector.load %arg5[%c6_56, %c0_57, %c0_58] : memref<9x32x16xf32, #tpu.memory_space<vmem>>, vector<1x32x16xf32>
    %56 = vector.shape_cast %55 : vector<1x32x16xf32> to vector<32x16xf32>
    %cst_59 = arith.constant dense<0.000000e+00> : vector<64x16xf32>
    %57 = tpu.matmul %54, %56, %cst_59 {dimension_numbers = #tpu.dot_dimension_numbers<[1], [0], [0], [1], [0, 0, 1, 1], [], []>} : vector<64x32xf32>, vector<32x16xf32>, vector<64x16xf32> -> vector<64x16xf32>
    %58 = arith.addf %51, %57 : vector<64x16xf32>
    %c7 = arith.constant 7 : index
    %c0_60 = arith.constant 0 : index
    %c0_61 = arith.constant 0 : index
    %59 = vector.load %arg7[%c7, %c0_60, %c0_61] : memref<9x64x256xf32, #tpu.memory_space<vmem>>, vector<1x64x256xf32>
    %60 = vector.shape_cast %59 : vector<1x64x256xf32> to vector<64x256xf32>
    %cst_62 = arith.constant dense<0.000000e+00> : vector<64x32xf32>
    %61 = tpu.matmul %60, %8, %cst_62 {dimension_numbers = #tpu.dot_dimension_numbers<[1], [0], [0], [1], [0, 0, 1, 1], [], []>} : vector<64x256xf32>, vector<256x32xf32>, vector<64x32xf32> -> vector<64x32xf32>
    %c7_63 = arith.constant 7 : index
    %c0_64 = arith.constant 0 : index
    %c0_65 = arith.constant 0 : index
    %62 = vector.load %arg5[%c7_63, %c0_64, %c0_65] : memref<9x32x16xf32, #tpu.memory_space<vmem>>, vector<1x32x16xf32>
    %63 = vector.shape_cast %62 : vector<1x32x16xf32> to vector<32x16xf32>
    %cst_66 = arith.constant dense<0.000000e+00> : vector<64x16xf32>
    %64 = tpu.matmul %61, %63, %cst_66 {dimension_numbers = #tpu.dot_dimension_numbers<[1], [0], [0], [1], [0, 0, 1, 1], [], []>} : vector<64x32xf32>, vector<32x16xf32>, vector<64x16xf32> -> vector<64x16xf32>
    %65 = arith.addf %58, %64 : vector<64x16xf32>
    %c8 = arith.constant 8 : index
    %c0_67 = arith.constant 0 : index
    %c0_68 = arith.constant 0 : index
    %66 = vector.load %arg7[%c8, %c0_67, %c0_68] : memref<9x64x256xf32, #tpu.memory_space<vmem>>, vector<1x64x256xf32>
    %67 = vector.shape_cast %66 : vector<1x64x256xf32> to vector<64x256xf32>
    %cst_69 = arith.constant dense<0.000000e+00> : vector<64x32xf32>
    %68 = tpu.matmul %67, %8, %cst_69 {dimension_numbers = #tpu.dot_dimension_numbers<[1], [0], [0], [1], [0, 0, 1, 1], [], []>} : vector<64x256xf32>, vector<256x32xf32>, vector<64x32xf32> -> vector<64x32xf32>
    %c8_70 = arith.constant 8 : index
    %c0_71 = arith.constant 0 : index
    %c0_72 = arith.constant 0 : index
    %69 = vector.load %arg5[%c8_70, %c0_71, %c0_72] : memref<9x32x16xf32, #tpu.memory_space<vmem>>, vector<1x32x16xf32>
    %70 = vector.shape_cast %69 : vector<1x32x16xf32> to vector<32x16xf32>
    %cst_73 = arith.constant dense<0.000000e+00> : vector<64x16xf32>
    %71 = tpu.matmul %68, %70, %cst_73 {dimension_numbers = #tpu.dot_dimension_numbers<[1], [0], [0], [1], [0, 0, 1, 1], [], []>} : vector<64x32xf32>, vector<32x16xf32>, vector<64x16xf32> -> vector<64x16xf32>
    %72 = arith.addf %65, %71 : vector<64x16xf32>
    %c0_74 = arith.constant 0 : index
    %c0_75 = arith.constant 0 : index
    %73 = vector.load %arg6[%c0_74, %c0_75] : memref<1x16xf32, #tpu.memory_space<vmem>>, vector<1x16xf32>
    %74 = vector.broadcast %73 : vector<1x16xf32> to vector<64x16xf32>
    %75 = arith.addf %72, %74 : vector<64x16xf32>
    %cst_76 = arith.constant 0.000000e+00 : f32
    %76 = vector.broadcast %cst_76 : f32 to vector<64x16xf32>
    %77 = arith.maximumf %75, %76 : vector<64x16xf32>
    %78 = arith.addf %77, %6 : vector<64x16xf32>
    %cst_77 = arith.constant 0.000000e+00 : f32
    %79 = vector.broadcast %cst_77 : f32 to vector<16x8xf32>
    %c0_78 = arith.constant 0 : index
    %c0_79 = arith.constant 0 : index
    %c0_80 = arith.constant 0 : index
    %80 = vector.load %arg10[%c0_78, %c0_79, %c0_80] : memref<9x16x64xf32, #tpu.memory_space<vmem>>, vector<1x16x64xf32>
    %81 = vector.shape_cast %80 : vector<1x16x64xf32> to vector<16x64xf32>
    %cst_81 = arith.constant dense<0.000000e+00> : vector<16x16xf32>
    %82 = tpu.matmul %81, %78, %cst_81 {dimension_numbers = #tpu.dot_dimension_numbers<[1], [0], [0], [1], [0, 0, 1, 1], [], []>} : vector<16x64xf32>, vector<64x16xf32>, vector<16x16xf32> -> vector<16x16xf32>
    %c0_82 = arith.constant 0 : index
    %c0_83 = arith.constant 0 : index
    %c0_84 = arith.constant 0 : index
    %83 = vector.load %arg8[%c0_82, %c0_83, %c0_84] : memref<9x16x8xf32, #tpu.memory_space<vmem>>, vector<1x16x8xf32>
    %84 = vector.shape_cast %83 : vector<1x16x8xf32> to vector<16x8xf32>
    %cst_85 = arith.constant dense<0.000000e+00> : vector<16x8xf32>
    %85 = tpu.matmul %82, %84, %cst_85 {dimension_numbers = #tpu.dot_dimension_numbers<[1], [0], [0], [1], [0, 0, 1, 1], [], []>} : vector<16x16xf32>, vector<16x8xf32>, vector<16x8xf32> -> vector<16x8xf32>
    %86 = arith.addf %79, %85 : vector<16x8xf32>
    %c1_86 = arith.constant 1 : index
    %c0_87 = arith.constant 0 : index
    %c0_88 = arith.constant 0 : index
    %87 = vector.load %arg10[%c1_86, %c0_87, %c0_88] : memref<9x16x64xf32, #tpu.memory_space<vmem>>, vector<1x16x64xf32>
    %88 = vector.shape_cast %87 : vector<1x16x64xf32> to vector<16x64xf32>
    %cst_89 = arith.constant dense<0.000000e+00> : vector<16x16xf32>
    %89 = tpu.matmul %88, %78, %cst_89 {dimension_numbers = #tpu.dot_dimension_numbers<[1], [0], [0], [1], [0, 0, 1, 1], [], []>} : vector<16x64xf32>, vector<64x16xf32>, vector<16x16xf32> -> vector<16x16xf32>
    %c1_90 = arith.constant 1 : index
    %c0_91 = arith.constant 0 : index
    %c0_92 = arith.constant 0 : index
    %90 = vector.load %arg8[%c1_90, %c0_91, %c0_92] : memref<9x16x8xf32, #tpu.memory_space<vmem>>, vector<1x16x8xf32>
    %91 = vector.shape_cast %90 : vector<1x16x8xf32> to vector<16x8xf32>
    %cst_93 = arith.constant dense<0.000000e+00> : vector<16x8xf32>
    %92 = tpu.matmul %89, %91, %cst_93 {dimension_numbers = #tpu.dot_dimension_numbers<[1], [0], [0], [1], [0, 0, 1, 1], [], []>} : vector<16x16xf32>, vector<16x8xf32>, vector<16x8xf32> -> vector<16x8xf32>
    %93 = arith.addf %86, %92 : vector<16x8xf32>
    %c2_94 = arith.constant 2 : index
    %c0_95 = arith.constant 0 : index
    %c0_96 = arith.constant 0 : index
    %94 = vector.load %arg10[%c2_94, %c0_95, %c0_96] : memref<9x16x64xf32, #tpu.memory_space<vmem>>, vector<1x16x64xf32>
    %95 = vector.shape_cast %94 : vector<1x16x64xf32> to vector<16x64xf32>
    %cst_97 = arith.constant dense<0.000000e+00> : vector<16x16xf32>
    %96 = tpu.matmul %95, %78, %cst_97 {dimension_numbers = #tpu.dot_dimension_numbers<[1], [0], [0], [1], [0, 0, 1, 1], [], []>} : vector<16x64xf32>, vector<64x16xf32>, vector<16x16xf32> -> vector<16x16xf32>
    %c2_98 = arith.constant 2 : index
    %c0_99 = arith.constant 0 : index
    %c0_100 = arith.constant 0 : index
    %97 = vector.load %arg8[%c2_98, %c0_99, %c0_100] : memref<9x16x8xf32, #tpu.memory_space<vmem>>, vector<1x16x8xf32>
    %98 = vector.shape_cast %97 : vector<1x16x8xf32> to vector<16x8xf32>
    %cst_101 = arith.constant dense<0.000000e+00> : vector<16x8xf32>
    %99 = tpu.matmul %96, %98, %cst_101 {dimension_numbers = #tpu.dot_dimension_numbers<[1], [0], [0], [1], [0, 0, 1, 1], [], []>} : vector<16x16xf32>, vector<16x8xf32>, vector<16x8xf32> -> vector<16x8xf32>
    %100 = arith.addf %93, %99 : vector<16x8xf32>
    %c3_102 = arith.constant 3 : index
    %c0_103 = arith.constant 0 : index
    %c0_104 = arith.constant 0 : index
    %101 = vector.load %arg10[%c3_102, %c0_103, %c0_104] : memref<9x16x64xf32, #tpu.memory_space<vmem>>, vector<1x16x64xf32>
    %102 = vector.shape_cast %101 : vector<1x16x64xf32> to vector<16x64xf32>
    %cst_105 = arith.constant dense<0.000000e+00> : vector<16x16xf32>
    %103 = tpu.matmul %102, %78, %cst_105 {dimension_numbers = #tpu.dot_dimension_numbers<[1], [0], [0], [1], [0, 0, 1, 1], [], []>} : vector<16x64xf32>, vector<64x16xf32>, vector<16x16xf32> -> vector<16x16xf32>
    %c3_106 = arith.constant 3 : index
    %c0_107 = arith.constant 0 : index
    %c0_108 = arith.constant 0 : index
    %104 = vector.load %arg8[%c3_106, %c0_107, %c0_108] : memref<9x16x8xf32, #tpu.memory_space<vmem>>, vector<1x16x8xf32>
    %105 = vector.shape_cast %104 : vector<1x16x8xf32> to vector<16x8xf32>
    %cst_109 = arith.constant dense<0.000000e+00> : vector<16x8xf32>
    %106 = tpu.matmul %103, %105, %cst_109 {dimension_numbers = #tpu.dot_dimension_numbers<[1], [0], [0], [1], [0, 0, 1, 1], [], []>} : vector<16x16xf32>, vector<16x8xf32>, vector<16x8xf32> -> vector<16x8xf32>
    %107 = arith.addf %100, %106 : vector<16x8xf32>
    %c4_110 = arith.constant 4 : index
    %c0_111 = arith.constant 0 : index
    %c0_112 = arith.constant 0 : index
    %108 = vector.load %arg10[%c4_110, %c0_111, %c0_112] : memref<9x16x64xf32, #tpu.memory_space<vmem>>, vector<1x16x64xf32>
    %109 = vector.shape_cast %108 : vector<1x16x64xf32> to vector<16x64xf32>
    %cst_113 = arith.constant dense<0.000000e+00> : vector<16x16xf32>
    %110 = tpu.matmul %109, %78, %cst_113 {dimension_numbers = #tpu.dot_dimension_numbers<[1], [0], [0], [1], [0, 0, 1, 1], [], []>} : vector<16x64xf32>, vector<64x16xf32>, vector<16x16xf32> -> vector<16x16xf32>
    %c4_114 = arith.constant 4 : index
    %c0_115 = arith.constant 0 : index
    %c0_116 = arith.constant 0 : index
    %111 = vector.load %arg8[%c4_114, %c0_115, %c0_116] : memref<9x16x8xf32, #tpu.memory_space<vmem>>, vector<1x16x8xf32>
    %112 = vector.shape_cast %111 : vector<1x16x8xf32> to vector<16x8xf32>
    %cst_117 = arith.constant dense<0.000000e+00> : vector<16x8xf32>
    %113 = tpu.matmul %110, %112, %cst_117 {dimension_numbers = #tpu.dot_dimension_numbers<[1], [0], [0], [1], [0, 0, 1, 1], [], []>} : vector<16x16xf32>, vector<16x8xf32>, vector<16x8xf32> -> vector<16x8xf32>
    %114 = arith.addf %107, %113 : vector<16x8xf32>
    %c5_118 = arith.constant 5 : index
    %c0_119 = arith.constant 0 : index
    %c0_120 = arith.constant 0 : index
    %115 = vector.load %arg10[%c5_118, %c0_119, %c0_120] : memref<9x16x64xf32, #tpu.memory_space<vmem>>, vector<1x16x64xf32>
    %116 = vector.shape_cast %115 : vector<1x16x64xf32> to vector<16x64xf32>
    %cst_121 = arith.constant dense<0.000000e+00> : vector<16x16xf32>
    %117 = tpu.matmul %116, %78, %cst_121 {dimension_numbers = #tpu.dot_dimension_numbers<[1], [0], [0], [1], [0, 0, 1, 1], [], []>} : vector<16x64xf32>, vector<64x16xf32>, vector<16x16xf32> -> vector<16x16xf32>
    %c5_122 = arith.constant 5 : index
    %c0_123 = arith.constant 0 : index
    %c0_124 = arith.constant 0 : index
    %118 = vector.load %arg8[%c5_122, %c0_123, %c0_124] : memref<9x16x8xf32, #tpu.memory_space<vmem>>, vector<1x16x8xf32>
    %119 = vector.shape_cast %118 : vector<1x16x8xf32> to vector<16x8xf32>
    %cst_125 = arith.constant dense<0.000000e+00> : vector<16x8xf32>
    %120 = tpu.matmul %117, %119, %cst_125 {dimension_numbers = #tpu.dot_dimension_numbers<[1], [0], [0], [1], [0, 0, 1, 1], [], []>} : vector<16x16xf32>, vector<16x8xf32>, vector<16x8xf32> -> vector<16x8xf32>
    %121 = arith.addf %114, %120 : vector<16x8xf32>
    %c6_126 = arith.constant 6 : index
    %c0_127 = arith.constant 0 : index
    %c0_128 = arith.constant 0 : index
    %122 = vector.load %arg10[%c6_126, %c0_127, %c0_128] : memref<9x16x64xf32, #tpu.memory_space<vmem>>, vector<1x16x64xf32>
    %123 = vector.shape_cast %122 : vector<1x16x64xf32> to vector<16x64xf32>
    %cst_129 = arith.constant dense<0.000000e+00> : vector<16x16xf32>
    %124 = tpu.matmul %123, %78, %cst_129 {dimension_numbers = #tpu.dot_dimension_numbers<[1], [0], [0], [1], [0, 0, 1, 1], [], []>} : vector<16x64xf32>, vector<64x16xf32>, vector<16x16xf32> -> vector<16x16xf32>
    %c6_130 = arith.constant 6 : index
    %c0_131 = arith.constant 0 : index
    %c0_132 = arith.constant 0 : index
    %125 = vector.load %arg8[%c6_130, %c0_131, %c0_132] : memref<9x16x8xf32, #tpu.memory_space<vmem>>, vector<1x16x8xf32>
    %126 = vector.shape_cast %125 : vector<1x16x8xf32> to vector<16x8xf32>
    %cst_133 = arith.constant dense<0.000000e+00> : vector<16x8xf32>
    %127 = tpu.matmul %124, %126, %cst_133 {dimension_numbers = #tpu.dot_dimension_numbers<[1], [0], [0], [1], [0, 0, 1, 1], [], []>} : vector<16x16xf32>, vector<16x8xf32>, vector<16x8xf32> -> vector<16x8xf32>
    %128 = arith.addf %121, %127 : vector<16x8xf32>
    %c7_134 = arith.constant 7 : index
    %c0_135 = arith.constant 0 : index
    %c0_136 = arith.constant 0 : index
    %129 = vector.load %arg10[%c7_134, %c0_135, %c0_136] : memref<9x16x64xf32, #tpu.memory_space<vmem>>, vector<1x16x64xf32>
    %130 = vector.shape_cast %129 : vector<1x16x64xf32> to vector<16x64xf32>
    %cst_137 = arith.constant dense<0.000000e+00> : vector<16x16xf32>
    %131 = tpu.matmul %130, %78, %cst_137 {dimension_numbers = #tpu.dot_dimension_numbers<[1], [0], [0], [1], [0, 0, 1, 1], [], []>} : vector<16x64xf32>, vector<64x16xf32>, vector<16x16xf32> -> vector<16x16xf32>
    %c7_138 = arith.constant 7 : index
    %c0_139 = arith.constant 0 : index
    %c0_140 = arith.constant 0 : index
    %132 = vector.load %arg8[%c7_138, %c0_139, %c0_140] : memref<9x16x8xf32, #tpu.memory_space<vmem>>, vector<1x16x8xf32>
    %133 = vector.shape_cast %132 : vector<1x16x8xf32> to vector<16x8xf32>
    %cst_141 = arith.constant dense<0.000000e+00> : vector<16x8xf32>
    %134 = tpu.matmul %131, %133, %cst_141 {dimension_numbers = #tpu.dot_dimension_numbers<[1], [0], [0], [1], [0, 0, 1, 1], [], []>} : vector<16x16xf32>, vector<16x8xf32>, vector<16x8xf32> -> vector<16x8xf32>
    %135 = arith.addf %128, %134 : vector<16x8xf32>
    %c8_142 = arith.constant 8 : index
    %c0_143 = arith.constant 0 : index
    %c0_144 = arith.constant 0 : index
    %136 = vector.load %arg10[%c8_142, %c0_143, %c0_144] : memref<9x16x64xf32, #tpu.memory_space<vmem>>, vector<1x16x64xf32>
    %137 = vector.shape_cast %136 : vector<1x16x64xf32> to vector<16x64xf32>
    %cst_145 = arith.constant dense<0.000000e+00> : vector<16x16xf32>
    %138 = tpu.matmul %137, %78, %cst_145 {dimension_numbers = #tpu.dot_dimension_numbers<[1], [0], [0], [1], [0, 0, 1, 1], [], []>} : vector<16x64xf32>, vector<64x16xf32>, vector<16x16xf32> -> vector<16x16xf32>
    %c8_146 = arith.constant 8 : index
    %c0_147 = arith.constant 0 : index
    %c0_148 = arith.constant 0 : index
    %139 = vector.load %arg8[%c8_146, %c0_147, %c0_148] : memref<9x16x8xf32, #tpu.memory_space<vmem>>, vector<1x16x8xf32>
    %140 = vector.shape_cast %139 : vector<1x16x8xf32> to vector<16x8xf32>
    %cst_149 = arith.constant dense<0.000000e+00> : vector<16x8xf32>
    %141 = tpu.matmul %138, %140, %cst_149 {dimension_numbers = #tpu.dot_dimension_numbers<[1], [0], [0], [1], [0, 0, 1, 1], [], []>} : vector<16x16xf32>, vector<16x8xf32>, vector<16x8xf32> -> vector<16x8xf32>
    %142 = arith.addf %135, %141 : vector<16x8xf32>
    %c0_150 = arith.constant 0 : index
    %c0_151 = arith.constant 0 : index
    %143 = vector.load %arg9[%c0_150, %c0_151] : memref<1x8xf32, #tpu.memory_space<vmem>>, vector<1x8xf32>
    %144 = vector.broadcast %143 : vector<1x8xf32> to vector<16x8xf32>
    %145 = arith.addf %142, %144 : vector<16x8xf32>
    %cst_152 = arith.constant 0.000000e+00 : f32
    %146 = vector.broadcast %cst_152 : f32 to vector<16x8xf32>
    %147 = arith.maximumf %145, %146 : vector<16x8xf32>
    %cst_153 = arith.constant 0.000000e+00 : f32
    %148 = vector.broadcast %cst_153 : f32 to vector<4x4xf32>
    %c0_154 = arith.constant 0 : index
    %c0_155 = arith.constant 0 : index
    %c0_156 = arith.constant 0 : index
    %149 = vector.load %arg13[%c0_154, %c0_155, %c0_156] : memref<9x4x16xf32, #tpu.memory_space<vmem>>, vector<1x4x16xf32>
    %150 = vector.shape_cast %149 : vector<1x4x16xf32> to vector<4x16xf32>
    %cst_157 = arith.constant dense<0.000000e+00> : vector<4x8xf32>
    %151 = tpu.matmul %150, %147, %cst_157 {dimension_numbers = #tpu.dot_dimension_numbers<[1], [0], [0], [1], [0, 0, 1, 1], [], []>} : vector<4x16xf32>, vector<16x8xf32>, vector<4x8xf32> -> vector<4x8xf32>
    %c0_158 = arith.constant 0 : index
    %c0_159 = arith.constant 0 : index
    %c0_160 = arith.constant 0 : index
    %152 = vector.load %arg11[%c0_158, %c0_159, %c0_160] : memref<9x8x4xf32, #tpu.memory_space<vmem>>, vector<1x8x4xf32>
    %153 = vector.shape_cast %152 : vector<1x8x4xf32> to vector<8x4xf32>
    %cst_161 = arith.constant dense<0.000000e+00> : vector<4x4xf32>
    %154 = tpu.matmul %151, %153, %cst_161 {dimension_numbers = #tpu.dot_dimension_numbers<[1], [0], [0], [1], [0, 0, 1, 1], [], []>} : vector<4x8xf32>, vector<8x4xf32>, vector<4x4xf32> -> vector<4x4xf32>
    %155 = arith.addf %148, %154 : vector<4x4xf32>
    %c1_162 = arith.constant 1 : index
    %c0_163 = arith.constant 0 : index
    %c0_164 = arith.constant 0 : index
    %156 = vector.load %arg13[%c1_162, %c0_163, %c0_164] : memref<9x4x16xf32, #tpu.memory_space<vmem>>, vector<1x4x16xf32>
    %157 = vector.shape_cast %156 : vector<1x4x16xf32> to vector<4x16xf32>
    %cst_165 = arith.constant dense<0.000000e+00> : vector<4x8xf32>
    %158 = tpu.matmul %157, %147, %cst_165 {dimension_numbers = #tpu.dot_dimension_numbers<[1], [0], [0], [1], [0, 0, 1, 1], [], []>} : vector<4x16xf32>, vector<16x8xf32>, vector<4x8xf32> -> vector<4x8xf32>
    %c1_166 = arith.constant 1 : index
    %c0_167 = arith.constant 0 : index
    %c0_168 = arith.constant 0 : index
    %159 = vector.load %arg11[%c1_166, %c0_167, %c0_168] : memref<9x8x4xf32, #tpu.memory_space<vmem>>, vector<1x8x4xf32>
    %160 = vector.shape_cast %159 : vector<1x8x4xf32> to vector<8x4xf32>
    %cst_169 = arith.constant dense<0.000000e+00> : vector<4x4xf32>
    %161 = tpu.matmul %158, %160, %cst_169 {dimension_numbers = #tpu.dot_dimension_numbers<[1], [0], [0], [1], [0, 0, 1, 1], [], []>} : vector<4x8xf32>, vector<8x4xf32>, vector<4x4xf32> -> vector<4x4xf32>
    %162 = arith.addf %155, %161 : vector<4x4xf32>
    %c2_170 = arith.constant 2 : index
    %c0_171 = arith.constant 0 : index
    %c0_172 = arith.constant 0 : index
    %163 = vector.load %arg13[%c2_170, %c0_171, %c0_172] : memref<9x4x16xf32, #tpu.memory_space<vmem>>, vector<1x4x16xf32>
    %164 = vector.shape_cast %163 : vector<1x4x16xf32> to vector<4x16xf32>
    %cst_173 = arith.constant dense<0.000000e+00> : vector<4x8xf32>
    %165 = tpu.matmul %164, %147, %cst_173 {dimension_numbers = #tpu.dot_dimension_numbers<[1], [0], [0], [1], [0, 0, 1, 1], [], []>} : vector<4x16xf32>, vector<16x8xf32>, vector<4x8xf32> -> vector<4x8xf32>
    %c2_174 = arith.constant 2 : index
    %c0_175 = arith.constant 0 : index
    %c0_176 = arith.constant 0 : index
    %166 = vector.load %arg11[%c2_174, %c0_175, %c0_176] : memref<9x8x4xf32, #tpu.memory_space<vmem>>, vector<1x8x4xf32>
    %167 = vector.shape_cast %166 : vector<1x8x4xf32> to vector<8x4xf32>
    %cst_177 = arith.constant dense<0.000000e+00> : vector<4x4xf32>
    %168 = tpu.matmul %165, %167, %cst_177 {dimension_numbers = #tpu.dot_dimension_numbers<[1], [0], [0], [1], [0, 0, 1, 1], [], []>} : vector<4x8xf32>, vector<8x4xf32>, vector<4x4xf32> -> vector<4x4xf32>
    %169 = arith.addf %162, %168 : vector<4x4xf32>
    %c3_178 = arith.constant 3 : index
    %c0_179 = arith.constant 0 : index
    %c0_180 = arith.constant 0 : index
    %170 = vector.load %arg13[%c3_178, %c0_179, %c0_180] : memref<9x4x16xf32, #tpu.memory_space<vmem>>, vector<1x4x16xf32>
    %171 = vector.shape_cast %170 : vector<1x4x16xf32> to vector<4x16xf32>
    %cst_181 = arith.constant dense<0.000000e+00> : vector<4x8xf32>
    %172 = tpu.matmul %171, %147, %cst_181 {dimension_numbers = #tpu.dot_dimension_numbers<[1], [0], [0], [1], [0, 0, 1, 1], [], []>} : vector<4x16xf32>, vector<16x8xf32>, vector<4x8xf32> -> vector<4x8xf32>
    %c3_182 = arith.constant 3 : index
    %c0_183 = arith.constant 0 : index
    %c0_184 = arith.constant 0 : index
    %173 = vector.load %arg11[%c3_182, %c0_183, %c0_184] : memref<9x8x4xf32, #tpu.memory_space<vmem>>, vector<1x8x4xf32>
    %174 = vector.shape_cast %173 : vector<1x8x4xf32> to vector<8x4xf32>
    %cst_185 = arith.constant dense<0.000000e+00> : vector<4x4xf32>
    %175 = tpu.matmul %172, %174, %cst_185 {dimension_numbers = #tpu.dot_dimension_numbers<[1], [0], [0], [1], [0, 0, 1, 1], [], []>} : vector<4x8xf32>, vector<8x4xf32>, vector<4x4xf32> -> vector<4x4xf32>
    %176 = arith.addf %169, %175 : vector<4x4xf32>
    %c4_186 = arith.constant 4 : index
    %c0_187 = arith.constant 0 : index
    %c0_188 = arith.constant 0 : index
    %177 = vector.load %arg13[%c4_186, %c0_187, %c0_188] : memref<9x4x16xf32, #tpu.memory_space<vmem>>, vector<1x4x16xf32>
    %178 = vector.shape_cast %177 : vector<1x4x16xf32> to vector<4x16xf32>
    %cst_189 = arith.constant dense<0.000000e+00> : vector<4x8xf32>
    %179 = tpu.matmul %178, %147, %cst_189 {dimension_numbers = #tpu.dot_dimension_numbers<[1], [0], [0], [1], [0, 0, 1, 1], [], []>} : vector<4x16xf32>, vector<16x8xf32>, vector<4x8xf32> -> vector<4x8xf32>
    %c4_190 = arith.constant 4 : index
    %c0_191 = arith.constant 0 : index
    %c0_192 = arith.constant 0 : index
    %180 = vector.load %arg11[%c4_190, %c0_191, %c0_192] : memref<9x8x4xf32, #tpu.memory_space<vmem>>, vector<1x8x4xf32>
    %181 = vector.shape_cast %180 : vector<1x8x4xf32> to vector<8x4xf32>
    %cst_193 = arith.constant dense<0.000000e+00> : vector<4x4xf32>
    %182 = tpu.matmul %179, %181, %cst_193 {dimension_numbers = #tpu.dot_dimension_numbers<[1], [0], [0], [1], [0, 0, 1, 1], [], []>} : vector<4x8xf32>, vector<8x4xf32>, vector<4x4xf32> -> vector<4x4xf32>
    %183 = arith.addf %176, %182 : vector<4x4xf32>
    %c5_194 = arith.constant 5 : index
    %c0_195 = arith.constant 0 : index
    %c0_196 = arith.constant 0 : index
    %184 = vector.load %arg13[%c5_194, %c0_195, %c0_196] : memref<9x4x16xf32, #tpu.memory_space<vmem>>, vector<1x4x16xf32>
    %185 = vector.shape_cast %184 : vector<1x4x16xf32> to vector<4x16xf32>
    %cst_197 = arith.constant dense<0.000000e+00> : vector<4x8xf32>
    %186 = tpu.matmul %185, %147, %cst_197 {dimension_numbers = #tpu.dot_dimension_numbers<[1], [0], [0], [1], [0, 0, 1, 1], [], []>} : vector<4x16xf32>, vector<16x8xf32>, vector<4x8xf32> -> vector<4x8xf32>
    %c5_198 = arith.constant 5 : index
    %c0_199 = arith.constant 0 : index
    %c0_200 = arith.constant 0 : index
    %187 = vector.load %arg11[%c5_198, %c0_199, %c0_200] : memref<9x8x4xf32, #tpu.memory_space<vmem>>, vector<1x8x4xf32>
    %188 = vector.shape_cast %187 : vector<1x8x4xf32> to vector<8x4xf32>
    %cst_201 = arith.constant dense<0.000000e+00> : vector<4x4xf32>
    %189 = tpu.matmul %186, %188, %cst_201 {dimension_numbers = #tpu.dot_dimension_numbers<[1], [0], [0], [1], [0, 0, 1, 1], [], []>} : vector<4x8xf32>, vector<8x4xf32>, vector<4x4xf32> -> vector<4x4xf32>
    %190 = arith.addf %183, %189 : vector<4x4xf32>
    %c6_202 = arith.constant 6 : index
    %c0_203 = arith.constant 0 : index
    %c0_204 = arith.constant 0 : index
    %191 = vector.load %arg13[%c6_202, %c0_203, %c0_204] : memref<9x4x16xf32, #tpu.memory_space<vmem>>, vector<1x4x16xf32>
    %192 = vector.shape_cast %191 : vector<1x4x16xf32> to vector<4x16xf32>
    %cst_205 = arith.constant dense<0.000000e+00> : vector<4x8xf32>
    %193 = tpu.matmul %192, %147, %cst_205 {dimension_numbers = #tpu.dot_dimension_numbers<[1], [0], [0], [1], [0, 0, 1, 1], [], []>} : vector<4x16xf32>, vector<16x8xf32>, vector<4x8xf32> -> vector<4x8xf32>
    %c6_206 = arith.constant 6 : index
    %c0_207 = arith.constant 0 : index
    %c0_208 = arith.constant 0 : index
    %194 = vector.load %arg11[%c6_206, %c0_207, %c0_208] : memref<9x8x4xf32, #tpu.memory_space<vmem>>, vector<1x8x4xf32>
    %195 = vector.shape_cast %194 : vector<1x8x4xf32> to vector<8x4xf32>
    %cst_209 = arith.constant dense<0.000000e+00> : vector<4x4xf32>
    %196 = tpu.matmul %193, %195, %cst_209 {dimension_numbers = #tpu.dot_dimension_numbers<[1], [0], [0], [1], [0, 0, 1, 1], [], []>} : vector<4x8xf32>, vector<8x4xf32>, vector<4x4xf32> -> vector<4x4xf32>
    %197 = arith.addf %190, %196 : vector<4x4xf32>
    %c7_210 = arith.constant 7 : index
    %c0_211 = arith.constant 0 : index
    %c0_212 = arith.constant 0 : index
    %198 = vector.load %arg13[%c7_210, %c0_211, %c0_212] : memref<9x4x16xf32, #tpu.memory_space<vmem>>, vector<1x4x16xf32>
    %199 = vector.shape_cast %198 : vector<1x4x16xf32> to vector<4x16xf32>
    %cst_213 = arith.constant dense<0.000000e+00> : vector<4x8xf32>
    %200 = tpu.matmul %199, %147, %cst_213 {dimension_numbers = #tpu.dot_dimension_numbers<[1], [0], [0], [1], [0, 0, 1, 1], [], []>} : vector<4x16xf32>, vector<16x8xf32>, vector<4x8xf32> -> vector<4x8xf32>
    %c7_214 = arith.constant 7 : index
    %c0_215 = arith.constant 0 : index
    %c0_216 = arith.constant 0 : index
    %201 = vector.load %arg11[%c7_214, %c0_215, %c0_216] : memref<9x8x4xf32, #tpu.memory_space<vmem>>, vector<1x8x4xf32>
    %202 = vector.shape_cast %201 : vector<1x8x4xf32> to vector<8x4xf32>
    %cst_217 = arith.constant dense<0.000000e+00> : vector<4x4xf32>
    %203 = tpu.matmul %200, %202, %cst_217 {dimension_numbers = #tpu.dot_dimension_numbers<[1], [0], [0], [1], [0, 0, 1, 1], [], []>} : vector<4x8xf32>, vector<8x4xf32>, vector<4x4xf32> -> vector<4x4xf32>
    %204 = arith.addf %197, %203 : vector<4x4xf32>
    %c8_218 = arith.constant 8 : index
    %c0_219 = arith.constant 0 : index
    %c0_220 = arith.constant 0 : index
    %205 = vector.load %arg13[%c8_218, %c0_219, %c0_220] : memref<9x4x16xf32, #tpu.memory_space<vmem>>, vector<1x4x16xf32>
    %206 = vector.shape_cast %205 : vector<1x4x16xf32> to vector<4x16xf32>
    %cst_221 = arith.constant dense<0.000000e+00> : vector<4x8xf32>
    %207 = tpu.matmul %206, %147, %cst_221 {dimension_numbers = #tpu.dot_dimension_numbers<[1], [0], [0], [1], [0, 0, 1, 1], [], []>} : vector<4x16xf32>, vector<16x8xf32>, vector<4x8xf32> -> vector<4x8xf32>
    %c8_222 = arith.constant 8 : index
    %c0_223 = arith.constant 0 : index
    %c0_224 = arith.constant 0 : index
    %208 = vector.load %arg11[%c8_222, %c0_223, %c0_224] : memref<9x8x4xf32, #tpu.memory_space<vmem>>, vector<1x8x4xf32>
    %209 = vector.shape_cast %208 : vector<1x8x4xf32> to vector<8x4xf32>
    %cst_225 = arith.constant dense<0.000000e+00> : vector<4x4xf32>
    %210 = tpu.matmul %207, %209, %cst_225 {dimension_numbers = #tpu.dot_dimension_numbers<[1], [0], [0], [1], [0, 0, 1, 1], [], []>} : vector<4x8xf32>, vector<8x4xf32>, vector<4x4xf32> -> vector<4x4xf32>
    %211 = arith.addf %204, %210 : vector<4x4xf32>
    %c0_226 = arith.constant 0 : index
    %c0_227 = arith.constant 0 : index
    %212 = vector.load %arg12[%c0_226, %c0_227] : memref<1x4xf32, #tpu.memory_space<vmem>>, vector<1x4xf32>
    %213 = vector.broadcast %212 : vector<1x4xf32> to vector<4x4xf32>
    %214 = arith.addf %211, %213 : vector<4x4xf32>
    %cst_228 = arith.constant 0.000000e+00 : f32
    %215 = vector.broadcast %cst_228 : f32 to vector<4x4xf32>
    %216 = arith.maximumf %214, %215 : vector<4x4xf32>
    %c0_229 = arith.constant 0 : index
    %c0_230 = arith.constant 0 : index
    %217 = vector.load %arg14[%c0_229, %c0_230] : memref<4x4xf32, #tpu.memory_space<vmem>>, vector<4x4xf32>
    %218 = arith.mulf %216, %217 : vector<4x4xf32>
    %cst_231 = arith.constant dense<0.000000e+00> : vector<4xf32>
    %219 = vector.multi_reduction <add>, %218, %cst_231 [0] : vector<4x4xf32> to vector<4xf32>
    %220 = vector.shape_cast %219 : vector<4xf32> to vector<1x4xf32>
    %cst_232 = arith.constant dense<0.000000e+00> : vector<1xf32>
    %221 = vector.multi_reduction <add>, %220, %cst_232 [1] : vector<1x4xf32> to vector<1xf32>
    %222 = vector.shape_cast %221 : vector<1xf32> to vector<1x1xf32>
    %c0_233 = arith.constant 0 : index
    %c0_234 = arith.constant 0 : index
    %223 = vector.load %arg15[%c0_233, %c0_234] : memref<1x1xf32, #tpu.memory_space<vmem>>, vector<1x1xf32>
    %224 = arith.addf %222, %223 : vector<1x1xf32>
    %c0_235 = arith.constant 0 : index
    %c0_236 = arith.constant 0 : index
    %c0_237 = arith.constant 0 : index
    %225 = vector.load %arg16[%c0_235, %c0_236, %c0_237] : memref<1x1x1xf32, #tpu.memory_space<vmem>>, vector<1x1x1xf32>
    %226 = vector.shape_cast %225 : vector<1x1x1xf32> to vector<1x1xf32>
    %227 = vector.shape_cast %224 : vector<1x1xf32> to vector<1x1x1xf32>
    tpu.vector_store %arg16[%c0_235, %c0_236, %c0_237], %227 {strides = array<i32>} : memref<1x1x1xf32, #tpu.memory_space<vmem>>, vector<1x1x1xf32>,
    return
  }
  func.func @transform_0(%arg0: i32) -> (i32, i32, i32) {
    %c0_i32 = arith.constant 0 : i32
    %c0_i32_0 = arith.constant 0 : i32
    %c0_i32_1 = arith.constant 0 : i32
    return %arg0, %c0_i32, %c0_i32_0 : i32, i32, i32
  }
  func.func @transform_1(%arg0: i32) -> (i32, i32, i32) {
    %c0_i32 = arith.constant 0 : i32
    %c0_i32_0 = arith.constant 0 : i32
    %c0_i32_1 = arith.constant 0 : i32
    return %arg0, %c0_i32, %c0_i32_0 : i32, i32, i32
  }
  func.func @transform_2(%arg0: i32) -> (i32, i32) {
    %c0_i32 = arith.constant 0 : i32
    %c0_i32_0 = arith.constant 0 : i32
    %c0_i32_1 = arith.constant 0 : i32
    return %c0_i32, %c0_i32_0 : i32, i32
  }
  func.func @transform_3(%arg0: i32) -> (i32, i32) {
    %c0_i32 = arith.constant 0 : i32
    %c0_i32_0 = arith.constant 0 : i32
    %c0_i32_1 = arith.constant 0 : i32
    return %c0_i32, %c0_i32_0 : i32, i32
  }
  func.func @transform_4(%arg0: i32) -> (i32, i32, i32) {
    %c0_i32 = arith.constant 0 : i32
    %c0_i32_0 = arith.constant 0 : i32
    %c0_i32_1 = arith.constant 0 : i32
    %c0_i32_2 = arith.constant 0 : i32
    return %c0_i32, %c0_i32_0, %c0_i32_1 : i32, i32, i32
  }
  func.func @transform_5(%arg0: i32) -> (i32, i32) {
    %c0_i32 = arith.constant 0 : i32
    %c0_i32_0 = arith.constant 0 : i32
    %c0_i32_1 = arith.constant 0 : i32
    return %c0_i32, %c0_i32_0 : i32, i32
  }
  func.func @transform_6(%arg0: i32) -> (i32, i32, i32) {
    %c0_i32 = arith.constant 0 : i32
    %c0_i32_0 = arith.constant 0 : i32
    %c0_i32_1 = arith.constant 0 : i32
    %c0_i32_2 = arith.constant 0 : i32
    return %c0_i32, %c0_i32_0, %c0_i32_1 : i32, i32, i32
  }
  func.func @transform_7(%arg0: i32) -> (i32, i32, i32) {
    %c0_i32 = arith.constant 0 : i32
    %c0_i32_0 = arith.constant 0 : i32
    %c0_i32_1 = arith.constant 0 : i32
    %c0_i32_2 = arith.constant 0 : i32
    return %c0_i32, %c0_i32_0, %c0_i32_1 : i32, i32, i32
  }
  func.func @transform_8(%arg0: i32) -> (i32, i32) {
    %c0_i32 = arith.constant 0 : i32
    %c0_i32_0 = arith.constant 0 : i32
    %c0_i32_1 = arith.constant 0 : i32
    return %c0_i32, %c0_i32_0 : i32, i32
  }
  func.func @transform_9(%arg0: i32) -> (i32, i32, i32) {
    %c0_i32 = arith.constant 0 : i32
    %c0_i32_0 = arith.constant 0 : i32
    %c0_i32_1 = arith.constant 0 : i32
    %c0_i32_2 = arith.constant 0 : i32
    return %c0_i32, %c0_i32_0, %c0_i32_1 : i32, i32, i32
  }
  func.func @transform_10(%arg0: i32) -> (i32, i32, i32) {
    %c0_i32 = arith.constant 0 : i32
    %c0_i32_0 = arith.constant 0 : i32
    %c0_i32_1 = arith.constant 0 : i32
    %c0_i32_2 = arith.constant 0 : i32
    return %c0_i32, %c0_i32_0, %c0_i32_1 : i32, i32, i32
  }
  func.func @transform_11(%arg0: i32) -> (i32, i32) {
    %c0_i32 = arith.constant 0 : i32
    %c0_i32_0 = arith.constant 0 : i32
    %c0_i32_1 = arith.constant 0 : i32
    return %c0_i32, %c0_i32_0 : i32, i32
  }
  func.func @transform_12(%arg0: i32) -> (i32, i32, i32) {
    %c0_i32 = arith.constant 0 : i32
    %c0_i32_0 = arith.constant 0 : i32
    %c0_i32_1 = arith.constant 0 : i32
    %c0_i32_2 = arith.constant 0 : i32
    return %c0_i32, %c0_i32_0, %c0_i32_1 : i32, i32, i32
  }
  func.func @transform_13(%arg0: i32) -> (i32, i32) {
    %c0_i32 = arith.constant 0 : i32
    %c0_i32_0 = arith.constant 0 : i32
    %c0_i32_1 = arith.constant 0 : i32
    return %c0_i32, %c0_i32_0 : i32, i32
  }
  func.func @transform_14(%arg0: i32) -> (i32, i32) {
    %c0_i32 = arith.constant 0 : i32
    %c0_i32_0 = arith.constant 0 : i32
    %c0_i32_1 = arith.constant 0 : i32
    return %c0_i32, %c0_i32_0 : i32, i32
  }
  func.func @transform_15(%arg0: i32) -> (i32, i32, i32) {
    %c0_i32 = arith.constant 0 : i32
    %c0_i32_0 = arith.constant 0 : i32
    %c0_i32_1 = arith.constant 0 : i32
    return %arg0, %c0_i32, %c0_i32_0 : i32, i32, i32
  }
}

</mosaic_0001>

<llo_original>
// kernel: fov_forward.1
$region0: #{fov_forward.1}
  #allocation0 [shape = 'u32[]', space=smem, size = 0x4, offset = 0x4, fixed_abs, tag = 'smem constant byte address 0x4 - core index']
  #allocation1 [shape = 'u32[144,128]{1,0:T(1,128)}', space=vmem, size = 0x12000, scoped, tag = 'internal scratch']
  #allocation2 [shape = 'f32[1,1]{1,0:T(1,128)S(1)}', space=vmem, size = 0x200, scoped, tag = 'scoped memory for fov_forward.1']
  %s0 = inlined_call_operand.vmem [shape: f32[2,64,12], index: 0, kind: input, shape index: {}]
  %s1 = inlined_call_operand.vmem [shape: f32[2,256,32], index: 1, kind: input, shape index: {}]
  %s2 = inlined_call_operand.vmem [shape: f32[12,16], index: 2, kind: input, shape index: {}]
  %s3 = inlined_call_operand.vmem [shape: f32[1,16], index: 3, kind: input, shape index: {}]
  %s4 = inlined_call_operand.vmem [shape: f32[9,32,16], index: 4, kind: input, shape index: {}]
  %s5 = inlined_call_operand.vmem [shape: f32[1,16], index: 5, kind: input, shape index: {}]
  %s6 = inlined_call_operand.vmem [shape: f32[9,64,256], index: 6, kind: input, shape index: {}]
  %s7 = inlined_call_operand.vmem [shape: f32[9,16,8], index: 7, kind: input, shape index: {}]
  %s8 = inlined_call_operand.vmem [shape: f32[1,8], index: 8, kind: input, shape index: {}]
  %s9 = inlined_call_operand.vmem [shape: f32[9,16,64], index: 9, kind: input, shape index: {}]
  %s10 = inlined_call_operand.vmem [shape: f32[9,8,4], index: 10, kind: input, shape index: {}]
  %s11 = inlined_call_operand.vmem [shape: f32[1,4], index: 11, kind: input, shape index: {}]
  %s12 = inlined_call_operand.vmem [shape: f32[9,4,16], index: 12, kind: input, shape index: {}]
  %s13 = inlined_call_operand.vmem [shape: f32[4,4], index: 13, kind: input, shape index: {}]
  %s14 = inlined_call_operand.<no memory space> [shape: f32[1,1], index: 14, kind: input, shape index: {}]
  %s15 = inlined_call_operand.vmem [shape: f32[2,1,1], index: 15, kind: output, shape index: {}]
  %s16 = sld [smem:[#allocation0]]
  $region93: #{fov_forward.1} parent=0
    _
  %s18 = ssub.s32 1, %s16
  %s19 = scalar_select 0, %s18, %s16
  %v20 = vstv %s14
  %21 = vst [vmem:[#allocation2] sm:$0x1] %v20
  loop: start=0, step=1, limit=4
  $region2: #{fov_forward.1} parent=0 // loop_pre_header
    _
  $region3: #{fov_forward.1} parent=0 // loop_header
    %s23 = sphi 0, %s27
    %p24 = scmp.ge.s32.totalorder %s23, 4
    %s33 = sphi 0, %s35
    %s36 = sphi 0, %s33
    %s37 = sphi 0, %s36
    %s53 = sphi 0, %s37
    %s59 = sphi 0, %s61
    %s62 = sphi 0, %s59
    %s63 = sphi 0, %s62
    %s79 = sphi 0, %s63
    %s83 = sphi 0, %s83
    %s85 = sphi 0, %s83
    %s86 = sphi 0, %s85
    %s100 = sphi 0, %s86
    %s104 = sphi 0, %s104
    %s106 = sphi 0, %s104
    %s107 = sphi 0, %s106
    %s121 = sphi 0, %s107
    %s125 = sphi 0, %s125
    %s127 = sphi 0, %s125
    %s128 = sphi 0, %s127
    %s142 = sphi 0, %s128
    %s146 = sphi 0, %s146
    %s148 = sphi 0, %s146
    %s149 = sphi 0, %s148
    %s163 = sphi 0, %s149
    %s167 = sphi 0, %s167
    %s169 = sphi 0, %s167
    %s170 = sphi 0, %s169
    %s184 = sphi 0, %s170
    %s188 = sphi 0, %s188
    %s190 = sphi 0, %s188
    %s191 = sphi 0, %s190
    %s205 = sphi 0, %s191
    %s209 = sphi 0, %s209
    %s211 = sphi 0, %s209
    %s212 = sphi 0, %s211
    %s226 = sphi 0, %s212
    %s230 = sphi 0, %s230
    %s232 = sphi 0, %s230
    %s233 = sphi 0, %s232
    %s247 = sphi 0, %s233
    %s251 = sphi 0, %s251
    %s253 = sphi 0, %s251
    %s254 = sphi 0, %s253
    %s268 = sphi 0, %s254
    %s272 = sphi 0, %s272
    %s274 = sphi 0, %s272
    %s275 = sphi 0, %s274
    %s289 = sphi 0, %s275
    %s293 = sphi 0, %s293
    %s295 = sphi 0, %s293
    %s296 = sphi 0, %s295
    %s310 = sphi 0, %s296
    %s314 = sphi 0, %s314
    %s316 = sphi 0, %s314
    %s317 = sphi 0, %s316
    %s331 = sphi 0, %s317
    %s335 = sphi 0, %s335
    %s337 = sphi 0, %s335
    %s338 = sphi 0, %s337
    %s352 = sphi 0, %s338
    %s358 = sphi 0, %s360
    %s361 = sphi 0, %s358
    %s362 = sphi 0, %s361
    %s378 = sphi 0, %s362
  $region4: #{fov_forward.1} parent=0 // loop_header_branch
    %26 = sbr.rel (%p24) target = $region8
  $region5: #{fov_forward.1} parent=0 // loop_body
    %s28 = ssub.s32 %s23, 1
    %s29 = ssub.s32 %s23, 2
    %s30 = sadd.s32 %s23, 1
    %s31 = ssub.s32 %s23, %s30
    %p32 = scmp.eq.s32.totalorder %s31, 0
    %s34 = sadd.s32 %s33, 1
    %s35 = scalar_select %p32, %s33, %s34
    %p38 = pneg %p32
    %p39 = scmp.eq.s32.totalorder %s23, 1
    %p40 = por %p38, %p39
    %p41 = scmp.ne.s32.totalorder %s33, %s36
    %p42 = scmp.eq.s32.totalorder %s23, 0
    %p43 = por %p41, %p42
    %p44 = scmp.ne.s32.totalorder %s33, %s36
    %p45 = scmp.eq.s32.totalorder %s28, 1
    %p46 = por %p44, %p45
    %p47 = scmp.ne.s32.totalorder %s36, %s37
    %p48 = scmp.eq.s32.totalorder %s28, 0
    %p49 = por %p47, %p48
    %p50 = scmp.ne.s32.totalorder %s36, %s37
    %p51 = scmp.eq.s32.totalorder %s29, 1
    %p52 = por %p50, %p51
    %p54 = scmp.ne.s32.totalorder %s37, %s53
    %p55 = scmp.eq.s32.totalorder %s29, 0
    %p56 = por %p54, %p55
    %s57 = ssub.s32 %s23, %s30
    %p58 = scmp.eq.s32.totalorder %s57, 0
    %s60 = sadd.s32 %s59, 1
    %s61 = scalar_select %p58, %s59, %s60
    %p64 = pneg %p58
    %p65 = scmp.eq.s32.totalorder %s23, 1
    %p66 = por %p64, %p65
    %p67 = scmp.ne.s32.totalorder %s59, %s62
    %p68 = scmp.eq.s32.totalorder %s23, 0
    %p69 = por %p67, %p68
    %p70 = scmp.ne.s32.totalorder %s59, %s62
    %p71 = scmp.eq.s32.totalorder %s28, 1
    %p72 = por %p70, %p71
    %p73 = scmp.ne.s32.totalorder %s62, %s63
    %p74 = scmp.eq.s32.totalorder %s28, 0
    %p75 = por %p73, %p74
    %p76 = scmp.ne.s32.totalorder %s62, %s63
    %p77 = scmp.eq.s32.totalorder %s29, 1
    %p78 = por %p76, %p77
    %p80 = scmp.ne.s32.totalorder %s63, %s79
    %p81 = scmp.eq.s32.totalorder %s29, 0
    %p82 = por %p80, %p81
    %s84 = sadd.s32 %s83, 1
    %p87 = scmp.eq.s32.totalorder %s23, 1
    %p88 = scmp.ne.s32.totalorder %s83, %s85
    %p89 = scmp.eq.s32.totalorder %s23, 0
    %p90 = por %p88, %p89
    %p91 = scmp.ne.s32.totalorder %s83, %s85
    %p92 = scmp.eq.s32.totalorder %s28, 1
    %p93 = por %p91, %p92
    %p94 = scmp.ne.s32.totalorder %s85, %s86
    %p95 = scmp.eq.s32.totalorder %s28, 0
    %p96 = por %p94, %p95
    %p97 = scmp.ne.s32.totalorder %s85, %s86
    %p98 = scmp.eq.s32.totalorder %s29, 1
    %p99 = por %p97, %p98
    %p101 = scmp.ne.s32.totalorder %s86, %s100
    %p102 = scmp.eq.s32.totalorder %s29, 0
    %p103 = por %p101, %p102
    %s105 = sadd.s32 %s104, 1
    %p108 = scmp.eq.s32.totalorder %s23, 1
    %p109 = scmp.ne.s32.totalorder %s104, %s106
    %p110 = scmp.eq.s32.totalorder %s23, 0
    %p111 = por %p109, %p110
    %p112 = scmp.ne.s32.totalorder %s104, %s106
    %p113 = scmp.eq.s32.totalorder %s28, 1
    %p114 = por %p112, %p113
    %p115 = scmp.ne.s32.totalorder %s106, %s107
    %p116 = scmp.eq.s32.totalorder %s28, 0
    %p117 = por %p115, %p116
    %p118 = scmp.ne.s32.totalorder %s106, %s107
    %p119 = scmp.eq.s32.totalorder %s29, 1
    %p120 = por %p118, %p119
    %p122 = scmp.ne.s32.totalorder %s107, %s121
    %p123 = scmp.eq.s32.totalorder %s29, 0
    %p124 = por %p122, %p123
    %s126 = sadd.s32 %s125, 1
    %p129 = scmp.eq.s32.totalorder %s23, 1
    %p130 = scmp.ne.s32.totalorder %s125, %s127
    %p131 = scmp.eq.s32.totalorder %s23, 0
    %p132 = por %p130, %p131
    %p133 = scmp.ne.s32.totalorder %s125, %s127
    %p134 = scmp.eq.s32.totalorder %s28, 1
    %p135 = por %p133, %p134
    %p136 = scmp.ne.s32.totalorder %s127, %s128
    %p137 = scmp.eq.s32.totalorder %s28, 0
    %p138 = por %p136, %p137
    %p139 = scmp.ne.s32.totalorder %s127, %s128
    %p140 = scmp.eq.s32.totalorder %s29, 1
    %p141 = por %p139, %p140
    %p143 = scmp.ne.s32.totalorder %s128, %s142
    %p144 = scmp.eq.s32.totalorder %s29, 0
    %p145 = por %p143, %p144
    %s147 = sadd.s32 %s146, 1
    %p150 = scmp.eq.s32.totalorder %s23, 1
    %p151 = scmp.ne.s32.totalorder %s146, %s148
    %p152 = scmp.eq.s32.totalorder %s23, 0
    %p153 = por %p151, %p152
    %p154 = scmp.ne.s32.totalorder %s146, %s148
    %p155 = scmp.eq.s32.totalorder %s28, 1
    %p156 = por %p154, %p155
    %p157 = scmp.ne.s32.totalorder %s148, %s149
    %p158 = scmp.eq.s32.totalorder %s28, 0
    %p159 = por %p157, %p158
    %p160 = scmp.ne.s32.totalorder %s148, %s149
    %p161 = scmp.eq.s32.totalorder %s29, 1
    %p162 = por %p160, %p161
    %p164 = scmp.ne.s32.totalorder %s149, %s163
    %p165 = scmp.eq.s32.totalorder %s29, 0
    %p166 = por %p164, %p165
    %s168 = sadd.s32 %s167, 1
    %p171 = scmp.eq.s32.totalorder %s23, 1
    %p172 = scmp.ne.s32.totalorder %s167, %s169
    %p173 = scmp.eq.s32.totalorder %s23, 0
    %p174 = por %p172, %p173
    %p175 = scmp.ne.s32.totalorder %s167, %s169
    %p176 = scmp.eq.s32.totalorder %s28, 1
    %p177 = por %p175, %p176
    %p178 = scmp.ne.s32.totalorder %s169, %s170
    %p179 = scmp.eq.s32.totalorder %s28, 0
    %p180 = por %p178, %p179
    %p181 = scmp.ne.s32.totalorder %s169, %s170
    %p182 = scmp.eq.s32.totalorder %s29, 1
    %p183 = por %p181, %p182
    %p185 = scmp.ne.s32.totalorder %s170, %s184
    %p186 = scmp.eq.s32.totalorder %s29, 0
    %p187 = por %p185, %p186
    %s189 = sadd.s32 %s188, 1
    %p192 = scmp.eq.s32.totalorder %s23, 1
    %p193 = scmp.ne.s32.totalorder %s188, %s190
    %p194 = scmp.eq.s32.totalorder %s23, 0
    %p195 = por %p193, %p194
    %p196 = scmp.ne.s32.totalorder %s188, %s190
    %p197 = scmp.eq.s32.totalorder %s28, 1
    %p198 = por %p196, %p197
    %p199 = scmp.ne.s32.totalorder %s190, %s191
    %p200 = scmp.eq.s32.totalorder %s28, 0
    %p201 = por %p199, %p200
    %p202 = scmp.ne.s32.totalorder %s190, %s191
    %p203 = scmp.eq.s32.totalorder %s29, 1
    %p204 = por %p202, %p203
    %p206 = scmp.ne.s32.totalorder %s191, %s205
    %p207 = scmp.eq.s32.totalorder %s29, 0
    %p208 = por %p206, %p207
    %s210 = sadd.s32 %s209, 1
    %p213 = scmp.eq.s32.totalorder %s23, 1
    %p214 = scmp.ne.s32.totalorder %s209, %s211
    %p215 = scmp.eq.s32.totalorder %s23, 0
    %p216 = por %p214, %p215
    %p217 = scmp.ne.s32.totalorder %s209, %s211
    %p218 = scmp.eq.s32.totalorder %s28, 1
    %p219 = por %p217, %p218
    %p220 = scmp.ne.s32.totalorder %s211, %s212
    %p221 = scmp.eq.s32.totalorder %s28, 0
    %p222 = por %p220, %p221
    %p223 = scmp.ne.s32.totalorder %s211, %s212
    %p224 = scmp.eq.s32.totalorder %s29, 1
    %p225 = por %p223, %p224
    %p227 = scmp.ne.s32.totalorder %s212, %s226
    %p228 = scmp.eq.s32.totalorder %s29, 0
    %p229 = por %p227, %p228
    %s231 = sadd.s32 %s230, 1
    %p234 = scmp.eq.s32.totalorder %s23, 1
    %p235 = scmp.ne.s32.totalorder %s230, %s232
    %p236 = scmp.eq.s32.totalorder %s23, 0
    %p237 = por %p235, %p236
    %p238 = scmp.ne.s32.totalorder %s230, %s232
    %p239 = scmp.eq.s32.totalorder %s28, 1
    %p240 = por %p238, %p239
    %p241 = scmp.ne.s32.totalorder %s232, %s233
    %p242 = scmp.eq.s32.totalorder %s28, 0
    %p243 = por %p241, %p242
    %p244 = scmp.ne.s32.totalorder %s232, %s233
    %p245 = scmp.eq.s32.totalorder %s29, 1
    %p246 = por %p244, %p245
    %p248 = scmp.ne.s32.totalorder %s233, %s247
    %p249 = scmp.eq.s32.totalorder %s29, 0
    %p250 = por %p248, %p249
    %s252 = sadd.s32 %s251, 1
    %p255 = scmp.eq.s32.totalorder %s23, 1
    %p256 = scmp.ne.s32.totalorder %s251, %s253
    %p257 = scmp.eq.s32.totalorder %s23, 0
    %p258 = por %p256, %p257
    %p259 = scmp.ne.s32.totalorder %s251, %s253
    %p260 = scmp.eq.s32.totalorder %s28, 1
    %p261 = por %p259, %p260
    %p262 = scmp.ne.s32.totalorder %s253, %s254
    %p263 = scmp.eq.s32.totalorder %s28, 0
    %p264 = por %p262, %p263
    %p265 = scmp.ne.s32.totalorder %s253, %s254
    %p266 = scmp.eq.s32.totalorder %s29, 1
    %p267 = por %p265, %p266
    %p269 = scmp.ne.s32.totalorder %s254, %s268
    %p270 = scmp.eq.s32.totalorder %s29, 0
    %p271 = por %p269, %p270
    %s273 = sadd.s32 %s272, 1
    %p276 = scmp.eq.s32.totalorder %s23, 1
    %p277 = scmp.ne.s32.totalorder %s272, %s274
    %p278 = scmp.eq.s32.totalorder %s23, 0
    %p279 = por %p277, %p278
    %p280 = scmp.ne.s32.totalorder %s272, %s274
    %p281 = scmp.eq.s32.totalorder %s28, 1
    %p282 = por %p280, %p281
    %p283 = scmp.ne.s32.totalorder %s274, %s275
    %p284 = scmp.eq.s32.totalorder %s28, 0
    %p285 = por %p283, %p284
    %p286 = scmp.ne.s32.totalorder %s274, %s275
    %p287 = scmp.eq.s32.totalorder %s29, 1
    %p288 = por %p286, %p287
    %p290 = scmp.ne.s32.totalorder %s275, %s289
    %p291 = scmp.eq.s32.totalorder %s29, 0
    %p292 = por %p290, %p291
    %s294 = sadd.s32 %s293, 1
    %p297 = scmp.eq.s32.totalorder %s23, 1
    %p298 = scmp.ne.s32.totalorder %s293, %s295
    %p299 = scmp.eq.s32.totalorder %s23, 0
    %p300 = por %p298, %p299
    %p301 = scmp.ne.s32.totalorder %s293, %s295
    %p302 = scmp.eq.s32.totalorder %s28, 1
    %p303 = por %p301, %p302
    %p304 = scmp.ne.s32.totalorder %s295, %s296
    %p305 = scmp.eq.s32.totalorder %s28, 0
    %p306 = por %p304, %p305
    %p307 = scmp.ne.s32.totalorder %s295, %s296
    %p308 = scmp.eq.s32.totalorder %s29, 1
    %p309 = por %p307, %p308
    %p311 = scmp.ne.s32.totalorder %s296, %s310
    %p312 = scmp.eq.s32.totalorder %s29, 0
    %p313 = por %p311, %p312
    %s315 = sadd.s32 %s314, 1
    %p318 = scmp.eq.s32.totalorder %s23, 1
    %p319 = scmp.ne.s32.totalorder %s314, %s316
    %p320 = scmp.eq.s32.totalorder %s23, 0
    %p321 = por %p319, %p320
    %p322 = scmp.ne.s32.totalorder %s314, %s316
    %p323 = scmp.eq.s32.totalorder %s28, 1
    %p324 = por %p322, %p323
    %p325 = scmp.ne.s32.totalorder %s316, %s317
    %p326 = scmp.eq.s32.totalorder %s28, 0
    %p327 = por %p325, %p326
    %p328 = scmp.ne.s32.totalorder %s316, %s317
    %p329 = scmp.eq.s32.totalorder %s29, 1
    %p330 = por %p328, %p329
    %p332 = scmp.ne.s32.totalorder %s317, %s331
    %p333 = scmp.eq.s32.totalorder %s29, 0
    %p334 = por %p332, %p333
    %s336 = sadd.s32 %s335, 1
    %p339 = scmp.eq.s32.totalorder %s23, 1
    %p340 = scmp.ne.s32.totalorder %s335, %s337
    %p341 = scmp.eq.s32.totalorder %s23, 0
    %p342 = por %p340, %p341
    %p343 = scmp.ne.s32.totalorder %s335, %s337
    %p344 = scmp.eq.s32.totalorder %s28, 1
    %p345 = por %p343, %p344
    %p346 = scmp.ne.s32.totalorder %s337, %s338
    %p347 = scmp.eq.s32.totalorder %s28, 0
    %p348 = por %p346, %p347
    %p349 = scmp.ne.s32.totalorder %s337, %s338
    %p350 = scmp.eq.s32.totalorder %s29, 1
    %p351 = por %p349, %p350
    %p353 = scmp.ne.s32.totalorder %s338, %s352
    %p354 = scmp.eq.s32.totalorder %s29, 0
    %p355 = por %p353, %p354
    %s356 = ssub.s32 %s23, %s30
    %p357 = scmp.eq.s32.totalorder %s356, 0
    %s359 = sadd.s32 %s358, 1
    %s360 = scalar_select %p357, %s358, %s359
    %p363 = pneg %p357
    %p364 = scmp.eq.s32.totalorder %s23, 1
    %p365 = por %p363, %p364
    %p366 = scmp.ne.s32.totalorder %s358, %s361
    %p367 = scmp.eq.s32.totalorder %s23, 0
    %p368 = por %p366, %p367
    %p369 = scmp.ne.s32.totalorder %s358, %s361
    %p370 = scmp.eq.s32.totalorder %s28, 1
    %p371 = por %p369, %p370
    %p372 = scmp.ne.s32.totalorder %s361, %s362
    %p373 = scmp.eq.s32.totalorder %s28, 0
    %p374 = por %p372, %p373
    %p375 = scmp.ne.s32.totalorder %s361, %s362
    %p376 = scmp.eq.s32.totalorder %s29, 1
    %p377 = por %p375, %p376
    %p379 = scmp.ne.s32.totalorder %s362, %s378
    %p380 = scmp.eq.s32.totalorder %s29, 0
    %p381 = por %p379, %p380
    %p382 = scmp.le.s32.totalorder 1, %s23
    %p383 = scmp.lt.s32.totalorder %s23, 3
    %p384 = pnand %p382, %p383
    %p385 = pneg %p384
    // Predicated region
    $region9: #{fov_forward.1} parent=5 // pred_check
      _
    $region10: #{fov_forward.1} parent=5 // pred_check_branch
      %387 = sbr.rel (%p384) target = $region12
    $region11: #{fov_forward.1} parent=5 // pred_region
      %s388 = ssub.s32 %s23, 1
      // Predicated region
      $region13: #{fov_forward.1} parent=11 // pred_check
        %p389 = pneg %p96
      $region14: #{fov_forward.1} parent=11 // pred_check_branch
        %391 = sbr.rel (%p389) target = $region16
      $region15: #{fov_forward.1} parent=11 // pred_region
        _
      $region16: #{fov_forward.1} parent=11 // pred_fallthru
        _
      // Predicated region
      $region17: #{fov_forward.1} parent=11 // pred_check
        %p392 = pneg %p117
      $region18: #{fov_forward.1} parent=11 // pred_check_branch
        %394 = sbr.rel (%p392) target = $region20
      $region19: #{fov_forward.1} parent=11 // pred_region
        _
      $region20: #{fov_forward.1} parent=11 // pred_fallthru
        _
      // Predicated region
      $region21: #{fov_forward.1} parent=11 // pred_check
        %p395 = pneg %p138
      $region22: #{fov_forward.1} parent=11 // pred_check_branch
        %397 = sbr.rel (%p395) target = $region24
      $region23: #{fov_forward.1} parent=11 // pred_region
        _
      $region24: #{fov_forward.1} parent=11 // pred_fallthru
        _
      // Predicated region
      $region25: #{fov_forward.1} parent=11 // pred_check
        %p398 = pneg %p159
      $region26: #{fov_forward.1} parent=11 // pred_check_branch
        %400 = sbr.rel (%p398) target = $region28
      $region27: #{fov_forward.1} parent=11 // pred_region
        _
      $region28: #{fov_forward.1} parent=11 // pred_fallthru
        _
      // Predicated region
      $region29: #{fov_forward.1} parent=11 // pred_check
        %p401 = pneg %p180
      $region30: #{fov_forward.1} parent=11 // pred_check_branch
        %403 = sbr.rel (%p401) target = $region32
      $region31: #{fov_forward.1} parent=11 // pred_region
        _
      $region32: #{fov_forward.1} parent=11 // pred_fallthru
        _
      // Predicated region
      $region33: #{fov_forward.1} parent=11 // pred_check
        %p404 = pneg %p201
      $region34: #{fov_forward.1} parent=11 // pred_check_branch
        %406 = sbr.rel (%p404) target = $region36
      $region35: #{fov_forward.1} parent=11 // pred_region
        _
      $region36: #{fov_forward.1} parent=11 // pred_fallthru
        _
      // Predicated region
      $region37: #{fov_forward.1} parent=11 // pred_check
        %p407 = pneg %p222
      $region38: #{fov_forward.1} parent=11 // pred_check_branch
        %409 = sbr.rel (%p407) target = $region40
      $region39: #{fov_forward.1} parent=11 // pred_region
        _
      $region40: #{fov_forward.1} parent=11 // pred_fallthru
        _
      // Predicated region
      $region41: #{fov_forward.1} parent=11 // pred_check
        %p410 = pneg %p243
      $region42: #{fov_forward.1} parent=11 // pred_check_branch
        %412 = sbr.rel (%p410) target = $region44
      $region43: #{fov_forward.1} parent=11 // pred_region
        _
      $region44: #{fov_forward.1} parent=11 // pred_fallthru
        _
      // Predicated region
      $region45: #{fov_forward.1} parent=11 // pred_check
        %p413 = pneg %p264
      $region46: #{fov_forward.1} parent=11 // pred_check_branch
        %415 = sbr.rel (%p413) target = $region48
      $region47: #{fov_forward.1} parent=11 // pred_region
        _
      $region48: #{fov_forward.1} parent=11 // pred_fallthru
        _
      // Predicated region
      $region49: #{fov_forward.1} parent=11 // pred_check
        %p416 = pneg %p285
      $region50: #{fov_forward.1} parent=11 // pred_check_branch
        %418 = sbr.rel (%p416) target = $region52
      $region51: #{fov_forward.1} parent=11 // pred_region
        _
      $region52: #{fov_forward.1} parent=11 // pred_fallthru
        _
      // Predicated region
      $region53: #{fov_forward.1} parent=11 // pred_check
        %p419 = pneg %p306
      $region54: #{fov_forward.1} parent=11 // pred_check_branch
        %421 = sbr.rel (%p419) target = $region56
      $region55: #{fov_forward.1} parent=11 // pred_region
        _
      $region56: #{fov_forward.1} parent=11 // pred_fallthru
        _
      // Predicated region
      $region57: #{fov_forward.1} parent=11 // pred_check
        %p422 = pneg %p327
      $region58: #{fov_forward.1} parent=11 // pred_check_branch
        %424 = sbr.rel (%p422) target = $region60
      $region59: #{fov_forward.1} parent=11 // pred_region
        _
      $region60: #{fov_forward.1} parent=11 // pred_fallthru
        _
      // Predicated region
      $region61: #{fov_forward.1} parent=11 // pred_check
        %p425 = pneg %p348
      $region62: #{fov_forward.1} parent=11 // pred_check_branch
        %427 = sbr.rel (%p425) target = $region64
      $region63: #{fov_forward.1} parent=11 // pred_region
        _
      $region64: #{fov_forward.1} parent=11 // pred_fallthru
        _
    $region12: #{fov_forward.1} parent=5 // pred_fallthru
      _
    %p428 = scmp.lt.s32.totalorder %s23, 2
    // Predicated region
    $region65: #{fov_forward.1} parent=5 // pred_check
      %p429 = pneg %p428
    $region66: #{fov_forward.1} parent=5 // pred_check_branch
      %431 = sbr.rel (%p429) target = $region68
    $region67: #{fov_forward.1} parent=5 // pred_region
      // Predicated region
      $region69: #{fov_forward.1} parent=67 // pred_check
        %p432 = pneg %p43
      $region70: #{fov_forward.1} parent=67 // pred_check_branch
        %434 = sbr.rel (%p432) target = $region72
      $region71: #{fov_forward.1} parent=67 // pred_region
        %p435 = scmp.lt.s32.totalorder %s23, 1
        %s436 = scalar_select %p435, %s23, 1
        %s437 = smul.addr %s436, 8
        %s438 = smul.addr %s437, 8
        %s439 = scalar_lea.vmem %s0, %s438
      $region72: #{fov_forward.1} parent=67 // pred_fallthru
        _
      // Predicated region
      $region73: #{fov_forward.1} parent=67 // pred_check
        %p440 = pneg %p69
      $region74: #{fov_forward.1} parent=67 // pred_check_branch
        %442 = sbr.rel (%p440) target = $region76
      $region75: #{fov_forward.1} parent=67 // pred_region
        %p443 = scmp.lt.s32.totalorder %s23, 1
        %s444 = scalar_select %p443, %s23, 1
        %s445 = smul.addr %s444, 32
        %s446 = smul.addr %s445, 8
        %s447 = scalar_lea.vmem %s1, %s446
      $region76: #{fov_forward.1} parent=67 // pred_fallthru
        _
    $region68: #{fov_forward.1} parent=5 // pred_fallthru
      _
    %p448 = scmp.le.s32.totalorder 1, %s23
    %p449 = scmp.lt.s32.totalorder %s23, 3
    %p450 = pnand %p448, %p449
    %p451 = pneg %p450
    // Predicated region
    $region77: #{fov_forward.1} parent=5 // pred_check
      _
    $region78: #{fov_forward.1} parent=5 // pred_check_branch
      %453 = sbr.rel (%p450) target = $region80
    $region79: #{fov_forward.1} parent=5 // pred_region
      %s454 = ssub.s32 %s23, 1
      %p455 = scmp.lt.s32.totalorder %s28, 1
      %s456 = scalar_select %p455, %s28, 1
      %s457 = smul.addr %s456, 8
      %s458 = smul.addr %s457, 8
      %s459 = scalar_lea.vmem %s0, %s458
      %p460 = pneg %p49
      %p461 = pneg %p46
      %p462 = scmp.lt.s32.totalorder %s28, 1
      %s463 = scalar_select %p462, %s28, 1
      %s464 = smul.addr %s463, 32
      %s465 = smul.addr %s464, 8
      %s466 = scalar_lea.vmem %s1, %s465
      %p467 = pneg %p75
      %p468 = pneg %p72
      %p469 = pneg %p96
      %p470 = pneg %p93
      %p471 = pneg %p117
      %p472 = pneg %p114
      %p473 = pneg %p138
      %p474 = pneg %p135
      %p475 = pneg %p159
      %p476 = pneg %p156
      %p477 = pneg %p180
      %p478 = pneg %p177
      %p479 = pneg %p201
      %p480 = pneg %p198
      %p481 = pneg %p222
      %p482 = pneg %p219
      %p483 = pneg %p243
      %p484 = pneg %p240
      %p485 = pneg %p264
      %p486 = pneg %p261
      %p487 = pneg %p285
      %p488 = pneg %p282
      %p489 = pneg %p306
      %p490 = pneg %p303
      %p491 = pneg %p327
      %p492 = pneg %p324
      %p493 = pneg %p348
      %p494 = pneg %p345
      %p495 = pneg %p374
      %p496 = pneg %p371
      %p497 = scmp.lt.s32.totalorder %s28, 1
      %s498 = scalar_select %p497, %s28, 1
      %s499 = scalar_lea.vmem %s15, %s498
      %p500 = scmp.lt.s32.totalorder %s28, 1
      %s501 = scalar_select %p500, %s28, 1
      %s502 = smul.addr %s501, 8
      %s503 = smul.addr %s502, 8
      %s504 = scalar_lea.vmem %s0, %s503
      %p505 = scmp.lt.s32.totalorder %s28, 1
      %s506 = scalar_select %p505, %s28, 1
      %s507 = smul.addr %s506, 32
      %s508 = smul.addr %s507, 8
      %s509 = scalar_lea.vmem %s1, %s508
      %p510 = scmp.lt.s32.totalorder %s28, 1
      %s511 = scalar_select %p510, %s28, 1
      %s512 = scalar_lea.vmem %s15, %s511
      %v513 = vld [vmem:[%s504] sm:$0xff]
      %v514 = vld [vmem:[%s504 + $0x8] sm:$0xff]
      %v515 = vld [vmem:[%s504 + $0x10] sm:$0xff]
      %v516 = vld [vmem:[%s504 + $0x18] sm:$0xff]
      %v517 = vld [vmem:[%s504 + $0x20] sm:$0xff]
      %v518 = vld [vmem:[%s504 + $0x28] sm:$0xff]
      %v519 = vld [vmem:[%s504 + $0x30] sm:$0xff]
      %v520 = vld [vmem:[%s504 + $0x38] sm:$0xff]
      %v521 = vld [vmem:[%s2] sm:$0xff]
      %v522 = vld [vmem:[%s2 + $0x8] sm:$0xf]
      %v523 = vld [vmem:[%s3] sm:$0x1]
      %v525 = vlaneseq
      %v526 = vshrl.u32 %v525, 7
      %v527 = vsub.s32 0, %v526
      %v528 = vrot.slane %v523, %v527
      %vm530 = vcmask 97280
      %v532 = vsel %vm530, %v513, 0
      %v535 = vsel %vm530, %v514, 0
      %v538 = vsel %vm530, %v515, 0
      %v541 = vsel %vm530, %v516, 0
      %v544 = vsel %vm530, %v517, 0
      %v547 = vsel %vm530, %v518, 0
      %v550 = vsel %vm530, %v519, 0
      %v553 = vsel %vm530, %v520, 0
      %vm555 = vcmask 1043456
      %v557 = vsel %vm555, %v522, 0
      %559 = vmatprep.subr.mxu0 0.0
      %560 = vmatpush1.msra.mxu0 %v521
      %561 = vmatprep.subr.mxu0 0.0
      %562 = vmatpush1.msra.mxu0 %v557
      %563 = vmatprep.subr.mxu0 0.0
      %564 = vmatpush1.msra.mxu0 0.0
      %565 = vmatprep.subr.mxu0 0.0
      %566 = vmatpush1.msra.mxu0 0.0
      %567 = vmatprep.subr.mxu0 0.0
      %568 = vmatpush1.msra.mxu0 0.0
      %569 = vmatprep.subr.mxu0 0.0
      %570 = vmatpush1.msra.mxu0 0.0
      %571 = vmatprep.subr.mxu0 0.0
      %572 = vmatpush1.msra.mxu0 0.0
      %573 = vmatprep.subr.mxu0 0.0
      %574 = vmatpush1.msra.mxu0 0.0
      %575 = vmatprep.subr.mxu0 0.0
      %576 = vmatpush1.msra.mxu0 0.0
      %577 = vmatprep.subr.mxu0 0.0
      %578 = vmatpush1.msra.mxu0 0.0
      %579 = vmatprep.subr.mxu0 0.0
      %580 = vmatpush1.msra.mxu0 0.0
      %581 = vmatprep.subr.mxu0 0.0
      %582 = vmatpush1.msra.mxu0 0.0
      %583 = vmatprep.subr.mxu0 0.0
      %584 = vmatpush1.msra.mxu0 0.0
      %585 = vmatprep.subr.mxu0 0.0
      %586 = vmatpush1.msra.mxu0 0.0
      %587 = vmatprep.subr.mxu0 0.0
      %588 = vmatpush1.msra.mxu0 0.0
      %589 = vmatprep.subr.mxu0 0.0
      %590 = vmatpush1.msra.mxu0 0.0
      %591 = vmatprep.subr.mxu0 0.0
      %592 = vmatpush1.msra.mxu0 0.0
      %593 = vmatprep.subr.mxu0 0.0
      %594 = vmatpush1.msra.mxu0 0.0
      %595 = vmatprep.subr.mxu0 0.0
      %596 = vmatpush1.msra.mxu0 0.0
      %597 = vmatprep.subr.mxu0 0.0
      %598 = vmatpush1.msra.mxu0 0.0
      %599 = vmatprep.subr.mxu0 0.0
      %600 = vmatpush1.msra.mxu0 0.0
      %601 = vmatprep.subr.mxu0 0.0
      %602 = vmatpush1.msra.mxu0 0.0
      %603 = vmatprep.subr.mxu0 0.0
      %604 = vmatpush1.msra.mxu0 0.0
      %605 = vmatprep.subr.mxu0 0.0
      %606 = vmatpush1.msra.mxu0 0.0
      %607 = vmatprep.subr.mxu0 0.0
      %608 = vmatpush1.msra.mxu0 0.0
      %609 = vmatprep.subr.mxu0 0.0
      %610 = vmatpush1.msra.mxu0 0.0
      %611 = vmatprep.subr.mxu0 0.0
      %612 = vmatpush1.msra.mxu0 0.0
      %613 = vmatprep.subr.mxu0 0.0
      %614 = vmatpush1.msra.mxu0 0.0
      %615 = vmatprep.subr.mxu0 0.0
      %616 = vmatpush1.msra.mxu0 0.0
      %617 = vmatprep.subr.mxu0 0.0
      %618 = vmatpush1.msra.mxu0 0.0
      %619 = vmatprep.subr.mxu0 0.0
      %620 = vmatpush1.msra.mxu0 0.0
      %621 = vmatprep.subr.mxu0 0.0
      %622 = vmatpush1.msra.mxu0 0.0
      %623 = vmatprep.mubr.f32.mxu0 0.0
      %624 = vmatmul.mubr.f32.gmra.mrb[0].mxu0 %v532
      %v625 = vpop.f32.mrb[0].mxu0
      %v626 = vadd.f32 %v528, %v625
      %v627 = vpop.f32.mrb[0].mxu0
      %628 = vmatprep.mubr.f32.mxu0 0.0
      %629 = vmatmul.mubr.f32.gmra.mrb[0].mxu0 %v535
      %v630 = vpop.f32.mrb[0].mxu0
      %v631 = vadd.f32 %v528, %v630
      %v632 = vpop.f32.mrb[0].mxu0
      %633 = vmatprep.mubr.f32.mxu0 0.0
      %634 = vmatmul.mubr.f32.gmra.mrb[0].mxu0 %v538
      %v635 = vpop.f32.mrb[0].mxu0
      %v636 = vadd.f32 %v528, %v635
      %v637 = vpop.f32.mrb[0].mxu0
      %638 = vmatprep.mubr.f32.mxu0 0.0
      %639 = vmatmul.mubr.f32.gmra.mrb[0].mxu0 %v541
      %v640 = vpop.f32.mrb[0].mxu0
      %v641 = vadd.f32 %v528, %v640
      %v642 = vpop.f32.mrb[0].mxu0
      %643 = vmatprep.mubr.f32.mxu0 0.0
      %644 = vmatmul.mubr.f32.gmra.mrb[0].mxu0 %v544
      %v645 = vpop.f32.mrb[0].mxu0
      %v646 = vadd.f32 %v528, %v645
      %v647 = vpop.f32.mrb[0].mxu0
      %648 = vmatprep.mubr.f32.mxu0 0.0
      %649 = vmatmul.mubr.f32.gmra.mrb[0].mxu0 %v547
      %v650 = vpop.f32.mrb[0].mxu0
      %v651 = vadd.f32 %v528, %v650
      %v652 = vpop.f32.mrb[0].mxu0
      %653 = vmatprep.mubr.f32.mxu0 0.0
      %654 = vmatmul.mubr.f32.gmra.mrb[0].mxu0 %v550
      %v655 = vpop.f32.mrb[0].mxu0
      %v656 = vadd.f32 %v528, %v655
      %v657 = vpop.f32.mrb[0].mxu0
      %658 = vmatprep.mubr.f32.mxu0 0.0
      %659 = vmatmul.mubr.f32.gmra.mrb[0].mxu0 %v553
      %v660 = vpop.f32.mrb[0].mxu0
      %v661 = vadd.f32 %v528, %v660
      %v662 = vpop.f32.mrb[0].mxu0
      %663 = vdwg.mxu0
      %v664 = vld [vmem:[%s509] sm:$0xff]
      %v665 = vld [vmem:[%s509 + $0x8] sm:$0xff]
      %v666 = vld [vmem:[%s509 + $0x10] sm:$0xff]
      %v667 = vld [vmem:[%s509 + $0x18] sm:$0xff]
      %v668 = vld [vmem:[%s509 + $0x20] sm:$0xff]
      %v669 = vld [vmem:[%s509 + $0x28] sm:$0xff]
      %v670 = vld [vmem:[%s509 + $0x30] sm:$0xff]
      %v671 = vld [vmem:[%s509 + $0x38] sm:$0xff]
      %v672 = vld [vmem:[%s509 + $0x40] sm:$0xff]
      %v673 = vld [vmem:[%s509 + $0x48] sm:$0xff]
      %v674 = vld [vmem:[%s509 + $0x50] sm:$0xff]
      %v675 = vld [vmem:[%s509 + $0x58] sm:$0xff]
      %v676 = vld [vmem:[%s509 + $0x60] sm:$0xff]
      %v677 = vld [vmem:[%s509 + $0x68] sm:$0xff]
      %v678 = vld [vmem:[%s509 + $0x70] sm:$0xff]
      %v679 = vld [vmem:[%s509 + $0x78] sm:$0xff]
      %v680 = vld [vmem:[%s509 + $0x80] sm:$0xff]
      %v681 = vld [vmem:[%s509 + $0x88] sm:$0xff]
      %v682 = vld [vmem:[%s509 + $0x90] sm:$0xff]
      %v683 = vld [vmem:[%s509 + $0x98] sm:$0xff]
      %v684 = vld [vmem:[%s509 + $0xa0] sm:$0xff]
      %v685 = vld [vmem:[%s509 + $0xa8] sm:$0xff]
      %v686 = vld [vmem:[%s509 + $0xb0] sm:$0xff]
      %v687 = vld [vmem:[%s509 + $0xb8] sm:$0xff]
      %v688 = vld [vmem:[%s509 + $0xc0] sm:$0xff]
      %v689 = vld [vmem:[%s509 + $0xc8] sm:$0xff]
      %v690 = vld [vmem:[%s509 + $0xd0] sm:$0xff]
      %v691 = vld [vmem:[%s509 + $0xd8] sm:$0xff]
      %v692 = vld [vmem:[%s509 + $0xe0] sm:$0xff]
      %v693 = vld [vmem:[%s509 + $0xe8] sm:$0xff]
      %v694 = vld [vmem:[%s509 + $0xf0] sm:$0xff]
      %v695 = vld [vmem:[%s509 + $0xf8] sm:$0xff]
      %v696 = vld [vmem:[%s6] sm:$0xff]
      %v697 = vld [vmem:[%s6 + $0x8] sm:$0xff]
      %v698 = vld [vmem:[%s6 + $0x10] sm:$0xff]
      %v699 = vld [vmem:[%s6 + $0x18] sm:$0xff]
      %v700 = vld [vmem:[%s6 + $0x20] sm:$0xff]
      %v701 = vld [vmem:[%s6 + $0x28] sm:$0xff]
      %v702 = vld [vmem:[%s6 + $0x30] sm:$0xff]
      %v703 = vld [vmem:[%s6 + $0x38] sm:$0xff]
      %v704 = vld [vmem:[%s6 + $0x40] sm:$0xff]
      %v705 = vld [vmem:[%s6 + $0x48] sm:$0xff]
      %v706 = vld [vmem:[%s6 + $0x50] sm:$0xff]
      %v707 = vld [vmem:[%s6 + $0x58] sm:$0xff]
      %v708 = vld [vmem:[%s6 + $0x60] sm:$0xff]
      %v709 = vld [vmem:[%s6 + $0x68] sm:$0xff]
      %v710 = vld [vmem:[%s6 + $0x70] sm:$0xff]
      %v711 = vld [vmem:[%s6 + $0x78] sm:$0xff]
      %712 = vmatprep.subr.mxu0 0.0
      %713 = vmatpush1.msra.mxu0 %v664
      %714 = vmatprep.subr.mxu0 0.0
      %715 = vmatpush1.msra.mxu0 %v665
      %716 = vmatprep.subr.mxu0 0.0
      %717 = vmatpush1.msra.mxu0 %v666
      %718 = vmatprep.subr.mxu0 0.0
      %719 = vmatpush1.msra.mxu0 %v667
      %720 = vmatprep.subr.mxu0 0.0
      %721 = vmatpush1.msra.mxu0 %v668
      %722 = vmatprep.subr.mxu0 0.0
      %723 = vmatpush1.msra.mxu0 %v669
      %724 = vmatprep.subr.mxu0 0.0
      %725 = vmatpush1.msra.mxu0 %v670
      %726 = vmatprep.subr.mxu0 0.0
      %727 = vmatpush1.msra.mxu0 %v671
      %728 = vmatprep.subr.mxu0 0.0
      %729 = vmatpush1.msra.mxu0 %v672
      %730 = vmatprep.subr.mxu0 0.0
      %731 = vmatpush1.msra.mxu0 %v673
      %732 = vmatprep.subr.mxu0 0.0
      %733 = vmatpush1.msra.mxu0 %v674
      %734 = vmatprep.subr.mxu0 0.0
      %735 = vmatpush1.msra.mxu0 %v675
      %736 = vmatprep.subr.mxu0 0.0
      %737 = vmatpush1.msra.mxu0 %v676
      %738 = vmatprep.subr.mxu0 0.0
      %739 = vmatpush1.msra.mxu0 %v677
      %740 = vmatprep.subr.mxu0 0.0
      %741 = vmatpush1.msra.mxu0 %v678
      %742 = vmatprep.subr.mxu0 0.0
      %743 = vmatpush1.msra.mxu0 %v679
      %744 = vmatprep.subr.mxu0 0.0
      %745 = vmatpush1.msra.mxu0 %v680
      %746 = vmatprep.subr.mxu0 0.0
      %747 = vmatpush1.msra.mxu0 %v681
      %748 = vmatprep.subr.mxu0 0.0
      %749 = vmatpush1.msra.mxu0 %v682
      %750 = vmatprep.subr.mxu0 0.0
      %751 = vmatpush1.msra.mxu0 %v683
      %752 = vmatprep.subr.mxu0 0.0
      %753 = vmatpush1.msra.mxu0 %v684
      %754 = vmatprep.subr.mxu0 0.0
      %755 = vmatpush1.msra.mxu0 %v685
      %756 = vmatprep.subr.mxu0 0.0
      %757 = vmatpush1.msra.mxu0 %v686
      %758 = vmatprep.subr.mxu0 0.0
      %759 = vmatpush1.msra.mxu0 %v687
      %760 = vmatprep.subr.mxu0 0.0
      %761 = vmatpush1.msra.mxu0 %v688
      %762 = vmatprep.subr.mxu0 0.0
      %763 = vmatpush1.msra.mxu0 %v689
      %764 = vmatprep.subr.mxu0 0.0
      %765 = vmatpush1.msra.mxu0 %v690
      %766 = vmatprep.subr.mxu0 0.0
      %767 = vmatpush1.msra.mxu0 %v691
      %768 = vmatprep.subr.mxu0 0.0
      %769 = vmatpush1.msra.mxu0 %v692
      %770 = vmatprep.subr.mxu0 0.0
      %771 = vmatpush1.msra.mxu0 %v693
      %772 = vmatprep.subr.mxu0 0.0
      %773 = vmatpush1.msra.mxu0 %v694
      %774 = vmatprep.subr.mxu0 0.0
      %775 = vmatpush1.msra.mxu0 %v695
      %776 = vmatprep.mubr.f32.mxu0 %v697
      %777 = vmatmul.mubr.f32.gmra.mrb[0].mxu0 %v696
      %v778 = vpop.f32.mrb[0].mxu0
      %v779 = vadd.f32 0.0, %v778
      %v780 = vpop.f32.mrb[0].mxu0
      %781 = vmatprep.mubr.f32.mxu0 %v699
      %782 = vmatmul.mubr.f32.gmra.mrb[0].mxu0 %v698
      %v783 = vpop.f32.mrb[0].mxu0
      %v784 = vadd.f32 0.0, %v783
      %v785 = vpop.f32.mrb[0].mxu0
      %786 = vmatprep.mubr.f32.mxu0 %v701
      %787 = vmatmul.mubr.f32.gmra.mrb[0].mxu0 %v700
      %v788 = vpop.f32.mrb[0].mxu0
      %v789 = vadd.f32 0.0, %v788
      %v790 = vpop.f32.mrb[0].mxu0
      %791 = vmatprep.mubr.f32.mxu0 %v703
      %792 = vmatmul.mubr.f32.gmra.mrb[0].mxu0 %v702
      %v793 = vpop.f32.mrb[0].mxu0
      %v794 = vadd.f32 0.0, %v793
      %v795 = vpop.f32.mrb[0].mxu0
      %796 = vmatprep.mubr.f32.mxu0 %v705
      %797 = vmatmul.mubr.f32.gmra.mrb[0].mxu0 %v704
      %v798 = vpop.f32.mrb[0].mxu0
      %v799 = vadd.f32 0.0, %v798
      %v800 = vpop.f32.mrb[0].mxu0
      %801 = vmatprep.mubr.f32.mxu0 %v707
      %802 = vmatmul.mubr.f32.gmra.mrb[0].mxu0 %v706
      %v803 = vpop.f32.mrb[0].mxu0
      %v804 = vadd.f32 0.0, %v803
      %v805 = vpop.f32.mrb[0].mxu0
      %806 = vmatprep.mubr.f32.mxu0 %v709
      %807 = vmatmul.mubr.f32.gmra.mrb[0].mxu0 %v708
      %v808 = vpop.f32.mrb[0].mxu0
      %v809 = vadd.f32 0.0, %v808
      %v810 = vpop.f32.mrb[0].mxu0
      %811 = vmatprep.mubr.f32.mxu0 %v711
      %812 = vmatmul.mubr.f32.gmra.mrb[0].mxu0 %v710
      %v813 = vpop.f32.mrb[0].mxu0
      %v814 = vadd.f32 0.0, %v813
      %v815 = vpop.f32.mrb[0].mxu0
      %816 = vdwg.mxu0
      %v817 = vld [vmem:[%s4] sm:$0xff]
      %v818 = vld [vmem:[%s4 + $0x8] sm:$0xff]
      %v819 = vld [vmem:[%s4 + $0x10] sm:$0xff]
      %v820 = vld [vmem:[%s4 + $0x18] sm:$0xff]
      %s821 = scalar_lea.vmem %s6, 128
      %v822 = vld [vmem:[%s821] sm:$0xff]
      %v823 = vld [vmem:[%s821 + $0x8] sm:$0xff]
      %v824 = vld [vmem:[%s821 + $0x10] sm:$0xff]
      %v825 = vld [vmem:[%s821 + $0x18] sm:$0xff]
      %v826 = vld [vmem:[%s821 + $0x20] sm:$0xff]
      %v827 = vld [vmem:[%s821 + $0x28] sm:$0xff]
      %v828 = vld [vmem:[%s821 + $0x30] sm:$0xff]
      %v829 = vld [vmem:[%s821 + $0x38] sm:$0xff]
      %v830 = vld [vmem:[%s821 + $0x40] sm:$0xff]
      %v831 = vld [vmem:[%s821 + $0x48] sm:$0xff]
      %v832 = vld [vmem:[%s821 + $0x50] sm:$0xff]
      %v833 = vld [vmem:[%s821 + $0x58] sm:$0xff]
      %v834 = vld [vmem:[%s821 + $0x60] sm:$0xff]
      %v835 = vld [vmem:[%s821 + $0x68] sm:$0xff]
      %v836 = vld [vmem:[%s821 + $0x70] sm:$0xff]
      %v837 = vld [vmem:[%s821 + $0x78] sm:$0xff]
      %838 = vmatprep.subr.mxu0 0.0
      %839 = vmatpush1.msra.mxu0 %v664
      %840 = vmatprep.subr.mxu0 0.0
      %841 = vmatpush1.msra.mxu0 %v665
      %842 = vmatprep.subr.mxu0 0.0
      %843 = vmatpush1.msra.mxu0 %v666
      %844 = vmatprep.subr.mxu0 0.0
      %845 = vmatpush1.msra.mxu0 %v667
      %846 = vmatprep.subr.mxu0 0.0
      %847 = vmatpush1.msra.mxu0 %v668
      %848 = vmatprep.subr.mxu0 0.0
      %849 = vmatpush1.msra.mxu0 %v669
      %850 = vmatprep.subr.mxu0 0.0
      %851 = vmatpush1.msra.mxu0 %v670
      %852 = vmatprep.subr.mxu0 0.0
      %853 = vmatpush1.msra.mxu0 %v671
      %854 = vmatprep.subr.mxu0 0.0
      %855 = vmatpush1.msra.mxu0 %v672
      %856 = vmatprep.subr.mxu0 0.0
      %857 = vmatpush1.msra.mxu0 %v673
      %858 = vmatprep.subr.mxu0 0.0
      %859 = vmatpush1.msra.mxu0 %v674
      %860 = vmatprep.subr.mxu0 0.0
      %861 = vmatpush1.msra.mxu0 %v675
      %862 = vmatprep.subr.mxu0 0.0
      %863 = vmatpush1.msra.mxu0 %v676
      %864 = vmatprep.subr.mxu0 0.0
      %865 = vmatpush1.msra.mxu0 %v677
      %866 = vmatprep.subr.mxu0 0.0
      %867 = vmatpush1.msra.mxu0 %v678
      %868 = vmatprep.subr.mxu0 0.0
      %869 = vmatpush1.msra.mxu0 %v679
      %870 = vmatprep.subr.mxu0 0.0
      %871 = vmatpush1.msra.mxu0 %v680
      %872 = vmatprep.subr.mxu0 0.0
      %873 = vmatpush1.msra.mxu0 %v681
      %874 = vmatprep.subr.mxu0 0.0
      %875 = vmatpush1.msra.mxu0 %v682
      %876 = vmatprep.subr.mxu0 0.0
      %877 = vmatpush1.msra.mxu0 %v683
      %878 = vmatprep.subr.mxu0 0.0
      %879 = vmatpush1.msra.mxu0 %v684
      %880 = vmatprep.subr.mxu0 0.0
      %881 = vmatpush1.msra.mxu0 %v685
      %882 = vmatprep.subr.mxu0 0.0
      %883 = vmatpush1.msra.mxu0 %v686
      %884 = vmatprep.subr.mxu0 0.0
      %885 = vmatpush1.msra.mxu0 %v687
      %886 = vmatprep.subr.mxu0 0.0
      %887 = vmatpush1.msra.mxu0 %v688
      %888 = vmatprep.subr.mxu0 0.0
      %889 = vmatpush1.msra.mxu0 %v689
      %890 = vmatprep.subr.mxu0 0.0
      %891 = vmatpush1.msra.mxu0 %v690
      %892 = vmatprep.subr.mxu0 0.0
      %893 = vmatpush1.msra.mxu0 %v691
      %894 = vmatprep.subr.mxu0 0.0
      %895 = vmatpush1.msra.mxu0 %v692
      %896 = vmatprep.subr.mxu0 0.0
      %897 = vmatpush1.msra.mxu0 %v693
      %898 = vmatprep.subr.mxu0 0.0
      %899 = vmatpush1.msra.mxu0 %v694
      %900 = vmatprep.subr.mxu0 0.0
      %901 = vmatpush1.msra.mxu0 %v695
      %902 = vmatprep.mubr.f32.mxu0 %v823
      %903 = vmatmul.mubr.f32.gmra.mrb[0].mxu0 %v822
      %v904 = vpop.f32.mrb[0].mxu0
      %v905 = vadd.f32 0.0, %v904
      %v906 = vpop.f32.mrb[0].mxu0
      %907 = vmatprep.mubr.f32.mxu0 %v825
      %908 = vmatmul.mubr.f32.gmra.mrb[0].mxu0 %v824
      %v909 = vpop.f32.mrb[0].mxu0
      %v910 = vadd.f32 0.0, %v909
      %v911 = vpop.f32.mrb[0].mxu0
      %912 = vmatprep.mubr.f32.mxu0 %v827
      %913 = vmatmul.mubr.f32.gmra.mrb[0].mxu0 %v826
      %v914 = vpop.f32.mrb[0].mxu0
      %v915 = vadd.f32 0.0, %v914
      %v916 = vpop.f32.mrb[0].mxu0
      %917 = vmatprep.mubr.f32.mxu0 %v829
      %918 = vmatmul.mubr.f32.gmra.mrb[0].mxu0 %v828
      %v919 = vpop.f32.mrb[0].mxu0
      %v920 = vadd.f32 0.0, %v919
      %v921 = vpop.f32.mrb[0].mxu0
      %922 = vmatprep.mubr.f32.mxu0 %v831
      %923 = vmatmul.mubr.f32.gmra.mrb[0].mxu0 %v830
      %v924 = vpop.f32.mrb[0].mxu0
      %v925 = vadd.f32 0.0, %v924
      %v926 = vpop.f32.mrb[0].mxu0
      %927 = vmatprep.mubr.f32.mxu0 %v833
      %928 = vmatmul.mubr.f32.gmra.mrb[0].mxu0 %v832
      %v929 = vpop.f32.mrb[0].mxu0
      %v930 = vadd.f32 0.0, %v929
      %v931 = vpop.f32.mrb[0].mxu0
      %932 = vmatprep.mubr.f32.mxu0 %v835
      %933 = vmatmul.mubr.f32.gmra.mrb[0].mxu0 %v834
      %v934 = vpop.f32.mrb[0].mxu0
      %v935 = vadd.f32 0.0, %v934
      %v936 = vpop.f32.mrb[0].mxu0
      %937 = vmatprep.mubr.f32.mxu0 %v837
      %938 = vmatmul.mubr.f32.gmra.mrb[0].mxu0 %v836
      %v939 = vpop.f32.mrb[0].mxu0
      %v940 = vadd.f32 0.0, %v939
      %v941 = vpop.f32.mrb[0].mxu0
      %942 = vdwg.mxu0
      %s943 = scalar_lea.vmem %s4, 32
      %v944 = vld [vmem:[%s943] sm:$0xff]
      %v945 = vld [vmem:[%s943 + $0x8] sm:$0xff]
      %v946 = vld [vmem:[%s943 + $0x10] sm:$0xff]
      %v947 = vld [vmem:[%s943 + $0x18] sm:$0xff]
      %vm948 = vcmask 261120
      %v950 = vsel %vm948, %v905, 0
      %v953 = vsel %vm948, %v910, 0
      %v956 = vsel %vm948, %v915, 0
      %v959 = vsel %vm948, %v920, 0
      %v962 = vsel %vm948, %v925, 0
      %v965 = vsel %vm948, %v930, 0
      %v968 = vsel %vm948, %v935, 0
      %v971 = vsel %vm948, %v940, 0
      %973 = vmatprep.subr.mxu0 0.0
      %974 = vmatpush1.msra.mxu0 %v944
      %975 = vmatprep.subr.mxu0 0.0
      %976 = vmatpush1.msra.mxu0 %v945
      %977 = vmatprep.subr.mxu0 0.0
      %978 = vmatpush1.msra.mxu0 %v946
      %979 = vmatprep.subr.mxu0 0.0
      %980 = vmatpush1.msra.mxu0 %v947
      %981 = vmatprep.subr.mxu0 0.0
      %982 = vmatpush1.msra.mxu0 0.0
      %983 = vmatprep.subr.mxu0 0.0
      %984 = vmatpush1.msra.mxu0 0.0
      %985 = vmatprep.subr.mxu0 0.0
      %986 = vmatpush1.msra.mxu0 0.0
      %987 = vmatprep.subr.mxu0 0.0
      %988 = vmatpush1.msra.mxu0 0.0
      %989 = vmatprep.subr.mxu0 0.0
      %990 = vmatpush1.msra.mxu0 0.0
      %991 = vmatprep.subr.mxu0 0.0
      %992 = vmatpush1.msra.mxu0 0.0
      %993 = vmatprep.subr.mxu0 0.0
      %994 = vmatpush1.msra.mxu0 0.0
      %995 = vmatprep.subr.mxu0 0.0
      %996 = vmatpush1.msra.mxu0 0.0
      %997 = vmatprep.subr.mxu0 0.0
      %998 = vmatpush1.msra.mxu0 0.0
      %999 = vmatprep.subr.mxu0 0.0
      %1000 = vmatpush1.msra.mxu0 0.0
      %1001 = vmatprep.subr.mxu0 0.0
      %1002 = vmatpush1.msra.mxu0 0.0
      %1003 = vmatprep.subr.mxu0 0.0
      %1004 = vmatpush1.msra.mxu0 0.0
      %1005 = vmatprep.subr.mxu0 0.0
      %1006 = vmatpush1.msra.mxu0 0.0
      %1007 = vmatprep.subr.mxu0 0.0
      %1008 = vmatpush1.msra.mxu0 0.0
      %1009 = vmatprep.subr.mxu0 0.0
      %1010 = vmatpush1.msra.mxu0 0.0
      %1011 = vmatprep.subr.mxu0 0.0
      %1012 = vmatpush1.msra.mxu0 0.0
      %1013 = vmatprep.subr.mxu0 0.0
      %1014 = vmatpush1.msra.mxu0 0.0
      %1015 = vmatprep.subr.mxu0 0.0
      %1016 = vmatpush1.msra.mxu0 0.0
      %1017 = vmatprep.subr.mxu0 0.0
      %1018 = vmatpush1.msra.mxu0 0.0
      %1019 = vmatprep.subr.mxu0 0.0
      %1020 = vmatpush1.msra.mxu0 0.0
      %1021 = vmatprep.subr.mxu0 0.0
      %1022 = vmatpush1.msra.mxu0 0.0
      %1023 = vmatprep.subr.mxu0 0.0
      %1024 = vmatpush1.msra.mxu0 0.0
      %1025 = vmatprep.subr.mxu0 0.0
      %1026 = vmatpush1.msra.mxu0 0.0
      %1027 = vmatprep.subr.mxu0 0.0
      %1028 = vmatpush1.msra.mxu0 0.0
      %1029 = vmatprep.subr.mxu0 0.0
      %1030 = vmatpush1.msra.mxu0 0.0
      %1031 = vmatprep.subr.mxu0 0.0
      %1032 = vmatpush1.msra.mxu0 0.0
      %1033 = vmatprep.subr.mxu0 0.0
      %1034 = vmatpush1.msra.mxu0 0.0
      %1035 = vmatprep.subr.mxu0 0.0
      %1036 = vmatpush1.msra.mxu0 0.0
      %1037 = vmatprep.mubr.f32.mxu0 0.0
      %1038 = vmatmul.mubr.f32.gmra.mrb[0].mxu0 %v950
      %v1039 = vpop.f32.mrb[0].mxu0
      %v1040 = vadd.f32 0.0, %v1039
      %v1041 = vpop.f32.mrb[0].mxu0
      %1042 = vmatprep.mubr.f32.mxu0 0.0
      %1043 = vmatmul.mubr.f32.gmra.mrb[0].mxu0 %v953
      %v1044 = vpop.f32.mrb[0].mxu0
      %v1045 = vadd.f32 0.0, %v1044
      %v1046 = vpop.f32.mrb[0].mxu0
      %1047 = vmatprep.mubr.f32.mxu0 0.0
      %1048 = vmatmul.mubr.f32.gmra.mrb[0].mxu0 %v956
      %v1049 = vpop.f32.mrb[0].mxu0
      %v1050 = vadd.f32 0.0, %v1049
      %v1051 = vpop.f32.mrb[0].mxu0
      %1052 = vmatprep.mubr.f32.mxu0 0.0
      %1053 = vmatmul.mubr.f32.gmra.mrb[0].mxu0 %v959
      %v1054 = vpop.f32.mrb[0].mxu0
      %v1055 = vadd.f32 0.0, %v1054
      %v1056 = vpop.f32.mrb[0].mxu0
      %1057 = vmatprep.mubr.f32.mxu0 0.0
      %1058 = vmatmul.mubr.f32.gmra.mrb[0].mxu0 %v962
      %v1059 = vpop.f32.mrb[0].mxu0
      %v1060 = vadd.f32 0.0, %v1059
      %v1061 = vpop.f32.mrb[0].mxu0
      %1062 = vmatprep.mubr.f32.mxu0 0.0
      %1063 = vmatmul.mubr.f32.gmra.mrb[0].mxu0 %v965
      %v1064 = vpop.f32.mrb[0].mxu0
      %v1065 = vadd.f32 0.0, %v1064
      %v1066 = vpop.f32.mrb[0].mxu0
      %1067 = vmatprep.mubr.f32.mxu0 0.0
      %1068 = vmatmul.mubr.f32.gmra.mrb[0].mxu0 %v968
      %v1069 = vpop.f32.mrb[0].mxu0
      %v1070 = vadd.f32 0.0, %v1069
      %v1071 = vpop.f32.mrb[0].mxu0
      %1072 = vmatprep.mubr.f32.mxu0 0.0
      %1073 = vmatmul.mubr.f32.gmra.mrb[0].mxu0 %v971
      %v1074 = vpop.f32.mrb[0].mxu0
      %v1075 = vadd.f32 0.0, %v1074
      %v1076 = vpop.f32.mrb[0].mxu0
      %1077 = vdwg.mxu0
      %v1079 = vsel %vm948, %v779, 0
      %v1082 = vsel %vm948, %v784, 0
      %v1085 = vsel %vm948, %v789, 0
      %v1088 = vsel %vm948, %v794, 0
      %v1091 = vsel %vm948, %v799, 0
      %v1094 = vsel %vm948, %v804, 0
      %v1097 = vsel %vm948, %v809, 0
      %v1100 = vsel %vm948, %v814, 0
      %1102 = vmatprep.subr.mxu0 0.0
      %1103 = vmatpush1.msra.mxu0 %v817
      %1104 = vmatprep.subr.mxu0 0.0
      %1105 = vmatpush1.msra.mxu0 %v818
      %1106 = vmatprep.subr.mxu0 0.0
      %1107 = vmatpush1.msra.mxu0 %v819
      %1108 = vmatprep.subr.mxu0 0.0
      %1109 = vmatpush1.msra.mxu0 %v820
      %1110 = vmatprep.subr.mxu0 0.0
      %1111 = vmatpush1.msra.mxu0 0.0
      %1112 = vmatprep.subr.mxu0 0.0
      %1113 = vmatpush1.msra.mxu0 0.0
      %1114 = vmatprep.subr.mxu0 0.0
      %1115 = vmatpush1.msra.mxu0 0.0
      %1116 = vmatprep.subr.mxu0 0.0
      %1117 = vmatpush1.msra.mxu0 0.0
      %1118 = vmatprep.subr.mxu0 0.0
      %1119 = vmatpush1.msra.mxu0 0.0
      %1120 = vmatprep.subr.mxu0 0.0
      %1121 = vmatpush1.msra.mxu0 0.0
      %1122 = vmatprep.subr.mxu0 0.0
      %1123 = vmatpush1.msra.mxu0 0.0
      %1124 = vmatprep.subr.mxu0 0.0
      %1125 = vmatpush1.msra.mxu0 0.0
      %1126 = vmatprep.subr.mxu0 0.0
      %1127 = vmatpush1.msra.mxu0 0.0
      %1128 = vmatprep.subr.mxu0 0.0
      %1129 = vmatpush1.msra.mxu0 0.0
      %1130 = vmatprep.subr.mxu0 0.0
      %1131 = vmatpush1.msra.mxu0 0.0
      %1132 = vmatprep.subr.mxu0 0.0
      %1133 = vmatpush1.msra.mxu0 0.0
      %1134 = vmatprep.subr.mxu0 0.0
      %1135 = vmatpush1.msra.mxu0 0.0
      %1136 = vmatprep.subr.mxu0 0.0
      %1137 = vmatpush1.msra.mxu0 0.0
      %1138 = vmatprep.subr.mxu0 0.0
      %1139 = vmatpush1.msra.mxu0 0.0
      %1140 = vmatprep.subr.mxu0 0.0
      %1141 = vmatpush1.msra.mxu0 0.0
      %1142 = vmatprep.subr.mxu0 0.0
      %1143 = vmatpush1.msra.mxu0 0.0
      %1144 = vmatprep.subr.mxu0 0.0
      %1145 = vmatpush1.msra.mxu0 0.0
      %1146 = vmatprep.subr.mxu0 0.0
      %1147 = vmatpush1.msra.mxu0 0.0
      %1148 = vmatprep.subr.mxu0 0.0
      %1149 = vmatpush1.msra.mxu0 0.0
      %1150 = vmatprep.subr.mxu0 0.0
      %1151 = vmatpush1.msra.mxu0 0.0
      %1152 = vmatprep.subr.mxu0 0.0
      %1153 = vmatpush1.msra.mxu0 0.0
      %1154 = vmatprep.subr.mxu0 0.0
      %1155 = vmatpush1.msra.mxu0 0.0
      %1156 = vmatprep.subr.mxu0 0.0
      %1157 = vmatpush1.msra.mxu0 0.0
      %1158 = vmatprep.subr.mxu0 0.0
      %1159 = vmatpush1.msra.mxu0 0.0
      %1160 = vmatprep.subr.mxu0 0.0
      %1161 = vmatpush1.msra.mxu0 0.0
      %1162 = vmatprep.subr.mxu0 0.0
      %1163 = vmatpush1.msra.mxu0 0.0
      %1164 = vmatprep.subr.mxu0 0.0
      %1165 = vmatpush1.msra.mxu0 0.0
      %1166 = vmatprep.mubr.f32.mxu0 0.0
      %1167 = vmatmul.mubr.f32.gmra.mrb[0].mxu0 %v1079
      %v1168 = vpop.f32.mrb[0].mxu0
      %v1169 = vadd.f32 %v1040, %v1168
      %v1170 = vpop.f32.mrb[0].mxu0
      %1171 = vmatprep.mubr.f32.mxu0 0.0
      %1172 = vmatmul.mubr.f32.gmra.mrb[0].mxu0 %v1082
      %v1173 = vpop.f32.mrb[0].mxu0
      %v1174 = vadd.f32 %v1045, %v1173
      %v1175 = vpop.f32.mrb[0].mxu0
      %1176 = vmatprep.mubr.f32.mxu0 0.0
      %1177 = vmatmul.mubr.f32.gmra.mrb[0].mxu0 %v1085
      %v1178 = vpop.f32.mrb[0].mxu0
      %v1179 = vadd.f32 %v1050, %v1178
      %v1180 = vpop.f32.mrb[0].mxu0
      %1181 = vmatprep.mubr.f32.mxu0 0.0
      %1182 = vmatmul.mubr.f32.gmra.mrb[0].mxu0 %v1088
      %v1183 = vpop.f32.mrb[0].mxu0
      %v1184 = vadd.f32 %v1055, %v1183
      %v1185 = vpop.f32.mrb[0].mxu0
      %1186 = vmatprep.mubr.f32.mxu0 0.0
      %1187 = vmatmul.mubr.f32.gmra.mrb[0].mxu0 %v1091
      %v1188 = vpop.f32.mrb[0].mxu0
      %v1189 = vadd.f32 %v1060, %v1188
      %v1190 = vpop.f32.mrb[0].mxu0
      %1191 = vmatprep.mubr.f32.mxu0 0.0
      %1192 = vmatmul.mubr.f32.gmra.mrb[0].mxu0 %v1094
      %v1193 = vpop.f32.mrb[0].mxu0
      %v1194 = vadd.f32 %v1065, %v1193
      %v1195 = vpop.f32.mrb[0].mxu0
      %1196 = vmatprep.mubr.f32.mxu0 0.0
      %1197 = vmatmul.mubr.f32.gmra.mrb[0].mxu0 %v1097
      %v1198 = vpop.f32.mrb[0].mxu0
      %v1199 = vadd.f32 %v1070, %v1198
      %v1200 = vpop.f32.mrb[0].mxu0
      %1201 = vmatprep.mubr.f32.mxu0 0.0
      %1202 = vmatmul.mubr.f32.gmra.mrb[0].mxu0 %v1100
      %v1203 = vpop.f32.mrb[0].mxu0
      %v1204 = vadd.f32 %v1075, %v1203
      %v1205 = vpop.f32.mrb[0].mxu0
      %1206 = vdwg.mxu0
      %s1207 = scalar_lea.vmem %s6, 256
      %v1208 = vld [vmem:[%s1207] sm:$0xff]
      %v1209 = vld [vmem:[%s1207 + $0x8] sm:$0xff]
      %v1210 = vld [vmem:[%s1207 + $0x10] sm:$0xff]
      %v1211 = vld [vmem:[%s1207 + $0x18] sm:$0xff]
      %v1212 = vld [vmem:[%s1207 + $0x20] sm:$0xff]
      %v1213 = vld [vmem:[%s1207 + $0x28] sm:$0xff]
      %v1214 = vld [vmem:[%s1207 + $0x30] sm:$0xff]
      %v1215 = vld [vmem:[%s1207 + $0x38] sm:$0xff]
      %v1216 = vld [vmem:[%s1207 + $0x40] sm:$0xff]
      %v1217 = vld [vmem:[%s1207 + $0x48] sm:$0xff]
      %v1218 = vld [vmem:[%s1207 + $0x50] sm:$0xff]
      %v1219 = vld [vmem:[%s1207 + $0x58] sm:$0xff]
      %v1220 = vld [vmem:[%s1207 + $0x60] sm:$0xff]
      %v1221 = vld [vmem:[%s1207 + $0x68] sm:$0xff]
      %v1222 = vld [vmem:[%s1207 + $0x70] sm:$0xff]
      %v1223 = vld [vmem:[%s1207 + $0x78] sm:$0xff]
      %1224 = vmatprep.subr.mxu0 0.0
      %1225 = vmatpush1.msra.mxu0 %v664
      %1226 = vmatprep.subr.mxu0 0.0
      %1227 = vmatpush1.msra.mxu0 %v665
      %1228 = vmatprep.subr.mxu0 0.0
      %1229 = vmatpush1.msra.mxu0 %v666
      %1230 = vmatprep.subr.mxu0 0.0
      %1231 = vmatpush1.msra.mxu0 %v667
      %1232 = vmatprep.subr.mxu0 0.0
      %1233 = vmatpush1.msra.mxu0 %v668
      %1234 = vmatprep.subr.mxu0 0.0
      %1235 = vmatpush1.msra.mxu0 %v669
      %1236 = vmatprep.subr.mxu0 0.0
      %1237 = vmatpush1.msra.mxu0 %v670
      %1238 = vmatprep.subr.mxu0 0.0
      %1239 = vmatpush1.msra.mxu0 %v671
      %1240 = vmatprep.subr.mxu0 0.0
      %1241 = vmatpush1.msra.mxu0 %v672
      %1242 = vmatprep.subr.mxu0 0.0
      %1243 = vmatpush1.msra.mxu0 %v673
      %1244 = vmatprep.subr.mxu0 0.0
      %1245 = vmatpush1.msra.mxu0 %v674
      %1246 = vmatprep.subr.mxu0 0.0
      %1247 = vmatpush1.msra.mxu0 %v675
      %1248 = vmatprep.subr.mxu0 0.0
      %1249 = vmatpush1.msra.mxu0 %v676
      %1250 = vmatprep.subr.mxu0 0.0
      %1251 = vmatpush1.msra.mxu0 %v677
      %1252 = vmatprep.subr.mxu0 0.0
      %1253 = vmatpush1.msra.mxu0 %v678
      %1254 = vmatprep.subr.mxu0 0.0
      %1255 = vmatpush1.msra.mxu0 %v679
      %1256 = vmatprep.subr.mxu0 0.0
      %1257 = vmatpush1.msra.mxu0 %v680
      %1258 = vmatprep.subr.mxu0 0.0
      %1259 = vmatpush1.msra.mxu0 %v681
      %1260 = vmatprep.subr.mxu0 0.0
      %1261 = vmatpush1.msra.mxu0 %v682
      %1262 = vmatprep.subr.mxu0 0.0
      %1263 = vmatpush1.msra.mxu0 %v683
      %1264 = vmatprep.subr.mxu0 0.0
      %1265 = vmatpush1.msra.mxu0 %v684
      %1266 = vmatprep.subr.mxu0 0.0
      %1267 = vmatpush1.msra.mxu0 %v685
      %1268 = vmatprep.subr.mxu0 0.0
      %1269 = vmatpush1.msra.mxu0 %v686
      %1270 = vmatprep.subr.mxu0 0.0
      %1271 = vmatpush1.msra.mxu0 %v687
      %1272 = vmatprep.subr.mxu0 0.0
      %1273 = vmatpush1.msra.mxu0 %v688
      %1274 = vmatprep.subr.mxu0 0.0
      %1275 = vmatpush1.msra.mxu0 %v689
      %1276 = vmatprep.subr.mxu0 0.0
      %1277 = vmatpush1.msra.mxu0 %v690
      %1278 = vmatprep.subr.mxu0 0.0
      %1279 = vmatpush1.msra.mxu0 %v691
      %1280 = vmatprep.subr.mxu0 0.0
      %1281 = vmatpush1.msra.mxu0 %v692
      %1282 = vmatprep.subr.mxu0 0.0
      %1283 = vmatpush1.msra.mxu0 %v693
      %1284 = vmatprep.subr.mxu0 0.0
      %1285 = vmatpush1.msra.mxu0 %v694
      %1286 = vmatprep.subr.mxu0 0.0
      %1287 = vmatpush1.msra.mxu0 %v695
      %1288 = vmatprep.mubr.f32.mxu0 %v1209
      %1289 = vmatmul.mubr.f32.gmra.mrb[0].mxu0 %v1208
      %v1290 = vpop.f32.mrb[0].mxu0
      %v1291 = vadd.f32 0.0, %v1290
      %v1292 = vpop.f32.mrb[0].mxu0
      %1293 = vmatprep.mubr.f32.mxu0 %v1211
      %1294 = vmatmul.mubr.f32.gmra.mrb[0].mxu0 %v1210
      %v1295 = vpop.f32.mrb[0].mxu0
      %v1296 = vadd.f32 0.0, %v1295
      %v1297 = vpop.f32.mrb[0].mxu0
      %1298 = vmatprep.mubr.f32.mxu0 %v1213
      %1299 = vmatmul.mubr.f32.gmra.mrb[0].mxu0 %v1212
      %v1300 = vpop.f32.mrb[0].mxu0
      %v1301 = vadd.f32 0.0, %v1300
      %v1302 = vpop.f32.mrb[0].mxu0
      %1303 = vmatprep.mubr.f32.mxu0 %v1215
      %1304 = vmatmul.mubr.f32.gmra.mrb[0].mxu0 %v1214
      %v1305 = vpop.f32.mrb[0].mxu0
      %v1306 = vadd.f32 0.0, %v1305
      %v1307 = vpop.f32.mrb[0].mxu0
      %1308 = vmatprep.mubr.f32.mxu0 %v1217
      %1309 = vmatmul.mubr.f32.gmra.mrb[0].mxu0 %v1216
      %v1310 = vpop.f32.mrb[0].mxu0
      %v1311 = vadd.f32 0.0, %v1310
      %v1312 = vpop.f32.mrb[0].mxu0
      %1313 = vmatprep.mubr.f32.mxu0 %v1219
      %1314 = vmatmul.mubr.f32.gmra.mrb[0].mxu0 %v1218
      %v1315 = vpop.f32.mrb[0].mxu0
      %v1316 = vadd.f32 0.0, %v1315
      %v1317 = vpop.f32.mrb[0].mxu0
      %1318 = vmatprep.mubr.f32.mxu0 %v1221
      %1319 = vmatmul.mubr.f32.gmra.mrb[0].mxu0 %v1220
      %v1320 = vpop.f32.mrb[0].mxu0
      %v1321 = vadd.f32 0.0, %v1320
      %v1322 = vpop.f32.mrb[0].mxu0
      %1323 = vmatprep.mubr.f32.mxu0 %v1223
      %1324 = vmatmul.mubr.f32.gmra.mrb[0].mxu0 %v1222
      %v1325 = vpop.f32.mrb[0].mxu0
      %v1326 = vadd.f32 0.0, %v1325
      %v1327 = vpop.f32.mrb[0].mxu0
      %1328 = vdwg.mxu0
      %s1329 = scalar_lea.vmem %s4, 64
      %v1330 = vld [vmem:[%s1329] sm:$0xff]
      %v1331 = vld [vmem:[%s1329 + $0x8] sm:$0xff]
      %v1332 = vld [vmem:[%s1329 + $0x10] sm:$0xff]
      %v1333 = vld [vmem:[%s1329 + $0x18] sm:$0xff]
      %v1335 = vsel %vm948, %v1291, 0
      %v1338 = vsel %vm948, %v1296, 0
      %v1341 = vsel %vm948, %v1301, 0
      %v1344 = vsel %vm948, %v1306, 0
      %v1347 = vsel %vm948, %v1311, 0
      %v1350 = vsel %vm948, %v1316, 0
      %v1353 = vsel %vm948, %v1321, 0
      %v1356 = vsel %vm948, %v1326, 0
      %1358 = vmatprep.subr.mxu0 0.0
      %1359 = vmatpush1.msra.mxu0 %v1330
      %1360 = vmatprep.subr.mxu0 0.0
      %1361 = vmatpush1.msra.mxu0 %v1331
      %1362 = vmatprep.subr.mxu0 0.0
      %1363 = vmatpush1.msra.mxu0 %v1332
      %1364 = vmatprep.subr.mxu0 0.0
      %1365 = vmatpush1.msra.mxu0 %v1333
      %1366 = vmatprep.subr.mxu0 0.0
      %1367 = vmatpush1.msra.mxu0 0.0
      %1368 = vmatprep.subr.mxu0 0.0
      %1369 = vmatpush1.msra.mxu0 0.0
      %1370 = vmatprep.subr.mxu0 0.0
      %1371 = vmatpush1.msra.mxu0 0.0
      %1372 = vmatprep.subr.mxu0 0.0
      %1373 = vmatpush1.msra.mxu0 0.0
      %1374 = vmatprep.subr.mxu0 0.0
      %1375 = vmatpush1.msra.mxu0 0.0
      %1376 = vmatprep.subr.mxu0 0.0
      %1377 = vmatpush1.msra.mxu0 0.0
      %1378 = vmatprep.subr.mxu0 0.0
      %1379 = vmatpush1.msra.mxu0 0.0
      %1380 = vmatprep.subr.mxu0 0.0
      %1381 = vmatpush1.msra.mxu0 0.0
      %1382 = vmatprep.subr.mxu0 0.0
      %1383 = vmatpush1.msra.mxu0 0.0
      %1384 = vmatprep.subr.mxu0 0.0
      %1385 = vmatpush1.msra.mxu0 0.0
      %1386 = vmatprep.subr.mxu0 0.0
      %1387 = vmatpush1.msra.mxu0 0.0
      %1388 = vmatprep.subr.mxu0 0.0
      %1389 = vmatpush1.msra.mxu0 0.0
      %1390 = vmatprep.subr.mxu0 0.0
      %1391 = vmatpush1.msra.mxu0 0.0
      %1392 = vmatprep.subr.mxu0 0.0
      %1393 = vmatpush1.msra.mxu0 0.0
      %1394 = vmatprep.subr.mxu0 0.0
      %1395 = vmatpush1.msra.mxu0 0.0
      %1396 = vmatprep.subr.mxu0 0.0
      %1397 = vmatpush1.msra.mxu0 0.0
      %1398 = vmatprep.subr.mxu0 0.0
      %1399 = vmatpush1.msra.mxu0 0.0
      %1400 = vmatprep.subr.mxu0 0.0
      %1401 = vmatpush1.msra.mxu0 0.0
      %1402 = vmatprep.subr.mxu0 0.0
      %1403 = vmatpush1.msra.mxu0 0.0
      %1404 = vmatprep.subr.mxu0 0.0
      %1405 = vmatpush1.msra.mxu0 0.0
      %1406 = vmatprep.subr.mxu0 0.0
      %1407 = vmatpush1.msra.mxu0 0.0
      %1408 = vmatprep.subr.mxu0 0.0
      %1409 = vmatpush1.msra.mxu0 0.0
      %1410 = vmatprep.subr.mxu0 0.0
      %1411 = vmatpush1.msra.mxu0 0.0
      %1412 = vmatprep.subr.mxu0 0.0
      %1413 = vmatpush1.msra.mxu0 0.0
      %1414 = vmatprep.subr.mxu0 0.0
      %1415 = vmatpush1.msra.mxu0 0.0
      %1416 = vmatprep.subr.mxu0 0.0
      %1417 = vmatpush1.msra.mxu0 0.0
      %1418 = vmatprep.subr.mxu0 0.0
      %1419 = vmatpush1.msra.mxu0 0.0
      %1420 = vmatprep.subr.mxu0 0.0
      %1421 = vmatpush1.msra.mxu0 0.0
      %1422 = vmatprep.mubr.f32.mxu0 0.0
      %1423 = vmatmul.mubr.f32.gmra.mrb[0].mxu0 %v1335
      %v1424 = vpop.f32.mrb[0].mxu0
      %v1425 = vadd.f32 0.0, %v1424
      %v1426 = vpop.f32.mrb[0].mxu0
      %1427 = vmatprep.mubr.f32.mxu0 0.0
      %1428 = vmatmul.mubr.f32.gmra.mrb[0].mxu0 %v1338
      %v1429 = vpop.f32.mrb[0].mxu0
      %v1430 = vadd.f32 0.0, %v1429
      %v1431 = vpop.f32.mrb[0].mxu0
      %1432 = vmatprep.mubr.f32.mxu0 0.0
      %1433 = vmatmul.mubr.f32.gmra.mrb[0].mxu0 %v1341
      %v1434 = vpop.f32.mrb[0].mxu0
      %v1435 = vadd.f32 0.0, %v1434
      %v1436 = vpop.f32.mrb[0].mxu0
      %1437 = vmatprep.mubr.f32.mxu0 0.0
      %1438 = vmatmul.mubr.f32.gmra.mrb[0].mxu0 %v1344
      %v1439 = vpop.f32.mrb[0].mxu0
      %v1440 = vadd.f32 0.0, %v1439
      %v1441 = vpop.f32.mrb[0].mxu0
      %1442 = vmatprep.mubr.f32.mxu0 0.0
      %1443 = vmatmul.mubr.f32.gmra.mrb[0].mxu0 %v1347
      %v1444 = vpop.f32.mrb[0].mxu0
      %v1445 = vadd.f32 0.0, %v1444
      %v1446 = vpop.f32.mrb[0].mxu0
      %1447 = vmatprep.mubr.f32.mxu0 0.0
      %1448 = vmatmul.mubr.f32.gmra.mrb[0].mxu0 %v1350
      %v1449 = vpop.f32.mrb[0].mxu0
      %v1450 = vadd.f32 0.0, %v1449
      %v1451 = vpop.f32.mrb[0].mxu0
      %1452 = vmatprep.mubr.f32.mxu0 0.0
      %1453 = vmatmul.mubr.f32.gmra.mrb[0].mxu0 %v1353
      %v1454 = vpop.f32.mrb[0].mxu0
      %v1455 = vadd.f32 0.0, %v1454
      %v1456 = vpop.f32.mrb[0].mxu0
      %1457 = vmatprep.mubr.f32.mxu0 0.0
      %1458 = vmatmul.mubr.f32.gmra.mrb[0].mxu0 %v1356
      %v1459 = vpop.f32.mrb[0].mxu0
      %v1460 = vadd.f32 0.0, %v1459
      %v1461 = vpop.f32.mrb[0].mxu0
      %1462 = vdwg.mxu0
      %v1463 = vadd.f32 %v1169, %v1425
      %v1464 = vadd.f32 %v1174, %v1430
      %v1465 = vadd.f32 %v1179, %v1435
      %v1466 = vadd.f32 %v1184, %v1440
      %v1467 = vadd.f32 %v1189, %v1445
      %v1468 = vadd.f32 %v1194, %v1450
      %v1469 = vadd.f32 %v1199, %v1455
      %v1470 = vadd.f32 %v1204, %v1460
      %s1471 = scalar_lea.vmem %s6, 384
      %v1472 = vld [vmem:[%s1471] sm:$0xff]
      %v1473 = vld [vmem:[%s1471 + $0x8] sm:$0xff]
      %v1474 = vld [vmem:[%s1471 + $0x10] sm:$0xff]
      %v1475 = vld [vmem:[%s1471 + $0x18] sm:$0xff]
      %v1476 = vld [vmem:[%s1471 + $0x20] sm:$0xff]
      %v1477 = vld [vmem:[%s1471 + $0x28] sm:$0xff]
      %v1478 = vld [vmem:[%s1471 + $0x30] sm:$0xff]
      %v1479 = vld [vmem:[%s1471 + $0x38] sm:$0xff]
      %v1480 = vld [vmem:[%s1471 + $0x40] sm:$0xff]
      %v1481 = vld [vmem:[%s1471 + $0x48] sm:$0xff]
      %v1482 = vld [vmem:[%s1471 + $0x50] sm:$0xff]
      %v1483 = vld [vmem:[%s1471 + $0x58] sm:$0xff]
      %v1484 = vld [vmem:[%s1471 + $0x60] sm:$0xff]
      %v1485 = vld [vmem:[%s1471 + $0x68] sm:$0xff]
      %v1486 = vld [vmem:[%s1471 + $0x70] sm:$0xff]
      %v1487 = vld [vmem:[%s1471 + $0x78] sm:$0xff]
      %1488 = vmatprep.subr.mxu0 0.0
      %1489 = vmatpush1.msra.mxu0 %v664
      %1490 = vmatprep.subr.mxu0 0.0
      %1491 = vmatpush1.msra.mxu0 %v665
      %1492 = vmatprep.subr.mxu0 0.0
      %1493 = vmatpush1.msra.mxu0 %v666
      %1494 = vmatprep.subr.mxu0 0.0
      %1495 = vmatpush1.msra.mxu0 %v667
      %1496 = vmatprep.subr.mxu0 0.0
      %1497 = vmatpush1.msra.mxu0 %v668
      %1498 = vmatprep.subr.mxu0 0.0
      %1499 = vmatpush1.msra.mxu0 %v669
      %1500 = vmatprep.subr.mxu0 0.0
      %1501 = vmatpush1.msra.mxu0 %v670
      %1502 = vmatprep.subr.mxu0 0.0
      %1503 = vmatpush1.msra.mxu0 %v671
      %1504 = vmatprep.subr.mxu0 0.0
      %1505 = vmatpush1.msra.mxu0 %v672
      %1506 = vmatprep.subr.mxu0 0.0
      %1507 = vmatpush1.msra.mxu0 %v673
      %1508 = vmatprep.subr.mxu0 0.0
      %1509 = vmatpush1.msra.mxu0 %v674
      %1510 = vmatprep.subr.mxu0 0.0
      %1511 = vmatpush1.msra.mxu0 %v675
      %1512 = vmatprep.subr.mxu0 0.0
      %1513 = vmatpush1.msra.mxu0 %v676
      %1514 = vmatprep.subr.mxu0 0.0
      %1515 = vmatpush1.msra.mxu0 %v677
      %1516 = vmatprep.subr.mxu0 0.0
      %1517 = vmatpush1.msra.mxu0 %v678
      %1518 = vmatprep.subr.mxu0 0.0
      %1519 = vmatpush1.msra.mxu0 %v679
      %1520 = vmatprep.subr.mxu0 0.0
      %1521 = vmatpush1.msra.mxu0 %v680
      %1522 = vmatprep.subr.mxu0 0.0
      %1523 = vmatpush1.msra.mxu0 %v681
      %1524 = vmatprep.subr.mxu0 0.0
      %1525 = vmatpush1.msra.mxu0 %v682
      %1526 = vmatprep.subr.mxu0 0.0
      %1527 = vmatpush1.msra.mxu0 %v683
      %1528 = vmatprep.subr.mxu0 0.0
      %1529 = vmatpush1.msra.mxu0 %v684
      %1530 = vmatprep.subr.mxu0 0.0
      %1531 = vmatpush1.msra.mxu0 %v685
      %1532 = vmatprep.subr.mxu0 0.0
      %1533 = vmatpush1.msra.mxu0 %v686
      %1534 = vmatprep.subr.mxu0 0.0
      %1535 = vmatpush1.msra.mxu0 %v687
      %1536 = vmatprep.subr.mxu0 0.0
      %1537 = vmatpush1.msra.mxu0 %v688
      %1538 = vmatprep.subr.mxu0 0.0
      %1539 = vmatpush1.msra.mxu0 %v689
      %1540 = vmatprep.subr.mxu0 0.0
      %1541 = vmatpush1.msra.mxu0 %v690
      %1542 = vmatprep.subr.mxu0 0.0
      %1543 = vmatpush1.msra.mxu0 %v691
      %1544 = vmatprep.subr.mxu0 0.0
      %1545 = vmatpush1.msra.mxu0 %v692
      %1546 = vmatprep.subr.mxu0 0.0
      %1547 = vmatpush1.msra.mxu0 %v693
      %1548 = vmatprep.subr.mxu0 0.0
      %1549 = vmatpush1.msra.mxu0 %v694
      %1550 = vmatprep.subr.mxu0 0.0
      %1551 = vmatpush1.msra.mxu0 %v695
      %1552 = vmatprep.mubr.f32.mxu0 %v1473
      %1553 = vmatmul.mubr.f32.gmra.mrb[0].mxu0 %v1472
      %v1554 = vpop.f32.mrb[0].mxu0
      %v1555 = vadd.f32 0.0, %v1554
      %v1556 = vpop.f32.mrb[0].mxu0
      %1557 = vmatprep.mubr.f32.mxu0 %v1475
      %1558 = vmatmul.mubr.f32.gmra.mrb[0].mxu0 %v1474
      %v1559 = vpop.f32.mrb[0].mxu0
      %v1560 = vadd.f32 0.0, %v1559
      %v1561 = vpop.f32.mrb[0].mxu0
      %1562 = vmatprep.mubr.f32.mxu0 %v1477
      %1563 = vmatmul.mubr.f32.gmra.mrb[0].mxu0 %v1476
      %v1564 = vpop.f32.mrb[0].mxu0
      %v1565 = vadd.f32 0.0, %v1564
      %v1566 = vpop.f32.mrb[0].mxu0
      %1567 = vmatprep.mubr.f32.mxu0 %v1479
      %1568 = vmatmul.mubr.f32.gmra.mrb[0].mxu0 %v1478
      %v1569 = vpop.f32.mrb[0].mxu0
      %v1570 = vadd.f32 0.0, %v1569
      %v1571 = vpop.f32.mrb[0].mxu0
      %1572 = vmatprep.mubr.f32.mxu0 %v1481
      %1573 = vmatmul.mubr.f32.gmra.mrb[0].mxu0 %v1480
      %v1574 = vpop.f32.mrb[0].mxu0
      %v1575 = vadd.f32 0.0, %v1574
      %v1576 = vpop.f32.mrb[0].mxu0
      %1577 = vmatprep.mubr.f32.mxu0 %v1483
      %1578 = vmatmul.mubr.f32.gmra.mrb[0].mxu0 %v1482
      %v1579 = vpop.f32.mrb[0].mxu0
      %v1580 = vadd.f32 0.0, %v1579
      %v1581 = vpop.f32.mrb[0].mxu0
      %1582 = vmatprep.mubr.f32.mxu0 %v1485
      %1583 = vmatmul.mubr.f32.gmra.mrb[0].mxu0 %v1484
      %v1584 = vpop.f32.mrb[0].mxu0
      %v1585 = vadd.f32 0.0, %v1584
      %v1586 = vpop.f32.mrb[0].mxu0
      %1587 = vmatprep.mubr.f32.mxu0 %v1487
      %1588 = vmatmul.mubr.f32.gmra.mrb[0].mxu0 %v1486
      %v1589 = vpop.f32.mrb[0].mxu0
      %v1590 = vadd.f32 0.0, %v1589
      %v1591 = vpop.f32.mrb[0].mxu0
      %1592 = vdwg.mxu0
      %s1593 = scalar_lea.vmem %s4, 96
      %v1594 = vld [vmem:[%s1593] sm:$0xff]
      %v1595 = vld [vmem:[%s1593 + $0x8] sm:$0xff]
      %v1596 = vld [vmem:[%s1593 + $0x10] sm:$0xff]
      %v1597 = vld [vmem:[%s1593 + $0x18] sm:$0xff]
      %v1599 = vsel %vm948, %v1555, 0
      %v1602 = vsel %vm948, %v1560, 0
      %v1605 = vsel %vm948, %v1565, 0
      %v1608 = vsel %vm948, %v1570, 0
      %v1611 = vsel %vm948, %v1575, 0
      %v1614 = vsel %vm948, %v1580, 0
      %v1617 = vsel %vm948, %v1585, 0
      %v1620 = vsel %vm948, %v1590, 0
      %1622 = vmatprep.subr.mxu0 0.0
      %1623 = vmatpush1.msra.mxu0 %v1594
      %1624 = vmatprep.subr.mxu0 0.0
      %1625 = vmatpush1.msra.mxu0 %v1595
      %1626 = vmatprep.subr.mxu0 0.0
      %1627 = vmatpush1.msra.mxu0 %v1596
      %1628 = vmatprep.subr.mxu0 0.0
      %1629 = vmatpush1.msra.mxu0 %v1597
      %1630 = vmatprep.subr.mxu0 0.0
      %1631 = vmatpush1.msra.mxu0 0.0
      %1632 = vmatprep.subr.mxu0 0.0
      %1633 = vmatpush1.msra.mxu0 0.0
      %1634 = vmatprep.subr.mxu0 0.0
      %1635 = vmatpush1.msra.mxu0 0.0
      %1636 = vmatprep.subr.mxu0 0.0
      %1637 = vmatpush1.msra.mxu0 0.0
      %1638 = vmatprep.subr.mxu0 0.0
      %1639 = vmatpush1.msra.mxu0 0.0
      %1640 = vmatprep.subr.mxu0 0.0
      %1641 = vmatpush1.msra.mxu0 0.0
      %1642 = vmatprep.subr.mxu0 0.0
      %1643 = vmatpush1.msra.mxu0 0.0
      %1644 = vmatprep.subr.mxu0 0.0
      %1645 = vmatpush1.msra.mxu0 0.0
      %1646 = vmatprep.subr.mxu0 0.0
      %1647 = vmatpush1.msra.mxu0 0.0
      %1648 = vmatprep.subr.mxu0 0.0
      %1649 = vmatpush1.msra.mxu0 0.0
      %1650 = vmatprep.subr.mxu0 0.0
      %1651 = vmatpush1.msra.mxu0 0.0
      %1652 = vmatprep.subr.mxu0 0.0
      %1653 = vmatpush1.msra.mxu0 0.0
      %1654 = vmatprep.subr.mxu0 0.0
      %1655 = vmatpush1.msra.mxu0 0.0
      %1656 = vmatprep.subr.mxu0 0.0
      %1657 = vmatpush1.msra.mxu0 0.0
      %1658 = vmatprep.subr.mxu0 0.0
      %1659 = vmatpush1.msra.mxu0 0.0
      %1660 = vmatprep.subr.mxu0 0.0
      %1661 = vmatpush1.msra.mxu0 0.0
      %1662 = vmatprep.subr.mxu0 0.0
      %1663 = vmatpush1.msra.mxu0 0.0
      %1664 = vmatprep.subr.mxu0 0.0
      %1665 = vmatpush1.msra.mxu0 0.0
      %1666 = vmatprep.subr.mxu0 0.0
      %1667 = vmatpush1.msra.mxu0 0.0
      %1668 = vmatprep.subr.mxu0 0.0
      %1669 = vmatpush1.msra.mxu0 0.0
      %1670 = vmatprep.subr.mxu0 0.0
      %1671 = vmatpush1.msra.mxu0 0.0
      %1672 = vmatprep.subr.mxu0 0.0
      %1673 = vmatpush1.msra.mxu0 0.0
      %1674 = vmatprep.subr.mxu0 0.0
      %1675 = vmatpush1.msra.mxu0 0.0
      %1676 = vmatprep.subr.mxu0 0.0
      %1677 = vmatpush1.msra.mxu0 0.0
      %1678 = vmatprep.subr.mxu0 0.0
      %1679 = vmatpush1.msra.mxu0 0.0
      %1680 = vmatprep.subr.mxu0 0.0
      %1681 = vmatpush1.msra.mxu0 0.0
      %1682 = vmatprep.subr.mxu0 0.0
      %1683 = vmatpush1.msra.mxu0 0.0
      %1684 = vmatprep.subr.mxu0 0.0
      %1685 = vmatpush1.msra.mxu0 0.0
      %1686 = vmatprep.mubr.f32.mxu0 0.0
      %1687 = vmatmul.mubr.f32.gmra.mrb[0].mxu0 %v1599
      %v1688 = vpop.f32.mrb[0].mxu0
      %v1689 = vadd.f32 0.0, %v1688
      %v1690 = vpop.f32.mrb[0].mxu0
      %1691 = vmatprep.mubr.f32.mxu0 0.0
      %1692 = vmatmul.mubr.f32.gmra.mrb[0].mxu0 %v1602
      %v1693 = vpop.f32.mrb[0].mxu0
      %v1694 = vadd.f32 0.0, %v1693
      %v1695 = vpop.f32.mrb[0].mxu0
      %1696 = vmatprep.mubr.f32.mxu0 0.0
      %1697 = vmatmul.mubr.f32.gmra.mrb[0].mxu0 %v1605
      %v1698 = vpop.f32.mrb[0].mxu0
      %v1699 = vadd.f32 0.0, %v1698
      %v1700 = vpop.f32.mrb[0].mxu0
      %1701 = vmatprep.mubr.f32.mxu0 0.0
      %1702 = vmatmul.mubr.f32.gmra.mrb[0].mxu0 %v1608
      %v1703 = vpop.f32.mrb[0].mxu0
      %v1704 = vadd.f32 0.0, %v1703
      %v1705 = vpop.f32.mrb[0].mxu0
      %1706 = vmatprep.mubr.f32.mxu0 0.0
      %1707 = vmatmul.mubr.f32.gmra.mrb[0].mxu0 %v1611
      %v1708 = vpop.f32.mrb[0].mxu0
      %v1709 = vadd.f32 0.0, %v1708
      %v1710 = vpop.f32.mrb[0].mxu0
      %1711 = vmatprep.mubr.f32.mxu0 0.0
      %1712 = vmatmul.mubr.f32.gmra.mrb[0].mxu0 %v1614
      %v1713 = vpop.f32.mrb[0].mxu0
      %v1714 = vadd.f32 0.0, %v1713
      %v1715 = vpop.f32.mrb[0].mxu0
      %1716 = vmatprep.mubr.f32.mxu0 0.0
      %1717 = vmatmul.mubr.f32.gmra.mrb[0].mxu0 %v1617
      %v1718 = vpop.f32.mrb[0].mxu0
      %v1719 = vadd.f32 0.0, %v1718
      %v1720 = vpop.f32.mrb[0].mxu0
      %1721 = vmatprep.mubr.f32.mxu0 0.0
      %1722 = vmatmul.mubr.f32.gmra.mrb[0].mxu0 %v1620
      %v1723 = vpop.f32.mrb[0].mxu0
      %v1724 = vadd.f32 0.0, %v1723
      %v1725 = vpop.f32.mrb[0].mxu0
      %1726 = vdwg.mxu0
      %v1727 = vadd.f32 %v1463, %v1689
      %v1728 = vadd.f32 %v1464, %v1694
      %v1729 = vadd.f32 %v1465, %v1699
      %v1730 = vadd.f32 %v1466, %v1704
      %v1731 = vadd.f32 %v1467, %v1709
      %v1732 = vadd.f32 %v1468, %v1714
      %v1733 = vadd.f32 %v1469, %v1719
      %v1734 = vadd.f32 %v1470, %v1724
      %s1735 = scalar_lea.vmem %s6, 512
      %v1736 = vld [vmem:[%s1735] sm:$0xff]
      %v1737 = vld [vmem:[%s1735 + $0x8] sm:$0xff]
      %v1738 = vld [vmem:[%s1735 + $0x10] sm:$0xff]
      %v1739 = vld [vmem:[%s1735 + $0x18] sm:$0xff]
      %v1740 = vld [vmem:[%s1735 + $0x20] sm:$0xff]
      %v1741 = vld [vmem:[%s1735 + $0x28] sm:$0xff]
      %v1742 = vld [vmem:[%s1735 + $0x30] sm:$0xff]
      %v1743 = vld [vmem:[%s1735 + $0x38] sm:$0xff]
      %v1744 = vld [vmem:[%s1735 + $0x40] sm:$0xff]
      %v1745 = vld [vmem:[%s1735 + $0x48] sm:$0xff]
      %v1746 = vld [vmem:[%s1735 + $0x50] sm:$0xff]
      %v1747 = vld [vmem:[%s1735 + $0x58] sm:$0xff]
      %v1748 = vld [vmem:[%s1735 + $0x60] sm:$0xff]
      %v1749 = vld [vmem:[%s1735 + $0x68] sm:$0xff]
      %v1750 = vld [vmem:[%s1735 + $0x70] sm:$0xff]
      %v1751 = vld [vmem:[%s1735 + $0x78] sm:$0xff]
      %1752 = vmatprep.subr.mxu0 0.0
      %1753 = vmatpush1.msra.mxu0 %v664
      %1754 = vmatprep.subr.mxu0 0.0
      %1755 = vmatpush1.msra.mxu0 %v665
      %1756 = vmatprep.subr.mxu0 0.0
      %1757 = vmatpush1.msra.mxu0 %v666
      %1758 = vmatprep.subr.mxu0 0.0
      %1759 = vmatpush1.msra.mxu0 %v667
      %1760 = vmatprep.subr.mxu0 0.0
      %1761 = vmatpush1.msra.mxu0 %v668
      %1762 = vmatprep.subr.mxu0 0.0
      %1763 = vmatpush1.msra.mxu0 %v669
      %1764 = vmatprep.subr.mxu0 0.0
      %1765 = vmatpush1.msra.mxu0 %v670
      %1766 = vmatprep.subr.mxu0 0.0
      %1767 = vmatpush1.msra.mxu0 %v671
      %1768 = vmatprep.subr.mxu0 0.0
      %1769 = vmatpush1.msra.mxu0 %v672
      %1770 = vmatprep.subr.mxu0 0.0
      %1771 = vmatpush1.msra.mxu0 %v673
      %1772 = vmatprep.subr.mxu0 0.0
      %1773 = vmatpush1.msra.mxu0 %v674
      %1774 = vmatprep.subr.mxu0 0.0
      %1775 = vmatpush1.msra.mxu0 %v675
      %1776 = vmatprep.subr.mxu0 0.0
      %1777 = vmatpush1.msra.mxu0 %v676
      %1778 = vmatprep.subr.mxu0 0.0
      %1779 = vmatpush1.msra.mxu0 %v677
      %1780 = vmatprep.subr.mxu0 0.0
      %1781 = vmatpush1.msra.mxu0 %v678
      %1782 = vmatprep.subr.mxu0 0.0
      %1783 = vmatpush1.msra.mxu0 %v679
      %1784 = vmatprep.subr.mxu0 0.0
      %1785 = vmatpush1.msra.mxu0 %v680
      %1786 = vmatprep.subr.mxu0 0.0
      %1787 = vmatpush1.msra.mxu0 %v681
      %1788 = vmatprep.subr.mxu0 0.0
      %1789 = vmatpush1.msra.mxu0 %v682
      %1790 = vmatprep.subr.mxu0 0.0
      %1791 = vmatpush1.msra.mxu0 %v683
      %1792 = vmatprep.subr.mxu0 0.0
      %1793 = vmatpush1.msra.mxu0 %v684
      %1794 = vmatprep.subr.mxu0 0.0
      %1795 = vmatpush1.msra.mxu0 %v685
      %1796 = vmatprep.subr.mxu0 0.0
      %1797 = vmatpush1.msra.mxu0 %v686
      %1798 = vmatprep.subr.mxu0 0.0
      %1799 = vmatpush1.msra.mxu0 %v687
      %1800 = vmatprep.subr.mxu0 0.0
      %1801 = vmatpush1.msra.mxu0 %v688
      %1802 = vmatprep.subr.mxu0 0.0
      %1803 = vmatpush1.msra.mxu0 %v689
      %1804 = vmatprep.subr.mxu0 0.0
      %1805 = vmatpush1.msra.mxu0 %v690
      %1806 = vmatprep.subr.mxu0 0.0
      %1807 = vmatpush1.msra.mxu0 %v691
      %1808 = vmatprep.subr.mxu0 0.0
      %1809 = vmatpush1.msra.mxu0 %v692
      %1810 = vmatprep.subr.mxu0 0.0
      %1811 = vmatpush1.msra.mxu0 %v693
      %1812 = vmatprep.subr.mxu0 0.0
      %1813 = vmatpush1.msra.mxu0 %v694
      %1814 = vmatprep.subr.mxu0 0.0
      %1815 = vmatpush1.msra.mxu0 %v695
      %1816 = vmatprep.mubr.f32.mxu0 %v1737
      %1817 = vmatmul.mubr.f32.gmra.mrb[0].mxu0 %v1736
      %v1818 = vpop.f32.mrb[0].mxu0
      %v1819 = vadd.f32 0.0, %v1818
      %v1820 = vpop.f32.mrb[0].mxu0
      %1821 = vmatprep.mubr.f32.mxu0 %v1739
      %1822 = vmatmul.mubr.f32.gmra.mrb[0].mxu0 %v1738
      %v1823 = vpop.f32.mrb[0].mxu0
      %v1824 = vadd.f32 0.0, %v1823
      %v1825 = vpop.f32.mrb[0].mxu0
      %1826 = vmatprep.mubr.f32.mxu0 %v1741
      %1827 = vmatmul.mubr.f32.gmra.mrb[0].mxu0 %v1740
      %v1828 = vpop.f32.mrb[0].mxu0
      %v1829 = vadd.f32 0.0, %v1828
      %v1830 = vpop.f32.mrb[0].mxu0
      %1831 = vmatprep.mubr.f32.mxu0 %v1743
      %1832 = vmatmul.mubr.f32.gmra.mrb[0].mxu0 %v1742
      %v1833 = vpop.f32.mrb[0].mxu0
      %v1834 = vadd.f32 0.0, %v1833
      %v1835 = vpop.f32.mrb[0].mxu0
      %1836 = vmatprep.mubr.f32.mxu0 %v1745
      %1837 = vmatmul.mubr.f32.gmra.mrb[0].mxu0 %v1744
      %v1838 = vpop.f32.mrb[0].mxu0
      %v1839 = vadd.f32 0.0, %v1838
      %v1840 = vpop.f32.mrb[0].mxu0
      %1841 = vmatprep.mubr.f32.mxu0 %v1747
      %1842 = vmatmul.mubr.f32.gmra.mrb[0].mxu0 %v1746
      %v1843 = vpop.f32.mrb[0].mxu0
      %v1844 = vadd.f32 0.0, %v1843
      %v1845 = vpop.f32.mrb[0].mxu0
      %1846 = vmatprep.mubr.f32.mxu0 %v1749
      %1847 = vmatmul.mubr.f32.gmra.mrb[0].mxu0 %v1748
      %v1848 = vpop.f32.mrb[0].mxu0
      %v1849 = vadd.f32 0.0, %v1848
      %v1850 = vpop.f32.mrb[0].mxu0
      %1851 = vmatprep.mubr.f32.mxu0 %v1751
      %1852 = vmatmul.mubr.f32.gmra.mrb[0].mxu0 %v1750
      %v1853 = vpop.f32.mrb[0].mxu0
      %v1854 = vadd.f32 0.0, %v1853
      %v1855 = vpop.f32.mrb[0].mxu0
      %1856 = vdwg.mxu0
      %s1857 = scalar_lea.vmem %s4, 128
      %v1858 = vld [vmem:[%s1857] sm:$0xff]
      %v1859 = vld [vmem:[%s1857 + $0x8] sm:$0xff]
      %v1860 = vld [vmem:[%s1857 + $0x10] sm:$0xff]
      %v1861 = vld [vmem:[%s1857 + $0x18] sm:$0xff]
      %v1863 = vsel %vm948, %v1819, 0
      %v1866 = vsel %vm948, %v1824, 0
      %v1869 = vsel %vm948, %v1829, 0
      %v1872 = vsel %vm948, %v1834, 0
      %v1875 = vsel %vm948, %v1839, 0
      %v1878 = vsel %vm948, %v1844, 0
      %v1881 = vsel %vm948, %v1849, 0
      %v1884 = vsel %vm948, %v1854, 0
      %1886 = vmatprep.subr.mxu0 0.0
      %1887 = vmatpush1.msra.mxu0 %v1858
      %1888 = vmatprep.subr.mxu0 0.0
      %1889 = vmatpush1.msra.mxu0 %v1859
      %1890 = vmatprep.subr.mxu0 0.0
      %1891 = vmatpush1.msra.mxu0 %v1860
      %1892 = vmatprep.subr.mxu0 0.0
      %1893 = vmatpush1.msra.mxu0 %v1861
      %1894 = vmatprep.subr.mxu0 0.0
      %1895 = vmatpush1.msra.mxu0 0.0
      %1896 = vmatprep.subr.mxu0 0.0
      %1897 = vmatpush1.msra.mxu0 0.0
      %1898 = vmatprep.subr.mxu0 0.0
      %1899 = vmatpush1.msra.mxu0 0.0
      %1900 = vmatprep.subr.mxu0 0.0
      %1901 = vmatpush1.msra.mxu0 0.0
      %1902 = vmatprep.subr.mxu0 0.0
      %1903 = vmatpush1.msra.mxu0 0.0
      %1904 = vmatprep.subr.mxu0 0.0
      %1905 = vmatpush1.msra.mxu0 0.0
      %1906 = vmatprep.subr.mxu0 0.0
      %1907 = vmatpush1.msra.mxu0 0.0
      %1908 = vmatprep.subr.mxu0 0.0
      %1909 = vmatpush1.msra.mxu0 0.0
      %1910 = vmatprep.subr.mxu0 0.0
      %1911 = vmatpush1.msra.mxu0 0.0
      %1912 = vmatprep.subr.mxu0 0.0
      %1913 = vmatpush1.msra.mxu0 0.0
      %1914 = vmatprep.subr.mxu0 0.0
      %1915 = vmatpush1.msra.mxu0 0.0
      %1916 = vmatprep.subr.mxu0 0.0
      %1917 = vmatpush1.msra.mxu0 0.0
      %1918 = vmatprep.subr.mxu0 0.0
      %1919 = vmatpush1.msra.mxu0 0.0
      %1920 = vmatprep.subr.mxu0 0.0
      %1921 = vmatpush1.msra.mxu0 0.0
      %1922 = vmatprep.subr.mxu0 0.0
      %1923 = vmatpush1.msra.mxu0 0.0
      %1924 = vmatprep.subr.mxu0 0.0
      %1925 = vmatpush1.msra.mxu0 0.0
      %1926 = vmatprep.subr.mxu0 0.0
      %1927 = vmatpush1.msra.mxu0 0.0
      %1928 = vmatprep.subr.mxu0 0.0
      %1929 = vmatpush1.msra.mxu0 0.0
      %1930 = vmatprep.subr.mxu0 0.0
      %1931 = vmatpush1.msra.mxu0 0.0
      %1932 = vmatprep.subr.mxu0 0.0
      %1933 = vmatpush1.msra.mxu0 0.0
      %1934 = vmatprep.subr.mxu0 0.0
      %1935 = vmatpush1.msra.mxu0 0.0
      %1936 = vmatprep.subr.mxu0 0.0
      %1937 = vmatpush1.msra.mxu0 0.0
      %1938 = vmatprep.subr.mxu0 0.0
      %1939 = vmatpush1.msra.mxu0 0.0
      %1940 = vmatprep.subr.mxu0 0.0
      %1941 = vmatpush1.msra.mxu0 0.0
      %1942 = vmatprep.subr.mxu0 0.0
      %1943 = vmatpush1.msra.mxu0 0.0
      %1944 = vmatprep.subr.mxu0 0.0
      %1945 = vmatpush1.msra.mxu0 0.0
      %1946 = vmatprep.subr.mxu0 0.0
      %1947 = vmatpush1.msra.mxu0 0.0
      %1948 = vmatprep.subr.mxu0 0.0
      %1949 = vmatpush1.msra.mxu0 0.0
      %1950 = vmatprep.mubr.f32.mxu0 0.0
      %1951 = vmatmul.mubr.f32.gmra.mrb[0].mxu0 %v1863
      %v1952 = vpop.f32.mrb[0].mxu0
      %v1953 = vadd.f32 0.0, %v1952
      %v1954 = vpop.f32.mrb[0].mxu0
      %1955 = vmatprep.mubr.f32.mxu0 0.0
      %1956 = vmatmul.mubr.f32.gmra.mrb[0].mxu0 %v1866
      %v1957 = vpop.f32.mrb[0].mxu0
      %v1958 = vadd.f32 0.0, %v1957
      %v1959 = vpop.f32.mrb[0].mxu0
      %1960 = vmatprep.mubr.f32.mxu0 0.0
      %1961 = vmatmul.mubr.f32.gmra.mrb[0].mxu0 %v1869
      %v1962 = vpop.f32.mrb[0].mxu0
      %v1963 = vadd.f32 0.0, %v1962
      %v1964 = vpop.f32.mrb[0].mxu0
      %1965 = vmatprep.mubr.f32.mxu0 0.0
      %1966 = vmatmul.mubr.f32.gmra.mrb[0].mxu0 %v1872
      %v1967 = vpop.f32.mrb[0].mxu0
      %v1968 = vadd.f32 0.0, %v1967
      %v1969 = vpop.f32.mrb[0].mxu0
      %1970 = vmatprep.mubr.f32.mxu0 0.0
      %1971 = vmatmul.mubr.f32.gmra.mrb[0].mxu0 %v1875
      %v1972 = vpop.f32.mrb[0].mxu0
      %v1973 = vadd.f32 0.0, %v1972
      %v1974 = vpop.f32.mrb[0].mxu0
      %1975 = vmatprep.mubr.f32.mxu0 0.0
      %1976 = vmatmul.mubr.f32.gmra.mrb[0].mxu0 %v1878
      %v1977 = vpop.f32.mrb[0].mxu0
      %v1978 = vadd.f32 0.0, %v1977
      %v1979 = vpop.f32.mrb[0].mxu0
      %1980 = vmatprep.mubr.f32.mxu0 0.0
      %1981 = vmatmul.mubr.f32.gmra.mrb[0].mxu0 %v1881
      %v1982 = vpop.f32.mrb[0].mxu0
      %v1983 = vadd.f32 0.0, %v1982
      %v1984 = vpop.f32.mrb[0].mxu0
      %1985 = vmatprep.mubr.f32.mxu0 0.0
      %1986 = vmatmul.mubr.f32.gmra.mrb[0].mxu0 %v1884
      %v1987 = vpop.f32.mrb[0].mxu0
      %v1988 = vadd.f32 0.0, %v1987
      %v1989 = vpop.f32.mrb[0].mxu0
      %1990 = vdwg.mxu0
      %v1991 = vadd.f32 %v1727, %v1953
      %v1992 = vadd.f32 %v1728, %v1958
      %v1993 = vadd.f32 %v1729, %v1963
      %v1994 = vadd.f32 %v1730, %v1968
      %v1995 = vadd.f32 %v1731, %v1973
      %v1996 = vadd.f32 %v1732, %v1978
      %v1997 = vadd.f32 %v1733, %v1983
      %v1998 = vadd.f32 %v1734, %v1988
      %s1999 = scalar_lea.vmem %s6, 640
      %v2000 = vld [vmem:[%s1999] sm:$0xff]
      %v2001 = vld [vmem:[%s1999 + $0x8] sm:$0xff]
      %v2002 = vld [vmem:[%s1999 + $0x10] sm:$0xff]
      %v2003 = vld [vmem:[%s1999 + $0x18] sm:$0xff]
      %v2004 = vld [vmem:[%s1999 + $0x20] sm:$0xff]
      %v2005 = vld [vmem:[%s1999 + $0x28] sm:$0xff]
      %v2006 = vld [vmem:[%s1999 + $0x30] sm:$0xff]
      %v2007 = vld [vmem:[%s1999 + $0x38] sm:$0xff]
      %v2008 = vld [vmem:[%s1999 + $0x40] sm:$0xff]
      %v2009 = vld [vmem:[%s1999 + $0x48] sm:$0xff]
      %v2010 = vld [vmem:[%s1999 + $0x50] sm:$0xff]
      %v2011 = vld [vmem:[%s1999 + $0x58] sm:$0xff]
      %v2012 = vld [vmem:[%s1999 + $0x60] sm:$0xff]
      %v2013 = vld [vmem:[%s1999 + $0x68] sm:$0xff]
      %v2014 = vld [vmem:[%s1999 + $0x70] sm:$0xff]
      %v2015 = vld [vmem:[%s1999 + $0x78] sm:$0xff]
      %2016 = vmatprep.subr.mxu0 0.0
      %2017 = vmatpush1.msra.mxu0 %v664
      %2018 = vmatprep.subr.mxu0 0.0
      %2019 = vmatpush1.msra.mxu0 %v665
      %2020 = vmatprep.subr.mxu0 0.0
      %2021 = vmatpush1.msra.mxu0 %v666
      %2022 = vmatprep.subr.mxu0 0.0
      %2023 = vmatpush1.msra.mxu0 %v667
      %2024 = vmatprep.subr.mxu0 0.0
      %2025 = vmatpush1.msra.mxu0 %v668
      %2026 = vmatprep.subr.mxu0 0.0
      %2027 = vmatpush1.msra.mxu0 %v669
      %2028 = vmatprep.subr.mxu0 0.0
      %2029 = vmatpush1.msra.mxu0 %v670
      %2030 = vmatprep.subr.mxu0 0.0
      %2031 = vmatpush1.msra.mxu0 %v671
      %2032 = vmatprep.subr.mxu0 0.0
      %2033 = vmatpush1.msra.mxu0 %v672
      %2034 = vmatprep.subr.mxu0 0.0
      %2035 = vmatpush1.msra.mxu0 %v673
      %2036 = vmatprep.subr.mxu0 0.0
      %2037 = vmatpush1.msra.mxu0 %v674
      %2038 = vmatprep.subr.mxu0 0.0
      %2039 = vmatpush1.msra.mxu0 %v675
      %2040 = vmatprep.subr.mxu0 0.0
      %2041 = vmatpush1.msra.mxu0 %v676
      %2042 = vmatprep.subr.mxu0 0.0
      %2043 = vmatpush1.msra.mxu0 %v677
      %2044 = vmatprep.subr.mxu0 0.0
      %2045 = vmatpush1.msra.mxu0 %v678
      %2046 = vmatprep.subr.mxu0 0.0
      %2047 = vmatpush1.msra.mxu0 %v679
      %2048 = vmatprep.subr.mxu0 0.0
      %2049 = vmatpush1.msra.mxu0 %v680
      %2050 = vmatprep.subr.mxu0 0.0
      %2051 = vmatpush1.msra.mxu0 %v681
      %2052 = vmatprep.subr.mxu0 0.0
      %2053 = vmatpush1.msra.mxu0 %v682
      %2054 = vmatprep.subr.mxu0 0.0
      %2055 = vmatpush1.msra.mxu0 %v683
      %2056 = vmatprep.subr.mxu0 0.0
      %2057 = vmatpush1.msra.mxu0 %v684
      %2058 = vmatprep.subr.mxu0 0.0
      %2059 = vmatpush1.msra.mxu0 %v685
      %2060 = vmatprep.subr.mxu0 0.0
      %2061 = vmatpush1.msra.mxu0 %v686
      %2062 = vmatprep.subr.mxu0 0.0
      %2063 = vmatpush1.msra.mxu0 %v687
      %2064 = vmatprep.subr.mxu0 0.0
      %2065 = vmatpush1.msra.mxu0 %v688
      %2066 = vmatprep.subr.mxu0 0.0
      %2067 = vmatpush1.msra.mxu0 %v689
      %2068 = vmatprep.subr.mxu0 0.0
      %2069 = vmatpush1.msra.mxu0 %v690
      %2070 = vmatprep.subr.mxu0 0.0
      %2071 = vmatpush1.msra.mxu0 %v691
      %2072 = vmatprep.subr.mxu0 0.0
      %2073 = vmatpush1.msra.mxu0 %v692
      %2074 = vmatprep.subr.mxu0 0.0
      %2075 = vmatpush1.msra.mxu0 %v693
      %2076 = vmatprep.subr.mxu0 0.0
      %2077 = vmatpush1.msra.mxu0 %v694
      %2078 = vmatprep.subr.mxu0 0.0
      %2079 = vmatpush1.msra.mxu0 %v695
      %2080 = vmatprep.mubr.f32.mxu0 %v2001
      %2081 = vmatmul.mubr.f32.gmra.mrb[0].mxu0 %v2000
      %v2082 = vpop.f32.mrb[0].mxu0
      %v2083 = vadd.f32 0.0, %v2082
      %v2084 = vpop.f32.mrb[0].mxu0
      %2085 = vmatprep.mubr.f32.mxu0 %v2003
      %2086 = vmatmul.mubr.f32.gmra.mrb[0].mxu0 %v2002
      %v2087 = vpop.f32.mrb[0].mxu0
      %v2088 = vadd.f32 0.0, %v2087
      %v2089 = vpop.f32.mrb[0].mxu0
      %2090 = vmatprep.mubr.f32.mxu0 %v2005
      %2091 = vmatmul.mubr.f32.gmra.mrb[0].mxu0 %v2004
      %v2092 = vpop.f32.mrb[0].mxu0
      %v2093 = vadd.f32 0.0, %v2092
      %v2094 = vpop.f32.mrb[0].mxu0
      %2095 = vmatprep.mubr.f32.mxu0 %v2007
      %2096 = vmatmul.mubr.f32.gmra.mrb[0].mxu0 %v2006
      %v2097 = vpop.f32.mrb[0].mxu0
      %v2098 = vadd.f32 0.0, %v2097
      %v2099 = vpop.f32.mrb[0].mxu0
      %2100 = vmatprep.mubr.f32.mxu0 %v2009
      %2101 = vmatmul.mubr.f32.gmra.mrb[0].mxu0 %v2008
      %v2102 = vpop.f32.mrb[0].mxu0
      %v2103 = vadd.f32 0.0, %v2102
      %v2104 = vpop.f32.mrb[0].mxu0
      %2105 = vmatprep.mubr.f32.mxu0 %v2011
      %2106 = vmatmul.mubr.f32.gmra.mrb[0].mxu0 %v2010
      %v2107 = vpop.f32.mrb[0].mxu0
      %v2108 = vadd.f32 0.0, %v2107
      %v2109 = vpop.f32.mrb[0].mxu0
      %2110 = vmatprep.mubr.f32.mxu0 %v2013
      %2111 = vmatmul.mubr.f32.gmra.mrb[0].mxu0 %v2012
      %v2112 = vpop.f32.mrb[0].mxu0
      %v2113 = vadd.f32 0.0, %v2112
      %v2114 = vpop.f32.mrb[0].mxu0
      %2115 = vmatprep.mubr.f32.mxu0 %v2015
      %2116 = vmatmul.mubr.f32.gmra.mrb[0].mxu0 %v2014
      %v2117 = vpop.f32.mrb[0].mxu0
      %v2118 = vadd.f32 0.0, %v2117
      %v2119 = vpop.f32.mrb[0].mxu0
      %2120 = vdwg.mxu0
      %s2121 = scalar_lea.vmem %s4, 160
      %v2122 = vld [vmem:[%s2121] sm:$0xff]
      %v2123 = vld [vmem:[%s2121 + $0x8] sm:$0xff]
      %v2124 = vld [vmem:[%s2121 + $0x10] sm:$0xff]
      %v2125 = vld [vmem:[%s2121 + $0x18] sm:$0xff]
      %v2127 = vsel %vm948, %v2083, 0
      %v2130 = vsel %vm948, %v2088, 0
      %v2133 = vsel %vm948, %v2093, 0
      %v2136 = vsel %vm948, %v2098, 0
      %v2139 = vsel %vm948, %v2103, 0
      %v2142 = vsel %vm948, %v2108, 0
      %v2145 = vsel %vm948, %v2113, 0
      %v2148 = vsel %vm948, %v2118, 0
      %2150 = vmatprep.subr.mxu0 0.0
      %2151 = vmatpush1.msra.mxu0 %v2122
      %2152 = vmatprep.subr.mxu0 0.0
      %2153 = vmatpush1.msra.mxu0 %v2123
      %2154 = vmatprep.subr.mxu0 0.0
      %2155 = vmatpush1.msra.mxu0 %v2124
      %2156 = vmatprep.subr.mxu0 0.0
      %2157 = vmatpush1.msra.mxu0 %v2125
      %2158 = vmatprep.subr.mxu0 0.0
      %2159 = vmatpush1.msra.mxu0 0.0
      %2160 = vmatprep.subr.mxu0 0.0
      %2161 = vmatpush1.msra.mxu0 0.0
      %2162 = vmatprep.subr.mxu0 0.0
      %2163 = vmatpush1.msra.mxu0 0.0
      %2164 = vmatprep.subr.mxu0 0.0
      %2165 = vmatpush1.msra.mxu0 0.0
      %2166 = vmatprep.subr.mxu0 0.0
      %2167 = vmatpush1.msra.mxu0 0.0
      %2168 = vmatprep.subr.mxu0 0.0
      %2169 = vmatpush1.msra.mxu0 0.0
      %2170 = vmatprep.subr.mxu0 0.0
      %2171 = vmatpush1.msra.mxu0 0.0
      %2172 = vmatprep.subr.mxu0 0.0
      %2173 = vmatpush1.msra.mxu0 0.0
      %2174 = vmatprep.subr.mxu0 0.0
      %2175 = vmatpush1.msra.mxu0 0.0
      %2176 = vmatprep.subr.mxu0 0.0
      %2177 = vmatpush1.msra.mxu0 0.0
      %2178 = vmatprep.subr.mxu0 0.0
      %2179 = vmatpush1.msra.mxu0 0.0
      %2180 = vmatprep.subr.mxu0 0.0
      %2181 = vmatpush1.msra.mxu0 0.0
      %2182 = vmatprep.subr.mxu0 0.0
      %2183 = vmatpush1.msra.mxu0 0.0
      %2184 = vmatprep.subr.mxu0 0.0
      %2185 = vmatpush1.msra.mxu0 0.0
      %2186 = vmatprep.subr.mxu0 0.0
      %2187 = vmatpush1.msra.mxu0 0.0
      %2188 = vmatprep.subr.mxu0 0.0
      %2189 = vmatpush1.msra.mxu0 0.0
      %2190 = vmatprep.subr.mxu0 0.0
      %2191 = vmatpush1.msra.mxu0 0.0
      %2192 = vmatprep.subr.mxu0 0.0
      %2193 = vmatpush1.msra.mxu0 0.0
      %2194 = vmatprep.subr.mxu0 0.0
      %2195 = vmatpush1.msra.mxu0 0.0
      %2196 = vmatprep.subr.mxu0 0.0
      %2197 = vmatpush1.msra.mxu0 0.0
      %2198 = vmatprep.subr.mxu0 0.0
      %2199 = vmatpush1.msra.mxu0 0.0
      %2200 = vmatprep.subr.mxu0 0.0
      %2201 = vmatpush1.msra.mxu0 0.0
      %2202 = vmatprep.subr.mxu0 0.0
      %2203 = vmatpush1.msra.mxu0 0.0
      %2204 = vmatprep.subr.mxu0 0.0
      %2205 = vmatpush1.msra.mxu0 0.0
      %2206 = vmatprep.subr.mxu0 0.0
      %2207 = vmatpush1.msra.mxu0 0.0
      %2208 = vmatprep.subr.mxu0 0.0
      %2209 = vmatpush1.msra.mxu0 0.0
      %2210 = vmatprep.subr.mxu0 0.0
      %2211 = vmatpush1.msra.mxu0 0.0
      %2212 = vmatprep.subr.mxu0 0.0
      %2213 = vmatpush1.msra.mxu0 0.0
      %2214 = vmatprep.mubr.f32.mxu0 0.0
      %2215 = vmatmul.mubr.f32.gmra.mrb[0].mxu0 %v2127
      %v2216 = vpop.f32.mrb[0].mxu0
      %v2217 = vadd.f32 0.0, %v2216
      %v2218 = vpop.f32.mrb[0].mxu0
      %2219 = vmatprep.mubr.f32.mxu0 0.0
      %2220 = vmatmul.mubr.f32.gmra.mrb[0].mxu0 %v2130
      %v2221 = vpop.f32.mrb[0].mxu0
      %v2222 = vadd.f32 0.0, %v2221
      %v2223 = vpop.f32.mrb[0].mxu0
      %2224 = vmatprep.mubr.f32.mxu0 0.0
      %2225 = vmatmul.mubr.f32.gmra.mrb[0].mxu0 %v2133
      %v2226 = vpop.f32.mrb[0].mxu0
      %v2227 = vadd.f32 0.0, %v2226
      %v2228 = vpop.f32.mrb[0].mxu0
      %2229 = vmatprep.mubr.f32.mxu0 0.0
      %2230 = vmatmul.mubr.f32.gmra.mrb[0].mxu0 %v2136
      %v2231 = vpop.f32.mrb[0].mxu0
      %v2232 = vadd.f32 0.0, %v2231
      %v2233 = vpop.f32.mrb[0].mxu0
      %2234 = vmatprep.mubr.f32.mxu0 0.0
      %2235 = vmatmul.mubr.f32.gmra.mrb[0].mxu0 %v2139
      %v2236 = vpop.f32.mrb[0].mxu0
      %v2237 = vadd.f32 0.0, %v2236
      %v2238 = vpop.f32.mrb[0].mxu0
      %2239 = vmatprep.mubr.f32.mxu0 0.0
      %2240 = vmatmul.mubr.f32.gmra.mrb[0].mxu0 %v2142
      %v2241 = vpop.f32.mrb[0].mxu0
      %v2242 = vadd.f32 0.0, %v2241
      %v2243 = vpop.f32.mrb[0].mxu0
      %2244 = vmatprep.mubr.f32.mxu0 0.0
      %2245 = vmatmul.mubr.f32.gmra.mrb[0].mxu0 %v2145
      %v2246 = vpop.f32.mrb[0].mxu0
      %v2247 = vadd.f32 0.0, %v2246
      %v2248 = vpop.f32.mrb[0].mxu0
      %2249 = vmatprep.mubr.f32.mxu0 0.0
      %2250 = vmatmul.mubr.f32.gmra.mrb[0].mxu0 %v2148
      %v2251 = vpop.f32.mrb[0].mxu0
      %v2252 = vadd.f32 0.0, %v2251
      %v2253 = vpop.f32.mrb[0].mxu0
      %2254 = vdwg.mxu0
      %v2255 = vadd.f32 %v1991, %v2217
      %v2256 = vadd.f32 %v1992, %v2222
      %v2257 = vadd.f32 %v1993, %v2227
      %v2258 = vadd.f32 %v1994, %v2232
      %v2259 = vadd.f32 %v1995, %v2237
      %v2260 = vadd.f32 %v1996, %v2242
      %v2261 = vadd.f32 %v1997, %v2247
      %v2262 = vadd.f32 %v1998, %v2252
      %s2263 = scalar_lea.vmem %s6, 768
      %v2264 = vld [vmem:[%s2263] sm:$0xff]
      %v2265 = vld [vmem:[%s2263 + $0x8] sm:$0xff]
      %v2266 = vld [vmem:[%s2263 + $0x10] sm:$0xff]
      %v2267 = vld [vmem:[%s2263 + $0x18] sm:$0xff]
      %v2268 = vld [vmem:[%s2263 + $0x20] sm:$0xff]
      %v2269 = vld [vmem:[%s2263 + $0x28] sm:$0xff]
      %v2270 = vld [vmem:[%s2263 + $0x30] sm:$0xff]
      %v2271 = vld [vmem:[%s2263 + $0x38] sm:$0xff]
      %v2272 = vld [vmem:[%s2263 + $0x40] sm:$0xff]
      %v2273 = vld [vmem:[%s2263 + $0x48] sm:$0xff]
      %v2274 = vld [vmem:[%s2263 + $0x50] sm:$0xff]
      %v2275 = vld [vmem:[%s2263 + $0x58] sm:$0xff]
      %v2276 = vld [vmem:[%s2263 + $0x60] sm:$0xff]
      %v2277 = vld [vmem:[%s2263 + $0x68] sm:$0xff]
      %v2278 = vld [vmem:[%s2263 + $0x70] sm:$0xff]
      %v2279 = vld [vmem:[%s2263 + $0x78] sm:$0xff]
      %2280 = vmatprep.subr.mxu0 0.0
      %2281 = vmatpush1.msra.mxu0 %v664
      %2282 = vmatprep.subr.mxu0 0.0
      %2283 = vmatpush1.msra.mxu0 %v665
      %2284 = vmatprep.subr.mxu0 0.0
      %2285 = vmatpush1.msra.mxu0 %v666
      %2286 = vmatprep.subr.mxu0 0.0
      %2287 = vmatpush1.msra.mxu0 %v667
      %2288 = vmatprep.subr.mxu0 0.0
      %2289 = vmatpush1.msra.mxu0 %v668
      %2290 = vmatprep.subr.mxu0 0.0
      %2291 = vmatpush1.msra.mxu0 %v669
      %2292 = vmatprep.subr.mxu0 0.0
      %2293 = vmatpush1.msra.mxu0 %v670
      %2294 = vmatprep.subr.mxu0 0.0
      %2295 = vmatpush1.msra.mxu0 %v671
      %2296 = vmatprep.subr.mxu0 0.0
      %2297 = vmatpush1.msra.mxu0 %v672
      %2298 = vmatprep.subr.mxu0 0.0
      %2299 = vmatpush1.msra.mxu0 %v673
      %2300 = vmatprep.subr.mxu0 0.0
      %2301 = vmatpush1.msra.mxu0 %v674
      %2302 = vmatprep.subr.mxu0 0.0
      %2303 = vmatpush1.msra.mxu0 %v675
      %2304 = vmatprep.subr.mxu0 0.0
      %2305 = vmatpush1.msra.mxu0 %v676
      %2306 = vmatprep.subr.mxu0 0.0
      %2307 = vmatpush1.msra.mxu0 %v677
      %2308 = vmatprep.subr.mxu0 0.0
      %2309 = vmatpush1.msra.mxu0 %v678
      %2310 = vmatprep.subr.mxu0 0.0
      %2311 = vmatpush1.msra.mxu0 %v679
      %2312 = vmatprep.subr.mxu0 0.0
      %2313 = vmatpush1.msra.mxu0 %v680
      %2314 = vmatprep.subr.mxu0 0.0
      %2315 = vmatpush1.msra.mxu0 %v681
      %2316 = vmatprep.subr.mxu0 0.0
      %2317 = vmatpush1.msra.mxu0 %v682
      %2318 = vmatprep.subr.mxu0 0.0
      %2319 = vmatpush1.msra.mxu0 %v683
      %2320 = vmatprep.subr.mxu0 0.0
      %2321 = vmatpush1.msra.mxu0 %v684
      %2322 = vmatprep.subr.mxu0 0.0
      %2323 = vmatpush1.msra.mxu0 %v685
      %2324 = vmatprep.subr.mxu0 0.0
      %2325 = vmatpush1.msra.mxu0 %v686
      %2326 = vmatprep.subr.mxu0 0.0
      %2327 = vmatpush1.msra.mxu0 %v687
      %2328 = vmatprep.subr.mxu0 0.0
      %2329 = vmatpush1.msra.mxu0 %v688
      %2330 = vmatprep.subr.mxu0 0.0
      %2331 = vmatpush1.msra.mxu0 %v689
      %2332 = vmatprep.subr.mxu0 0.0
      %2333 = vmatpush1.msra.mxu0 %v690
      %2334 = vmatprep.subr.mxu0 0.0
      %2335 = vmatpush1.msra.mxu0 %v691
      %2336 = vmatprep.subr.mxu0 0.0
      %2337 = vmatpush1.msra.mxu0 %v692
      %2338 = vmatprep.subr.mxu0 0.0
      %2339 = vmatpush1.msra.mxu0 %v693
      %2340 = vmatprep.subr.mxu0 0.0
      %2341 = vmatpush1.msra.mxu0 %v694
      %2342 = vmatprep.subr.mxu0 0.0
      %2343 = vmatpush1.msra.mxu0 %v695
      %2344 = vmatprep.mubr.f32.mxu0 %v2265
      %2345 = vmatmul.mubr.f32.gmra.mrb[0].mxu0 %v2264
      %v2346 = vpop.f32.mrb[0].mxu0
      %v2347 = vadd.f32 0.0, %v2346
      %v2348 = vpop.f32.mrb[0].mxu0
      %2349 = vmatprep.mubr.f32.mxu0 %v2267
      %2350 = vmatmul.mubr.f32.gmra.mrb[0].mxu0 %v2266
      %v2351 = vpop.f32.mrb[0].mxu0
      %v2352 = vadd.f32 0.0, %v2351
      %v2353 = vpop.f32.mrb[0].mxu0
      %2354 = vmatprep.mubr.f32.mxu0 %v2269
      %2355 = vmatmul.mubr.f32.gmra.mrb[0].mxu0 %v2268
      %v2356 = vpop.f32.mrb[0].mxu0
      %v2357 = vadd.f32 0.0, %v2356
      %v2358 = vpop.f32.mrb[0].mxu0
      %2359 = vmatprep.mubr.f32.mxu0 %v2271
      %2360 = vmatmul.mubr.f32.gmra.mrb[0].mxu0 %v2270
      %v2361 = vpop.f32.mrb[0].mxu0
      %v2362 = vadd.f32 0.0, %v2361
      %v2363 = vpop.f32.mrb[0].mxu0
      %2364 = vmatprep.mubr.f32.mxu0 %v2273
      %2365 = vmatmul.mubr.f32.gmra.mrb[0].mxu0 %v2272
      %v2366 = vpop.f32.mrb[0].mxu0
      %v2367 = vadd.f32 0.0, %v2366
      %v2368 = vpop.f32.mrb[0].mxu0
      %2369 = vmatprep.mubr.f32.mxu0 %v2275
      %2370 = vmatmul.mubr.f32.gmra.mrb[0].mxu0 %v2274
      %v2371 = vpop.f32.mrb[0].mxu0
      %v2372 = vadd.f32 0.0, %v2371
      %v2373 = vpop.f32.mrb[0].mxu0
      %2374 = vmatprep.mubr.f32.mxu0 %v2277
      %2375 = vmatmul.mubr.f32.gmra.mrb[0].mxu0 %v2276
      %v2376 = vpop.f32.mrb[0].mxu0
      %v2377 = vadd.f32 0.0, %v2376
      %v2378 = vpop.f32.mrb[0].mxu0
      %2379 = vmatprep.mubr.f32.mxu0 %v2279
      %2380 = vmatmul.mubr.f32.gmra.mrb[0].mxu0 %v2278
      %v2381 = vpop.f32.mrb[0].mxu0
      %v2382 = vadd.f32 0.0, %v2381
      %v2383 = vpop.f32.mrb[0].mxu0
      %2384 = vdwg.mxu0
      %s2385 = scalar_lea.vmem %s4, 192
      %v2386 = vld [vmem:[%s2385] sm:$0xff]
      %v2387 = vld [vmem:[%s2385 + $0x8] sm:$0xff]
      %v2388 = vld [vmem:[%s2385 + $0x10] sm:$0xff]
      %v2389 = vld [vmem:[%s2385 + $0x18] sm:$0xff]
      %v2391 = vsel %vm948, %v2347, 0
      %v2394 = vsel %vm948, %v2352, 0
      %v2397 = vsel %vm948, %v2357, 0
      %v2400 = vsel %vm948, %v2362, 0
      %v2403 = vsel %vm948, %v2367, 0
      %v2406 = vsel %vm948, %v2372, 0
      %v2409 = vsel %vm948, %v2377, 0
      %v2412 = vsel %vm948, %v2382, 0
      %2414 = vmatprep.subr.mxu0 0.0
      %2415 = vmatpush1.msra.mxu0 %v2386
      %2416 = vmatprep.subr.mxu0 0.0
      %2417 = vmatpush1.msra.mxu0 %v2387
      %2418 = vmatprep.subr.mxu0 0.0
      %2419 = vmatpush1.msra.mxu0 %v2388
      %2420 = vmatprep.subr.mxu0 0.0
      %2421 = vmatpush1.msra.mxu0 %v2389
      %2422 = vmatprep.subr.mxu0 0.0
      %2423 = vmatpush1.msra.mxu0 0.0
      %2424 = vmatprep.subr.mxu0 0.0
      %2425 = vmatpush1.msra.mxu0 0.0
      %2426 = vmatprep.subr.mxu0 0.0
      %2427 = vmatpush1.msra.mxu0 0.0
      %2428 = vmatprep.subr.mxu0 0.0
      %2429 = vmatpush1.msra.mxu0 0.0
      %2430 = vmatprep.subr.mxu0 0.0
      %2431 = vmatpush1.msra.mxu0 0.0
      %2432 = vmatprep.subr.mxu0 0.0
      %2433 = vmatpush1.msra.mxu0 0.0
      %2434 = vmatprep.subr.mxu0 0.0
      %2435 = vmatpush1.msra.mxu0 0.0
      %2436 = vmatprep.subr.mxu0 0.0
      %2437 = vmatpush1.msra.mxu0 0.0
      %2438 = vmatprep.subr.mxu0 0.0
      %2439 = vmatpush1.msra.mxu0 0.0
      %2440 = vmatprep.subr.mxu0 0.0
      %2441 = vmatpush1.msra.mxu0 0.0
      %2442 = vmatprep.subr.mxu0 0.0
      %2443 = vmatpush1.msra.mxu0 0.0
      %2444 = vmatprep.subr.mxu0 0.0
      %2445 = vmatpush1.msra.mxu0 0.0
      %2446 = vmatprep.subr.mxu0 0.0
      %2447 = vmatpush1.msra.mxu0 0.0
      %2448 = vmatprep.subr.mxu0 0.0
      %2449 = vmatpush1.msra.mxu0 0.0
      %2450 = vmatprep.subr.mxu0 0.0
      %2451 = vmatpush1.msra.mxu0 0.0
      %2452 = vmatprep.subr.mxu0 0.0
      %2453 = vmatpush1.msra.mxu0 0.0
      %2454 = vmatprep.subr.mxu0 0.0
      %2455 = vmatpush1.msra.mxu0 0.0
      %2456 = vmatprep.subr.mxu0 0.0
      %2457 = vmatpush1.msra.mxu0 0.0
      %2458 = vmatprep.subr.mxu0 0.0
      %2459 = vmatpush1.msra.mxu0 0.0
      %2460 = vmatprep.subr.mxu0 0.0
      %2461 = vmatpush1.msra.mxu0 0.0
      %2462 = vmatprep.subr.mxu0 0.0
      %2463 = vmatpush1.msra.mxu0 0.0
      %2464 = vmatprep.subr.mxu0 0.0
      %2465 = vmatpush1.msra.mxu0 0.0
      %2466 = vmatprep.subr.mxu0 0.0
      %2467 = vmatpush1.msra.mxu0 0.0
      %2468 = vmatprep.subr.mxu0 0.0
      %2469 = vmatpush1.msra.mxu0 0.0
      %2470 = vmatprep.subr.mxu0 0.0
      %2471 = vmatpush1.msra.mxu0 0.0
      %2472 = vmatprep.subr.mxu0 0.0
      %2473 = vmatpush1.msra.mxu0 0.0
      %2474 = vmatprep.subr.mxu0 0.0
      %2475 = vmatpush1.msra.mxu0 0.0
      %2476 = vmatprep.subr.mxu0 0.0
      %2477 = vmatpush1.msra.mxu0 0.0
      %2478 = vmatprep.mubr.f32.mxu0 0.0
      %2479 = vmatmul.mubr.f32.gmra.mrb[0].mxu0 %v2391
      %v2480 = vpop.f32.mrb[0].mxu0
      %v2481 = vadd.f32 0.0, %v2480
      %v2482 = vpop.f32.mrb[0].mxu0
      %2483 = vmatprep.mubr.f32.mxu0 0.0
      %2484 = vmatmul.mubr.f32.gmra.mrb[0].mxu0 %v2394
      %v2485 = vpop.f32.mrb[0].mxu0
      %v2486 = vadd.f32 0.0, %v2485
      %v2487 = vpop.f32.mrb[0].mxu0
      %2488 = vmatprep.mubr.f32.mxu0 0.0
      %2489 = vmatmul.mubr.f32.gmra.mrb[0].mxu0 %v2397
      %v2490 = vpop.f32.mrb[0].mxu0
      %v2491 = vadd.f32 0.0, %v2490
      %v2492 = vpop.f32.mrb[0].mxu0
      %2493 = vmatprep.mubr.f32.mxu0 0.0
      %2494 = vmatmul.mubr.f32.gmra.mrb[0].mxu0 %v2400
      %v2495 = vpop.f32.mrb[0].mxu0
      %v2496 = vadd.f32 0.0, %v2495
      %v2497 = vpop.f32.mrb[0].mxu0
      %2498 = vmatprep.mubr.f32.mxu0 0.0
      %2499 = vmatmul.mubr.f32.gmra.mrb[0].mxu0 %v2403
      %v2500 = vpop.f32.mrb[0].mxu0
      %v2501 = vadd.f32 0.0, %v2500
      %v2502 = vpop.f32.mrb[0].mxu0
      %2503 = vmatprep.mubr.f32.mxu0 0.0
      %2504 = vmatmul.mubr.f32.gmra.mrb[0].mxu0 %v2406
      %v2505 = vpop.f32.mrb[0].mxu0
      %v2506 = vadd.f32 0.0, %v2505
      %v2507 = vpop.f32.mrb[0].mxu0
      %2508 = vmatprep.mubr.f32.mxu0 0.0
      %2509 = vmatmul.mubr.f32.gmra.mrb[0].mxu0 %v2409
      %v2510 = vpop.f32.mrb[0].mxu0
      %v2511 = vadd.f32 0.0, %v2510
      %v2512 = vpop.f32.mrb[0].mxu0
      %2513 = vmatprep.mubr.f32.mxu0 0.0
      %2514 = vmatmul.mubr.f32.gmra.mrb[0].mxu0 %v2412
      %v2515 = vpop.f32.mrb[0].mxu0
      %v2516 = vadd.f32 0.0, %v2515
      %v2517 = vpop.f32.mrb[0].mxu0
      %2518 = vdwg.mxu0
      %v2519 = vadd.f32 %v2255, %v2481
      %v2520 = vadd.f32 %v2256, %v2486
      %v2521 = vadd.f32 %v2257, %v2491
      %v2522 = vadd.f32 %v2258, %v2496
      %v2523 = vadd.f32 %v2259, %v2501
      %v2524 = vadd.f32 %v2260, %v2506
      %v2525 = vadd.f32 %v2261, %v2511
      %v2526 = vadd.f32 %v2262, %v2516
      %s2527 = scalar_lea.vmem %s6, 896
      %v2528 = vld [vmem:[%s2527] sm:$0xff]
      %v2529 = vld [vmem:[%s2527 + $0x8] sm:$0xff]
      %v2530 = vld [vmem:[%s2527 + $0x10] sm:$0xff]
      %v2531 = vld [vmem:[%s2527 + $0x18] sm:$0xff]
      %v2532 = vld [vmem:[%s2527 + $0x20] sm:$0xff]
      %v2533 = vld [vmem:[%s2527 + $0x28] sm:$0xff]
      %v2534 = vld [vmem:[%s2527 + $0x30] sm:$0xff]
      %v2535 = vld [vmem:[%s2527 + $0x38] sm:$0xff]
      %v2536 = vld [vmem:[%s2527 + $0x40] sm:$0xff]
      %v2537 = vld [vmem:[%s2527 + $0x48] sm:$0xff]
      %v2538 = vld [vmem:[%s2527 + $0x50] sm:$0xff]
      %v2539 = vld [vmem:[%s2527 + $0x58] sm:$0xff]
      %v2540 = vld [vmem:[%s2527 + $0x60] sm:$0xff]
      %v2541 = vld [vmem:[%s2527 + $0x68] sm:$0xff]
      %v2542 = vld [vmem:[%s2527 + $0x70] sm:$0xff]
      %v2543 = vld [vmem:[%s2527 + $0x78] sm:$0xff]
      %2544 = vmatprep.subr.mxu0 0.0
      %2545 = vmatpush1.msra.mxu0 %v664
      %2546 = vmatprep.subr.mxu0 0.0
      %2547 = vmatpush1.msra.mxu0 %v665
      %2548 = vmatprep.subr.mxu0 0.0
      %2549 = vmatpush1.msra.mxu0 %v666
      %2550 = vmatprep.subr.mxu0 0.0
      %2551 = vmatpush1.msra.mxu0 %v667
      %2552 = vmatprep.subr.mxu0 0.0
      %2553 = vmatpush1.msra.mxu0 %v668
      %2554 = vmatprep.subr.mxu0 0.0
      %2555 = vmatpush1.msra.mxu0 %v669
      %2556 = vmatprep.subr.mxu0 0.0
      %2557 = vmatpush1.msra.mxu0 %v670
      %2558 = vmatprep.subr.mxu0 0.0
      %2559 = vmatpush1.msra.mxu0 %v671
      %2560 = vmatprep.subr.mxu0 0.0
      %2561 = vmatpush1.msra.mxu0 %v672
      %2562 = vmatprep.subr.mxu0 0.0
      %2563 = vmatpush1.msra.mxu0 %v673
      %2564 = vmatprep.subr.mxu0 0.0
      %2565 = vmatpush1.msra.mxu0 %v674
      %2566 = vmatprep.subr.mxu0 0.0
      %2567 = vmatpush1.msra.mxu0 %v675
      %2568 = vmatprep.subr.mxu0 0.0
      %2569 = vmatpush1.msra.mxu0 %v676
      %2570 = vmatprep.subr.mxu0 0.0
      %2571 = vmatpush1.msra.mxu0 %v677
      %2572 = vmatprep.subr.mxu0 0.0
      %2573 = vmatpush1.msra.mxu0 %v678
      %2574 = vmatprep.subr.mxu0 0.0
      %2575 = vmatpush1.msra.mxu0 %v679
      %2576 = vmatprep.subr.mxu0 0.0
      %2577 = vmatpush1.msra.mxu0 %v680
      %2578 = vmatprep.subr.mxu0 0.0
      %2579 = vmatpush1.msra.mxu0 %v681
      %2580 = vmatprep.subr.mxu0 0.0
      %2581 = vmatpush1.msra.mxu0 %v682
      %2582 = vmatprep.subr.mxu0 0.0
      %2583 = vmatpush1.msra.mxu0 %v683
      %2584 = vmatprep.subr.mxu0 0.0
      %2585 = vmatpush1.msra.mxu0 %v684
      %2586 = vmatprep.subr.mxu0 0.0
      %2587 = vmatpush1.msra.mxu0 %v685
      %2588 = vmatprep.subr.mxu0 0.0
      %2589 = vmatpush1.msra.mxu0 %v686
      %2590 = vmatprep.subr.mxu0 0.0
      %2591 = vmatpush1.msra.mxu0 %v687
      %2592 = vmatprep.subr.mxu0 0.0
      %2593 = vmatpush1.msra.mxu0 %v688
      %2594 = vmatprep.subr.mxu0 0.0
      %2595 = vmatpush1.msra.mxu0 %v689
      %2596 = vmatprep.subr.mxu0 0.0
      %2597 = vmatpush1.msra.mxu0 %v690
      %2598 = vmatprep.subr.mxu0 0.0
      %2599 = vmatpush1.msra.mxu0 %v691
      %2600 = vmatprep.subr.mxu0 0.0
      %2601 = vmatpush1.msra.mxu0 %v692
      %2602 = vmatprep.subr.mxu0 0.0
      %2603 = vmatpush1.msra.mxu0 %v693
      %2604 = vmatprep.subr.mxu0 0.0
      %2605 = vmatpush1.msra.mxu0 %v694
      %2606 = vmatprep.subr.mxu0 0.0
      %2607 = vmatpush1.msra.mxu0 %v695
      %2608 = vmatprep.mubr.f32.mxu0 %v2529
      %2609 = vmatmul.mubr.f32.gmra.mrb[0].mxu0 %v2528
      %v2610 = vpop.f32.mrb[0].mxu0
      %v2611 = vadd.f32 0.0, %v2610
      %v2612 = vpop.f32.mrb[0].mxu0
      %2613 = vmatprep.mubr.f32.mxu0 %v2531
      %2614 = vmatmul.mubr.f32.gmra.mrb[0].mxu0 %v2530
      %v2615 = vpop.f32.mrb[0].mxu0
      %v2616 = vadd.f32 0.0, %v2615
      %v2617 = vpop.f32.mrb[0].mxu0
      %2618 = vmatprep.mubr.f32.mxu0 %v2533
      %2619 = vmatmul.mubr.f32.gmra.mrb[0].mxu0 %v2532
      %v2620 = vpop.f32.mrb[0].mxu0
      %v2621 = vadd.f32 0.0, %v2620
      %v2622 = vpop.f32.mrb[0].mxu0
      %2623 = vmatprep.mubr.f32.mxu0 %v2535
      %2624 = vmatmul.mubr.f32.gmra.mrb[0].mxu0 %v2534
      %v2625 = vpop.f32.mrb[0].mxu0
      %v2626 = vadd.f32 0.0, %v2625
      %v2627 = vpop.f32.mrb[0].mxu0
      %2628 = vmatprep.mubr.f32.mxu0 %v2537
      %2629 = vmatmul.mubr.f32.gmra.mrb[0].mxu0 %v2536
      %v2630 = vpop.f32.mrb[0].mxu0
      %v2631 = vadd.f32 0.0, %v2630
      %v2632 = vpop.f32.mrb[0].mxu0
      %2633 = vmatprep.mubr.f32.mxu0 %v2539
      %2634 = vmatmul.mubr.f32.gmra.mrb[0].mxu0 %v2538
      %v2635 = vpop.f32.mrb[0].mxu0
      %v2636 = vadd.f32 0.0, %v2635
      %v2637 = vpop.f32.mrb[0].mxu0
      %2638 = vmatprep.mubr.f32.mxu0 %v2541
      %2639 = vmatmul.mubr.f32.gmra.mrb[0].mxu0 %v2540
      %v2640 = vpop.f32.mrb[0].mxu0
      %v2641 = vadd.f32 0.0, %v2640
      %v2642 = vpop.f32.mrb[0].mxu0
      %2643 = vmatprep.mubr.f32.mxu0 %v2543
      %2644 = vmatmul.mubr.f32.gmra.mrb[0].mxu0 %v2542
      %v2645 = vpop.f32.mrb[0].mxu0
      %v2646 = vadd.f32 0.0, %v2645
      %v2647 = vpop.f32.mrb[0].mxu0
      %2648 = vdwg.mxu0
      %s2649 = scalar_lea.vmem %s4, 224
      %v2650 = vld [vmem:[%s2649] sm:$0xff]
      %v2651 = vld [vmem:[%s2649 + $0x8] sm:$0xff]
      %v2652 = vld [vmem:[%s2649 + $0x10] sm:$0xff]
      %v2653 = vld [vmem:[%s2649 + $0x18] sm:$0xff]
      %v2655 = vsel %vm948, %v2611, 0
      %v2658 = vsel %vm948, %v2616, 0
      %v2661 = vsel %vm948, %v2621, 0
      %v2664 = vsel %vm948, %v2626, 0
      %v2667 = vsel %vm948, %v2631, 0
      %v2670 = vsel %vm948, %v2636, 0
      %v2673 = vsel %vm948, %v2641, 0
      %v2676 = vsel %vm948, %v2646, 0
      %2678 = vmatprep.subr.mxu0 0.0
      %2679 = vmatpush1.msra.mxu0 %v2650
      %2680 = vmatprep.subr.mxu0 0.0
      %2681 = vmatpush1.msra.mxu0 %v2651
      %2682 = vmatprep.subr.mxu0 0.0
      %2683 = vmatpush1.msra.mxu0 %v2652
      %2684 = vmatprep.subr.mxu0 0.0
      %2685 = vmatpush1.msra.mxu0 %v2653
      %2686 = vmatprep.subr.mxu0 0.0
      %2687 = vmatpush1.msra.mxu0 0.0
      %2688 = vmatprep.subr.mxu0 0.0
      %2689 = vmatpush1.msra.mxu0 0.0
      %2690 = vmatprep.subr.mxu0 0.0
      %2691 = vmatpush1.msra.mxu0 0.0
      %2692 = vmatprep.subr.mxu0 0.0
      %2693 = vmatpush1.msra.mxu0 0.0
      %2694 = vmatprep.subr.mxu0 0.0
      %2695 = vmatpush1.msra.mxu0 0.0
      %2696 = vmatprep.subr.mxu0 0.0
      %2697 = vmatpush1.msra.mxu0 0.0
      %2698 = vmatprep.subr.mxu0 0.0
      %2699 = vmatpush1.msra.mxu0 0.0
      %2700 = vmatprep.subr.mxu0 0.0
      %2701 = vmatpush1.msra.mxu0 0.0
      %2702 = vmatprep.subr.mxu0 0.0
      %2703 = vmatpush1.msra.mxu0 0.0
      %2704 = vmatprep.subr.mxu0 0.0
      %2705 = vmatpush1.msra.mxu0 0.0
      %2706 = vmatprep.subr.mxu0 0.0
      %2707 = vmatpush1.msra.mxu0 0.0
      %2708 = vmatprep.subr.mxu0 0.0
      %2709 = vmatpush1.msra.mxu0 0.0
      %2710 = vmatprep.subr.mxu0 0.0
      %2711 = vmatpush1.msra.mxu0 0.0
      %2712 = vmatprep.subr.mxu0 0.0
      %2713 = vmatpush1.msra.mxu0 0.0
      %2714 = vmatprep.subr.mxu0 0.0
      %2715 = vmatpush1.msra.mxu0 0.0
      %2716 = vmatprep.subr.mxu0 0.0
      %2717 = vmatpush1.msra.mxu0 0.0
      %2718 = vmatprep.subr.mxu0 0.0
      %2719 = vmatpush1.msra.mxu0 0.0
      %2720 = vmatprep.subr.mxu0 0.0
      %2721 = vmatpush1.msra.mxu0 0.0
      %2722 = vmatprep.subr.mxu0 0.0
      %2723 = vmatpush1.msra.mxu0 0.0
      %2724 = vmatprep.subr.mxu0 0.0
      %2725 = vmatpush1.msra.mxu0 0.0
      %2726 = vmatprep.subr.mxu0 0.0
      %2727 = vmatpush1.msra.mxu0 0.0
      %2728 = vmatprep.subr.mxu0 0.0
      %2729 = vmatpush1.msra.mxu0 0.0
      %2730 = vmatprep.subr.mxu0 0.0
      %2731 = vmatpush1.msra.mxu0 0.0
      %2732 = vmatprep.subr.mxu0 0.0
      %2733 = vmatpush1.msra.mxu0 0.0
      %2734 = vmatprep.subr.mxu0 0.0
      %2735 = vmatpush1.msra.mxu0 0.0
      %2736 = vmatprep.subr.mxu0 0.0
      %2737 = vmatpush1.msra.mxu0 0.0
      %2738 = vmatprep.subr.mxu0 0.0
      %2739 = vmatpush1.msra.mxu0 0.0
      %2740 = vmatprep.subr.mxu0 0.0
      %2741 = vmatpush1.msra.mxu0 0.0
      %2742 = vmatprep.mubr.f32.mxu0 0.0
      %2743 = vmatmul.mubr.f32.gmra.mrb[0].mxu0 %v2655
      %v2744 = vpop.f32.mrb[0].mxu0
      %v2745 = vadd.f32 0.0, %v2744
      %v2746 = vpop.f32.mrb[0].mxu0
      %2747 = vmatprep.mubr.f32.mxu0 0.0
      %2748 = vmatmul.mubr.f32.gmra.mrb[0].mxu0 %v2658
      %v2749 = vpop.f32.mrb[0].mxu0
      %v2750 = vadd.f32 0.0, %v2749
      %v2751 = vpop.f32.mrb[0].mxu0
      %2752 = vmatprep.mubr.f32.mxu0 0.0
      %2753 = vmatmul.mubr.f32.gmra.mrb[0].mxu0 %v2661
      %v2754 = vpop.f32.mrb[0].mxu0
      %v2755 = vadd.f32 0.0, %v2754
      %v2756 = vpop.f32.mrb[0].mxu0
      %2757 = vmatprep.mubr.f32.mxu0 0.0
      %2758 = vmatmul.mubr.f32.gmra.mrb[0].mxu0 %v2664
      %v2759 = vpop.f32.mrb[0].mxu0
      %v2760 = vadd.f32 0.0, %v2759
      %v2761 = vpop.f32.mrb[0].mxu0
      %2762 = vmatprep.mubr.f32.mxu0 0.0
      %2763 = vmatmul.mubr.f32.gmra.mrb[0].mxu0 %v2667
      %v2764 = vpop.f32.mrb[0].mxu0
      %v2765 = vadd.f32 0.0, %v2764
      %v2766 = vpop.f32.mrb[0].mxu0
      %2767 = vmatprep.mubr.f32.mxu0 0.0
      %2768 = vmatmul.mubr.f32.gmra.mrb[0].mxu0 %v2670
      %v2769 = vpop.f32.mrb[0].mxu0
      %v2770 = vadd.f32 0.0, %v2769
      %v2771 = vpop.f32.mrb[0].mxu0
      %2772 = vmatprep.mubr.f32.mxu0 0.0
      %2773 = vmatmul.mubr.f32.gmra.mrb[0].mxu0 %v2673
      %v2774 = vpop.f32.mrb[0].mxu0
      %v2775 = vadd.f32 0.0, %v2774
      %v2776 = vpop.f32.mrb[0].mxu0
      %2777 = vmatprep.mubr.f32.mxu0 0.0
      %2778 = vmatmul.mubr.f32.gmra.mrb[0].mxu0 %v2676
      %v2779 = vpop.f32.mrb[0].mxu0
      %v2780 = vadd.f32 0.0, %v2779
      %v2781 = vpop.f32.mrb[0].mxu0
      %2782 = vdwg.mxu0
      %v2783 = vadd.f32 %v2519, %v2745
      %v2784 = vadd.f32 %v2520, %v2750
      %v2785 = vadd.f32 %v2521, %v2755
      %v2786 = vadd.f32 %v2522, %v2760
      %v2787 = vadd.f32 %v2523, %v2765
      %v2788 = vadd.f32 %v2524, %v2770
      %v2789 = vadd.f32 %v2525, %v2775
      %v2790 = vadd.f32 %v2526, %v2780
      %s2791 = scalar_lea.vmem %s6, 1024
      %v2792 = vld [vmem:[%s2791] sm:$0xff]
      %v2793 = vld [vmem:[%s2791 + $0x8] sm:$0xff]
      %v2794 = vld [vmem:[%s2791 + $0x10] sm:$0xff]
      %v2795 = vld [vmem:[%s2791 + $0x18] sm:$0xff]
      %v2796 = vld [vmem:[%s2791 + $0x20] sm:$0xff]
      %v2797 = vld [vmem:[%s2791 + $0x28] sm:$0xff]
      %v2798 = vld [vmem:[%s2791 + $0x30] sm:$0xff]
      %v2799 = vld [vmem:[%s2791 + $0x38] sm:$0xff]
      %v2800 = vld [vmem:[%s2791 + $0x40] sm:$0xff]
      %v2801 = vld [vmem:[%s2791 + $0x48] sm:$0xff]
      %v2802 = vld [vmem:[%s2791 + $0x50] sm:$0xff]
      %v2803 = vld [vmem:[%s2791 + $0x58] sm:$0xff]
      %v2804 = vld [vmem:[%s2791 + $0x60] sm:$0xff]
      %v2805 = vld [vmem:[%s2791 + $0x68] sm:$0xff]
      %v2806 = vld [vmem:[%s2791 + $0x70] sm:$0xff]
      %v2807 = vld [vmem:[%s2791 + $0x78] sm:$0xff]
      %2808 = vmatprep.subr.mxu0 0.0
      %2809 = vmatpush1.msra.mxu0 %v664
      %2810 = vmatprep.subr.mxu0 0.0
      %2811 = vmatpush1.msra.mxu0 %v665
      %2812 = vmatprep.subr.mxu0 0.0
      %2813 = vmatpush1.msra.mxu0 %v666
      %2814 = vmatprep.subr.mxu0 0.0
      %2815 = vmatpush1.msra.mxu0 %v667
      %2816 = vmatprep.subr.mxu0 0.0
      %2817 = vmatpush1.msra.mxu0 %v668
      %2818 = vmatprep.subr.mxu0 0.0
      %2819 = vmatpush1.msra.mxu0 %v669
      %2820 = vmatprep.subr.mxu0 0.0
      %2821 = vmatpush1.msra.mxu0 %v670
      %2822 = vmatprep.subr.mxu0 0.0
      %2823 = vmatpush1.msra.mxu0 %v671
      %2824 = vmatprep.subr.mxu0 0.0
      %2825 = vmatpush1.msra.mxu0 %v672
      %2826 = vmatprep.subr.mxu0 0.0
      %2827 = vmatpush1.msra.mxu0 %v673
      %2828 = vmatprep.subr.mxu0 0.0
      %2829 = vmatpush1.msra.mxu0 %v674
      %2830 = vmatprep.subr.mxu0 0.0
      %2831 = vmatpush1.msra.mxu0 %v675
      %2832 = vmatprep.subr.mxu0 0.0
      %2833 = vmatpush1.msra.mxu0 %v676
      %2834 = vmatprep.subr.mxu0 0.0
      %2835 = vmatpush1.msra.mxu0 %v677
      %2836 = vmatprep.subr.mxu0 0.0
      %2837 = vmatpush1.msra.mxu0 %v678
      %2838 = vmatprep.subr.mxu0 0.0
      %2839 = vmatpush1.msra.mxu0 %v679
      %2840 = vmatprep.subr.mxu0 0.0
      %2841 = vmatpush1.msra.mxu0 %v680
      %2842 = vmatprep.subr.mxu0 0.0
      %2843 = vmatpush1.msra.mxu0 %v681
      %2844 = vmatprep.subr.mxu0 0.0
      %2845 = vmatpush1.msra.mxu0 %v682
      %2846 = vmatprep.subr.mxu0 0.0
      %2847 = vmatpush1.msra.mxu0 %v683
      %2848 = vmatprep.subr.mxu0 0.0
      %2849 = vmatpush1.msra.mxu0 %v684
      %2850 = vmatprep.subr.mxu0 0.0
      %2851 = vmatpush1.msra.mxu0 %v685
      %2852 = vmatprep.subr.mxu0 0.0
      %2853 = vmatpush1.msra.mxu0 %v686
      %2854 = vmatprep.subr.mxu0 0.0
      %2855 = vmatpush1.msra.mxu0 %v687
      %2856 = vmatprep.subr.mxu0 0.0
      %2857 = vmatpush1.msra.mxu0 %v688
      %2858 = vmatprep.subr.mxu0 0.0
      %2859 = vmatpush1.msra.mxu0 %v689
      %2860 = vmatprep.subr.mxu0 0.0
      %2861 = vmatpush1.msra.mxu0 %v690
      %2862 = vmatprep.subr.mxu0 0.0
      %2863 = vmatpush1.msra.mxu0 %v691
      %2864 = vmatprep.subr.mxu0 0.0
      %2865 = vmatpush1.msra.mxu0 %v692
      %2866 = vmatprep.subr.mxu0 0.0
      %2867 = vmatpush1.msra.mxu0 %v693
      %2868 = vmatprep.subr.mxu0 0.0
      %2869 = vmatpush1.msra.mxu0 %v694
      %2870 = vmatprep.subr.mxu0 0.0
      %2871 = vmatpush1.msra.mxu0 %v695
      %2872 = vmatprep.mubr.f32.mxu0 %v2793
      %2873 = vmatmul.mubr.f32.gmra.mrb[0].mxu0 %v2792
      %v2874 = vpop.f32.mrb[0].mxu0
      %v2875 = vadd.f32 0.0, %v2874
      %v2876 = vpop.f32.mrb[0].mxu0
      %2877 = vmatprep.mubr.f32.mxu0 %v2795
      %2878 = vmatmul.mubr.f32.gmra.mrb[0].mxu0 %v2794
      %v2879 = vpop.f32.mrb[0].mxu0
      %v2880 = vadd.f32 0.0, %v2879
      %v2881 = vpop.f32.mrb[0].mxu0
      %2882 = vmatprep.mubr.f32.mxu0 %v2797
      %2883 = vmatmul.mubr.f32.gmra.mrb[0].mxu0 %v2796
      %v2884 = vpop.f32.mrb[0].mxu0
      %v2885 = vadd.f32 0.0, %v2884
      %v2886 = vpop.f32.mrb[0].mxu0
      %2887 = vmatprep.mubr.f32.mxu0 %v2799
      %2888 = vmatmul.mubr.f32.gmra.mrb[0].mxu0 %v2798
      %v2889 = vpop.f32.mrb[0].mxu0
      %v2890 = vadd.f32 0.0, %v2889
      %v2891 = vpop.f32.mrb[0].mxu0
      %2892 = vmatprep.mubr.f32.mxu0 %v2801
      %2893 = vmatmul.mubr.f32.gmra.mrb[0].mxu0 %v2800
      %v2894 = vpop.f32.mrb[0].mxu0
      %v2895 = vadd.f32 0.0, %v2894
      %v2896 = vpop.f32.mrb[0].mxu0
      %2897 = vmatprep.mubr.f32.mxu0 %v2803
      %2898 = vmatmul.mubr.f32.gmra.mrb[0].mxu0 %v2802
      %v2899 = vpop.f32.mrb[0].mxu0
      %v2900 = vadd.f32 0.0, %v2899
      %v2901 = vpop.f32.mrb[0].mxu0
      %2902 = vmatprep.mubr.f32.mxu0 %v2805
      %2903 = vmatmul.mubr.f32.gmra.mrb[0].mxu0 %v2804
      %v2904 = vpop.f32.mrb[0].mxu0
      %v2905 = vadd.f32 0.0, %v2904
      %v2906 = vpop.f32.mrb[0].mxu0
      %2907 = vmatprep.mubr.f32.mxu0 %v2807
      %2908 = vmatmul.mubr.f32.gmra.mrb[0].mxu0 %v2806
      %v2909 = vpop.f32.mrb[0].mxu0
      %v2910 = vadd.f32 0.0, %v2909
      %v2911 = vpop.f32.mrb[0].mxu0
      %2912 = vdwg.mxu0
      %s2913 = scalar_lea.vmem %s4, 256
      %v2914 = vld [vmem:[%s2913] sm:$0xff]
      %v2915 = vld [vmem:[%s2913 + $0x8] sm:$0xff]
      %v2916 = vld [vmem:[%s2913 + $0x10] sm:$0xff]
      %v2917 = vld [vmem:[%s2913 + $0x18] sm:$0xff]
      %v2919 = vsel %vm948, %v2875, 0
      %v2922 = vsel %vm948, %v2880, 0
      %v2925 = vsel %vm948, %v2885, 0
      %v2928 = vsel %vm948, %v2890, 0
      %v2931 = vsel %vm948, %v2895, 0
      %v2934 = vsel %vm948, %v2900, 0
      %v2937 = vsel %vm948, %v2905, 0
      %v2940 = vsel %vm948, %v2910, 0
      %2942 = vmatprep.subr.mxu0 0.0
      %2943 = vmatpush1.msra.mxu0 %v2914
      %2944 = vmatprep.subr.mxu0 0.0
      %2945 = vmatpush1.msra.mxu0 %v2915
      %2946 = vmatprep.subr.mxu0 0.0
      %2947 = vmatpush1.msra.mxu0 %v2916
      %2948 = vmatprep.subr.mxu0 0.0
      %2949 = vmatpush1.msra.mxu0 %v2917
      %2950 = vmatprep.subr.mxu0 0.0
      %2951 = vmatpush1.msra.mxu0 0.0
      %2952 = vmatprep.subr.mxu0 0.0
      %2953 = vmatpush1.msra.mxu0 0.0
      %2954 = vmatprep.subr.mxu0 0.0
      %2955 = vmatpush1.msra.mxu0 0.0
      %2956 = vmatprep.subr.mxu0 0.0
      %2957 = vmatpush1.msra.mxu0 0.0
      %2958 = vmatprep.subr.mxu0 0.0
      %2959 = vmatpush1.msra.mxu0 0.0
      %2960 = vmatprep.subr.mxu0 0.0
      %2961 = vmatpush1.msra.mxu0 0.0
      %2962 = vmatprep.subr.mxu0 0.0
      %2963 = vmatpush1.msra.mxu0 0.0
      %2964 = vmatprep.subr.mxu0 0.0
      %2965 = vmatpush1.msra.mxu0 0.0
      %2966 = vmatprep.subr.mxu0 0.0
      %2967 = vmatpush1.msra.mxu0 0.0
      %2968 = vmatprep.subr.mxu0 0.0
      %2969 = vmatpush1.msra.mxu0 0.0
      %2970 = vmatprep.subr.mxu0 0.0
      %2971 = vmatpush1.msra.mxu0 0.0
      %2972 = vmatprep.subr.mxu0 0.0
      %2973 = vmatpush1.msra.mxu0 0.0
      %2974 = vmatprep.subr.mxu0 0.0
      %2975 = vmatpush1.msra.mxu0 0.0
      %2976 = vmatprep.subr.mxu0 0.0
      %2977 = vmatpush1.msra.mxu0 0.0
      %2978 = vmatprep.subr.mxu0 0.0
      %2979 = vmatpush1.msra.mxu0 0.0
      %2980 = vmatprep.subr.mxu0 0.0
      %2981 = vmatpush1.msra.mxu0 0.0
      %2982 = vmatprep.subr.mxu0 0.0
      %2983 = vmatpush1.msra.mxu0 0.0
      %2984 = vmatprep.subr.mxu0 0.0
      %2985 = vmatpush1.msra.mxu0 0.0
      %2986 = vmatprep.subr.mxu0 0.0
      %2987 = vmatpush1.msra.mxu0 0.0
      %2988 = vmatprep.subr.mxu0 0.0
      %2989 = vmatpush1.msra.mxu0 0.0
      %2990 = vmatprep.subr.mxu0 0.0
      %2991 = vmatpush1.msra.mxu0 0.0
      %2992 = vmatprep.subr.mxu0 0.0
      %2993 = vmatpush1.msra.mxu0 0.0
      %2994 = vmatprep.subr.mxu0 0.0
      %2995 = vmatpush1.msra.mxu0 0.0
      %2996 = vmatprep.subr.mxu0 0.0
      %2997 = vmatpush1.msra.mxu0 0.0
      %2998 = vmatprep.subr.mxu0 0.0
      %2999 = vmatpush1.msra.mxu0 0.0
      %3000 = vmatprep.subr.mxu0 0.0
      %3001 = vmatpush1.msra.mxu0 0.0
      %3002 = vmatprep.subr.mxu0 0.0
      %3003 = vmatpush1.msra.mxu0 0.0
      %3004 = vmatprep.subr.mxu0 0.0
      %3005 = vmatpush1.msra.mxu0 0.0
      %3006 = vmatprep.mubr.f32.mxu0 0.0
      %3007 = vmatmul.mubr.f32.gmra.mrb[0].mxu0 %v2919
      %v3008 = vpop.f32.mrb[0].mxu0
      %v3009 = vadd.f32 0.0, %v3008
      %v3010 = vpop.f32.mrb[0].mxu0
      %3011 = vmatprep.mubr.f32.mxu0 0.0
      %3012 = vmatmul.mubr.f32.gmra.mrb[0].mxu0 %v2922
      %v3013 = vpop.f32.mrb[0].mxu0
      %v3014 = vadd.f32 0.0, %v3013
      %v3015 = vpop.f32.mrb[0].mxu0
      %3016 = vmatprep.mubr.f32.mxu0 0.0
      %3017 = vmatmul.mubr.f32.gmra.mrb[0].mxu0 %v2925
      %v3018 = vpop.f32.mrb[0].mxu0
      %v3019 = vadd.f32 0.0, %v3018
      %v3020 = vpop.f32.mrb[0].mxu0
      %3021 = vmatprep.mubr.f32.mxu0 0.0
      %3022 = vmatmul.mubr.f32.gmra.mrb[0].mxu0 %v2928
      %v3023 = vpop.f32.mrb[0].mxu0
      %v3024 = vadd.f32 0.0, %v3023
      %v3025 = vpop.f32.mrb[0].mxu0
      %3026 = vmatprep.mubr.f32.mxu0 0.0
      %3027 = vmatmul.mubr.f32.gmra.mrb[0].mxu0 %v2931
      %v3028 = vpop.f32.mrb[0].mxu0
      %v3029 = vadd.f32 0.0, %v3028
      %v3030 = vpop.f32.mrb[0].mxu0
      %3031 = vmatprep.mubr.f32.mxu0 0.0
      %3032 = vmatmul.mubr.f32.gmra.mrb[0].mxu0 %v2934
      %v3033 = vpop.f32.mrb[0].mxu0
      %v3034 = vadd.f32 0.0, %v3033
      %v3035 = vpop.f32.mrb[0].mxu0
      %3036 = vmatprep.mubr.f32.mxu0 0.0
      %3037 = vmatmul.mubr.f32.gmra.mrb[0].mxu0 %v2937
      %v3038 = vpop.f32.mrb[0].mxu0
      %v3039 = vadd.f32 0.0, %v3038
      %v3040 = vpop.f32.mrb[0].mxu0
      %3041 = vmatprep.mubr.f32.mxu0 0.0
      %3042 = vmatmul.mubr.f32.gmra.mrb[0].mxu0 %v2940
      %v3043 = vpop.f32.mrb[0].mxu0
      %v3044 = vadd.f32 0.0, %v3043
      %v3045 = vpop.f32.mrb[0].mxu0
      %3046 = vdwg.mxu0
      %v3047 = vadd.f32 %v2783, %v3009
      %v3048 = vadd.f32 %v2784, %v3014
      %v3049 = vadd.f32 %v2785, %v3019
      %v3050 = vadd.f32 %v2786, %v3024
      %v3051 = vadd.f32 %v2787, %v3029
      %v3052 = vadd.f32 %v2788, %v3034
      %v3053 = vadd.f32 %v2789, %v3039
      %v3054 = vadd.f32 %v2790, %v3044
      %v3055 = vld [vmem:[%s5] sm:$0x1]
      %v3057 = vlaneseq
      %v3058 = vshrl.u32 %v3057, 7
      %v3059 = vsub.s32 0, %v3058
      %v3060 = vrot.slane %v3055, %v3059
      %v3062 = vadd.f32 %v3047, %v3060
      %v3063 = vadd.f32 %v3048, %v3060
      %v3064 = vadd.f32 %v3049, %v3060
      %v3065 = vadd.f32 %v3050, %v3060
      %v3066 = vadd.f32 %v3051, %v3060
      %v3067 = vadd.f32 %v3052, %v3060
      %v3068 = vadd.f32 %v3053, %v3060
      %v3069 = vadd.f32 %v3054, %v3060
      %v3070 = vmax.f32 %v3062, 0.0
      %v3071 = vmax.f32 %v3063, 0.0
      %v3072 = vmax.f32 %v3064, 0.0
      %v3073 = vmax.f32 %v3065, 0.0
      %v3074 = vmax.f32 %v3066, 0.0
      %v3075 = vmax.f32 %v3067, 0.0
      %v3076 = vmax.f32 %v3068, 0.0
      %v3077 = vmax.f32 %v3069, 0.0
      %v3078 = vadd.f32 %v3070, %v626
      %v3079 = vadd.f32 %v3071, %v631
      %v3080 = vadd.f32 %v3072, %v636
      %v3081 = vadd.f32 %v3073, %v641
      %v3082 = vadd.f32 %v3074, %v646
      %v3083 = vadd.f32 %v3075, %v651
      %v3084 = vadd.f32 %v3076, %v656
      %v3085 = vadd.f32 %v3077, %v661
      %v3086 = vld [vmem:[%s9] sm:$0xff]
      %v3087 = vld [vmem:[%s9 + $0x8] sm:$0xff]
      %vm3088 = vcmask 523264
      %v3090 = vsel %vm3088, %v3086, 0
      %v3093 = vsel %vm3088, %v3087, 0
      %3095 = vmatprep.subr.mxu0 0.0
      %3096 = vmatpush1.msra.mxu0 %v3078
      %3097 = vmatprep.subr.mxu0 0.0
      %3098 = vmatpush1.msra.mxu0 %v3079
      %3099 = vmatprep.subr.mxu0 0.0
      %3100 = vmatpush1.msra.mxu0 %v3080
      %3101 = vmatprep.subr.mxu0 0.0
      %3102 = vmatpush1.msra.mxu0 %v3081
      %3103 = vmatprep.subr.mxu0 0.0
      %3104 = vmatpush1.msra.mxu0 %v3082
      %3105 = vmatprep.subr.mxu0 0.0
      %3106 = vmatpush1.msra.mxu0 %v3083
      %3107 = vmatprep.subr.mxu0 0.0
      %3108 = vmatpush1.msra.mxu0 %v3084
      %3109 = vmatprep.subr.mxu0 0.0
      %3110 = vmatpush1.msra.mxu0 %v3085
      %3111 = vmatprep.subr.mxu0 0.0
      %3112 = vmatpush1.msra.mxu0 0.0
      %3113 = vmatprep.subr.mxu0 0.0
      %3114 = vmatpush1.msra.mxu0 0.0
      %3115 = vmatprep.subr.mxu0 0.0
      %3116 = vmatpush1.msra.mxu0 0.0
      %3117 = vmatprep.subr.mxu0 0.0
      %3118 = vmatpush1.msra.mxu0 0.0
      %3119 = vmatprep.subr.mxu0 0.0
      %3120 = vmatpush1.msra.mxu0 0.0
      %3121 = vmatprep.subr.mxu0 0.0
      %3122 = vmatpush1.msra.mxu0 0.0
      %3123 = vmatprep.subr.mxu0 0.0
      %3124 = vmatpush1.msra.mxu0 0.0
      %3125 = vmatprep.subr.mxu0 0.0
      %3126 = vmatpush1.msra.mxu0 0.0
      %3127 = vmatprep.subr.mxu0 0.0
      %3128 = vmatpush1.msra.mxu0 0.0
      %3129 = vmatprep.subr.mxu0 0.0
      %3130 = vmatpush1.msra.mxu0 0.0
      %3131 = vmatprep.subr.mxu0 0.0
      %3132 = vmatpush1.msra.mxu0 0.0
      %3133 = vmatprep.subr.mxu0 0.0
      %3134 = vmatpush1.msra.mxu0 0.0
      %3135 = vmatprep.subr.mxu0 0.0
      %3136 = vmatpush1.msra.mxu0 0.0
      %3137 = vmatprep.subr.mxu0 0.0
      %3138 = vmatpush1.msra.mxu0 0.0
      %3139 = vmatprep.subr.mxu0 0.0
      %3140 = vmatpush1.msra.mxu0 0.0
      %3141 = vmatprep.subr.mxu0 0.0
      %3142 = vmatpush1.msra.mxu0 0.0
      %3143 = vmatprep.subr.mxu0 0.0
      %3144 = vmatpush1.msra.mxu0 0.0
      %3145 = vmatprep.subr.mxu0 0.0
      %3146 = vmatpush1.msra.mxu0 0.0
      %3147 = vmatprep.subr.mxu0 0.0
      %3148 = vmatpush1.msra.mxu0 0.0
      %3149 = vmatprep.subr.mxu0 0.0
      %3150 = vmatpush1.msra.mxu0 0.0
      %3151 = vmatprep.subr.mxu0 0.0
      %3152 = vmatpush1.msra.mxu0 0.0
      %3153 = vmatprep.subr.mxu0 0.0
      %3154 = vmatpush1.msra.mxu0 0.0
      %3155 = vmatprep.subr.mxu0 0.0
      %3156 = vmatpush1.msra.mxu0 0.0
      %3157 = vmatprep.subr.mxu0 0.0
      %3158 = vmatpush1.msra.mxu0 0.0
      %3159 = vmatprep.mubr.f32.mxu0 0.0
      %3160 = vmatmul.mubr.f32.gmra.mrb[0].mxu0 %v3090
      %v3161 = vpop.f32.mrb[0].mxu0
      %v3162 = vadd.f32 0.0, %v3161
      %v3163 = vpop.f32.mrb[0].mxu0
      %3164 = vmatprep.mubr.f32.mxu0 0.0
      %3165 = vmatmul.mubr.f32.gmra.mrb[0].mxu0 %v3093
      %v3166 = vpop.f32.mrb[0].mxu0
      %v3167 = vadd.f32 0.0, %v3166
      %v3168 = vpop.f32.mrb[0].mxu0
      %3169 = vdwg.mxu0
      %v3170 = vld [vmem:[%s7] sm:$0xff]
      %v3171 = vld [vmem:[%s7 + $0x8] sm:$0xff]
      %s3172 = scalar_lea.vmem %s9, 16
      %v3173 = vld [vmem:[%s3172] sm:$0xff]
      %v3174 = vld [vmem:[%s3172 + $0x8] sm:$0xff]
      %v3176 = vsel %vm3088, %v3173, 0
      %v3179 = vsel %vm3088, %v3174, 0
      %3181 = vmatprep.subr.mxu0 0.0
      %3182 = vmatpush1.msra.mxu0 %v3078
      %3183 = vmatprep.subr.mxu0 0.0
      %3184 = vmatpush1.msra.mxu0 %v3079
      %3185 = vmatprep.subr.mxu0 0.0
      %3186 = vmatpush1.msra.mxu0 %v3080
      %3187 = vmatprep.subr.mxu0 0.0
      %3188 = vmatpush1.msra.mxu0 %v3081
      %3189 = vmatprep.subr.mxu0 0.0
      %3190 = vmatpush1.msra.mxu0 %v3082
      %3191 = vmatprep.subr.mxu0 0.0
      %3192 = vmatpush1.msra.mxu0 %v3083
      %3193 = vmatprep.subr.mxu0 0.0
      %3194 = vmatpush1.msra.mxu0 %v3084
      %3195 = vmatprep.subr.mxu0 0.0
      %3196 = vmatpush1.msra.mxu0 %v3085
      %3197 = vmatprep.subr.mxu0 0.0
      %3198 = vmatpush1.msra.mxu0 0.0
      %3199 = vmatprep.subr.mxu0 0.0
      %3200 = vmatpush1.msra.mxu0 0.0
      %3201 = vmatprep.subr.mxu0 0.0
      %3202 = vmatpush1.msra.mxu0 0.0
      %3203 = vmatprep.subr.mxu0 0.0
      %3204 = vmatpush1.msra.mxu0 0.0
      %3205 = vmatprep.subr.mxu0 0.0
      %3206 = vmatpush1.msra.mxu0 0.0
      %3207 = vmatprep.subr.mxu0 0.0
      %3208 = vmatpush1.msra.mxu0 0.0
      %3209 = vmatprep.subr.mxu0 0.0
      %3210 = vmatpush1.msra.mxu0 0.0
      %3211 = vmatprep.subr.mxu0 0.0
      %3212 = vmatpush1.msra.mxu0 0.0
      %3213 = vmatprep.subr.mxu0 0.0
      %3214 = vmatpush1.msra.mxu0 0.0
      %3215 = vmatprep.subr.mxu0 0.0
      %3216 = vmatpush1.msra.mxu0 0.0
      %3217 = vmatprep.subr.mxu0 0.0
      %3218 = vmatpush1.msra.mxu0 0.0
      %3219 = vmatprep.subr.mxu0 0.0
      %3220 = vmatpush1.msra.mxu0 0.0
      %3221 = vmatprep.subr.mxu0 0.0
      %3222 = vmatpush1.msra.mxu0 0.0
      %3223 = vmatprep.subr.mxu0 0.0
      %3224 = vmatpush1.msra.mxu0 0.0
      %3225 = vmatprep.subr.mxu0 0.0
      %3226 = vmatpush1.msra.mxu0 0.0
      %3227 = vmatprep.subr.mxu0 0.0
      %3228 = vmatpush1.msra.mxu0 0.0
      %3229 = vmatprep.subr.mxu0 0.0
      %3230 = vmatpush1.msra.mxu0 0.0
      %3231 = vmatprep.subr.mxu0 0.0
      %3232 = vmatpush1.msra.mxu0 0.0
      %3233 = vmatprep.subr.mxu0 0.0
      %3234 = vmatpush1.msra.mxu0 0.0
      %3235 = vmatprep.subr.mxu0 0.0
      %3236 = vmatpush1.msra.mxu0 0.0
      %3237 = vmatprep.subr.mxu0 0.0
      %3238 = vmatpush1.msra.mxu0 0.0
      %3239 = vmatprep.subr.mxu0 0.0
      %3240 = vmatpush1.msra.mxu0 0.0
      %3241 = vmatprep.subr.mxu0 0.0
      %3242 = vmatpush1.msra.mxu0 0.0
      %3243 = vmatprep.subr.mxu0 0.0
      %3244 = vmatpush1.msra.mxu0 0.0
      %3245 = vmatprep.mubr.f32.mxu0 0.0
      %3246 = vmatmul.mubr.f32.gmra.mrb[0].mxu0 %v3176
      %v3247 = vpop.f32.mrb[0].mxu0
      %v3248 = vadd.f32 0.0, %v3247
      %v3249 = vpop.f32.mrb[0].mxu0
      %3250 = vmatprep.mubr.f32.mxu0 0.0
      %3251 = vmatmul.mubr.f32.gmra.mrb[0].mxu0 %v3179
      %v3252 = vpop.f32.mrb[0].mxu0
      %v3253 = vadd.f32 0.0, %v3252
      %v3254 = vpop.f32.mrb[0].mxu0
      %3255 = vdwg.mxu0
      %s3256 = scalar_lea.vmem %s7, 16
      %v3257 = vld [vmem:[%s3256] sm:$0xff]
      %v3258 = vld [vmem:[%s3256 + $0x8] sm:$0xff]
      %vm3259 = vcmask 130048
      %v3261 = vsel %vm3259, %v3248, 0
      %v3264 = vsel %vm3259, %v3253, 0
      %3266 = vmatprep.subr.mxu0 0.0
      %3267 = vmatpush1.msra.mxu0 %v3257
      %3268 = vmatprep.subr.mxu0 0.0
      %3269 = vmatpush1.msra.mxu0 %v3258
      %3270 = vmatprep.subr.mxu0 0.0
      %3271 = vmatpush1.msra.mxu0 0.0
      %3272 = vmatprep.subr.mxu0 0.0
      %3273 = vmatpush1.msra.mxu0 0.0
      %3274 = vmatprep.subr.mxu0 0.0
      %3275 = vmatpush1.msra.mxu0 0.0
      %3276 = vmatprep.subr.mxu0 0.0
      %3277 = vmatpush1.msra.mxu0 0.0
      %3278 = vmatprep.subr.mxu0 0.0
      %3279 = vmatpush1.msra.mxu0 0.0
      %3280 = vmatprep.subr.mxu0 0.0
      %3281 = vmatpush1.msra.mxu0 0.0
      %3282 = vmatprep.subr.mxu0 0.0
      %3283 = vmatpush1.msra.mxu0 0.0
      %3284 = vmatprep.subr.mxu0 0.0
      %3285 = vmatpush1.msra.mxu0 0.0
      %3286 = vmatprep.subr.mxu0 0.0
      %3287 = vmatpush1.msra.mxu0 0.0
      %3288 = vmatprep.subr.mxu0 0.0
      %3289 = vmatpush1.msra.mxu0 0.0
      %3290 = vmatprep.subr.mxu0 0.0
      %3291 = vmatpush1.msra.mxu0 0.0
      %3292 = vmatprep.subr.mxu0 0.0
      %3293 = vmatpush1.msra.mxu0 0.0
      %3294 = vmatprep.subr.mxu0 0.0
      %3295 = vmatpush1.msra.mxu0 0.0
      %3296 = vmatprep.subr.mxu0 0.0
      %3297 = vmatpush1.msra.mxu0 0.0
      %3298 = vmatprep.subr.mxu0 0.0
      %3299 = vmatpush1.msra.mxu0 0.0
      %3300 = vmatprep.subr.mxu0 0.0
      %3301 = vmatpush1.msra.mxu0 0.0
      %3302 = vmatprep.subr.mxu0 0.0
      %3303 = vmatpush1.msra.mxu0 0.0
      %3304 = vmatprep.subr.mxu0 0.0
      %3305 = vmatpush1.msra.mxu0 0.0
      %3306 = vmatprep.subr.mxu0 0.0
      %3307 = vmatpush1.msra.mxu0 0.0
      %3308 = vmatprep.subr.mxu0 0.0
      %3309 = vmatpush1.msra.mxu0 0.0
      %3310 = vmatprep.subr.mxu0 0.0
      %3311 = vmatpush1.msra.mxu0 0.0
      %3312 = vmatprep.subr.mxu0 0.0
      %3313 = vmatpush1.msra.mxu0 0.0
      %3314 = vmatprep.subr.mxu0 0.0
      %3315 = vmatpush1.msra.mxu0 0.0
      %3316 = vmatprep.subr.mxu0 0.0
      %3317 = vmatpush1.msra.mxu0 0.0
      %3318 = vmatprep.subr.mxu0 0.0
      %3319 = vmatpush1.msra.mxu0 0.0
      %3320 = vmatprep.subr.mxu0 0.0
      %3321 = vmatpush1.msra.mxu0 0.0
      %3322 = vmatprep.subr.mxu0 0.0
      %3323 = vmatpush1.msra.mxu0 0.0
      %3324 = vmatprep.subr.mxu0 0.0
      %3325 = vmatpush1.msra.mxu0 0.0
      %3326 = vmatprep.subr.mxu0 0.0
      %3327 = vmatpush1.msra.mxu0 0.0
      %3328 = vmatprep.subr.mxu0 0.0
      %3329 = vmatpush1.msra.mxu0 0.0
      %3330 = vmatprep.mubr.f32.mxu0 0.0
      %3331 = vmatmul.mubr.f32.gmra.mrb[0].mxu0 %v3261
      %v3332 = vpop.f32.mrb[0].mxu0
      %v3333 = vadd.f32 0.0, %v3332
      %v3334 = vpop.f32.mrb[0].mxu0
      %3335 = vmatprep.mubr.f32.mxu0 0.0
      %3336 = vmatmul.mubr.f32.gmra.mrb[0].mxu0 %v3264
      %v3337 = vpop.f32.mrb[0].mxu0
      %v3338 = vadd.f32 0.0, %v3337
      %v3339 = vpop.f32.mrb[0].mxu0
      %3340 = vdwg.mxu0
      %v3342 = vsel %vm3259, %v3162, 0
      %v3345 = vsel %vm3259, %v3167, 0
      %3347 = vmatprep.subr.mxu0 0.0
      %3348 = vmatpush1.msra.mxu0 %v3170
      %3349 = vmatprep.subr.mxu0 0.0
      %3350 = vmatpush1.msra.mxu0 %v3171
      %3351 = vmatprep.subr.mxu0 0.0
      %3352 = vmatpush1.msra.mxu0 0.0
      %3353 = vmatprep.subr.mxu0 0.0
      %3354 = vmatpush1.msra.mxu0 0.0
      %3355 = vmatprep.subr.mxu0 0.0
      %3356 = vmatpush1.msra.mxu0 0.0
      %3357 = vmatprep.subr.mxu0 0.0
      %3358 = vmatpush1.msra.mxu0 0.0
      %3359 = vmatprep.subr.mxu0 0.0
      %3360 = vmatpush1.msra.mxu0 0.0
      %3361 = vmatprep.subr.mxu0 0.0
      %3362 = vmatpush1.msra.mxu0 0.0
      %3363 = vmatprep.subr.mxu0 0.0
      %3364 = vmatpush1.msra.mxu0 0.0
      %3365 = vmatprep.subr.mxu0 0.0
      %3366 = vmatpush1.msra.mxu0 0.0
      %3367 = vmatprep.subr.mxu0 0.0
      %3368 = vmatpush1.msra.mxu0 0.0
      %3369 = vmatprep.subr.mxu0 0.0
      %3370 = vmatpush1.msra.mxu0 0.0
      %3371 = vmatprep.subr.mxu0 0.0
      %3372 = vmatpush1.msra.mxu0 0.0
      %3373 = vmatprep.subr.mxu0 0.0
      %3374 = vmatpush1.msra.mxu0 0.0
      %3375 = vmatprep.subr.mxu0 0.0
      %3376 = vmatpush1.msra.mxu0 0.0
      %3377 = vmatprep.subr.mxu0 0.0
      %3378 = vmatpush1.msra.mxu0 0.0
      %3379 = vmatprep.subr.mxu0 0.0
      %3380 = vmatpush1.msra.mxu0 0.0
      %3381 = vmatprep.subr.mxu0 0.0
      %3382 = vmatpush1.msra.mxu0 0.0
      %3383 = vmatprep.subr.mxu0 0.0
      %3384 = vmatpush1.msra.mxu0 0.0
      %3385 = vmatprep.subr.mxu0 0.0
      %3386 = vmatpush1.msra.mxu0 0.0
      %3387 = vmatprep.subr.mxu0 0.0
      %3388 = vmatpush1.msra.mxu0 0.0
      %3389 = vmatprep.subr.mxu0 0.0
      %3390 = vmatpush1.msra.mxu0 0.0
      %3391 = vmatprep.subr.mxu0 0.0
      %3392 = vmatpush1.msra.mxu0 0.0
      %3393 = vmatprep.subr.mxu0 0.0
      %3394 = vmatpush1.msra.mxu0 0.0
      %3395 = vmatprep.subr.mxu0 0.0
      %3396 = vmatpush1.msra.mxu0 0.0
      %3397 = vmatprep.subr.mxu0 0.0
      %3398 = vmatpush1.msra.mxu0 0.0
      %3399 = vmatprep.subr.mxu0 0.0
      %3400 = vmatpush1.msra.mxu0 0.0
      %3401 = vmatprep.subr.mxu0 0.0
      %3402 = vmatpush1.msra.mxu0 0.0
      %3403 = vmatprep.subr.mxu0 0.0
      %3404 = vmatpush1.msra.mxu0 0.0
      %3405 = vmatprep.subr.mxu0 0.0
      %3406 = vmatpush1.msra.mxu0 0.0
      %3407 = vmatprep.subr.mxu0 0.0
      %3408 = vmatpush1.msra.mxu0 0.0
      %3409 = vmatprep.subr.mxu0 0.0
      %3410 = vmatpush1.msra.mxu0 0.0
      %3411 = vmatprep.mubr.f32.mxu0 0.0
      %3412 = vmatmul.mubr.f32.gmra.mrb[0].mxu0 %v3342
      %v3413 = vpop.f32.mrb[0].mxu0
      %v3414 = vadd.f32 %v3333, %v3413
      %v3415 = vpop.f32.mrb[0].mxu0
      %3416 = vmatprep.mubr.f32.mxu0 0.0
      %3417 = vmatmul.mubr.f32.gmra.mrb[0].mxu0 %v3345
      %v3418 = vpop.f32.mrb[0].mxu0
      %v3419 = vadd.f32 %v3338, %v3418
      %v3420 = vpop.f32.mrb[0].mxu0
      %3421 = vdwg.mxu0
      %s3422 = scalar_lea.vmem %s9, 32
      %v3423 = vld [vmem:[%s3422] sm:$0xff]
      %v3424 = vld [vmem:[%s3422 + $0x8] sm:$0xff]
      %v3426 = vsel %vm3088, %v3423, 0
      %v3429 = vsel %vm3088, %v3424, 0
      %3431 = vmatprep.subr.mxu0 0.0
      %3432 = vmatpush1.msra.mxu0 %v3078
      %3433 = vmatprep.subr.mxu0 0.0
      %3434 = vmatpush1.msra.mxu0 %v3079
      %3435 = vmatprep.subr.mxu0 0.0
      %3436 = vmatpush1.msra.mxu0 %v3080
      %3437 = vmatprep.subr.mxu0 0.0
      %3438 = vmatpush1.msra.mxu0 %v3081
      %3439 = vmatprep.subr.mxu0 0.0
      %3440 = vmatpush1.msra.mxu0 %v3082
      %3441 = vmatprep.subr.mxu0 0.0
      %3442 = vmatpush1.msra.mxu0 %v3083
      %3443 = vmatprep.subr.mxu0 0.0
      %3444 = vmatpush1.msra.mxu0 %v3084
      %3445 = vmatprep.subr.mxu0 0.0
      %3446 = vmatpush1.msra.mxu0 %v3085
      %3447 = vmatprep.subr.mxu0 0.0
      %3448 = vmatpush1.msra.mxu0 0.0
      %3449 = vmatprep.subr.mxu0 0.0
      %3450 = vmatpush1.msra.mxu0 0.0
      %3451 = vmatprep.subr.mxu0 0.0
      %3452 = vmatpush1.msra.mxu0 0.0
      %3453 = vmatprep.subr.mxu0 0.0
      %3454 = vmatpush1.msra.mxu0 0.0
      %3455 = vmatprep.subr.mxu0 0.0
      %3456 = vmatpush1.msra.mxu0 0.0
      %3457 = vmatprep.subr.mxu0 0.0
      %3458 = vmatpush1.msra.mxu0 0.0
      %3459 = vmatprep.subr.mxu0 0.0
      %3460 = vmatpush1.msra.mxu0 0.0
      %3461 = vmatprep.subr.mxu0 0.0
      %3462 = vmatpush1.msra.mxu0 0.0
      %3463 = vmatprep.subr.mxu0 0.0
      %3464 = vmatpush1.msra.mxu0 0.0
      %3465 = vmatprep.subr.mxu0 0.0
      %3466 = vmatpush1.msra.mxu0 0.0
      %3467 = vmatprep.subr.mxu0 0.0
      %3468 = vmatpush1.msra.mxu0 0.0
      %3469 = vmatprep.subr.mxu0 0.0
      %3470 = vmatpush1.msra.mxu0 0.0
      %3471 = vmatprep.subr.mxu0 0.0
      %3472 = vmatpush1.msra.mxu0 0.0
      %3473 = vmatprep.subr.mxu0 0.0
      %3474 = vmatpush1.msra.mxu0 0.0
      %3475 = vmatprep.subr.mxu0 0.0
      %3476 = vmatpush1.msra.mxu0 0.0
      %3477 = vmatprep.subr.mxu0 0.0
      %3478 = vmatpush1.msra.mxu0 0.0
      %3479 = vmatprep.subr.mxu0 0.0
      %3480 = vmatpush1.msra.mxu0 0.0
      %3481 = vmatprep.subr.mxu0 0.0
      %3482 = vmatpush1.msra.mxu0 0.0
      %3483 = vmatprep.subr.mxu0 0.0
      %3484 = vmatpush1.msra.mxu0 0.0
      %3485 = vmatprep.subr.mxu0 0.0
      %3486 = vmatpush1.msra.mxu0 0.0
      %3487 = vmatprep.subr.mxu0 0.0
      %3488 = vmatpush1.msra.mxu0 0.0
      %3489 = vmatprep.subr.mxu0 0.0
      %3490 = vmatpush1.msra.mxu0 0.0
      %3491 = vmatprep.subr.mxu0 0.0
      %3492 = vmatpush1.msra.mxu0 0.0
      %3493 = vmatprep.subr.mxu0 0.0
      %3494 = vmatpush1.msra.mxu0 0.0
      %3495 = vmatprep.mubr.f32.mxu0 0.0
      %3496 = vmatmul.mubr.f32.gmra.mrb[0].mxu0 %v3426
      %v3497 = vpop.f32.mrb[0].mxu0
      %v3498 = vadd.f32 0.0, %v3497
      %v3499 = vpop.f32.mrb[0].mxu0
      %3500 = vmatprep.mubr.f32.mxu0 0.0
      %3501 = vmatmul.mubr.f32.gmra.mrb[0].mxu0 %v3429
      %v3502 = vpop.f32.mrb[0].mxu0
      %v3503 = vadd.f32 0.0, %v3502
      %v3504 = vpop.f32.mrb[0].mxu0
      %3505 = vdwg.mxu0
      %s3506 = scalar_lea.vmem %s7, 32
      %v3507 = vld [vmem:[%s3506] sm:$0xff]
      %v3508 = vld [vmem:[%s3506 + $0x8] sm:$0xff]
      %v3510 = vsel %vm3259, %v3498, 0
      %v3513 = vsel %vm3259, %v3503, 0
      %3515 = vmatprep.subr.mxu0 0.0
      %3516 = vmatpush1.msra.mxu0 %v3507
      %3517 = vmatprep.subr.mxu0 0.0
      %3518 = vmatpush1.msra.mxu0 %v3508
      %3519 = vmatprep.subr.mxu0 0.0
      %3520 = vmatpush1.msra.mxu0 0.0
      %3521 = vmatprep.subr.mxu0 0.0
      %3522 = vmatpush1.msra.mxu0 0.0
      %3523 = vmatprep.subr.mxu0 0.0
      %3524 = vmatpush1.msra.mxu0 0.0
      %3525 = vmatprep.subr.mxu0 0.0
      %3526 = vmatpush1.msra.mxu0 0.0
      %3527 = vmatprep.subr.mxu0 0.0
      %3528 = vmatpush1.msra.mxu0 0.0
      %3529 = vmatprep.subr.mxu0 0.0
      %3530 = vmatpush1.msra.mxu0 0.0
      %3531 = vmatprep.subr.mxu0 0.0
      %3532 = vmatpush1.msra.mxu0 0.0
      %3533 = vmatprep.subr.mxu0 0.0
      %3534 = vmatpush1.msra.mxu0 0.0
      %3535 = vmatprep.subr.mxu0 0.0
      %3536 = vmatpush1.msra.mxu0 0.0
      %3537 = vmatprep.subr.mxu0 0.0
      %3538 = vmatpush1.msra.mxu0 0.0
      %3539 = vmatprep.subr.mxu0 0.0
      %3540 = vmatpush1.msra.mxu0 0.0
      %3541 = vmatprep.subr.mxu0 0.0
      %3542 = vmatpush1.msra.mxu0 0.0
      %3543 = vmatprep.subr.mxu0 0.0
      %3544 = vmatpush1.msra.mxu0 0.0
      %3545 = vmatprep.subr.mxu0 0.0
      %3546 = vmatpush1.msra.mxu0 0.0
      %3547 = vmatprep.subr.mxu0 0.0
      %3548 = vmatpush1.msra.mxu0 0.0
      %3549 = vmatprep.subr.mxu0 0.0
      %3550 = vmatpush1.msra.mxu0 0.0
      %3551 = vmatprep.subr.mxu0 0.0
      %3552 = vmatpush1.msra.mxu0 0.0
      %3553 = vmatprep.subr.mxu0 0.0
      %3554 = vmatpush1.msra.mxu0 0.0
      %3555 = vmatprep.subr.mxu0 0.0
      %3556 = vmatpush1.msra.mxu0 0.0
      %3557 = vmatprep.subr.mxu0 0.0
      %3558 = vmatpush1.msra.mxu0 0.0
      %3559 = vmatprep.subr.mxu0 0.0
      %3560 = vmatpush1.msra.mxu0 0.0
      %3561 = vmatprep.subr.mxu0 0.0
      %3562 = vmatpush1.msra.mxu0 0.0
      %3563 = vmatprep.subr.mxu0 0.0
      %3564 = vmatpush1.msra.mxu0 0.0
      %3565 = vmatprep.subr.mxu0 0.0
      %3566 = vmatpush1.msra.mxu0 0.0
      %3567 = vmatprep.subr.mxu0 0.0
      %3568 = vmatpush1.msra.mxu0 0.0
      %3569 = vmatprep.subr.mxu0 0.0
      %3570 = vmatpush1.msra.mxu0 0.0
      %3571 = vmatprep.subr.mxu0 0.0
      %3572 = vmatpush1.msra.mxu0 0.0
      %3573 = vmatprep.subr.mxu0 0.0
      %3574 = vmatpush1.msra.mxu0 0.0
      %3575 = vmatprep.subr.mxu0 0.0
      %3576 = vmatpush1.msra.mxu0 0.0
      %3577 = vmatprep.subr.mxu0 0.0
      %3578 = vmatpush1.msra.mxu0 0.0
      %3579 = vmatprep.mubr.f32.mxu0 0.0
      %3580 = vmatmul.mubr.f32.gmra.mrb[0].mxu0 %v3510
      %v3581 = vpop.f32.mrb[0].mxu0
      %v3582 = vadd.f32 0.0, %v3581
      %v3583 = vpop.f32.mrb[0].mxu0
      %3584 = vmatprep.mubr.f32.mxu0 0.0
      %3585 = vmatmul.mubr.f32.gmra.mrb[0].mxu0 %v3513
      %v3586 = vpop.f32.mrb[0].mxu0
      %v3587 = vadd.f32 0.0, %v3586
      %v3588 = vpop.f32.mrb[0].mxu0
      %3589 = vdwg.mxu0
      %v3590 = vadd.f32 %v3414, %v3582
      %v3591 = vadd.f32 %v3419, %v3587
      %s3592 = scalar_lea.vmem %s9, 48
      %v3593 = vld [vmem:[%s3592] sm:$0xff]
      %v3594 = vld [vmem:[%s3592 + $0x8] sm:$0xff]
      %v3596 = vsel %vm3088, %v3593, 0
      %v3599 = vsel %vm3088, %v3594, 0
      %3601 = vmatprep.subr.mxu0 0.0
      %3602 = vmatpush1.msra.mxu0 %v3078
      %3603 = vmatprep.subr.mxu0 0.0
      %3604 = vmatpush1.msra.mxu0 %v3079
      %3605 = vmatprep.subr.mxu0 0.0
      %3606 = vmatpush1.msra.mxu0 %v3080
      %3607 = vmatprep.subr.mxu0 0.0
      %3608 = vmatpush1.msra.mxu0 %v3081
      %3609 = vmatprep.subr.mxu0 0.0
      %3610 = vmatpush1.msra.mxu0 %v3082
      %3611 = vmatprep.subr.mxu0 0.0
      %3612 = vmatpush1.msra.mxu0 %v3083
      %3613 = vmatprep.subr.mxu0 0.0
      %3614 = vmatpush1.msra.mxu0 %v3084
      %3615 = vmatprep.subr.mxu0 0.0
      %3616 = vmatpush1.msra.mxu0 %v3085
      %3617 = vmatprep.subr.mxu0 0.0
      %3618 = vmatpush1.msra.mxu0 0.0
      %3619 = vmatprep.subr.mxu0 0.0
      %3620 = vmatpush1.msra.mxu0 0.0
      %3621 = vmatprep.subr.mxu0 0.0
      %3622 = vmatpush1.msra.mxu0 0.0
      %3623 = vmatprep.subr.mxu0 0.0
      %3624 = vmatpush1.msra.mxu0 0.0
      %3625 = vmatprep.subr.mxu0 0.0
      %3626 = vmatpush1.msra.mxu0 0.0
      %3627 = vmatprep.subr.mxu0 0.0
      %3628 = vmatpush1.msra.mxu0 0.0
      %3629 = vmatprep.subr.mxu0 0.0
      %3630 = vmatpush1.msra.mxu0 0.0
      %3631 = vmatprep.subr.mxu0 0.0
      %3632 = vmatpush1.msra.mxu0 0.0
      %3633 = vmatprep.subr.mxu0 0.0
      %3634 = vmatpush1.msra.mxu0 0.0
      %3635 = vmatprep.subr.mxu0 0.0
      %3636 = vmatpush1.msra.mxu0 0.0
      %3637 = vmatprep.subr.mxu0 0.0
      %3638 = vmatpush1.msra.mxu0 0.0
      %3639 = vmatprep.subr.mxu0 0.0
      %3640 = vmatpush1.msra.mxu0 0.0
      %3641 = vmatprep.subr.mxu0 0.0
      %3642 = vmatpush1.msra.mxu0 0.0
      %3643 = vmatprep.subr.mxu0 0.0
      %3644 = vmatpush1.msra.mxu0 0.0
      %3645 = vmatprep.subr.mxu0 0.0
      %3646 = vmatpush1.msra.mxu0 0.0
      %3647 = vmatprep.subr.mxu0 0.0
      %3648 = vmatpush1.msra.mxu0 0.0
      %3649 = vmatprep.subr.mxu0 0.0
      %3650 = vmatpush1.msra.mxu0 0.0
      %3651 = vmatprep.subr.mxu0 0.0
      %3652 = vmatpush1.msra.mxu0 0.0
      %3653 = vmatprep.subr.mxu0 0.0
      %3654 = vmatpush1.msra.mxu0 0.0
      %3655 = vmatprep.subr.mxu0 0.0
      %3656 = vmatpush1.msra.mxu0 0.0
      %3657 = vmatprep.subr.mxu0 0.0
      %3658 = vmatpush1.msra.mxu0 0.0
      %3659 = vmatprep.subr.mxu0 0.0
      %3660 = vmatpush1.msra.mxu0 0.0
      %3661 = vmatprep.subr.mxu0 0.0
      %3662 = vmatpush1.msra.mxu0 0.0
      %3663 = vmatprep.subr.mxu0 0.0
      %3664 = vmatpush1.msra.mxu0 0.0
      %3665 = vmatprep.mubr.f32.mxu0 0.0
      %3666 = vmatmul.mubr.f32.gmra.mrb[0].mxu0 %v3596
      %v3667 = vpop.f32.mrb[0].mxu0
      %v3668 = vadd.f32 0.0, %v3667
      %v3669 = vpop.f32.mrb[0].mxu0
      %3670 = vmatprep.mubr.f32.mxu0 0.0
      %3671 = vmatmul.mubr.f32.gmra.mrb[0].mxu0 %v3599
      %v3672 = vpop.f32.mrb[0].mxu0
      %v3673 = vadd.f32 0.0, %v3672
      %v3674 = vpop.f32.mrb[0].mxu0
      %3675 = vdwg.mxu0
      %s3676 = scalar_lea.vmem %s7, 48
      %v3677 = vld [vmem:[%s3676] sm:$0xff]
      %v3678 = vld [vmem:[%s3676 + $0x8] sm:$0xff]
      %v3680 = vsel %vm3259, %v3668, 0
      %v3683 = vsel %vm3259, %v3673, 0
      %3685 = vmatprep.subr.mxu0 0.0
      %3686 = vmatpush1.msra.mxu0 %v3677
      %3687 = vmatprep.subr.mxu0 0.0
      %3688 = vmatpush1.msra.mxu0 %v3678
      %3689 = vmatprep.subr.mxu0 0.0
      %3690 = vmatpush1.msra.mxu0 0.0
      %3691 = vmatprep.subr.mxu0 0.0
      %3692 = vmatpush1.msra.mxu0 0.0
      %3693 = vmatprep.subr.mxu0 0.0
      %3694 = vmatpush1.msra.mxu0 0.0
      %3695 = vmatprep.subr.mxu0 0.0
      %3696 = vmatpush1.msra.mxu0 0.0
      %3697 = vmatprep.subr.mxu0 0.0
      %3698 = vmatpush1.msra.mxu0 0.0
      %3699 = vmatprep.subr.mxu0 0.0
      %3700 = vmatpush1.msra.mxu0 0.0
      %3701 = vmatprep.subr.mxu0 0.0
      %3702 = vmatpush1.msra.mxu0 0.0
      %3703 = vmatprep.subr.mxu0 0.0
      %3704 = vmatpush1.msra.mxu0 0.0
      %3705 = vmatprep.subr.mxu0 0.0
      %3706 = vmatpush1.msra.mxu0 0.0
      %3707 = vmatprep.subr.mxu0 0.0
      %3708 = vmatpush1.msra.mxu0 0.0
      %3709 = vmatprep.subr.mxu0 0.0
      %3710 = vmatpush1.msra.mxu0 0.0
      %3711 = vmatprep.subr.mxu0 0.0
      %3712 = vmatpush1.msra.mxu0 0.0
      %3713 = vmatprep.subr.mxu0 0.0
      %3714 = vmatpush1.msra.mxu0 0.0
      %3715 = vmatprep.subr.mxu0 0.0
      %3716 = vmatpush1.msra.mxu0 0.0
      %3717 = vmatprep.subr.mxu0 0.0
      %3718 = vmatpush1.msra.mxu0 0.0
      %3719 = vmatprep.subr.mxu0 0.0
      %3720 = vmatpush1.msra.mxu0 0.0
      %3721 = vmatprep.subr.mxu0 0.0
      %3722 = vmatpush1.msra.mxu0 0.0
      %3723 = vmatprep.subr.mxu0 0.0
      %3724 = vmatpush1.msra.mxu0 0.0
      %3725 = vmatprep.subr.mxu0 0.0
      %3726 = vmatpush1.msra.mxu0 0.0
      %3727 = vmatprep.subr.mxu0 0.0
      %3728 = vmatpush1.msra.mxu0 0.0
      %3729 = vmatprep.subr.mxu0 0.0
      %3730 = vmatpush1.msra.mxu0 0.0
      %3731 = vmatprep.subr.mxu0 0.0
      %3732 = vmatpush1.msra.mxu0 0.0
      %3733 = vmatprep.subr.mxu0 0.0
      %3734 = vmatpush1.msra.mxu0 0.0
      %3735 = vmatprep.subr.mxu0 0.0
      %3736 = vmatpush1.msra.mxu0 0.0
      %3737 = vmatprep.subr.mxu0 0.0
      %3738 = vmatpush1.msra.mxu0 0.0
      %3739 = vmatprep.subr.mxu0 0.0
      %3740 = vmatpush1.msra.mxu0 0.0
      %3741 = vmatprep.subr.mxu0 0.0
      %3742 = vmatpush1.msra.mxu0 0.0
      %3743 = vmatprep.subr.mxu0 0.0
      %3744 = vmatpush1.msra.mxu0 0.0
      %3745 = vmatprep.subr.mxu0 0.0
      %3746 = vmatpush1.msra.mxu0 0.0
      %3747 = vmatprep.subr.mxu0 0.0
      %3748 = vmatpush1.msra.mxu0 0.0
      %3749 = vmatprep.mubr.f32.mxu0 0.0
      %3750 = vmatmul.mubr.f32.gmra.mrb[0].mxu0 %v3680
      %v3751 = vpop.f32.mrb[0].mxu0
      %v3752 = vadd.f32 0.0, %v3751
      %v3753 = vpop.f32.mrb[0].mxu0
      %3754 = vmatprep.mubr.f32.mxu0 0.0
      %3755 = vmatmul.mubr.f32.gmra.mrb[0].mxu0 %v3683
      %v3756 = vpop.f32.mrb[0].mxu0
      %v3757 = vadd.f32 0.0, %v3756
      %v3758 = vpop.f32.mrb[0].mxu0
      %3759 = vdwg.mxu0
      %v3760 = vadd.f32 %v3590, %v3752
      %v3761 = vadd.f32 %v3591, %v3757
      %s3762 = scalar_lea.vmem %s9, 64
      %v3763 = vld [vmem:[%s3762] sm:$0xff]
      %v3764 = vld [vmem:[%s3762 + $0x8] sm:$0xff]
      %v3766 = vsel %vm3088, %v3763, 0
      %v3769 = vsel %vm3088, %v3764, 0
      %3771 = vmatprep.subr.mxu0 0.0
      %3772 = vmatpush1.msra.mxu0 %v3078
      %3773 = vmatprep.subr.mxu0 0.0
      %3774 = vmatpush1.msra.mxu0 %v3079
      %3775 = vmatprep.subr.mxu0 0.0
      %3776 = vmatpush1.msra.mxu0 %v3080
      %3777 = vmatprep.subr.mxu0 0.0
      %3778 = vmatpush1.msra.mxu0 %v3081
      %3779 = vmatprep.subr.mxu0 0.0
      %3780 = vmatpush1.msra.mxu0 %v3082
      %3781 = vmatprep.subr.mxu0 0.0
      %3782 = vmatpush1.msra.mxu0 %v3083
      %3783 = vmatprep.subr.mxu0 0.0
      %3784 = vmatpush1.msra.mxu0 %v3084
      %3785 = vmatprep.subr.mxu0 0.0
      %3786 = vmatpush1.msra.mxu0 %v3085
      %3787 = vmatprep.subr.mxu0 0.0
      %3788 = vmatpush1.msra.mxu0 0.0
      %3789 = vmatprep.subr.mxu0 0.0
      %3790 = vmatpush1.msra.mxu0 0.0
      %3791 = vmatprep.subr.mxu0 0.0
      %3792 = vmatpush1.msra.mxu0 0.0
      %3793 = vmatprep.subr.mxu0 0.0
      %3794 = vmatpush1.msra.mxu0 0.0
      %3795 = vmatprep.subr.mxu0 0.0
      %3796 = vmatpush1.msra.mxu0 0.0
      %3797 = vmatprep.subr.mxu0 0.0
      %3798 = vmatpush1.msra.mxu0 0.0
      %3799 = vmatprep.subr.mxu0 0.0
      %3800 = vmatpush1.msra.mxu0 0.0
      %3801 = vmatprep.subr.mxu0 0.0
      %3802 = vmatpush1.msra.mxu0 0.0
      %3803 = vmatprep.subr.mxu0 0.0
      %3804 = vmatpush1.msra.mxu0 0.0
      %3805 = vmatprep.subr.mxu0 0.0
      %3806 = vmatpush1.msra.mxu0 0.0
      %3807 = vmatprep.subr.mxu0 0.0
      %3808 = vmatpush1.msra.mxu0 0.0
      %3809 = vmatprep.subr.mxu0 0.0
      %3810 = vmatpush1.msra.mxu0 0.0
      %3811 = vmatprep.subr.mxu0 0.0
      %3812 = vmatpush1.msra.mxu0 0.0
      %3813 = vmatprep.subr.mxu0 0.0
      %3814 = vmatpush1.msra.mxu0 0.0
      %3815 = vmatprep.subr.mxu0 0.0
      %3816 = vmatpush1.msra.mxu0 0.0
      %3817 = vmatprep.subr.mxu0 0.0
      %3818 = vmatpush1.msra.mxu0 0.0
      %3819 = vmatprep.subr.mxu0 0.0
      %3820 = vmatpush1.msra.mxu0 0.0
      %3821 = vmatprep.subr.mxu0 0.0
      %3822 = vmatpush1.msra.mxu0 0.0
      %3823 = vmatprep.subr.mxu0 0.0
      %3824 = vmatpush1.msra.mxu0 0.0
      %3825 = vmatprep.subr.mxu0 0.0
      %3826 = vmatpush1.msra.mxu0 0.0
      %3827 = vmatprep.subr.mxu0 0.0
      %3828 = vmatpush1.msra.mxu0 0.0
      %3829 = vmatprep.subr.mxu0 0.0
      %3830 = vmatpush1.msra.mxu0 0.0
      %3831 = vmatprep.subr.mxu0 0.0
      %3832 = vmatpush1.msra.mxu0 0.0
      %3833 = vmatprep.subr.mxu0 0.0
      %3834 = vmatpush1.msra.mxu0 0.0
      %3835 = vmatprep.mubr.f32.mxu0 0.0
      %3836 = vmatmul.mubr.f32.gmra.mrb[0].mxu0 %v3766
      %v3837 = vpop.f32.mrb[0].mxu0
      %v3838 = vadd.f32 0.0, %v3837
      %v3839 = vpop.f32.mrb[0].mxu0
      %3840 = vmatprep.mubr.f32.mxu0 0.0
      %3841 = vmatmul.mubr.f32.gmra.mrb[0].mxu0 %v3769
      %v3842 = vpop.f32.mrb[0].mxu0
      %v3843 = vadd.f32 0.0, %v3842
      %v3844 = vpop.f32.mrb[0].mxu0
      %3845 = vdwg.mxu0
      %s3846 = scalar_lea.vmem %s7, 64
      %v3847 = vld [vmem:[%s3846] sm:$0xff]
      %v3848 = vld [vmem:[%s3846 + $0x8] sm:$0xff]
      %v3850 = vsel %vm3259, %v3838, 0
      %v3853 = vsel %vm3259, %v3843, 0
      %3855 = vmatprep.subr.mxu0 0.0
      %3856 = vmatpush1.msra.mxu0 %v3847
      %3857 = vmatprep.subr.mxu0 0.0
      %3858 = vmatpush1.msra.mxu0 %v3848
      %3859 = vmatprep.subr.mxu0 0.0
      %3860 = vmatpush1.msra.mxu0 0.0
      %3861 = vmatprep.subr.mxu0 0.0
      %3862 = vmatpush1.msra.mxu0 0.0
      %3863 = vmatprep.subr.mxu0 0.0
      %3864 = vmatpush1.msra.mxu0 0.0
      %3865 = vmatprep.subr.mxu0 0.0
      %3866 = vmatpush1.msra.mxu0 0.0
      %3867 = vmatprep.subr.mxu0 0.0
      %3868 = vmatpush1.msra.mxu0 0.0
      %3869 = vmatprep.subr.mxu0 0.0
      %3870 = vmatpush1.msra.mxu0 0.0
      %3871 = vmatprep.subr.mxu0 0.0
      %3872 = vmatpush1.msra.mxu0 0.0
      %3873 = vmatprep.subr.mxu0 0.0
      %3874 = vmatpush1.msra.mxu0 0.0
      %3875 = vmatprep.subr.mxu0 0.0
      %3876 = vmatpush1.msra.mxu0 0.0
      %3877 = vmatprep.subr.mxu0 0.0
      %3878 = vmatpush1.msra.mxu0 0.0
      %3879 = vmatprep.subr.mxu0 0.0
      %3880 = vmatpush1.msra.mxu0 0.0
      %3881 = vmatprep.subr.mxu0 0.0
      %3882 = vmatpush1.msra.mxu0 0.0
      %3883 = vmatprep.subr.mxu0 0.0
      %3884 = vmatpush1.msra.mxu0 0.0
      %3885 = vmatprep.subr.mxu0 0.0
      %3886 = vmatpush1.msra.mxu0 0.0
      %3887 = vmatprep.subr.mxu0 0.0
      %3888 = vmatpush1.msra.mxu0 0.0
      %3889 = vmatprep.subr.mxu0 0.0
      %3890 = vmatpush1.msra.mxu0 0.0
      %3891 = vmatprep.subr.mxu0 0.0
      %3892 = vmatpush1.msra.mxu0 0.0
      %3893 = vmatprep.subr.mxu0 0.0
      %3894 = vmatpush1.msra.mxu0 0.0
      %3895 = vmatprep.subr.mxu0 0.0
      %3896 = vmatpush1.msra.mxu0 0.0
      %3897 = vmatprep.subr.mxu0 0.0
      %3898 = vmatpush1.msra.mxu0 0.0
      %3899 = vmatprep.subr.mxu0 0.0
      %3900 = vmatpush1.msra.mxu0 0.0
      %3901 = vmatprep.subr.mxu0 0.0
      %3902 = vmatpush1.msra.mxu0 0.0
      %3903 = vmatprep.subr.mxu0 0.0
      %3904 = vmatpush1.msra.mxu0 0.0
      %3905 = vmatprep.subr.mxu0 0.0
      %3906 = vmatpush1.msra.mxu0 0.0
      %3907 = vmatprep.subr.mxu0 0.0
      %3908 = vmatpush1.msra.mxu0 0.0
      %3909 = vmatprep.subr.mxu0 0.0
      %3910 = vmatpush1.msra.mxu0 0.0
      %3911 = vmatprep.subr.mxu0 0.0
      %3912 = vmatpush1.msra.mxu0 0.0
      %3913 = vmatprep.subr.mxu0 0.0
      %3914 = vmatpush1.msra.mxu0 0.0
      %3915 = vmatprep.subr.mxu0 0.0
      %3916 = vmatpush1.msra.mxu0 0.0
      %3917 = vmatprep.subr.mxu0 0.0
      %3918 = vmatpush1.msra.mxu0 0.0
      %3919 = vmatprep.mubr.f32.mxu0 0.0
      %3920 = vmatmul.mubr.f32.gmra.mrb[0].mxu0 %v3850
      %v3921 = vpop.f32.mrb[0].mxu0
      %v3922 = vadd.f32 0.0, %v3921
      %v3923 = vpop.f32.mrb[0].mxu0
      %3924 = vmatprep.mubr.f32.mxu0 0.0
      %3925 = vmatmul.mubr.f32.gmra.mrb[0].mxu0 %v3853
      %v3926 = vpop.f32.mrb[0].mxu0
      %v3927 = vadd.f32 0.0, %v3926
      %v3928 = vpop.f32.mrb[0].mxu0
      %3929 = vdwg.mxu0
      %v3930 = vadd.f32 %v3760, %v3922
      %v3931 = vadd.f32 %v3761, %v3927
      %s3932 = scalar_lea.vmem %s9, 80
      %v3933 = vld [vmem:[%s3932] sm:$0xff]
      %v3934 = vld [vmem:[%s3932 + $0x8] sm:$0xff]
      %v3936 = vsel %vm3088, %v3933, 0
      %v3939 = vsel %vm3088, %v3934, 0
      %3941 = vmatprep.subr.mxu0 0.0
      %3942 = vmatpush1.msra.mxu0 %v3078
      %3943 = vmatprep.subr.mxu0 0.0
      %3944 = vmatpush1.msra.mxu0 %v3079
      %3945 = vmatprep.subr.mxu0 0.0
      %3946 = vmatpush1.msra.mxu0 %v3080
      %3947 = vmatprep.subr.mxu0 0.0
      %3948 = vmatpush1.msra.mxu0 %v3081
      %3949 = vmatprep.subr.mxu0 0.0
      %3950 = vmatpush1.msra.mxu0 %v3082
      %3951 = vmatprep.subr.mxu0 0.0
      %3952 = vmatpush1.msra.mxu0 %v3083
      %3953 = vmatprep.subr.mxu0 0.0
      %3954 = vmatpush1.msra.mxu0 %v3084
      %3955 = vmatprep.subr.mxu0 0.0
      %3956 = vmatpush1.msra.mxu0 %v3085
      %3957 = vmatprep.subr.mxu0 0.0
      %3958 = vmatpush1.msra.mxu0 0.0
      %3959 = vmatprep.subr.mxu0 0.0
      %3960 = vmatpush1.msra.mxu0 0.0
      %3961 = vmatprep.subr.mxu0 0.0
      %3962 = vmatpush1.msra.mxu0 0.0
      %3963 = vmatprep.subr.mxu0 0.0
      %3964 = vmatpush1.msra.mxu0 0.0
      %3965 = vmatprep.subr.mxu0 0.0
      %3966 = vmatpush1.msra.mxu0 0.0
      %3967 = vmatprep.subr.mxu0 0.0
      %3968 = vmatpush1.msra.mxu0 0.0
      %3969 = vmatprep.subr.mxu0 0.0
      %3970 = vmatpush1.msra.mxu0 0.0
      %3971 = vmatprep.subr.mxu0 0.0
      %3972 = vmatpush1.msra.mxu0 0.0
      %3973 = vmatprep.subr.mxu0 0.0
      %3974 = vmatpush1.msra.mxu0 0.0
      %3975 = vmatprep.subr.mxu0 0.0
      %3976 = vmatpush1.msra.mxu0 0.0
      %3977 = vmatprep.subr.mxu0 0.0
      %3978 = vmatpush1.msra.mxu0 0.0
      %3979 = vmatprep.subr.mxu0 0.0
      %3980 = vmatpush1.msra.mxu0 0.0
      %3981 = vmatprep.subr.mxu0 0.0
      %3982 = vmatpush1.msra.mxu0 0.0
      %3983 = vmatprep.subr.mxu0 0.0
      %3984 = vmatpush1.msra.mxu0 0.0
      %3985 = vmatprep.subr.mxu0 0.0
      %3986 = vmatpush1.msra.mxu0 0.0
      %3987 = vmatprep.subr.mxu0 0.0
      %3988 = vmatpush1.msra.mxu0 0.0
      %3989 = vmatprep.subr.mxu0 0.0
      %3990 = vmatpush1.msra.mxu0 0.0
      %3991 = vmatprep.subr.mxu0 0.0
      %3992 = vmatpush1.msra.mxu0 0.0
      %3993 = vmatprep.subr.mxu0 0.0
      %3994 = vmatpush1.msra.mxu0 0.0
      %3995 = vmatprep.subr.mxu0 0.0
      %3996 = vmatpush1.msra.mxu0 0.0
      %3997 = vmatprep.subr.mxu0 0.0
      %3998 = vmatpush1.msra.mxu0 0.0
      %3999 = vmatprep.subr.mxu0 0.0
      %4000 = vmatpush1.msra.mxu0 0.0
      %4001 = vmatprep.subr.mxu0 0.0
      %4002 = vmatpush1.msra.mxu0 0.0
      %4003 = vmatprep.subr.mxu0 0.0
      %4004 = vmatpush1.msra.mxu0 0.0
      %4005 = vmatprep.mubr.f32.mxu0 0.0
      %4006 = vmatmul.mubr.f32.gmra.mrb[0].mxu0 %v3936
      %v4007 = vpop.f32.mrb[0].mxu0
      %v4008 = vadd.f32 0.0, %v4007
      %v4009 = vpop.f32.mrb[0].mxu0
      %4010 = vmatprep.mubr.f32.mxu0 0.0
      %4011 = vmatmul.mubr.f32.gmra.mrb[0].mxu0 %v3939
      %v4012 = vpop.f32.mrb[0].mxu0
      %v4013 = vadd.f32 0.0, %v4012
      %v4014 = vpop.f32.mrb[0].mxu0
      %4015 = vdwg.mxu0
      %s4016 = scalar_lea.vmem %s7, 80
      %v4017 = vld [vmem:[%s4016] sm:$0xff]
      %v4018 = vld [vmem:[%s4016 + $0x8] sm:$0xff]
      %v4020 = vsel %vm3259, %v4008, 0
      %v4023 = vsel %vm3259, %v4013, 0
      %4025 = vmatprep.subr.mxu0 0.0
      %4026 = vmatpush1.msra.mxu0 %v4017
      %4027 = vmatprep.subr.mxu0 0.0
      %4028 = vmatpush1.msra.mxu0 %v4018
      %4029 = vmatprep.subr.mxu0 0.0
      %4030 = vmatpush1.msra.mxu0 0.0
      %4031 = vmatprep.subr.mxu0 0.0
      %4032 = vmatpush1.msra.mxu0 0.0
      %4033 = vmatprep.subr.mxu0 0.0
      %4034 = vmatpush1.msra.mxu0 0.0
      %4035 = vmatprep.subr.mxu0 0.0
      %4036 = vmatpush1.msra.mxu0 0.0
      %4037 = vmatprep.subr.mxu0 0.0
      %4038 = vmatpush1.msra.mxu0 0.0
      %4039 = vmatprep.subr.mxu0 0.0
      %4040 = vmatpush1.msra.mxu0 0.0
      %4041 = vmatprep.subr.mxu0 0.0
      %4042 = vmatpush1.msra.mxu0 0.0
      %4043 = vmatprep.subr.mxu0 0.0
      %4044 = vmatpush1.msra.mxu0 0.0
      %4045 = vmatprep.subr.mxu0 0.0
      %4046 = vmatpush1.msra.mxu0 0.0
      %4047 = vmatprep.subr.mxu0 0.0
      %4048 = vmatpush1.msra.mxu0 0.0
      %4049 = vmatprep.subr.mxu0 0.0
      %4050 = vmatpush1.msra.mxu0 0.0
      %4051 = vmatprep.subr.mxu0 0.0
      %4052 = vmatpush1.msra.mxu0 0.0
      %4053 = vmatprep.subr.mxu0 0.0
      %4054 = vmatpush1.msra.mxu0 0.0
      %4055 = vmatprep.subr.mxu0 0.0
      %4056 = vmatpush1.msra.mxu0 0.0
      %4057 = vmatprep.subr.mxu0 0.0
      %4058 = vmatpush1.msra.mxu0 0.0
      %4059 = vmatprep.subr.mxu0 0.0
      %4060 = vmatpush1.msra.mxu0 0.0
      %4061 = vmatprep.subr.mxu0 0.0
      %4062 = vmatpush1.msra.mxu0 0.0
      %4063 = vmatprep.subr.mxu0 0.0
      %4064 = vmatpush1.msra.mxu0 0.0
      %4065 = vmatprep.subr.mxu0 0.0
      %4066 = vmatpush1.msra.mxu0 0.0
      %4067 = vmatprep.subr.mxu0 0.0
      %4068 = vmatpush1.msra.mxu0 0.0
      %4069 = vmatprep.subr.mxu0 0.0
      %4070 = vmatpush1.msra.mxu0 0.0
      %4071 = vmatprep.subr.mxu0 0.0
      %4072 = vmatpush1.msra.mxu0 0.0
      %4073 = vmatprep.subr.mxu0 0.0
      %4074 = vmatpush1.msra.mxu0 0.0
      %4075 = vmatprep.subr.mxu0 0.0
      %4076 = vmatpush1.msra.mxu0 0.0
      %4077 = vmatprep.subr.mxu0 0.0
      %4078 = vmatpush1.msra.mxu0 0.0
      %4079 = vmatprep.subr.mxu0 0.0
      %4080 = vmatpush1.msra.mxu0 0.0
      %4081 = vmatprep.subr.mxu0 0.0
      %4082 = vmatpush1.msra.mxu0 0.0
      %4083 = vmatprep.subr.mxu0 0.0
      %4084 = vmatpush1.msra.mxu0 0.0
      %4085 = vmatprep.subr.mxu0 0.0
      %4086 = vmatpush1.msra.mxu0 0.0
      %4087 = vmatprep.subr.mxu0 0.0
      %4088 = vmatpush1.msra.mxu0 0.0
      %4089 = vmatprep.mubr.f32.mxu0 0.0
      %4090 = vmatmul.mubr.f32.gmra.mrb[0].mxu0 %v4020
      %v4091 = vpop.f32.mrb[0].mxu0
      %v4092 = vadd.f32 0.0, %v4091
      %v4093 = vpop.f32.mrb[0].mxu0
      %4094 = vmatprep.mubr.f32.mxu0 0.0
      %4095 = vmatmul.mubr.f32.gmra.mrb[0].mxu0 %v4023
      %v4096 = vpop.f32.mrb[0].mxu0
      %v4097 = vadd.f32 0.0, %v4096
      %v4098 = vpop.f32.mrb[0].mxu0
      %4099 = vdwg.mxu0
      %v4100 = vadd.f32 %v3930, %v4092
      %v4101 = vadd.f32 %v3931, %v4097
      %s4102 = scalar_lea.vmem %s9, 96
      %v4103 = vld [vmem:[%s4102] sm:$0xff]
      %v4104 = vld [vmem:[%s4102 + $0x8] sm:$0xff]
      %v4106 = vsel %vm3088, %v4103, 0
      %v4109 = vsel %vm3088, %v4104, 0
      %4111 = vmatprep.subr.mxu0 0.0
      %4112 = vmatpush1.msra.mxu0 %v3078
      %4113 = vmatprep.subr.mxu0 0.0
      %4114 = vmatpush1.msra.mxu0 %v3079
      %4115 = vmatprep.subr.mxu0 0.0
      %4116 = vmatpush1.msra.mxu0 %v3080
      %4117 = vmatprep.subr.mxu0 0.0
      %4118 = vmatpush1.msra.mxu0 %v3081
      %4119 = vmatprep.subr.mxu0 0.0
      %4120 = vmatpush1.msra.mxu0 %v3082
      %4121 = vmatprep.subr.mxu0 0.0
      %4122 = vmatpush1.msra.mxu0 %v3083
      %4123 = vmatprep.subr.mxu0 0.0
      %4124 = vmatpush1.msra.mxu0 %v3084
      %4125 = vmatprep.subr.mxu0 0.0
      %4126 = vmatpush1.msra.mxu0 %v3085
      %4127 = vmatprep.subr.mxu0 0.0
      %4128 = vmatpush1.msra.mxu0 0.0
      %4129 = vmatprep.subr.mxu0 0.0
      %4130 = vmatpush1.msra.mxu0 0.0
      %4131 = vmatprep.subr.mxu0 0.0
      %4132 = vmatpush1.msra.mxu0 0.0
      %4133 = vmatprep.subr.mxu0 0.0
      %4134 = vmatpush1.msra.mxu0 0.0
      %4135 = vmatprep.subr.mxu0 0.0
      %4136 = vmatpush1.msra.mxu0 0.0
      %4137 = vmatprep.subr.mxu0 0.0
      %4138 = vmatpush1.msra.mxu0 0.0
      %4139 = vmatprep.subr.mxu0 0.0
      %4140 = vmatpush1.msra.mxu0 0.0
      %4141 = vmatprep.subr.mxu0 0.0
      %4142 = vmatpush1.msra.mxu0 0.0
      %4143 = vmatprep.subr.mxu0 0.0
      %4144 = vmatpush1.msra.mxu0 0.0
      %4145 = vmatprep.subr.mxu0 0.0
      %4146 = vmatpush1.msra.mxu0 0.0
      %4147 = vmatprep.subr.mxu0 0.0
      %4148 = vmatpush1.msra.mxu0 0.0
      %4149 = vmatprep.subr.mxu0 0.0
      %4150 = vmatpush1.msra.mxu0 0.0
      %4151 = vmatprep.subr.mxu0 0.0
      %4152 = vmatpush1.msra.mxu0 0.0
      %4153 = vmatprep.subr.mxu0 0.0
      %4154 = vmatpush1.msra.mxu0 0.0
      %4155 = vmatprep.subr.mxu0 0.0
      %4156 = vmatpush1.msra.mxu0 0.0
      %4157 = vmatprep.subr.mxu0 0.0
      %4158 = vmatpush1.msra.mxu0 0.0
      %4159 = vmatprep.subr.mxu0 0.0
      %4160 = vmatpush1.msra.mxu0 0.0
      %4161 = vmatprep.subr.mxu0 0.0
      %4162 = vmatpush1.msra.mxu0 0.0
      %4163 = vmatprep.subr.mxu0 0.0
      %4164 = vmatpush1.msra.mxu0 0.0
      %4165 = vmatprep.subr.mxu0 0.0
      %4166 = vmatpush1.msra.mxu0 0.0
      %4167 = vmatprep.subr.mxu0 0.0
      %4168 = vmatpush1.msra.mxu0 0.0
      %4169 = vmatprep.subr.mxu0 0.0
      %4170 = vmatpush1.msra.mxu0 0.0
      %4171 = vmatprep.subr.mxu0 0.0
      %4172 = vmatpush1.msra.mxu0 0.0
      %4173 = vmatprep.subr.mxu0 0.0
      %4174 = vmatpush1.msra.mxu0 0.0
      %4175 = vmatprep.mubr.f32.mxu0 0.0
      %4176 = vmatmul.mubr.f32.gmra.mrb[0].mxu0 %v4106
      %v4177 = vpop.f32.mrb[0].mxu0
      %v4178 = vadd.f32 0.0, %v4177
      %v4179 = vpop.f32.mrb[0].mxu0
      %4180 = vmatprep.mubr.f32.mxu0 0.0
      %4181 = vmatmul.mubr.f32.gmra.mrb[0].mxu0 %v4109
      %v4182 = vpop.f32.mrb[0].mxu0
      %v4183 = vadd.f32 0.0, %v4182
      %v4184 = vpop.f32.mrb[0].mxu0
      %4185 = vdwg.mxu0
      %s4186 = scalar_lea.vmem %s7, 96
      %v4187 = vld [vmem:[%s4186] sm:$0xff]
      %v4188 = vld [vmem:[%s4186 + $0x8] sm:$0xff]
      %v4190 = vsel %vm3259, %v4178, 0
      %v4193 = vsel %vm3259, %v4183, 0
      %4195 = vmatprep.subr.mxu0 0.0
      %4196 = vmatpush1.msra.mxu0 %v4187
      %4197 = vmatprep.subr.mxu0 0.0
      %4198 = vmatpush1.msra.mxu0 %v4188
      %4199 = vmatprep.subr.mxu0 0.0
      %4200 = vmatpush1.msra.mxu0 0.0
      %4201 = vmatprep.subr.mxu0 0.0
      %4202 = vmatpush1.msra.mxu0 0.0
      %4203 = vmatprep.subr.mxu0 0.0
      %4204 = vmatpush1.msra.mxu0 0.0
      %4205 = vmatprep.subr.mxu0 0.0
      %4206 = vmatpush1.msra.mxu0 0.0
      %4207 = vmatprep.subr.mxu0 0.0
      %4208 = vmatpush1.msra.mxu0 0.0
      %4209 = vmatprep.subr.mxu0 0.0
      %4210 = vmatpush1.msra.mxu0 0.0
      %4211 = vmatprep.subr.mxu0 0.0
      %4212 = vmatpush1.msra.mxu0 0.0
      %4213 = vmatprep.subr.mxu0 0.0
      %4214 = vmatpush1.msra.mxu0 0.0
      %4215 = vmatprep.subr.mxu0 0.0
      %4216 = vmatpush1.msra.mxu0 0.0
      %4217 = vmatprep.subr.mxu0 0.0
      %4218 = vmatpush1.msra.mxu0 0.0
      %4219 = vmatprep.subr.mxu0 0.0
      %4220 = vmatpush1.msra.mxu0 0.0
      %4221 = vmatprep.subr.mxu0 0.0
      %4222 = vmatpush1.msra.mxu0 0.0
      %4223 = vmatprep.subr.mxu0 0.0
      %4224 = vmatpush1.msra.mxu0 0.0
      %4225 = vmatprep.subr.mxu0 0.0
      %4226 = vmatpush1.msra.mxu0 0.0
      %4227 = vmatprep.subr.mxu0 0.0
      %4228 = vmatpush1.msra.mxu0 0.0
      %4229 = vmatprep.subr.mxu0 0.0
      %4230 = vmatpush1.msra.mxu0 0.0
      %4231 = vmatprep.subr.mxu0 0.0
      %4232 = vmatpush1.msra.mxu0 0.0
      %4233 = vmatprep.subr.mxu0 0.0
      %4234 = vmatpush1.msra.mxu0 0.0
      %4235 = vmatprep.subr.mxu0 0.0
      %4236 = vmatpush1.msra.mxu0 0.0
      %4237 = vmatprep.subr.mxu0 0.0
      %4238 = vmatpush1.msra.mxu0 0.0
      %4239 = vmatprep.subr.mxu0 0.0
      %4240 = vmatpush1.msra.mxu0 0.0
      %4241 = vmatprep.subr.mxu0 0.0
      %4242 = vmatpush1.msra.mxu0 0.0
      %4243 = vmatprep.subr.mxu0 0.0
      %4244 = vmatpush1.msra.mxu0 0.0
      %4245 = vmatprep.subr.mxu0 0.0
      %4246 = vmatpush1.msra.mxu0 0.0
      %4247 = vmatprep.subr.mxu0 0.0
      %4248 = vmatpush1.msra.mxu0 0.0
      %4249 = vmatprep.subr.mxu0 0.0
      %4250 = vmatpush1.msra.mxu0 0.0
      %4251 = vmatprep.subr.mxu0 0.0
      %4252 = vmatpush1.msra.mxu0 0.0
      %4253 = vmatprep.subr.mxu0 0.0
      %4254 = vmatpush1.msra.mxu0 0.0
      %4255 = vmatprep.subr.mxu0 0.0
      %4256 = vmatpush1.msra.mxu0 0.0
      %4257 = vmatprep.subr.mxu0 0.0
      %4258 = vmatpush1.msra.mxu0 0.0
      %4259 = vmatprep.mubr.f32.mxu0 0.0
      %4260 = vmatmul.mubr.f32.gmra.mrb[0].mxu0 %v4190
      %v4261 = vpop.f32.mrb[0].mxu0
      %v4262 = vadd.f32 0.0, %v4261
      %v4263 = vpop.f32.mrb[0].mxu0
      %4264 = vmatprep.mubr.f32.mxu0 0.0
      %4265 = vmatmul.mubr.f32.gmra.mrb[0].mxu0 %v4193
      %v4266 = vpop.f32.mrb[0].mxu0
      %v4267 = vadd.f32 0.0, %v4266
      %v4268 = vpop.f32.mrb[0].mxu0
      %4269 = vdwg.mxu0
      %v4270 = vadd.f32 %v4100, %v4262
      %v4271 = vadd.f32 %v4101, %v4267
      %s4272 = scalar_lea.vmem %s9, 112
      %v4273 = vld [vmem:[%s4272] sm:$0xff]
      %v4274 = vld [vmem:[%s4272 + $0x8] sm:$0xff]
      %v4276 = vsel %vm3088, %v4273, 0
      %v4279 = vsel %vm3088, %v4274, 0
      %4281 = vmatprep.subr.mxu0 0.0
      %4282 = vmatpush1.msra.mxu0 %v3078
      %4283 = vmatprep.subr.mxu0 0.0
      %4284 = vmatpush1.msra.mxu0 %v3079
      %4285 = vmatprep.subr.mxu0 0.0
      %4286 = vmatpush1.msra.mxu0 %v3080
      %4287 = vmatprep.subr.mxu0 0.0
      %4288 = vmatpush1.msra.mxu0 %v3081
      %4289 = vmatprep.subr.mxu0 0.0
      %4290 = vmatpush1.msra.mxu0 %v3082
      %4291 = vmatprep.subr.mxu0 0.0
      %4292 = vmatpush1.msra.mxu0 %v3083
      %4293 = vmatprep.subr.mxu0 0.0
      %4294 = vmatpush1.msra.mxu0 %v3084
      %4295 = vmatprep.subr.mxu0 0.0
      %4296 = vmatpush1.msra.mxu0 %v3085
      %4297 = vmatprep.subr.mxu0 0.0
      %4298 = vmatpush1.msra.mxu0 0.0
      %4299 = vmatprep.subr.mxu0 0.0
      %4300 = vmatpush1.msra.mxu0 0.0
      %4301 = vmatprep.subr.mxu0 0.0
      %4302 = vmatpush1.msra.mxu0 0.0
      %4303 = vmatprep.subr.mxu0 0.0
      %4304 = vmatpush1.msra.mxu0 0.0
      %4305 = vmatprep.subr.mxu0 0.0
      %4306 = vmatpush1.msra.mxu0 0.0
      %4307 = vmatprep.subr.mxu0 0.0
      %4308 = vmatpush1.msra.mxu0 0.0
      %4309 = vmatprep.subr.mxu0 0.0
      %4310 = vmatpush1.msra.mxu0 0.0
      %4311 = vmatprep.subr.mxu0 0.0
      %4312 = vmatpush1.msra.mxu0 0.0
      %4313 = vmatprep.subr.mxu0 0.0
      %4314 = vmatpush1.msra.mxu0 0.0
      %4315 = vmatprep.subr.mxu0 0.0
      %4316 = vmatpush1.msra.mxu0 0.0
      %4317 = vmatprep.subr.mxu0 0.0
      %4318 = vmatpush1.msra.mxu0 0.0
      %4319 = vmatprep.subr.mxu0 0.0
      %4320 = vmatpush1.msra.mxu0 0.0
      %4321 = vmatprep.subr.mxu0 0.0
      %4322 = vmatpush1.msra.mxu0 0.0
      %4323 = vmatprep.subr.mxu0 0.0
      %4324 = vmatpush1.msra.mxu0 0.0
      %4325 = vmatprep.subr.mxu0 0.0
      %4326 = vmatpush1.msra.mxu0 0.0
      %4327 = vmatprep.subr.mxu0 0.0
      %4328 = vmatpush1.msra.mxu0 0.0
      %4329 = vmatprep.subr.mxu0 0.0
      %4330 = vmatpush1.msra.mxu0 0.0
      %4331 = vmatprep.subr.mxu0 0.0
      %4332 = vmatpush1.msra.mxu0 0.0
      %4333 = vmatprep.subr.mxu0 0.0
      %4334 = vmatpush1.msra.mxu0 0.0
      %4335 = vmatprep.subr.mxu0 0.0
      %4336 = vmatpush1.msra.mxu0 0.0
      %4337 = vmatprep.subr.mxu0 0.0
      %4338 = vmatpush1.msra.mxu0 0.0
      %4339 = vmatprep.subr.mxu0 0.0
      %4340 = vmatpush1.msra.mxu0 0.0
      %4341 = vmatprep.subr.mxu0 0.0
      %4342 = vmatpush1.msra.mxu0 0.0
      %4343 = vmatprep.subr.mxu0 0.0
      %4344 = vmatpush1.msra.mxu0 0.0
      %4345 = vmatprep.mubr.f32.mxu0 0.0
      %4346 = vmatmul.mubr.f32.gmra.mrb[0].mxu0 %v4276
      %v4347 = vpop.f32.mrb[0].mxu0
      %v4348 = vadd.f32 0.0, %v4347
      %v4349 = vpop.f32.mrb[0].mxu0
      %4350 = vmatprep.mubr.f32.mxu0 0.0
      %4351 = vmatmul.mubr.f32.gmra.mrb[0].mxu0 %v4279
      %v4352 = vpop.f32.mrb[0].mxu0
      %v4353 = vadd.f32 0.0, %v4352
      %v4354 = vpop.f32.mrb[0].mxu0
      %4355 = vdwg.mxu0
      %s4356 = scalar_lea.vmem %s7, 112
      %v4357 = vld [vmem:[%s4356] sm:$0xff]
      %v4358 = vld [vmem:[%s4356 + $0x8] sm:$0xff]
      %v4360 = vsel %vm3259, %v4348, 0
      %v4363 = vsel %vm3259, %v4353, 0
      %4365 = vmatprep.subr.mxu0 0.0
      %4366 = vmatpush1.msra.mxu0 %v4357
      %4367 = vmatprep.subr.mxu0 0.0
      %4368 = vmatpush1.msra.mxu0 %v4358
      %4369 = vmatprep.subr.mxu0 0.0
      %4370 = vmatpush1.msra.mxu0 0.0
      %4371 = vmatprep.subr.mxu0 0.0
      %4372 = vmatpush1.msra.mxu0 0.0
      %4373 = vmatprep.subr.mxu0 0.0
      %4374 = vmatpush1.msra.mxu0 0.0
      %4375 = vmatprep.subr.mxu0 0.0
      %4376 = vmatpush1.msra.mxu0 0.0
      %4377 = vmatprep.subr.mxu0 0.0
      %4378 = vmatpush1.msra.mxu0 0.0
      %4379 = vmatprep.subr.mxu0 0.0
      %4380 = vmatpush1.msra.mxu0 0.0
      %4381 = vmatprep.subr.mxu0 0.0
      %4382 = vmatpush1.msra.mxu0 0.0
      %4383 = vmatprep.subr.mxu0 0.0
      %4384 = vmatpush1.msra.mxu0 0.0
      %4385 = vmatprep.subr.mxu0 0.0
      %4386 = vmatpush1.msra.mxu0 0.0
      %4387 = vmatprep.subr.mxu0 0.0
      %4388 = vmatpush1.msra.mxu0 0.0
      %4389 = vmatprep.subr.mxu0 0.0
      %4390 = vmatpush1.msra.mxu0 0.0
      %4391 = vmatprep.subr.mxu0 0.0
      %4392 = vmatpush1.msra.mxu0 0.0
      %4393 = vmatprep.subr.mxu0 0.0
      %4394 = vmatpush1.msra.mxu0 0.0
      %4395 = vmatprep.subr.mxu0 0.0
      %4396 = vmatpush1.msra.mxu0 0.0
      %4397 = vmatprep.subr.mxu0 0.0
      %4398 = vmatpush1.msra.mxu0 0.0
      %4399 = vmatprep.subr.mxu0 0.0
      %4400 = vmatpush1.msra.mxu0 0.0
      %4401 = vmatprep.subr.mxu0 0.0
      %4402 = vmatpush1.msra.mxu0 0.0
      %4403 = vmatprep.subr.mxu0 0.0
      %4404 = vmatpush1.msra.mxu0 0.0
      %4405 = vmatprep.subr.mxu0 0.0
      %4406 = vmatpush1.msra.mxu0 0.0
      %4407 = vmatprep.subr.mxu0 0.0
      %4408 = vmatpush1.msra.mxu0 0.0
      %4409 = vmatprep.subr.mxu0 0.0
      %4410 = vmatpush1.msra.mxu0 0.0
      %4411 = vmatprep.subr.mxu0 0.0
      %4412 = vmatpush1.msra.mxu0 0.0
      %4413 = vmatprep.subr.mxu0 0.0
      %4414 = vmatpush1.msra.mxu0 0.0
      %4415 = vmatprep.subr.mxu0 0.0
      %4416 = vmatpush1.msra.mxu0 0.0
      %4417 = vmatprep.subr.mxu0 0.0
      %4418 = vmatpush1.msra.mxu0 0.0
      %4419 = vmatprep.subr.mxu0 0.0
      %4420 = vmatpush1.msra.mxu0 0.0
      %4421 = vmatprep.subr.mxu0 0.0
      %4422 = vmatpush1.msra.mxu0 0.0
      %4423 = vmatprep.subr.mxu0 0.0
      %4424 = vmatpush1.msra.mxu0 0.0
      %4425 = vmatprep.subr.mxu0 0.0
      %4426 = vmatpush1.msra.mxu0 0.0
      %4427 = vmatprep.subr.mxu0 0.0
      %4428 = vmatpush1.msra.mxu0 0.0
      %4429 = vmatprep.mubr.f32.mxu0 0.0
      %4430 = vmatmul.mubr.f32.gmra.mrb[0].mxu0 %v4360
      %v4431 = vpop.f32.mrb[0].mxu0
      %v4432 = vadd.f32 0.0, %v4431
      %v4433 = vpop.f32.mrb[0].mxu0
      %4434 = vmatprep.mubr.f32.mxu0 0.0
      %4435 = vmatmul.mubr.f32.gmra.mrb[0].mxu0 %v4363
      %v4436 = vpop.f32.mrb[0].mxu0
      %v4437 = vadd.f32 0.0, %v4436
      %v4438 = vpop.f32.mrb[0].mxu0
      %4439 = vdwg.mxu0
      %v4440 = vadd.f32 %v4270, %v4432
      %v4441 = vadd.f32 %v4271, %v4437
      %s4442 = scalar_lea.vmem %s9, 128
      %v4443 = vld [vmem:[%s4442] sm:$0xff]
      %v4444 = vld [vmem:[%s4442 + $0x8] sm:$0xff]
      %v4446 = vsel %vm3088, %v4443, 0
      %v4449 = vsel %vm3088, %v4444, 0
      %4451 = vmatprep.subr.mxu0 0.0
      %4452 = vmatpush1.msra.mxu0 %v3078
      %4453 = vmatprep.subr.mxu0 0.0
      %4454 = vmatpush1.msra.mxu0 %v3079
      %4455 = vmatprep.subr.mxu0 0.0
      %4456 = vmatpush1.msra.mxu0 %v3080
      %4457 = vmatprep.subr.mxu0 0.0
      %4458 = vmatpush1.msra.mxu0 %v3081
      %4459 = vmatprep.subr.mxu0 0.0
      %4460 = vmatpush1.msra.mxu0 %v3082
      %4461 = vmatprep.subr.mxu0 0.0
      %4462 = vmatpush1.msra.mxu0 %v3083
      %4463 = vmatprep.subr.mxu0 0.0
      %4464 = vmatpush1.msra.mxu0 %v3084
      %4465 = vmatprep.subr.mxu0 0.0
      %4466 = vmatpush1.msra.mxu0 %v3085
      %4467 = vmatprep.subr.mxu0 0.0
      %4468 = vmatpush1.msra.mxu0 0.0
      %4469 = vmatprep.subr.mxu0 0.0
      %4470 = vmatpush1.msra.mxu0 0.0
      %4471 = vmatprep.subr.mxu0 0.0
      %4472 = vmatpush1.msra.mxu0 0.0
      %4473 = vmatprep.subr.mxu0 0.0
      %4474 = vmatpush1.msra.mxu0 0.0
      %4475 = vmatprep.subr.mxu0 0.0
      %4476 = vmatpush1.msra.mxu0 0.0
      %4477 = vmatprep.subr.mxu0 0.0
      %4478 = vmatpush1.msra.mxu0 0.0
      %4479 = vmatprep.subr.mxu0 0.0
      %4480 = vmatpush1.msra.mxu0 0.0
      %4481 = vmatprep.subr.mxu0 0.0
      %4482 = vmatpush1.msra.mxu0 0.0
      %4483 = vmatprep.subr.mxu0 0.0
      %4484 = vmatpush1.msra.mxu0 0.0
      %4485 = vmatprep.subr.mxu0 0.0
      %4486 = vmatpush1.msra.mxu0 0.0
      %4487 = vmatprep.subr.mxu0 0.0
      %4488 = vmatpush1.msra.mxu0 0.0
      %4489 = vmatprep.subr.mxu0 0.0
      %4490 = vmatpush1.msra.mxu0 0.0
      %4491 = vmatprep.subr.mxu0 0.0
      %4492 = vmatpush1.msra.mxu0 0.0
      %4493 = vmatprep.subr.mxu0 0.0
      %4494 = vmatpush1.msra.mxu0 0.0
      %4495 = vmatprep.subr.mxu0 0.0
      %4496 = vmatpush1.msra.mxu0 0.0
      %4497 = vmatprep.subr.mxu0 0.0
      %4498 = vmatpush1.msra.mxu0 0.0
      %4499 = vmatprep.subr.mxu0 0.0
      %4500 = vmatpush1.msra.mxu0 0.0
      %4501 = vmatprep.subr.mxu0 0.0
      %4502 = vmatpush1.msra.mxu0 0.0
      %4503 = vmatprep.subr.mxu0 0.0
      %4504 = vmatpush1.msra.mxu0 0.0
      %4505 = vmatprep.subr.mxu0 0.0
      %4506 = vmatpush1.msra.mxu0 0.0
      %4507 = vmatprep.subr.mxu0 0.0
      %4508 = vmatpush1.msra.mxu0 0.0
      %4509 = vmatprep.subr.mxu0 0.0
      %4510 = vmatpush1.msra.mxu0 0.0
      %4511 = vmatprep.subr.mxu0 0.0
      %4512 = vmatpush1.msra.mxu0 0.0
      %4513 = vmatprep.subr.mxu0 0.0
      %4514 = vmatpush1.msra.mxu0 0.0
      %4515 = vmatprep.mubr.f32.mxu0 0.0
      %4516 = vmatmul.mubr.f32.gmra.mrb[0].mxu0 %v4446
      %v4517 = vpop.f32.mrb[0].mxu0
      %v4518 = vadd.f32 0.0, %v4517
      %v4519 = vpop.f32.mrb[0].mxu0
      %4520 = vmatprep.mubr.f32.mxu0 0.0
      %4521 = vmatmul.mubr.f32.gmra.mrb[0].mxu0 %v4449
      %v4522 = vpop.f32.mrb[0].mxu0
      %v4523 = vadd.f32 0.0, %v4522
      %v4524 = vpop.f32.mrb[0].mxu0
      %4525 = vdwg.mxu0
      %s4526 = scalar_lea.vmem %s7, 128
      %v4527 = vld [vmem:[%s4526] sm:$0xff]
      %v4528 = vld [vmem:[%s4526 + $0x8] sm:$0xff]
      %v4530 = vsel %vm3259, %v4518, 0
      %v4533 = vsel %vm3259, %v4523, 0
      %4535 = vmatprep.subr.mxu0 0.0
      %4536 = vmatpush1.msra.mxu0 %v4527
      %4537 = vmatprep.subr.mxu0 0.0
      %4538 = vmatpush1.msra.mxu0 %v4528
      %4539 = vmatprep.subr.mxu0 0.0
      %4540 = vmatpush1.msra.mxu0 0.0
      %4541 = vmatprep.subr.mxu0 0.0
      %4542 = vmatpush1.msra.mxu0 0.0
      %4543 = vmatprep.subr.mxu0 0.0
      %4544 = vmatpush1.msra.mxu0 0.0
      %4545 = vmatprep.subr.mxu0 0.0
      %4546 = vmatpush1.msra.mxu0 0.0
      %4547 = vmatprep.subr.mxu0 0.0
      %4548 = vmatpush1.msra.mxu0 0.0
      %4549 = vmatprep.subr.mxu0 0.0
      %4550 = vmatpush1.msra.mxu0 0.0
      %4551 = vmatprep.subr.mxu0 0.0
      %4552 = vmatpush1.msra.mxu0 0.0
      %4553 = vmatprep.subr.mxu0 0.0
      %4554 = vmatpush1.msra.mxu0 0.0
      %4555 = vmatprep.subr.mxu0 0.0
      %4556 = vmatpush1.msra.mxu0 0.0
      %4557 = vmatprep.subr.mxu0 0.0
      %4558 = vmatpush1.msra.mxu0 0.0
      %4559 = vmatprep.subr.mxu0 0.0
      %4560 = vmatpush1.msra.mxu0 0.0
      %4561 = vmatprep.subr.mxu0 0.0
      %4562 = vmatpush1.msra.mxu0 0.0
      %4563 = vmatprep.subr.mxu0 0.0
      %4564 = vmatpush1.msra.mxu0 0.0
      %4565 = vmatprep.subr.mxu0 0.0
      %4566 = vmatpush1.msra.mxu0 0.0
      %4567 = vmatprep.subr.mxu0 0.0
      %4568 = vmatpush1.msra.mxu0 0.0
      %4569 = vmatprep.subr.mxu0 0.0
      %4570 = vmatpush1.msra.mxu0 0.0
      %4571 = vmatprep.subr.mxu0 0.0
      %4572 = vmatpush1.msra.mxu0 0.0
      %4573 = vmatprep.subr.mxu0 0.0
      %4574 = vmatpush1.msra.mxu0 0.0
      %4575 = vmatprep.subr.mxu0 0.0
      %4576 = vmatpush1.msra.mxu0 0.0
      %4577 = vmatprep.subr.mxu0 0.0
      %4578 = vmatpush1.msra.mxu0 0.0
      %4579 = vmatprep.subr.mxu0 0.0
      %4580 = vmatpush1.msra.mxu0 0.0
      %4581 = vmatprep.subr.mxu0 0.0
      %4582 = vmatpush1.msra.mxu0 0.0
      %4583 = vmatprep.subr.mxu0 0.0
      %4584 = vmatpush1.msra.mxu0 0.0
      %4585 = vmatprep.subr.mxu0 0.0
      %4586 = vmatpush1.msra.mxu0 0.0
      %4587 = vmatprep.subr.mxu0 0.0
      %4588 = vmatpush1.msra.mxu0 0.0
      %4589 = vmatprep.subr.mxu0 0.0
      %4590 = vmatpush1.msra.mxu0 0.0
      %4591 = vmatprep.subr.mxu0 0.0
      %4592 = vmatpush1.msra.mxu0 0.0
      %4593 = vmatprep.subr.mxu0 0.0
      %4594 = vmatpush1.msra.mxu0 0.0
      %4595 = vmatprep.subr.mxu0 0.0
      %4596 = vmatpush1.msra.mxu0 0.0
      %4597 = vmatprep.subr.mxu0 0.0
      %4598 = vmatpush1.msra.mxu0 0.0
      %4599 = vmatprep.mubr.f32.mxu0 0.0
      %4600 = vmatmul.mubr.f32.gmra.mrb[0].mxu0 %v4530
      %v4601 = vpop.f32.mrb[0].mxu0
      %v4602 = vadd.f32 0.0, %v4601
      %v4603 = vpop.f32.mrb[0].mxu0
      %4604 = vmatprep.mubr.f32.mxu0 0.0
      %4605 = vmatmul.mubr.f32.gmra.mrb[0].mxu0 %v4533
      %v4606 = vpop.f32.mrb[0].mxu0
      %v4607 = vadd.f32 0.0, %v4606
      %v4608 = vpop.f32.mrb[0].mxu0
      %4609 = vdwg.mxu0
      %v4610 = vadd.f32 %v4440, %v4602
      %v4611 = vadd.f32 %v4441, %v4607
      %v4612 = vld [vmem:[%s8] sm:$0x1]
      %v4614 = vlaneseq
      %v4615 = vshrl.u32 %v4614, 7
      %v4616 = vsub.s32 0, %v4615
      %v4617 = vrot.slane %v4612, %v4616
      %v4619 = vadd.f32 %v4610, %v4617
      %v4620 = vadd.f32 %v4611, %v4617
      %v4621 = vmax.f32 %v4619, 0.0
      %v4622 = vmax.f32 %v4620, 0.0
      %v4623 = vld [vmem:[%s12] sm:$0xf]
      %v4625 = vsel %vm3259, %v4623, 0
      %4627 = vmatprep.subr.mxu0 0.0
      %4628 = vmatpush1.msra.mxu0 %v4621
      %4629 = vmatprep.subr.mxu0 0.0
      %4630 = vmatpush1.msra.mxu0 %v4622
      %4631 = vmatprep.subr.mxu0 0.0
      %4632 = vmatpush1.msra.mxu0 0.0
      %4633 = vmatprep.subr.mxu0 0.0
      %4634 = vmatpush1.msra.mxu0 0.0
      %4635 = vmatprep.subr.mxu0 0.0
      %4636 = vmatpush1.msra.mxu0 0.0
      %4637 = vmatprep.subr.mxu0 0.0
      %4638 = vmatpush1.msra.mxu0 0.0
      %4639 = vmatprep.subr.mxu0 0.0
      %4640 = vmatpush1.msra.mxu0 0.0
      %4641 = vmatprep.subr.mxu0 0.0
      %4642 = vmatpush1.msra.mxu0 0.0
      %4643 = vmatprep.subr.mxu0 0.0
      %4644 = vmatpush1.msra.mxu0 0.0
      %4645 = vmatprep.subr.mxu0 0.0
      %4646 = vmatpush1.msra.mxu0 0.0
      %4647 = vmatprep.subr.mxu0 0.0
      %4648 = vmatpush1.msra.mxu0 0.0
      %4649 = vmatprep.subr.mxu0 0.0
      %4650 = vmatpush1.msra.mxu0 0.0
      %4651 = vmatprep.subr.mxu0 0.0
      %4652 = vmatpush1.msra.mxu0 0.0
      %4653 = vmatprep.subr.mxu0 0.0
      %4654 = vmatpush1.msra.mxu0 0.0
      %4655 = vmatprep.subr.mxu0 0.0
      %4656 = vmatpush1.msra.mxu0 0.0
      %4657 = vmatprep.subr.mxu0 0.0
      %4658 = vmatpush1.msra.mxu0 0.0
      %4659 = vmatprep.subr.mxu0 0.0
      %4660 = vmatpush1.msra.mxu0 0.0
      %4661 = vmatprep.subr.mxu0 0.0
      %4662 = vmatpush1.msra.mxu0 0.0
      %4663 = vmatprep.subr.mxu0 0.0
      %4664 = vmatpush1.msra.mxu0 0.0
      %4665 = vmatprep.subr.mxu0 0.0
      %4666 = vmatpush1.msra.mxu0 0.0
      %4667 = vmatprep.subr.mxu0 0.0
      %4668 = vmatpush1.msra.mxu0 0.0
      %4669 = vmatprep.subr.mxu0 0.0
      %4670 = vmatpush1.msra.mxu0 0.0
      %4671 = vmatprep.subr.mxu0 0.0
      %4672 = vmatpush1.msra.mxu0 0.0
      %4673 = vmatprep.subr.mxu0 0.0
      %4674 = vmatpush1.msra.mxu0 0.0
      %4675 = vmatprep.subr.mxu0 0.0
      %4676 = vmatpush1.msra.mxu0 0.0
      %4677 = vmatprep.subr.mxu0 0.0
      %4678 = vmatpush1.msra.mxu0 0.0
      %4679 = vmatprep.subr.mxu0 0.0
      %4680 = vmatpush1.msra.mxu0 0.0
      %4681 = vmatprep.subr.mxu0 0.0
      %4682 = vmatpush1.msra.mxu0 0.0
      %4683 = vmatprep.subr.mxu0 0.0
      %4684 = vmatpush1.msra.mxu0 0.0
      %4685 = vmatprep.subr.mxu0 0.0
      %4686 = vmatpush1.msra.mxu0 0.0
      %4687 = vmatprep.subr.mxu0 0.0
      %4688 = vmatpush1.msra.mxu0 0.0
      %4689 = vmatprep.subr.mxu0 0.0
      %4690 = vmatpush1.msra.mxu0 0.0
      %4691 = vmatprep.mubr.f32.mxu0 0.0
      %4692 = vmatmul.mubr.f32.gmra.mrb[0].mxu0 %v4625
      %v4693 = vpop.f32.mrb[0].mxu0
      %v4694 = vadd.f32 0.0, %v4693
      %v4695 = vpop.f32.mrb[0].mxu0
      %4696 = vdwg.mxu0
      %v4697 = vld [vmem:[%s10] sm:$0xff]
      %s4698 = scalar_lea.vmem %s12, 4
      %v4699 = vld [vmem:[%s4698] sm:$0xf]
      %v4701 = vsel %vm3259, %v4699, 0
      %4703 = vmatprep.subr.mxu0 0.0
      %4704 = vmatpush1.msra.mxu0 %v4621
      %4705 = vmatprep.subr.mxu0 0.0
      %4706 = vmatpush1.msra.mxu0 %v4622
      %4707 = vmatprep.subr.mxu0 0.0
      %4708 = vmatpush1.msra.mxu0 0.0
      %4709 = vmatprep.subr.mxu0 0.0
      %4710 = vmatpush1.msra.mxu0 0.0
      %4711 = vmatprep.subr.mxu0 0.0
      %4712 = vmatpush1.msra.mxu0 0.0
      %4713 = vmatprep.subr.mxu0 0.0
      %4714 = vmatpush1.msra.mxu0 0.0
      %4715 = vmatprep.subr.mxu0 0.0
      %4716 = vmatpush1.msra.mxu0 0.0
      %4717 = vmatprep.subr.mxu0 0.0
      %4718 = vmatpush1.msra.mxu0 0.0
      %4719 = vmatprep.subr.mxu0 0.0
      %4720 = vmatpush1.msra.mxu0 0.0
      %4721 = vmatprep.subr.mxu0 0.0
      %4722 = vmatpush1.msra.mxu0 0.0
      %4723 = vmatprep.subr.mxu0 0.0
      %4724 = vmatpush1.msra.mxu0 0.0
      %4725 = vmatprep.subr.mxu0 0.0
      %4726 = vmatpush1.msra.mxu0 0.0
      %4727 = vmatprep.subr.mxu0 0.0
      %4728 = vmatpush1.msra.mxu0 0.0
      %4729 = vmatprep.subr.mxu0 0.0
      %4730 = vmatpush1.msra.mxu0 0.0
      %4731 = vmatprep.subr.mxu0 0.0
      %4732 = vmatpush1.msra.mxu0 0.0
      %4733 = vmatprep.subr.mxu0 0.0
      %4734 = vmatpush1.msra.mxu0 0.0
      %4735 = vmatprep.subr.mxu0 0.0
      %4736 = vmatpush1.msra.mxu0 0.0
      %4737 = vmatprep.subr.mxu0 0.0
      %4738 = vmatpush1.msra.mxu0 0.0
      %4739 = vmatprep.subr.mxu0 0.0
      %4740 = vmatpush1.msra.mxu0 0.0
      %4741 = vmatprep.subr.mxu0 0.0
      %4742 = vmatpush1.msra.mxu0 0.0
      %4743 = vmatprep.subr.mxu0 0.0
      %4744 = vmatpush1.msra.mxu0 0.0
      %4745 = vmatprep.subr.mxu0 0.0
      %4746 = vmatpush1.msra.mxu0 0.0
      %4747 = vmatprep.subr.mxu0 0.0
      %4748 = vmatpush1.msra.mxu0 0.0
      %4749 = vmatprep.subr.mxu0 0.0
      %4750 = vmatpush1.msra.mxu0 0.0
      %4751 = vmatprep.subr.mxu0 0.0
      %4752 = vmatpush1.msra.mxu0 0.0
      %4753 = vmatprep.subr.mxu0 0.0
      %4754 = vmatpush1.msra.mxu0 0.0
      %4755 = vmatprep.subr.mxu0 0.0
      %4756 = vmatpush1.msra.mxu0 0.0
      %4757 = vmatprep.subr.mxu0 0.0
      %4758 = vmatpush1.msra.mxu0 0.0
      %4759 = vmatprep.subr.mxu0 0.0
      %4760 = vmatpush1.msra.mxu0 0.0
      %4761 = vmatprep.subr.mxu0 0.0
      %4762 = vmatpush1.msra.mxu0 0.0
      %4763 = vmatprep.subr.mxu0 0.0
      %4764 = vmatpush1.msra.mxu0 0.0
      %4765 = vmatprep.subr.mxu0 0.0
      %4766 = vmatpush1.msra.mxu0 0.0
      %4767 = vmatprep.mubr.f32.mxu0 0.0
      %4768 = vmatmul.mubr.f32.gmra.mrb[0].mxu0 %v4701
      %v4769 = vpop.f32.mrb[0].mxu0
      %v4770 = vadd.f32 0.0, %v4769
      %v4771 = vpop.f32.mrb[0].mxu0
      %4772 = vdwg.mxu0
      %s4773 = scalar_lea.vmem %s10, 8
      %v4774 = vld [vmem:[%s4773] sm:$0xff]
      %vm4775 = vcmask 64512
      %v4777 = vsel %vm4775, %v4770, 0
      %4779 = vmatprep.subr.mxu0 0.0
      %4780 = vmatpush1.msra.mxu0 %v4774
      %4781 = vmatprep.subr.mxu0 0.0
      %4782 = vmatpush1.msra.mxu0 0.0
      %4783 = vmatprep.subr.mxu0 0.0
      %4784 = vmatpush1.msra.mxu0 0.0
      %4785 = vmatprep.subr.mxu0 0.0
      %4786 = vmatpush1.msra.mxu0 0.0
      %4787 = vmatprep.subr.mxu0 0.0
      %4788 = vmatpush1.msra.mxu0 0.0
      %4789 = vmatprep.subr.mxu0 0.0
      %4790 = vmatpush1.msra.mxu0 0.0
      %4791 = vmatprep.subr.mxu0 0.0
      %4792 = vmatpush1.msra.mxu0 0.0
      %4793 = vmatprep.subr.mxu0 0.0
      %4794 = vmatpush1.msra.mxu0 0.0
      %4795 = vmatprep.subr.mxu0 0.0
      %4796 = vmatpush1.msra.mxu0 0.0
      %4797 = vmatprep.subr.mxu0 0.0
      %4798 = vmatpush1.msra.mxu0 0.0
      %4799 = vmatprep.subr.mxu0 0.0
      %4800 = vmatpush1.msra.mxu0 0.0
      %4801 = vmatprep.subr.mxu0 0.0
      %4802 = vmatpush1.msra.mxu0 0.0
      %4803 = vmatprep.subr.mxu0 0.0
      %4804 = vmatpush1.msra.mxu0 0.0
      %4805 = vmatprep.subr.mxu0 0.0
      %4806 = vmatpush1.msra.mxu0 0.0
      %4807 = vmatprep.subr.mxu0 0.0
      %4808 = vmatpush1.msra.mxu0 0.0
      %4809 = vmatprep.subr.mxu0 0.0
      %4810 = vmatpush1.msra.mxu0 0.0
      %4811 = vmatprep.subr.mxu0 0.0
      %4812 = vmatpush1.msra.mxu0 0.0
      %4813 = vmatprep.subr.mxu0 0.0
      %4814 = vmatpush1.msra.mxu0 0.0
      %4815 = vmatprep.subr.mxu0 0.0
      %4816 = vmatpush1.msra.mxu0 0.0
      %4817 = vmatprep.subr.mxu0 0.0
      %4818 = vmatpush1.msra.mxu0 0.0
      %4819 = vmatprep.subr.mxu0 0.0
      %4820 = vmatpush1.msra.mxu0 0.0
      %4821 = vmatprep.subr.mxu0 0.0
      %4822 = vmatpush1.msra.mxu0 0.0
      %4823 = vmatprep.subr.mxu0 0.0
      %4824 = vmatpush1.msra.mxu0 0.0
      %4825 = vmatprep.subr.mxu0 0.0
      %4826 = vmatpush1.msra.mxu0 0.0
      %4827 = vmatprep.subr.mxu0 0.0
      %4828 = vmatpush1.msra.mxu0 0.0
      %4829 = vmatprep.subr.mxu0 0.0
      %4830 = vmatpush1.msra.mxu0 0.0
      %4831 = vmatprep.subr.mxu0 0.0
      %4832 = vmatpush1.msra.mxu0 0.0
      %4833 = vmatprep.subr.mxu0 0.0
      %4834 = vmatpush1.msra.mxu0 0.0
      %4835 = vmatprep.subr.mxu0 0.0
      %4836 = vmatpush1.msra.mxu0 0.0
      %4837 = vmatprep.subr.mxu0 0.0
      %4838 = vmatpush1.msra.mxu0 0.0
      %4839 = vmatprep.subr.mxu0 0.0
      %4840 = vmatpush1.msra.mxu0 0.0
      %4841 = vmatprep.subr.mxu0 0.0
      %4842 = vmatpush1.msra.mxu0 0.0
      %4843 = vmatprep.mubr.f32.mxu0 0.0
      %4844 = vmatmul.mubr.f32.gmra.mrb[0].mxu0 %v4777
      %v4845 = vpop.f32.mrb[0].mxu0
      %v4846 = vadd.f32 0.0, %v4845
      %v4847 = vpop.f32.mrb[0].mxu0
      %4848 = vdwg.mxu0
      %v4850 = vsel %vm4775, %v4694, 0
      %4852 = vmatprep.subr.mxu0 0.0
      %4853 = vmatpush1.msra.mxu0 %v4697
      %4854 = vmatprep.subr.mxu0 0.0
      %4855 = vmatpush1.msra.mxu0 0.0
      %4856 = vmatprep.subr.mxu0 0.0
      %4857 = vmatpush1.msra.mxu0 0.0
      %4858 = vmatprep.subr.mxu0 0.0
      %4859 = vmatpush1.msra.mxu0 0.0
      %4860 = vmatprep.subr.mxu0 0.0
      %4861 = vmatpush1.msra.mxu0 0.0
      %4862 = vmatprep.subr.mxu0 0.0
      %4863 = vmatpush1.msra.mxu0 0.0
      %4864 = vmatprep.subr.mxu0 0.0
      %4865 = vmatpush1.msra.mxu0 0.0
      %4866 = vmatprep.subr.mxu0 0.0
      %4867 = vmatpush1.msra.mxu0 0.0
      %4868 = vmatprep.subr.mxu0 0.0
      %4869 = vmatpush1.msra.mxu0 0.0
      %4870 = vmatprep.subr.mxu0 0.0
      %4871 = vmatpush1.msra.mxu0 0.0
      %4872 = vmatprep.subr.mxu0 0.0
      %4873 = vmatpush1.msra.mxu0 0.0
      %4874 = vmatprep.subr.mxu0 0.0
      %4875 = vmatpush1.msra.mxu0 0.0
      %4876 = vmatprep.subr.mxu0 0.0
      %4877 = vmatpush1.msra.mxu0 0.0
      %4878 = vmatprep.subr.mxu0 0.0
      %4879 = vmatpush1.msra.mxu0 0.0
      %4880 = vmatprep.subr.mxu0 0.0
      %4881 = vmatpush1.msra.mxu0 0.0
      %4882 = vmatprep.subr.mxu0 0.0
      %4883 = vmatpush1.msra.mxu0 0.0
      %4884 = vmatprep.subr.mxu0 0.0
      %4885 = vmatpush1.msra.mxu0 0.0
      %4886 = vmatprep.subr.mxu0 0.0
      %4887 = vmatpush1.msra.mxu0 0.0
      %4888 = vmatprep.subr.mxu0 0.0
      %4889 = vmatpush1.msra.mxu0 0.0
      %4890 = vmatprep.subr.mxu0 0.0
      %4891 = vmatpush1.msra.mxu0 0.0
      %4892 = vmatprep.subr.mxu0 0.0
      %4893 = vmatpush1.msra.mxu0 0.0
      %4894 = vmatprep.subr.mxu0 0.0
      %4895 = vmatpush1.msra.mxu0 0.0
      %4896 = vmatprep.subr.mxu0 0.0
      %4897 = vmatpush1.msra.mxu0 0.0
      %4898 = vmatprep.subr.mxu0 0.0
      %4899 = vmatpush1.msra.mxu0 0.0
      %4900 = vmatprep.subr.mxu0 0.0
      %4901 = vmatpush1.msra.mxu0 0.0
      %4902 = vmatprep.subr.mxu0 0.0
      %4903 = vmatpush1.msra.mxu0 0.0
      %4904 = vmatprep.subr.mxu0 0.0
      %4905 = vmatpush1.msra.mxu0 0.0
      %4906 = vmatprep.subr.mxu0 0.0
      %4907 = vmatpush1.msra.mxu0 0.0
      %4908 = vmatprep.subr.mxu0 0.0
      %4909 = vmatpush1.msra.mxu0 0.0
      %4910 = vmatprep.subr.mxu0 0.0
      %4911 = vmatpush1.msra.mxu0 0.0
      %4912 = vmatprep.subr.mxu0 0.0
      %4913 = vmatpush1.msra.mxu0 0.0
      %4914 = vmatprep.subr.mxu0 0.0
      %4915 = vmatpush1.msra.mxu0 0.0
      %4916 = vmatprep.mubr.f32.mxu0 0.0
      %4917 = vmatmul.mubr.f32.gmra.mrb[0].mxu0 %v4850
      %v4918 = vpop.f32.mrb[0].mxu0
      %v4919 = vadd.f32 %v4846, %v4918
      %v4920 = vpop.f32.mrb[0].mxu0
      %4921 = vdwg.mxu0
      %s4922 = scalar_lea.vmem %s12, 8
      %v4923 = vld [vmem:[%s4922] sm:$0xf]
      %v4925 = vsel %vm3259, %v4923, 0
      %4927 = vmatprep.subr.mxu0 0.0
      %4928 = vmatpush1.msra.mxu0 %v4621
      %4929 = vmatprep.subr.mxu0 0.0
      %4930 = vmatpush1.msra.mxu0 %v4622
      %4931 = vmatprep.subr.mxu0 0.0
      %4932 = vmatpush1.msra.mxu0 0.0
      %4933 = vmatprep.subr.mxu0 0.0
      %4934 = vmatpush1.msra.mxu0 0.0
      %4935 = vmatprep.subr.mxu0 0.0
      %4936 = vmatpush1.msra.mxu0 0.0
      %4937 = vmatprep.subr.mxu0 0.0
      %4938 = vmatpush1.msra.mxu0 0.0
      %4939 = vmatprep.subr.mxu0 0.0
      %4940 = vmatpush1.msra.mxu0 0.0
      %4941 = vmatprep.subr.mxu0 0.0
      %4942 = vmatpush1.msra.mxu0 0.0
      %4943 = vmatprep.subr.mxu0 0.0
      %4944 = vmatpush1.msra.mxu0 0.0
      %4945 = vmatprep.subr.mxu0 0.0
      %4946 = vmatpush1.msra.mxu0 0.0
      %4947 = vmatprep.subr.mxu0 0.0
      %4948 = vmatpush1.msra.mxu0 0.0
      %4949 = vmatprep.subr.mxu0 0.0
      %4950 = vmatpush1.msra.mxu0 0.0
      %4951 = vmatprep.subr.mxu0 0.0
      %4952 = vmatpush1.msra.mxu0 0.0
      %4953 = vmatprep.subr.mxu0 0.0
      %4954 = vmatpush1.msra.mxu0 0.0
      %4955 = vmatprep.subr.mxu0 0.0
      %4956 = vmatpush1.msra.mxu0 0.0
      %4957 = vmatprep.subr.mxu0 0.0
      %4958 = vmatpush1.msra.mxu0 0.0
      %4959 = vmatprep.subr.mxu0 0.0
      %4960 = vmatpush1.msra.mxu0 0.0
      %4961 = vmatprep.subr.mxu0 0.0
      %4962 = vmatpush1.msra.mxu0 0.0
      %4963 = vmatprep.subr.mxu0 0.0
      %4964 = vmatpush1.msra.mxu0 0.0
      %4965 = vmatprep.subr.mxu0 0.0
      %4966 = vmatpush1.msra.mxu0 0.0
      %4967 = vmatprep.subr.mxu0 0.0
      %4968 = vmatpush1.msra.mxu0 0.0
      %4969 = vmatprep.subr.mxu0 0.0
      %4970 = vmatpush1.msra.mxu0 0.0
      %4971 = vmatprep.subr.mxu0 0.0
      %4972 = vmatpush1.msra.mxu0 0.0
      %4973 = vmatprep.subr.mxu0 0.0
      %4974 = vmatpush1.msra.mxu0 0.0
      %4975 = vmatprep.subr.mxu0 0.0
      %4976 = vmatpush1.msra.mxu0 0.0
      %4977 = vmatprep.subr.mxu0 0.0
      %4978 = vmatpush1.msra.mxu0 0.0
      %4979 = vmatprep.subr.mxu0 0.0
      %4980 = vmatpush1.msra.mxu0 0.0
      %4981 = vmatprep.subr.mxu0 0.0
      %4982 = vmatpush1.msra.mxu0 0.0
      %4983 = vmatprep.subr.mxu0 0.0
      %4984 = vmatpush1.msra.mxu0 0.0
      %4985 = vmatprep.subr.mxu0 0.0
      %4986 = vmatpush1.msra.mxu0 0.0
      %4987 = vmatprep.subr.mxu0 0.0
      %4988 = vmatpush1.msra.mxu0 0.0
      %4989 = vmatprep.subr.mxu0 0.0
      %4990 = vmatpush1.msra.mxu0 0.0
      %4991 = vmatprep.mubr.f32.mxu0 0.0
      %4992 = vmatmul.mubr.f32.gmra.mrb[0].mxu0 %v4925
      %v4993 = vpop.f32.mrb[0].mxu0
      %v4994 = vadd.f32 0.0, %v4993
      %v4995 = vpop.f32.mrb[0].mxu0
      %4996 = vdwg.mxu0
      %s4997 = scalar_lea.vmem %s10, 16
      %v4998 = vld [vmem:[%s4997] sm:$0xff]
      %v5000 = vsel %vm4775, %v4994, 0
      %5002 = vmatprep.subr.mxu0 0.0
      %5003 = vmatpush1.msra.mxu0 %v4998
      %5004 = vmatprep.subr.mxu0 0.0
      %5005 = vmatpush1.msra.mxu0 0.0
      %5006 = vmatprep.subr.mxu0 0.0
      %5007 = vmatpush1.msra.mxu0 0.0
      %5008 = vmatprep.subr.mxu0 0.0
      %5009 = vmatpush1.msra.mxu0 0.0
      %5010 = vmatprep.subr.mxu0 0.0
      %5011 = vmatpush1.msra.mxu0 0.0
      %5012 = vmatprep.subr.mxu0 0.0
      %5013 = vmatpush1.msra.mxu0 0.0
      %5014 = vmatprep.subr.mxu0 0.0
      %5015 = vmatpush1.msra.mxu0 0.0
      %5016 = vmatprep.subr.mxu0 0.0
      %5017 = vmatpush1.msra.mxu0 0.0
      %5018 = vmatprep.subr.mxu0 0.0
      %5019 = vmatpush1.msra.mxu0 0.0
      %5020 = vmatprep.subr.mxu0 0.0
      %5021 = vmatpush1.msra.mxu0 0.0
      %5022 = vmatprep.subr.mxu0 0.0
      %5023 = vmatpush1.msra.mxu0 0.0
      %5024 = vmatprep.subr.mxu0 0.0
      %5025 = vmatpush1.msra.mxu0 0.0
      %5026 = vmatprep.subr.mxu0 0.0
      %5027 = vmatpush1.msra.mxu0 0.0
      %5028 = vmatprep.subr.mxu0 0.0
      %5029 = vmatpush1.msra.mxu0 0.0
      %5030 = vmatprep.subr.mxu0 0.0
      %5031 = vmatpush1.msra.mxu0 0.0
      %5032 = vmatprep.subr.mxu0 0.0
      %5033 = vmatpush1.msra.mxu0 0.0
      %5034 = vmatprep.subr.mxu0 0.0
      %5035 = vmatpush1.msra.mxu0 0.0
      %5036 = vmatprep.subr.mxu0 0.0
      %5037 = vmatpush1.msra.mxu0 0.0
      %5038 = vmatprep.subr.mxu0 0.0
      %5039 = vmatpush1.msra.mxu0 0.0
      %5040 = vmatprep.subr.mxu0 0.0
      %5041 = vmatpush1.msra.mxu0 0.0
      %5042 = vmatprep.subr.mxu0 0.0
      %5043 = vmatpush1.msra.mxu0 0.0
      %5044 = vmatprep.subr.mxu0 0.0
      %5045 = vmatpush1.msra.mxu0 0.0
      %5046 = vmatprep.subr.mxu0 0.0
      %5047 = vmatpush1.msra.mxu0 0.0
      %5048 = vmatprep.subr.mxu0 0.0
      %5049 = vmatpush1.msra.mxu0 0.0
      %5050 = vmatprep.subr.mxu0 0.0
      %5051 = vmatpush1.msra.mxu0 0.0
      %5052 = vmatprep.subr.mxu0 0.0
      %5053 = vmatpush1.msra.mxu0 0.0
      %5054 = vmatprep.subr.mxu0 0.0
      %5055 = vmatpush1.msra.mxu0 0.0
      %5056 = vmatprep.subr.mxu0 0.0
      %5057 = vmatpush1.msra.mxu0 0.0
      %5058 = vmatprep.subr.mxu0 0.0
      %5059 = vmatpush1.msra.mxu0 0.0
      %5060 = vmatprep.subr.mxu0 0.0
      %5061 = vmatpush1.msra.mxu0 0.0
      %5062 = vmatprep.subr.mxu0 0.0
      %5063 = vmatpush1.msra.mxu0 0.0
      %5064 = vmatprep.subr.mxu0 0.0
      %5065 = vmatpush1.msra.mxu0 0.0
      %5066 = vmatprep.mubr.f32.mxu0 0.0
      %5067 = vmatmul.mubr.f32.gmra.mrb[0].mxu0 %v5000
      %v5068 = vpop.f32.mrb[0].mxu0
      %v5069 = vadd.f32 0.0, %v5068
      %v5070 = vpop.f32.mrb[0].mxu0
      %5071 = vdwg.mxu0
      %v5072 = vadd.f32 %v4919, %v5069
      %s5073 = scalar_lea.vmem %s12, 12
      %v5074 = vld [vmem:[%s5073] sm:$0xf]
      %v5076 = vsel %vm3259, %v5074, 0
      %5078 = vmatprep.subr.mxu0 0.0
      %5079 = vmatpush1.msra.mxu0 %v4621
      %5080 = vmatprep.subr.mxu0 0.0
      %5081 = vmatpush1.msra.mxu0 %v4622
      %5082 = vmatprep.subr.mxu0 0.0
      %5083 = vmatpush1.msra.mxu0 0.0
      %5084 = vmatprep.subr.mxu0 0.0
      %5085 = vmatpush1.msra.mxu0 0.0
      %5086 = vmatprep.subr.mxu0 0.0
      %5087 = vmatpush1.msra.mxu0 0.0
      %5088 = vmatprep.subr.mxu0 0.0
      %5089 = vmatpush1.msra.mxu0 0.0
      %5090 = vmatprep.subr.mxu0 0.0
      %5091 = vmatpush1.msra.mxu0 0.0
      %5092 = vmatprep.subr.mxu0 0.0
      %5093 = vmatpush1.msra.mxu0 0.0
      %5094 = vmatprep.subr.mxu0 0.0
      %5095 = vmatpush1.msra.mxu0 0.0
      %5096 = vmatprep.subr.mxu0 0.0
      %5097 = vmatpush1.msra.mxu0 0.0
      %5098 = vmatprep.subr.mxu0 0.0
      %5099 = vmatpush1.msra.mxu0 0.0
      %5100 = vmatprep.subr.mxu0 0.0
      %5101 = vmatpush1.msra.mxu0 0.0
      %5102 = vmatprep.subr.mxu0 0.0
      %5103 = vmatpush1.msra.mxu0 0.0
      %5104 = vmatprep.subr.mxu0 0.0
      %5105 = vmatpush1.msra.mxu0 0.0
      %5106 = vmatprep.subr.mxu0 0.0
      %5107 = vmatpush1.msra.mxu0 0.0
      %5108 = vmatprep.subr.mxu0 0.0
      %5109 = vmatpush1.msra.mxu0 0.0
      %5110 = vmatprep.subr.mxu0 0.0
      %5111 = vmatpush1.msra.mxu0 0.0
      %5112 = vmatprep.subr.mxu0 0.0
      %5113 = vmatpush1.msra.mxu0 0.0
      %5114 = vmatprep.subr.mxu0 0.0
      %5115 = vmatpush1.msra.mxu0 0.0
      %5116 = vmatprep.subr.mxu0 0.0
      %5117 = vmatpush1.msra.mxu0 0.0
      %5118 = vmatprep.subr.mxu0 0.0
      %5119 = vmatpush1.msra.mxu0 0.0
      %5120 = vmatprep.subr.mxu0 0.0
      %5121 = vmatpush1.msra.mxu0 0.0
      %5122 = vmatprep.subr.mxu0 0.0
      %5123 = vmatpush1.msra.mxu0 0.0
      %5124 = vmatprep.subr.mxu0 0.0
      %5125 = vmatpush1.msra.mxu0 0.0
      %5126 = vmatprep.subr.mxu0 0.0
      %5127 = vmatpush1.msra.mxu0 0.0
      %5128 = vmatprep.subr.mxu0 0.0
      %5129 = vmatpush1.msra.mxu0 0.0
      %5130 = vmatprep.subr.mxu0 0.0
      %5131 = vmatpush1.msra.mxu0 0.0
      %5132 = vmatprep.subr.mxu0 0.0
      %5133 = vmatpush1.msra.mxu0 0.0
      %5134 = vmatprep.subr.mxu0 0.0
      %5135 = vmatpush1.msra.mxu0 0.0
      %5136 = vmatprep.subr.mxu0 0.0
      %5137 = vmatpush1.msra.mxu0 0.0
      %5138 = vmatprep.subr.mxu0 0.0
      %5139 = vmatpush1.msra.mxu0 0.0
      %5140 = vmatprep.subr.mxu0 0.0
      %5141 = vmatpush1.msra.mxu0 0.0
      %5142 = vmatprep.mubr.f32.mxu0 0.0
      %5143 = vmatmul.mubr.f32.gmra.mrb[0].mxu0 %v5076
      %v5144 = vpop.f32.mrb[0].mxu0
      %v5145 = vadd.f32 0.0, %v5144
      %v5146 = vpop.f32.mrb[0].mxu0
      %5147 = vdwg.mxu0
      %s5148 = scalar_lea.vmem %s10, 24
      %v5149 = vld [vmem:[%s5148] sm:$0xff]
      %v5151 = vsel %vm4775, %v5145, 0
      %5153 = vmatprep.subr.mxu0 0.0
      %5154 = vmatpush1.msra.mxu0 %v5149
      %5155 = vmatprep.subr.mxu0 0.0
      %5156 = vmatpush1.msra.mxu0 0.0
      %5157 = vmatprep.subr.mxu0 0.0
      %5158 = vmatpush1.msra.mxu0 0.0
      %5159 = vmatprep.subr.mxu0 0.0
      %5160 = vmatpush1.msra.mxu0 0.0
      %5161 = vmatprep.subr.mxu0 0.0
      %5162 = vmatpush1.msra.mxu0 0.0
      %5163 = vmatprep.subr.mxu0 0.0
      %5164 = vmatpush1.msra.mxu0 0.0
      %5165 = vmatprep.subr.mxu0 0.0
      %5166 = vmatpush1.msra.mxu0 0.0
      %5167 = vmatprep.subr.mxu0 0.0
      %5168 = vmatpush1.msra.mxu0 0.0
      %5169 = vmatprep.subr.mxu0 0.0
      %5170 = vmatpush1.msra.mxu0 0.0
      %5171 = vmatprep.subr.mxu0 0.0
      %5172 = vmatpush1.msra.mxu0 0.0
      %5173 = vmatprep.subr.mxu0 0.0
      %5174 = vmatpush1.msra.mxu0 0.0
      %5175 = vmatprep.subr.mxu0 0.0
      %5176 = vmatpush1.msra.mxu0 0.0
      %5177 = vmatprep.subr.mxu0 0.0
      %5178 = vmatpush1.msra.mxu0 0.0
      %5179 = vmatprep.subr.mxu0 0.0
      %5180 = vmatpush1.msra.mxu0 0.0
      %5181 = vmatprep.subr.mxu0 0.0
      %5182 = vmatpush1.msra.mxu0 0.0
      %5183 = vmatprep.subr.mxu0 0.0
      %5184 = vmatpush1.msra.mxu0 0.0
      %5185 = vmatprep.subr.mxu0 0.0
      %5186 = vmatpush1.msra.mxu0 0.0
      %5187 = vmatprep.subr.mxu0 0.0
      %5188 = vmatpush1.msra.mxu0 0.0
      %5189 = vmatprep.subr.mxu0 0.0
      %5190 = vmatpush1.msra.mxu0 0.0
      %5191 = vmatprep.subr.mxu0 0.0
      %5192 = vmatpush1.msra.mxu0 0.0
      %5193 = vmatprep.subr.mxu0 0.0
      %5194 = vmatpush1.msra.mxu0 0.0
      %5195 = vmatprep.subr.mxu0 0.0
      %5196 = vmatpush1.msra.mxu0 0.0
      %5197 = vmatprep.subr.mxu0 0.0
      %5198 = vmatpush1.msra.mxu0 0.0
      %5199 = vmatprep.subr.mxu0 0.0
      %5200 = vmatpush1.msra.mxu0 0.0
      %5201 = vmatprep.subr.mxu0 0.0
      %5202 = vmatpush1.msra.mxu0 0.0
      %5203 = vmatprep.subr.mxu0 0.0
      %5204 = vmatpush1.msra.mxu0 0.0
      %5205 = vmatprep.subr.mxu0 0.0
      %5206 = vmatpush1.msra.mxu0 0.0
      %5207 = vmatprep.subr.mxu0 0.0
      %5208 = vmatpush1.msra.mxu0 0.0
      %5209 = vmatprep.subr.mxu0 0.0
      %5210 = vmatpush1.msra.mxu0 0.0
      %5211 = vmatprep.subr.mxu0 0.0
      %5212 = vmatpush1.msra.mxu0 0.0
      %5213 = vmatprep.subr.mxu0 0.0
      %5214 = vmatpush1.msra.mxu0 0.0
      %5215 = vmatprep.subr.mxu0 0.0
      %5216 = vmatpush1.msra.mxu0 0.0
      %5217 = vmatprep.mubr.f32.mxu0 0.0
      %5218 = vmatmul.mubr.f32.gmra.mrb[0].mxu0 %v5151
      %v5219 = vpop.f32.mrb[0].mxu0
      %v5220 = vadd.f32 0.0, %v5219
      %v5221 = vpop.f32.mrb[0].mxu0
      %5222 = vdwg.mxu0
      %v5223 = vadd.f32 %v5072, %v5220
      %s5224 = scalar_lea.vmem %s12, 16
      %v5225 = vld [vmem:[%s5224] sm:$0xf]
      %v5227 = vsel %vm3259, %v5225, 0
      %5229 = vmatprep.subr.mxu0 0.0
      %5230 = vmatpush1.msra.mxu0 %v4621
      %5231 = vmatprep.subr.mxu0 0.0
      %5232 = vmatpush1.msra.mxu0 %v4622
      %5233 = vmatprep.subr.mxu0 0.0
      %5234 = vmatpush1.msra.mxu0 0.0
      %5235 = vmatprep.subr.mxu0 0.0
      %5236 = vmatpush1.msra.mxu0 0.0
      %5237 = vmatprep.subr.mxu0 0.0
      %5238 = vmatpush1.msra.mxu0 0.0
      %5239 = vmatprep.subr.mxu0 0.0
      %5240 = vmatpush1.msra.mxu0 0.0
      %5241 = vmatprep.subr.mxu0 0.0
      %5242 = vmatpush1.msra.mxu0 0.0
      %5243 = vmatprep.subr.mxu0 0.0
      %5244 = vmatpush1.msra.mxu0 0.0
      %5245 = vmatprep.subr.mxu0 0.0
      %5246 = vmatpush1.msra.mxu0 0.0
      %5247 = vmatprep.subr.mxu0 0.0
      %5248 = vmatpush1.msra.mxu0 0.0
      %5249 = vmatprep.subr.mxu0 0.0
      %5250 = vmatpush1.msra.mxu0 0.0
      %5251 = vmatprep.subr.mxu0 0.0
      %5252 = vmatpush1.msra.mxu0 0.0
      %5253 = vmatprep.subr.mxu0 0.0
      %5254 = vmatpush1.msra.mxu0 0.0
      %5255 = vmatprep.subr.mxu0 0.0
      %5256 = vmatpush1.msra.mxu0 0.0
      %5257 = vmatprep.subr.mxu0 0.0
      %5258 = vmatpush1.msra.mxu0 0.0
      %5259 = vmatprep.subr.mxu0 0.0
      %5260 = vmatpush1.msra.mxu0 0.0
      %5261 = vmatprep.subr.mxu0 0.0
      %5262 = vmatpush1.msra.mxu0 0.0
      %5263 = vmatprep.subr.mxu0 0.0
      %5264 = vmatpush1.msra.mxu0 0.0
      %5265 = vmatprep.subr.mxu0 0.0
      %5266 = vmatpush1.msra.mxu0 0.0
      %5267 = vmatprep.subr.mxu0 0.0
      %5268 = vmatpush1.msra.mxu0 0.0
      %5269 = vmatprep.subr.mxu0 0.0
      %5270 = vmatpush1.msra.mxu0 0.0
      %5271 = vmatprep.subr.mxu0 0.0
      %5272 = vmatpush1.msra.mxu0 0.0
      %5273 = vmatprep.subr.mxu0 0.0
      %5274 = vmatpush1.msra.mxu0 0.0
      %5275 = vmatprep.subr.mxu0 0.0
      %5276 = vmatpush1.msra.mxu0 0.0
      %5277 = vmatprep.subr.mxu0 0.0
      %5278 = vmatpush1.msra.mxu0 0.0
      %5279 = vmatprep.subr.mxu0 0.0
      %5280 = vmatpush1.msra.mxu0 0.0
      %5281 = vmatprep.subr.mxu0 0.0
      %5282 = vmatpush1.msra.mxu0 0.0
      %5283 = vmatprep.subr.mxu0 0.0
      %5284 = vmatpush1.msra.mxu0 0.0
      %5285 = vmatprep.subr.mxu0 0.0
      %5286 = vmatpush1.msra.mxu0 0.0
      %5287 = vmatprep.subr.mxu0 0.0
      %5288 = vmatpush1.msra.mxu0 0.0
      %5289 = vmatprep.subr.mxu0 0.0
      %5290 = vmatpush1.msra.mxu0 0.0
      %5291 = vmatprep.subr.mxu0 0.0
      %5292 = vmatpush1.msra.mxu0 0.0
      %5293 = vmatprep.mubr.f32.mxu0 0.0
      %5294 = vmatmul.mubr.f32.gmra.mrb[0].mxu0 %v5227
      %v5295 = vpop.f32.mrb[0].mxu0
      %v5296 = vadd.f32 0.0, %v5295
      %v5297 = vpop.f32.mrb[0].mxu0
      %5298 = vdwg.mxu0
      %s5299 = scalar_lea.vmem %s10, 32
      %v5300 = vld [vmem:[%s5299] sm:$0xff]
      %v5302 = vsel %vm4775, %v5296, 0
      %5304 = vmatprep.subr.mxu0 0.0
      %5305 = vmatpush1.msra.mxu0 %v5300
      %5306 = vmatprep.subr.mxu0 0.0
      %5307 = vmatpush1.msra.mxu0 0.0
      %5308 = vmatprep.subr.mxu0 0.0
      %5309 = vmatpush1.msra.mxu0 0.0
      %5310 = vmatprep.subr.mxu0 0.0
      %5311 = vmatpush1.msra.mxu0 0.0
      %5312 = vmatprep.subr.mxu0 0.0
      %5313 = vmatpush1.msra.mxu0 0.0
      %5314 = vmatprep.subr.mxu0 0.0
      %5315 = vmatpush1.msra.mxu0 0.0
      %5316 = vmatprep.subr.mxu0 0.0
      %5317 = vmatpush1.msra.mxu0 0.0
      %5318 = vmatprep.subr.mxu0 0.0
      %5319 = vmatpush1.msra.mxu0 0.0
      %5320 = vmatprep.subr.mxu0 0.0
      %5321 = vmatpush1.msra.mxu0 0.0
      %5322 = vmatprep.subr.mxu0 0.0
      %5323 = vmatpush1.msra.mxu0 0.0
      %5324 = vmatprep.subr.mxu0 0.0
      %5325 = vmatpush1.msra.mxu0 0.0
      %5326 = vmatprep.subr.mxu0 0.0
      %5327 = vmatpush1.msra.mxu0 0.0
      %5328 = vmatprep.subr.mxu0 0.0
      %5329 = vmatpush1.msra.mxu0 0.0
      %5330 = vmatprep.subr.mxu0 0.0
      %5331 = vmatpush1.msra.mxu0 0.0
      %5332 = vmatprep.subr.mxu0 0.0
      %5333 = vmatpush1.msra.mxu0 0.0
      %5334 = vmatprep.subr.mxu0 0.0
      %5335 = vmatpush1.msra.mxu0 0.0
      %5336 = vmatprep.subr.mxu0 0.0
      %5337 = vmatpush1.msra.mxu0 0.0
      %5338 = vmatprep.subr.mxu0 0.0
      %5339 = vmatpush1.msra.mxu0 0.0
      %5340 = vmatprep.subr.mxu0 0.0
      %5341 = vmatpush1.msra.mxu0 0.0
      %5342 = vmatprep.subr.mxu0 0.0
      %5343 = vmatpush1.msra.mxu0 0.0
      %5344 = vmatprep.subr.mxu0 0.0
      %5345 = vmatpush1.msra.mxu0 0.0
      %5346 = vmatprep.subr.mxu0 0.0
      %5347 = vmatpush1.msra.mxu0 0.0
      %5348 = vmatprep.subr.mxu0 0.0
      %5349 = vmatpush1.msra.mxu0 0.0
      %5350 = vmatprep.subr.mxu0 0.0
      %5351 = vmatpush1.msra.mxu0 0.0
      %5352 = vmatprep.subr.mxu0 0.0
      %5353 = vmatpush1.msra.mxu0 0.0
      %5354 = vmatprep.subr.mxu0 0.0
      %5355 = vmatpush1.msra.mxu0 0.0
      %5356 = vmatprep.subr.mxu0 0.0
      %5357 = vmatpush1.msra.mxu0 0.0
      %5358 = vmatprep.subr.mxu0 0.0
      %5359 = vmatpush1.msra.mxu0 0.0
      %5360 = vmatprep.subr.mxu0 0.0
      %5361 = vmatpush1.msra.mxu0 0.0
      %5362 = vmatprep.subr.mxu0 0.0
      %5363 = vmatpush1.msra.mxu0 0.0
      %5364 = vmatprep.subr.mxu0 0.0
      %5365 = vmatpush1.msra.mxu0 0.0
      %5366 = vmatprep.subr.mxu0 0.0
      %5367 = vmatpush1.msra.mxu0 0.0
      %5368 = vmatprep.mubr.f32.mxu0 0.0
      %5369 = vmatmul.mubr.f32.gmra.mrb[0].mxu0 %v5302
      %v5370 = vpop.f32.mrb[0].mxu0
      %v5371 = vadd.f32 0.0, %v5370
      %v5372 = vpop.f32.mrb[0].mxu0
      %5373 = vdwg.mxu0
      %v5374 = vadd.f32 %v5223, %v5371
      %s5375 = scalar_lea.vmem %s12, 20
      %v5376 = vld [vmem:[%s5375] sm:$0xf]
      %v5378 = vsel %vm3259, %v5376, 0
      %5380 = vmatprep.subr.mxu0 0.0
      %5381 = vmatpush1.msra.mxu0 %v4621
      %5382 = vmatprep.subr.mxu0 0.0
      %5383 = vmatpush1.msra.mxu0 %v4622
      %5384 = vmatprep.subr.mxu0 0.0
      %5385 = vmatpush1.msra.mxu0 0.0
      %5386 = vmatprep.subr.mxu0 0.0
      %5387 = vmatpush1.msra.mxu0 0.0
      %5388 = vmatprep.subr.mxu0 0.0
      %5389 = vmatpush1.msra.mxu0 0.0
      %5390 = vmatprep.subr.mxu0 0.0
      %5391 = vmatpush1.msra.mxu0 0.0
      %5392 = vmatprep.subr.mxu0 0.0
      %5393 = vmatpush1.msra.mxu0 0.0
      %5394 = vmatprep.subr.mxu0 0.0
      %5395 = vmatpush1.msra.mxu0 0.0
      %5396 = vmatprep.subr.mxu0 0.0
      %5397 = vmatpush1.msra.mxu0 0.0
      %5398 = vmatprep.subr.mxu0 0.0
      %5399 = vmatpush1.msra.mxu0 0.0
      %5400 = vmatprep.subr.mxu0 0.0
      %5401 = vmatpush1.msra.mxu0 0.0
      %5402 = vmatprep.subr.mxu0 0.0
      %5403 = vmatpush1.msra.mxu0 0.0
      %5404 = vmatprep.subr.mxu0 0.0
      %5405 = vmatpush1.msra.mxu0 0.0
      %5406 = vmatprep.subr.mxu0 0.0
      %5407 = vmatpush1.msra.mxu0 0.0
      %5408 = vmatprep.subr.mxu0 0.0
      %5409 = vmatpush1.msra.mxu0 0.0
      %5410 = vmatprep.subr.mxu0 0.0
      %5411 = vmatpush1.msra.mxu0 0.0
      %5412 = vmatprep.subr.mxu0 0.0
      %5413 = vmatpush1.msra.mxu0 0.0
      %5414 = vmatprep.subr.mxu0 0.0
      %5415 = vmatpush1.msra.mxu0 0.0
      %5416 = vmatprep.subr.mxu0 0.0
      %5417 = vmatpush1.msra.mxu0 0.0
      %5418 = vmatprep.subr.mxu0 0.0
      %5419 = vmatpush1.msra.mxu0 0.0
      %5420 = vmatprep.subr.mxu0 0.0
      %5421 = vmatpush1.msra.mxu0 0.0
      %5422 = vmatprep.subr.mxu0 0.0
      %5423 = vmatpush1.msra.mxu0 0.0
      %5424 = vmatprep.subr.mxu0 0.0
      %5425 = vmatpush1.msra.mxu0 0.0
      %5426 = vmatprep.subr.mxu0 0.0
      %5427 = vmatpush1.msra.mxu0 0.0
      %5428 = vmatprep.subr.mxu0 0.0
      %5429 = vmatpush1.msra.mxu0 0.0
      %5430 = vmatprep.subr.mxu0 0.0
      %5431 = vmatpush1.msra.mxu0 0.0
      %5432 = vmatprep.subr.mxu0 0.0
      %5433 = vmatpush1.msra.mxu0 0.0
      %5434 = vmatprep.subr.mxu0 0.0
      %5435 = vmatpush1.msra.mxu0 0.0
      %5436 = vmatprep.subr.mxu0 0.0
      %5437 = vmatpush1.msra.mxu0 0.0
      %5438 = vmatprep.subr.mxu0 0.0
      %5439 = vmatpush1.msra.mxu0 0.0
      %5440 = vmatprep.subr.mxu0 0.0
      %5441 = vmatpush1.msra.mxu0 0.0
      %5442 = vmatprep.subr.mxu0 0.0
      %5443 = vmatpush1.msra.mxu0 0.0
      %5444 = vmatprep.mubr.f32.mxu0 0.0
      %5445 = vmatmul.mubr.f32.gmra.mrb[0].mxu0 %v5378
      %v5446 = vpop.f32.mrb[0].mxu0
      %v5447 = vadd.f32 0.0, %v5446
      %v5448 = vpop.f32.mrb[0].mxu0
      %5449 = vdwg.mxu0
      %s5450 = scalar_lea.vmem %s10, 40
      %v5451 = vld [vmem:[%s5450] sm:$0xff]
      %v5453 = vsel %vm4775, %v5447, 0
      %5455 = vmatprep.subr.mxu0 0.0
      %5456 = vmatpush1.msra.mxu0 %v5451
      %5457 = vmatprep.subr.mxu0 0.0
      %5458 = vmatpush1.msra.mxu0 0.0
      %5459 = vmatprep.subr.mxu0 0.0
      %5460 = vmatpush1.msra.mxu0 0.0
      %5461 = vmatprep.subr.mxu0 0.0
      %5462 = vmatpush1.msra.mxu0 0.0
      %5463 = vmatprep.subr.mxu0 0.0
      %5464 = vmatpush1.msra.mxu0 0.0
      %5465 = vmatprep.subr.mxu0 0.0
      %5466 = vmatpush1.msra.mxu0 0.0
      %5467 = vmatprep.subr.mxu0 0.0
      %5468 = vmatpush1.msra.mxu0 0.0
      %5469 = vmatprep.subr.mxu0 0.0
      %5470 = vmatpush1.msra.mxu0 0.0
      %5471 = vmatprep.subr.mxu0 0.0
      %5472 = vmatpush1.msra.mxu0 0.0
      %5473 = vmatprep.subr.mxu0 0.0
      %5474 = vmatpush1.msra.mxu0 0.0
      %5475 = vmatprep.subr.mxu0 0.0
      %5476 = vmatpush1.msra.mxu0 0.0
      %5477 = vmatprep.subr.mxu0 0.0
      %5478 = vmatpush1.msra.mxu0 0.0
      %5479 = vmatprep.subr.mxu0 0.0
      %5480 = vmatpush1.msra.mxu0 0.0
      %5481 = vmatprep.subr.mxu0 0.0
      %5482 = vmatpush1.msra.mxu0 0.0
      %5483 = vmatprep.subr.mxu0 0.0
      %5484 = vmatpush1.msra.mxu0 0.0
      %5485 = vmatprep.subr.mxu0 0.0
      %5486 = vmatpush1.msra.mxu0 0.0
      %5487 = vmatprep.subr.mxu0 0.0
      %5488 = vmatpush1.msra.mxu0 0.0
      %5489 = vmatprep.subr.mxu0 0.0
      %5490 = vmatpush1.msra.mxu0 0.0
      %5491 = vmatprep.subr.mxu0 0.0
      %5492 = vmatpush1.msra.mxu0 0.0
      %5493 = vmatprep.subr.mxu0 0.0
      %5494 = vmatpush1.msra.mxu0 0.0
      %5495 = vmatprep.subr.mxu0 0.0
      %5496 = vmatpush1.msra.mxu0 0.0
      %5497 = vmatprep.subr.mxu0 0.0
      %5498 = vmatpush1.msra.mxu0 0.0
      %5499 = vmatprep.subr.mxu0 0.0
      %5500 = vmatpush1.msra.mxu0 0.0
      %5501 = vmatprep.subr.mxu0 0.0
      %5502 = vmatpush1.msra.mxu0 0.0
      %5503 = vmatprep.subr.mxu0 0.0
      %5504 = vmatpush1.msra.mxu0 0.0
      %5505 = vmatprep.subr.mxu0 0.0
      %5506 = vmatpush1.msra.mxu0 0.0
      %5507 = vmatprep.subr.mxu0 0.0
      %5508 = vmatpush1.msra.mxu0 0.0
      %5509 = vmatprep.subr.mxu0 0.0
      %5510 = vmatpush1.msra.mxu0 0.0
      %5511 = vmatprep.subr.mxu0 0.0
      %5512 = vmatpush1.msra.mxu0 0.0
      %5513 = vmatprep.subr.mxu0 0.0
      %5514 = vmatpush1.msra.mxu0 0.0
      %5515 = vmatprep.subr.mxu0 0.0
      %5516 = vmatpush1.msra.mxu0 0.0
      %5517 = vmatprep.subr.mxu0 0.0
      %5518 = vmatpush1.msra.mxu0 0.0
      %5519 = vmatprep.mubr.f32.mxu0 0.0
      %5520 = vmatmul.mubr.f32.gmra.mrb[0].mxu0 %v5453
      %v5521 = vpop.f32.mrb[0].mxu0
      %v5522 = vadd.f32 0.0, %v5521
      %v5523 = vpop.f32.mrb[0].mxu0
      %5524 = vdwg.mxu0
      %v5525 = vadd.f32 %v5374, %v5522
      %s5526 = scalar_lea.vmem %s12, 24
      %v5527 = vld [vmem:[%s5526] sm:$0xf]
      %v5529 = vsel %vm3259, %v5527, 0
      %5531 = vmatprep.subr.mxu0 0.0
      %5532 = vmatpush1.msra.mxu0 %v4621
      %5533 = vmatprep.subr.mxu0 0.0
      %5534 = vmatpush1.msra.mxu0 %v4622
      %5535 = vmatprep.subr.mxu0 0.0
      %5536 = vmatpush1.msra.mxu0 0.0
      %5537 = vmatprep.subr.mxu0 0.0
      %5538 = vmatpush1.msra.mxu0 0.0
      %5539 = vmatprep.subr.mxu0 0.0
      %5540 = vmatpush1.msra.mxu0 0.0
      %5541 = vmatprep.subr.mxu0 0.0
      %5542 = vmatpush1.msra.mxu0 0.0
      %5543 = vmatprep.subr.mxu0 0.0
      %5544 = vmatpush1.msra.mxu0 0.0
      %5545 = vmatprep.subr.mxu0 0.0
      %5546 = vmatpush1.msra.mxu0 0.0
      %5547 = vmatprep.subr.mxu0 0.0
      %5548 = vmatpush1.msra.mxu0 0.0
      %5549 = vmatprep.subr.mxu0 0.0
      %5550 = vmatpush1.msra.mxu0 0.0
      %5551 = vmatprep.subr.mxu0 0.0
      %5552 = vmatpush1.msra.mxu0 0.0
      %5553 = vmatprep.subr.mxu0 0.0
      %5554 = vmatpush1.msra.mxu0 0.0
      %5555 = vmatprep.subr.mxu0 0.0
      %5556 = vmatpush1.msra.mxu0 0.0
      %5557 = vmatprep.subr.mxu0 0.0
      %5558 = vmatpush1.msra.mxu0 0.0
      %5559 = vmatprep.subr.mxu0 0.0
      %5560 = vmatpush1.msra.mxu0 0.0
      %5561 = vmatprep.subr.mxu0 0.0
      %5562 = vmatpush1.msra.mxu0 0.0
      %5563 = vmatprep.subr.mxu0 0.0
      %5564 = vmatpush1.msra.mxu0 0.0
      %5565 = vmatprep.subr.mxu0 0.0
      %5566 = vmatpush1.msra.mxu0 0.0
      %5567 = vmatprep.subr.mxu0 0.0
      %5568 = vmatpush1.msra.mxu0 0.0
      %5569 = vmatprep.subr.mxu0 0.0
      %5570 = vmatpush1.msra.mxu0 0.0
      %5571 = vmatprep.subr.mxu0 0.0
      %5572 = vmatpush1.msra.mxu0 0.0
      %5573 = vmatprep.subr.mxu0 0.0
      %5574 = vmatpush1.msra.mxu0 0.0
      %5575 = vmatprep.subr.mxu0 0.0
      %5576 = vmatpush1.msra.mxu0 0.0
      %5577 = vmatprep.subr.mxu0 0.0
      %5578 = vmatpush1.msra.mxu0 0.0
      %5579 = vmatprep.subr.mxu0 0.0
      %5580 = vmatpush1.msra.mxu0 0.0
      %5581 = vmatprep.subr.mxu0 0.0
      %5582 = vmatpush1.msra.mxu0 0.0
      %5583 = vmatprep.subr.mxu0 0.0
      %5584 = vmatpush1.msra.mxu0 0.0
      %5585 = vmatprep.subr.mxu0 0.0
      %5586 = vmatpush1.msra.mxu0 0.0
      %5587 = vmatprep.subr.mxu0 0.0
      %5588 = vmatpush1.msra.mxu0 0.0
      %5589 = vmatprep.subr.mxu0 0.0
      %5590 = vmatpush1.msra.mxu0 0.0
      %5591 = vmatprep.subr.mxu0 0.0
      %5592 = vmatpush1.msra.mxu0 0.0
      %5593 = vmatprep.subr.mxu0 0.0
      %5594 = vmatpush1.msra.mxu0 0.0
      %5595 = vmatprep.mubr.f32.mxu0 0.0
      %5596 = vmatmul.mubr.f32.gmra.mrb[0].mxu0 %v5529
      %v5597 = vpop.f32.mrb[0].mxu0
      %v5598 = vadd.f32 0.0, %v5597
      %v5599 = vpop.f32.mrb[0].mxu0
      %5600 = vdwg.mxu0
      %s5601 = scalar_lea.vmem %s10, 48
      %v5602 = vld [vmem:[%s5601] sm:$0xff]
      %v5604 = vsel %vm4775, %v5598, 0
      %5606 = vmatprep.subr.mxu0 0.0
      %5607 = vmatpush1.msra.mxu0 %v5602
      %5608 = vmatprep.subr.mxu0 0.0
      %5609 = vmatpush1.msra.mxu0 0.0
      %5610 = vmatprep.subr.mxu0 0.0
      %5611 = vmatpush1.msra.mxu0 0.0
      %5612 = vmatprep.subr.mxu0 0.0
      %5613 = vmatpush1.msra.mxu0 0.0
      %5614 = vmatprep.subr.mxu0 0.0
      %5615 = vmatpush1.msra.mxu0 0.0
      %5616 = vmatprep.subr.mxu0 0.0
      %5617 = vmatpush1.msra.mxu0 0.0
      %5618 = vmatprep.subr.mxu0 0.0
      %5619 = vmatpush1.msra.mxu0 0.0
      %5620 = vmatprep.subr.mxu0 0.0
      %5621 = vmatpush1.msra.mxu0 0.0
      %5622 = vmatprep.subr.mxu0 0.0
      %5623 = vmatpush1.msra.mxu0 0.0
      %5624 = vmatprep.subr.mxu0 0.0
      %5625 = vmatpush1.msra.mxu0 0.0
      %5626 = vmatprep.subr.mxu0 0.0
      %5627 = vmatpush1.msra.mxu0 0.0
      %5628 = vmatprep.subr.mxu0 0.0
      %5629 = vmatpush1.msra.mxu0 0.0
      %5630 = vmatprep.subr.mxu0 0.0
      %5631 = vmatpush1.msra.mxu0 0.0
      %5632 = vmatprep.subr.mxu0 0.0
      %5633 = vmatpush1.msra.mxu0 0.0
      %5634 = vmatprep.subr.mxu0 0.0
      %5635 = vmatpush1.msra.mxu0 0.0
      %5636 = vmatprep.subr.mxu0 0.0
      %5637 = vmatpush1.msra.mxu0 0.0
      %5638 = vmatprep.subr.mxu0 0.0
      %5639 = vmatpush1.msra.mxu0 0.0
      %5640 = vmatprep.subr.mxu0 0.0
      %5641 = vmatpush1.msra.mxu0 0.0
      %5642 = vmatprep.subr.mxu0 0.0
      %5643 = vmatpush1.msra.mxu0 0.0
      %5644 = vmatprep.subr.mxu0 0.0
      %5645 = vmatpush1.msra.mxu0 0.0
      %5646 = vmatprep.subr.mxu0 0.0
      %5647 = vmatpush1.msra.mxu0 0.0
      %5648 = vmatprep.subr.mxu0 0.0
      %5649 = vmatpush1.msra.mxu0 0.0
      %5650 = vmatprep.subr.mxu0 0.0
      %5651 = vmatpush1.msra.mxu0 0.0
      %5652 = vmatprep.subr.mxu0 0.0
      %5653 = vmatpush1.msra.mxu0 0.0
      %5654 = vmatprep.subr.mxu0 0.0
      %5655 = vmatpush1.msra.mxu0 0.0
      %5656 = vmatprep.subr.mxu0 0.0
      %5657 = vmatpush1.msra.mxu0 0.0
      %5658 = vmatprep.subr.mxu0 0.0
      %5659 = vmatpush1.msra.mxu0 0.0
      %5660 = vmatprep.subr.mxu0 0.0
      %5661 = vmatpush1.msra.mxu0 0.0
      %5662 = vmatprep.subr.mxu0 0.0
      %5663 = vmatpush1.msra.mxu0 0.0
      %5664 = vmatprep.subr.mxu0 0.0
      %5665 = vmatpush1.msra.mxu0 0.0
      %5666 = vmatprep.subr.mxu0 0.0
      %5667 = vmatpush1.msra.mxu0 0.0
      %5668 = vmatprep.subr.mxu0 0.0
      %5669 = vmatpush1.msra.mxu0 0.0
      %5670 = vmatprep.mubr.f32.mxu0 0.0
      %5671 = vmatmul.mubr.f32.gmra.mrb[0].mxu0 %v5604
      %v5672 = vpop.f32.mrb[0].mxu0
      %v5673 = vadd.f32 0.0, %v5672
      %v5674 = vpop.f32.mrb[0].mxu0
      %5675 = vdwg.mxu0
      %v5676 = vadd.f32 %v5525, %v5673
      %s5677 = scalar_lea.vmem %s12, 28
      %v5678 = vld [vmem:[%s5677] sm:$0xf]
      %v5680 = vsel %vm3259, %v5678, 0
      %5682 = vmatprep.subr.mxu0 0.0
      %5683 = vmatpush1.msra.mxu0 %v4621
      %5684 = vmatprep.subr.mxu0 0.0
      %5685 = vmatpush1.msra.mxu0 %v4622
      %5686 = vmatprep.subr.mxu0 0.0
      %5687 = vmatpush1.msra.mxu0 0.0
      %5688 = vmatprep.subr.mxu0 0.0
      %5689 = vmatpush1.msra.mxu0 0.0
      %5690 = vmatprep.subr.mxu0 0.0
      %5691 = vmatpush1.msra.mxu0 0.0
      %5692 = vmatprep.subr.mxu0 0.0
      %5693 = vmatpush1.msra.mxu0 0.0
      %5694 = vmatprep.subr.mxu0 0.0
      %5695 = vmatpush1.msra.mxu0 0.0
      %5696 = vmatprep.subr.mxu0 0.0
      %5697 = vmatpush1.msra.mxu0 0.0
      %5698 = vmatprep.subr.mxu0 0.0
      %5699 = vmatpush1.msra.mxu0 0.0
      %5700 = vmatprep.subr.mxu0 0.0
      %5701 = vmatpush1.msra.mxu0 0.0
      %5702 = vmatprep.subr.mxu0 0.0
      %5703 = vmatpush1.msra.mxu0 0.0
      %5704 = vmatprep.subr.mxu0 0.0
      %5705 = vmatpush1.msra.mxu0 0.0
      %5706 = vmatprep.subr.mxu0 0.0
      %5707 = vmatpush1.msra.mxu0 0.0
      %5708 = vmatprep.subr.mxu0 0.0
      %5709 = vmatpush1.msra.mxu0 0.0
      %5710 = vmatprep.subr.mxu0 0.0
      %5711 = vmatpush1.msra.mxu0 0.0
      %5712 = vmatprep.subr.mxu0 0.0
      %5713 = vmatpush1.msra.mxu0 0.0
      %5714 = vmatprep.subr.mxu0 0.0
      %5715 = vmatpush1.msra.mxu0 0.0
      %5716 = vmatprep.subr.mxu0 0.0
      %5717 = vmatpush1.msra.mxu0 0.0
      %5718 = vmatprep.subr.mxu0 0.0
      %5719 = vmatpush1.msra.mxu0 0.0
      %5720 = vmatprep.subr.mxu0 0.0
      %5721 = vmatpush1.msra.mxu0 0.0
      %5722 = vmatprep.subr.mxu0 0.0
      %5723 = vmatpush1.msra.mxu0 0.0
      %5724 = vmatprep.subr.mxu0 0.0
      %5725 = vmatpush1.msra.mxu0 0.0
      %5726 = vmatprep.subr.mxu0 0.0
      %5727 = vmatpush1.msra.mxu0 0.0
      %5728 = vmatprep.subr.mxu0 0.0
      %5729 = vmatpush1.msra.mxu0 0.0
      %5730 = vmatprep.subr.mxu0 0.0
      %5731 = vmatpush1.msra.mxu0 0.0
      %5732 = vmatprep.subr.mxu0 0.0
      %5733 = vmatpush1.msra.mxu0 0.0
      %5734 = vmatprep.subr.mxu0 0.0
      %5735 = vmatpush1.msra.mxu0 0.0
      %5736 = vmatprep.subr.mxu0 0.0
      %5737 = vmatpush1.msra.mxu0 0.0
      %5738 = vmatprep.subr.mxu0 0.0
      %5739 = vmatpush1.msra.mxu0 0.0
      %5740 = vmatprep.subr.mxu0 0.0
      %5741 = vmatpush1.msra.mxu0 0.0
      %5742 = vmatprep.subr.mxu0 0.0
      %5743 = vmatpush1.msra.mxu0 0.0
      %5744 = vmatprep.subr.mxu0 0.0
      %5745 = vmatpush1.msra.mxu0 0.0
      %5746 = vmatprep.mubr.f32.mxu0 0.0
      %5747 = vmatmul.mubr.f32.gmra.mrb[0].mxu0 %v5680
      %v5748 = vpop.f32.mrb[0].mxu0
      %v5749 = vadd.f32 0.0, %v5748
      %v5750 = vpop.f32.mrb[0].mxu0
      %5751 = vdwg.mxu0
      %s5752 = scalar_lea.vmem %s10, 56
      %v5753 = vld [vmem:[%s5752] sm:$0xff]
      %v5755 = vsel %vm4775, %v5749, 0
      %5757 = vmatprep.subr.mxu0 0.0
      %5758 = vmatpush1.msra.mxu0 %v5753
      %5759 = vmatprep.subr.mxu0 0.0
      %5760 = vmatpush1.msra.mxu0 0.0
      %5761 = vmatprep.subr.mxu0 0.0
      %5762 = vmatpush1.msra.mxu0 0.0
      %5763 = vmatprep.subr.mxu0 0.0
      %5764 = vmatpush1.msra.mxu0 0.0
      %5765 = vmatprep.subr.mxu0 0.0
      %5766 = vmatpush1.msra.mxu0 0.0
      %5767 = vmatprep.subr.mxu0 0.0
      %5768 = vmatpush1.msra.mxu0 0.0
      %5769 = vmatprep.subr.mxu0 0.0
      %5770 = vmatpush1.msra.mxu0 0.0
      %5771 = vmatprep.subr.mxu0 0.0
      %5772 = vmatpush1.msra.mxu0 0.0
      %5773 = vmatprep.subr.mxu0 0.0
      %5774 = vmatpush1.msra.mxu0 0.0
      %5775 = vmatprep.subr.mxu0 0.0
      %5776 = vmatpush1.msra.mxu0 0.0
      %5777 = vmatprep.subr.mxu0 0.0
      %5778 = vmatpush1.msra.mxu0 0.0
      %5779 = vmatprep.subr.mxu0 0.0
      %5780 = vmatpush1.msra.mxu0 0.0
      %5781 = vmatprep.subr.mxu0 0.0
      %5782 = vmatpush1.msra.mxu0 0.0
      %5783 = vmatprep.subr.mxu0 0.0
      %5784 = vmatpush1.msra.mxu0 0.0
      %5785 = vmatprep.subr.mxu0 0.0
      %5786 = vmatpush1.msra.mxu0 0.0
      %5787 = vmatprep.subr.mxu0 0.0
      %5788 = vmatpush1.msra.mxu0 0.0
      %5789 = vmatprep.subr.mxu0 0.0
      %5790 = vmatpush1.msra.mxu0 0.0
      %5791 = vmatprep.subr.mxu0 0.0
      %5792 = vmatpush1.msra.mxu0 0.0
      %5793 = vmatprep.subr.mxu0 0.0
      %5794 = vmatpush1.msra.mxu0 0.0
      %5795 = vmatprep.subr.mxu0 0.0
      %5796 = vmatpush1.msra.mxu0 0.0
      %5797 = vmatprep.subr.mxu0 0.0
      %5798 = vmatpush1.msra.mxu0 0.0
      %5799 = vmatprep.subr.mxu0 0.0
      %5800 = vmatpush1.msra.mxu0 0.0
      %5801 = vmatprep.subr.mxu0 0.0
      %5802 = vmatpush1.msra.mxu0 0.0
      %5803 = vmatprep.subr.mxu0 0.0
      %5804 = vmatpush1.msra.mxu0 0.0
      %5805 = vmatprep.subr.mxu0 0.0
      %5806 = vmatpush1.msra.mxu0 0.0
      %5807 = vmatprep.subr.mxu0 0.0
      %5808 = vmatpush1.msra.mxu0 0.0
      %5809 = vmatprep.subr.mxu0 0.0
      %5810 = vmatpush1.msra.mxu0 0.0
      %5811 = vmatprep.subr.mxu0 0.0
      %5812 = vmatpush1.msra.mxu0 0.0
      %5813 = vmatprep.subr.mxu0 0.0
      %5814 = vmatpush1.msra.mxu0 0.0
      %5815 = vmatprep.subr.mxu0 0.0
      %5816 = vmatpush1.msra.mxu0 0.0
      %5817 = vmatprep.subr.mxu0 0.0
      %5818 = vmatpush1.msra.mxu0 0.0
      %5819 = vmatprep.subr.mxu0 0.0
      %5820 = vmatpush1.msra.mxu0 0.0
      %5821 = vmatprep.mubr.f32.mxu0 0.0
      %5822 = vmatmul.mubr.f32.gmra.mrb[0].mxu0 %v5755
      %v5823 = vpop.f32.mrb[0].mxu0
      %v5824 = vadd.f32 0.0, %v5823
      %v5825 = vpop.f32.mrb[0].mxu0
      %5826 = vdwg.mxu0
      %v5827 = vadd.f32 %v5676, %v5824
      %s5828 = scalar_lea.vmem %s12, 32
      %v5829 = vld [vmem:[%s5828] sm:$0xf]
      %v5831 = vsel %vm3259, %v5829, 0
      %5833 = vmatprep.subr.mxu0 0.0
      %5834 = vmatpush1.msra.mxu0 %v4621
      %5835 = vmatprep.subr.mxu0 0.0
      %5836 = vmatpush1.msra.mxu0 %v4622
      %5837 = vmatprep.subr.mxu0 0.0
      %5838 = vmatpush1.msra.mxu0 0.0
      %5839 = vmatprep.subr.mxu0 0.0
      %5840 = vmatpush1.msra.mxu0 0.0
      %5841 = vmatprep.subr.mxu0 0.0
      %5842 = vmatpush1.msra.mxu0 0.0
      %5843 = vmatprep.subr.mxu0 0.0
      %5844 = vmatpush1.msra.mxu0 0.0
      %5845 = vmatprep.subr.mxu0 0.0
      %5846 = vmatpush1.msra.mxu0 0.0
      %5847 = vmatprep.subr.mxu0 0.0
      %5848 = vmatpush1.msra.mxu0 0.0
      %5849 = vmatprep.subr.mxu0 0.0
      %5850 = vmatpush1.msra.mxu0 0.0
      %5851 = vmatprep.subr.mxu0 0.0
      %5852 = vmatpush1.msra.mxu0 0.0
      %5853 = vmatprep.subr.mxu0 0.0
      %5854 = vmatpush1.msra.mxu0 0.0
      %5855 = vmatprep.subr.mxu0 0.0
      %5856 = vmatpush1.msra.mxu0 0.0
      %5857 = vmatprep.subr.mxu0 0.0
      %5858 = vmatpush1.msra.mxu0 0.0
      %5859 = vmatprep.subr.mxu0 0.0
      %5860 = vmatpush1.msra.mxu0 0.0
      %5861 = vmatprep.subr.mxu0 0.0
      %5862 = vmatpush1.msra.mxu0 0.0
      %5863 = vmatprep.subr.mxu0 0.0
      %5864 = vmatpush1.msra.mxu0 0.0
      %5865 = vmatprep.subr.mxu0 0.0
      %5866 = vmatpush1.msra.mxu0 0.0
      %5867 = vmatprep.subr.mxu0 0.0
      %5868 = vmatpush1.msra.mxu0 0.0
      %5869 = vmatprep.subr.mxu0 0.0
      %5870 = vmatpush1.msra.mxu0 0.0
      %5871 = vmatprep.subr.mxu0 0.0
      %5872 = vmatpush1.msra.mxu0 0.0
      %5873 = vmatprep.subr.mxu0 0.0
      %5874 = vmatpush1.msra.mxu0 0.0
      %5875 = vmatprep.subr.mxu0 0.0
      %5876 = vmatpush1.msra.mxu0 0.0
      %5877 = vmatprep.subr.mxu0 0.0
      %5878 = vmatpush1.msra.mxu0 0.0
      %5879 = vmatprep.subr.mxu0 0.0
      %5880 = vmatpush1.msra.mxu0 0.0
      %5881 = vmatprep.subr.mxu0 0.0
      %5882 = vmatpush1.msra.mxu0 0.0
      %5883 = vmatprep.subr.mxu0 0.0
      %5884 = vmatpush1.msra.mxu0 0.0
      %5885 = vmatprep.subr.mxu0 0.0
      %5886 = vmatpush1.msra.mxu0 0.0
      %5887 = vmatprep.subr.mxu0 0.0
      %5888 = vmatpush1.msra.mxu0 0.0
      %5889 = vmatprep.subr.mxu0 0.0
      %5890 = vmatpush1.msra.mxu0 0.0
      %5891 = vmatprep.subr.mxu0 0.0
      %5892 = vmatpush1.msra.mxu0 0.0
      %5893 = vmatprep.subr.mxu0 0.0
      %5894 = vmatpush1.msra.mxu0 0.0
      %5895 = vmatprep.subr.mxu0 0.0
      %5896 = vmatpush1.msra.mxu0 0.0
      %5897 = vmatprep.mubr.f32.mxu0 0.0
      %5898 = vmatmul.mubr.f32.gmra.mrb[0].mxu0 %v5831
      %v5899 = vpop.f32.mrb[0].mxu0
      %v5900 = vadd.f32 0.0, %v5899
      %v5901 = vpop.f32.mrb[0].mxu0
      %5902 = vdwg.mxu0
      %s5903 = scalar_lea.vmem %s10, 64
      %v5904 = vld [vmem:[%s5903] sm:$0xff]
      %v5906 = vsel %vm4775, %v5900, 0
      %5908 = vmatprep.subr.mxu0 0.0
      %5909 = vmatpush1.msra.mxu0 %v5904
      %5910 = vmatprep.subr.mxu0 0.0
      %5911 = vmatpush1.msra.mxu0 0.0
      %5912 = vmatprep.subr.mxu0 0.0
      %5913 = vmatpush1.msra.mxu0 0.0
      %5914 = vmatprep.subr.mxu0 0.0
      %5915 = vmatpush1.msra.mxu0 0.0
      %5916 = vmatprep.subr.mxu0 0.0
      %5917 = vmatpush1.msra.mxu0 0.0
      %5918 = vmatprep.subr.mxu0 0.0
      %5919 = vmatpush1.msra.mxu0 0.0
      %5920 = vmatprep.subr.mxu0 0.0
      %5921 = vmatpush1.msra.mxu0 0.0
      %5922 = vmatprep.subr.mxu0 0.0
      %5923 = vmatpush1.msra.mxu0 0.0
      %5924 = vmatprep.subr.mxu0 0.0
      %5925 = vmatpush1.msra.mxu0 0.0
      %5926 = vmatprep.subr.mxu0 0.0
      %5927 = vmatpush1.msra.mxu0 0.0
      %5928 = vmatprep.subr.mxu0 0.0
      %5929 = vmatpush1.msra.mxu0 0.0
      %5930 = vmatprep.subr.mxu0 0.0
      %5931 = vmatpush1.msra.mxu0 0.0
      %5932 = vmatprep.subr.mxu0 0.0
      %5933 = vmatpush1.msra.mxu0 0.0
      %5934 = vmatprep.subr.mxu0 0.0
      %5935 = vmatpush1.msra.mxu0 0.0
      %5936 = vmatprep.subr.mxu0 0.0
      %5937 = vmatpush1.msra.mxu0 0.0
      %5938 = vmatprep.subr.mxu0 0.0
      %5939 = vmatpush1.msra.mxu0 0.0
      %5940 = vmatprep.subr.mxu0 0.0
      %5941 = vmatpush1.msra.mxu0 0.0
      %5942 = vmatprep.subr.mxu0 0.0
      %5943 = vmatpush1.msra.mxu0 0.0
      %5944 = vmatprep.subr.mxu0 0.0
      %5945 = vmatpush1.msra.mxu0 0.0
      %5946 = vmatprep.subr.mxu0 0.0
      %5947 = vmatpush1.msra.mxu0 0.0
      %5948 = vmatprep.subr.mxu0 0.0
      %5949 = vmatpush1.msra.mxu0 0.0
      %5950 = vmatprep.subr.mxu0 0.0
      %5951 = vmatpush1.msra.mxu0 0.0
      %5952 = vmatprep.subr.mxu0 0.0
      %5953 = vmatpush1.msra.mxu0 0.0
      %5954 = vmatprep.subr.mxu0 0.0
      %5955 = vmatpush1.msra.mxu0 0.0
      %5956 = vmatprep.subr.mxu0 0.0
      %5957 = vmatpush1.msra.mxu0 0.0
      %5958 = vmatprep.subr.mxu0 0.0
      %5959 = vmatpush1.msra.mxu0 0.0
      %5960 = vmatprep.subr.mxu0 0.0
      %5961 = vmatpush1.msra.mxu0 0.0
      %5962 = vmatprep.subr.mxu0 0.0
      %5963 = vmatpush1.msra.mxu0 0.0
      %5964 = vmatprep.subr.mxu0 0.0
      %5965 = vmatpush1.msra.mxu0 0.0
      %5966 = vmatprep.subr.mxu0 0.0
      %5967 = vmatpush1.msra.mxu0 0.0
      %5968 = vmatprep.subr.mxu0 0.0
      %5969 = vmatpush1.msra.mxu0 0.0
      %5970 = vmatprep.subr.mxu0 0.0
      %5971 = vmatpush1.msra.mxu0 0.0
      %5972 = vmatprep.mubr.f32.mxu0 0.0
      %5973 = vmatmul.mubr.f32.gmra.mrb[0].mxu0 %v5906
      %v5974 = vpop.f32.mrb[0].mxu0
      %v5975 = vadd.f32 0.0, %v5974
      %v5976 = vpop.f32.mrb[0].mxu0
      %5977 = vdwg.mxu0
      %v5978 = vadd.f32 %v5827, %v5975
      %v5979 = vld [vmem:[%s11] sm:$0x1]
      %v5981 = vlaneseq
      %v5982 = vshrl.u32 %v5981, 7
      %v5983 = vsub.s32 0, %v5982
      %v5984 = vrot.slane %v5979, %v5983
      %v5986 = vadd.f32 %v5978, %v5984
      %v5987 = vmax.f32 %v5986, 0.0
      %v5988 = vld [vmem:[%s13] sm:$0xf]
      %v5989 = vmul.f32 %v5987, %v5988
      %vm5990 = vcmask 27648
      %v5991 = vsel %vm5990, %v5989, 0.0
      %v5992 = vrot.slane %v5991, 4
      %v5993 = vadd.f32 %v5991, %v5992
      %v5994 = vrot.slane %v5993, 2
      %v5995 = vadd.f32 %v5993, %v5994
      %v5996 = vrot.slane %v5995, 1
      %v5997 = vadd.f32 %v5995, %v5996
      %vm5998 = vcmask 31744
      %v5999 = vsel %vm5998, %v5997, 0.0
      %6000 = vadd.xlane.f32.xlu0 %v5999
      %v6001 = vpop.xlane.xlu0 %6000
      %v6002 = vld [vmem:[#allocation2] sm:$0x1]
      %v6003 = vadd.f32 %v6001, %v6002
      %vm6004 = vcmask 0
      %6005 = vst.msk [vmem:[%s512] sm:$0x1] %vm6004, %v6003
      %p6006 = scmp.lt.s32.totalorder %s28, 1
      %s6007 = scalar_select %p6006, %s28, 1
      %s6008 = scalar_lea.vmem %s15, %s6007
      // Predicated region
      $region81: #{fov_forward.1} parent=79 // pred_check
        %p6009 = pneg %p371
      $region82: #{fov_forward.1} parent=79 // pred_check_branch
        %6011 = sbr.rel (%p6009) target = $region84
      $region83: #{fov_forward.1} parent=79 // pred_region
        _
      $region84: #{fov_forward.1} parent=79 // pred_fallthru
        _
    $region80: #{fov_forward.1} parent=5 // pred_fallthru
      _
    %p6012 = scmp.le.s32.totalorder 2, %s23
    // Predicated region
    $region85: #{fov_forward.1} parent=5 // pred_check
      %p6013 = pneg %p6012
    $region86: #{fov_forward.1} parent=5 // pred_check_branch
      %6015 = sbr.rel (%p6013) target = $region88
    $region87: #{fov_forward.1} parent=5 // pred_region
      %s6016 = ssub.s32 %s23, 2
      // Predicated region
      $region89: #{fov_forward.1} parent=87 // pred_check
        %p6017 = pneg %p377
      $region90: #{fov_forward.1} parent=87 // pred_check_branch
        %6019 = sbr.rel (%p6017) target = $region92
      $region91: #{fov_forward.1} parent=87 // pred_region
        %p6020 = scmp.lt.s32.totalorder %s29, 1
        %s6021 = scalar_select %p6020, %s29, 1
        %s6022 = scalar_lea.vmem %s15, %s6021
      $region92: #{fov_forward.1} parent=87 // pred_fallthru
        _
    $region88: #{fov_forward.1} parent=5 // pred_fallthru
      _
  $region6: #{fov_forward.1} parent=0 // loop_footer
    %s27 = sadd.s32 1, %s23
  $region7: #{fov_forward.1} parent=0 // loop_footer_branch
    %22 = sbr.rel target = $region3
  $region8: #{fov_forward.1} parent=0 // loop_exit
    _

</llo_original>
